<compile_context>
chip_gen: v7x
topology: tpu7x:2x2x1
jax: 0.10.0
libtpu: 0.0.40
codegen_flags: <defaults>
</compile_context>

<pallas_src>
import jax
import jax.numpy as jnp
import numpy as np
from jax import lax
from jax.experimental import pallas as pl
from jax.experimental.pallas import tpu as pltpu


_TAPS = tuple((dy, dx) for dy in range(3) for dx in range(3))
_LANE = 128   # native lane tile; im2col / flatten slots are 128-lane aligned


# ----------------------------------------------------------------------------
# Fused kernel: one batch element per grid step, everything in VMEM.
# ----------------------------------------------------------------------------
def _fused_cnn_kernel(x_ref, w1_ref, b1_ref,
                      w2p_ref, b2_ref,
                      fc1wp_ref, fc1b_ref, fctw_ref, fctb_ref,
                      o_ref,
                      p1_ref, p2_ref, im2_ref, flat_ref):
    H, W = x_ref.shape[1], x_ref.shape[2]
    H2, W2 = H // 2, W // 2
    H4, W4 = H // 4, W // 4
    C1 = w1_ref.shape[1]          # 32
    C2 = b2_ref.shape[1]          # 64

    # ----- layer 1: conv3x3(pad=1) + folded BN + ReLU + 2x2 maxpool ---------
    # zero-padded input lives in a VMEM scratch (no host-side jnp.pad).
    p1_ref[...] = jnp.zeros(p1_ref.shape, jnp.float32)
    p1_ref[1:1 + H, 1:1 + W, :] = x_ref[0]

    # Cin == 1, so the conv is 9 rank-1 updates: shifted-input column (H*W,1)
    # times the per-tap output-channel weight row (1,32).  Pure VPU FMAs on
    # the channels-last accumulator; BN scale is pre-folded into w1.
    a1 = jnp.zeros((H * W, C1), jnp.float32)
    for k, (dy, dx) in enumerate(_TAPS):
        col = p1_ref[dy:dy + H, dx:dx + W, :].reshape(H * W, 1)
        a1 = a1 + col * w1_ref[k:k + 1, :]
    a1 = jnp.maximum(a1 + b1_ref[...], 0.0)                          # (H*W, 32)

    a1 = a1.reshape(H, W2, 2, C1)
    a1 = jnp.maximum(a1[:, :, 0, :], a1[:, :, 1, :])
    a1 = a1.reshape(H2, 2, W2, C1)
    h1 = jnp.maximum(a1[:, 0, :, :], a1[:, 1, :, :])                 # (H2, W2, 32)

    # ----- layer 2: conv3x3(pad=1) + folded BN + ReLU + 2x2 maxpool ---------
    p2_ref[...] = jnp.zeros(p2_ref.shape, jnp.float32)
    p2_ref[1:1 + H2, 1:1 + W2, :] = h1

    # im2col in a VMEM scratch; each of the 9 taps is stored at a
    # 128-lane-aligned offset (every store aligned).  The weight rows for the
    # unused pad lanes are zero, so a single matmul over K = 9*128 gives the
    # exact conv2 (+ folded BN scale) result.
    im2_ref[...] = jnp.zeros(im2_ref.shape, jnp.float32)
    for k, (dy, dx) in enumerate(_TAPS):
        blk = p2_ref[dy:dy + H2, dx:dx + W2, :].reshape(H2 * W2, C1)
        im2_ref[:, _LANE * k:_LANE * k + C1] = blk
    a2 = jnp.dot(im2_ref[...], w2p_ref[...],
                 preferred_element_type=jnp.float32)                 # (H2*W2, 64)
    a2 = jnp.maximum(a2 + b2_ref[...], 0.0)

    a2 = a2.reshape(H2, W4, 2, C2)
    a2 = jnp.maximum(a2[:, :, 0, :], a2[:, :, 1, :])
    a2 = a2.reshape(H4, 2, W4, C2)
    h2 = jnp.maximum(a2[:, 0, :, :], a2[:, 1, :, :])                 # (H4, W4, 64)

    # ----- head: flatten + fc1 + ReLU + dropout(identity) + fc_time ---------
    # NHWC flatten with each spatial position's 64 channels at a 128-aligned
    # lane offset; fc1 weight rows were pre-permuted (and zero-padded) on the
    # host, so no transpose / lane reshuffle is needed here.
    h2 = h2.reshape(H4 * W4, C2)                                     # (16, 64)
    flat_ref[...] = jnp.zeros(flat_ref.shape, jnp.float32)
    for r in range(H4 * W4):
        flat_ref[:, _LANE * r:_LANE * r + C2] = h2[r:r + 1, :]
    hfc = jnp.dot(flat_ref[...], fc1wp_ref[...],
                  preferred_element_type=jnp.float32) + fc1b_ref[...]
    hfc = jnp.maximum(hfc, 0.0)                                      # (1, 128)
    # dropout(p=0.5): identity in inference mode.
    # TODO(synk): training-mode dropout would need pltpu.prng_seed/prng_random_bits.
    y = jnp.sum(hfc * fctw_ref[...], axis=-1, keepdims=True) + fctb_ref[...]
    o_ref[...] = y.reshape(1, 1, 1).astype(o_ref.dtype)


# ----------------------------------------------------------------------------
# Host-side, one-time parameter preparation.
# ----------------------------------------------------------------------------
def _fold_bn(conv_b, gamma, beta, mean, var, eps=1e-5):
    scale = gamma / jnp.sqrt(var + eps)
    bias = scale * conv_b + beta - mean * scale
    return scale, bias


def prepare_kernel_params(p, H, W):
    """Fold BN into the conv weights (per-output-channel scale) and a bias,
    lay conv2 weights out for the in-kernel im2col (128-lane-aligned tap
    slots -> zero rows for pad lanes) and permute/zero-pad fc1 rows so the
    kernel can flatten directly in NHWC 128-lane slots (removes the
    pre-flatten transpose)."""
    H4, W4 = H // 4, W // 4
    s1, b1 = _fold_bn(p["conv1_b"], p["bn1_gamma"], p["bn1_beta"],
                      p["bn1_mean"], p["bn1_var"])
    s2, b2 = _fold_bn(p["conv2_b"], p["bn2_gamma"], p["bn2_beta"],
                      p["bn2_mean"], p["bn2_var"])

    # conv1: (3,3,1,32) -> (taps, Cout), BN scale folded into output channels.
    w1 = p["conv1_w"].reshape(9, 32) * s1[None, :]

    # conv2: (3,3,32,64) -> (taps, Cin, Cout), BN scale folded, taps placed at
    # 128-lane-aligned row blocks with zero rows for the pad lanes.
    w2 = p["conv2_w"].reshape(9, 32, 64) * s2[None, None, :]
    w2p = jnp.zeros((9, _LANE, 64), jnp.float32).at[:, :32, :].set(w2)
    w2p = w2p.reshape(9 * _LANE, 64)

    # torch flattens NCHW: row index c*H4*W4 + hq*W4 + wq.  The kernel places
    # position r = hq*W4 + wq at lanes [128*r, 128*r + 64), channel c at lane
    # 128*r + c, so permute + zero-pad the fc1 rows accordingly.
    fc1 = p["fc1_w"].reshape(64, H4, W4, 128)
    fc1 = jnp.transpose(fc1, (1, 2, 0, 3)).reshape(H4 * W4, 64, 128)
    fc1p = jnp.zeros((H4 * W4, _LANE, 128), jnp.float32).at[:, :64, :].set(fc1)
    fc1p = fc1p.reshape(H4 * W4 * _LANE, 128)

    return {
        "w1": w1, "b1": b1.reshape(1, 32),
        "w2p": w2p, "b2": b2.reshape(1, 64),
        "fc1wp": fc1p, "fc1b": p["fc1_b"].reshape(1, 128),
        "fctw": p["fct_w"].reshape(1, 128),
        "fctb": p["fct_b"].reshape(1, 1),
    }


# ----------------------------------------------------------------------------
# Public forward pass.
# ----------------------------------------------------------------------------
def spectrogram_arrival_cnn(x_nchw, kp):
    """Fused forward. x_nchw: (B, 1, H, W) float32 -> (B, 1) float32."""
    B, C, H, W = x_nchw.shape
    assert C == 1 and H % 4 == 0 and W % 4 == 0
    H2, W2 = H // 2, W // 2
    H4, W4 = H // 4, W // 4
    # NCHW with C == 1 -> NHWC is a pure reshape (no data movement).
    x = x_nchw.reshape(B, H, W, 1)

    # NOTE: for large spectrograms a spatial row-strip grid axis and a
    # K-tiled fc1 would be needed to fit v7x VMEM; at these sizes everything
    # (weights + activations, a few MB) fits comfortably under the default
    # scoped VMEM limit on v5e/v6e/v7x.
    out = pl.pallas_call(
        _fused_cnn_kernel,
        out_shape=jax.ShapeDtypeStruct((B, 1, 1), jnp.float32),
        grid=(B,),
        in_specs=[
            pl.BlockSpec((1, H, W, 1), lambda b: (b, 0, 0, 0)),
            pl.BlockSpec((9, 32), lambda b: (0, 0)),
            pl.BlockSpec((1, 32), lambda b: (0, 0)),
            pl.BlockSpec((9 * _LANE, 64), lambda b: (0, 0)),
            pl.BlockSpec((1, 64), lambda b: (0, 0)),
            pl.BlockSpec((H4 * W4 * _LANE, 128), lambda b: (0, 0)),
            pl.BlockSpec((1, 128), lambda b: (0, 0)),
            pl.BlockSpec((1, 128), lambda b: (0, 0)),
            pl.BlockSpec((1, 1), lambda b: (0, 0)),
        ],
        out_specs=pl.BlockSpec((1, 1, 1), lambda b: (b, 0, 0)),
        scratch_shapes=[
            pltpu.VMEM((H + 2, W + 2, 1), jnp.float32),       # padded input
            pltpu.VMEM((H2 + 2, W2 + 2, 32), jnp.float32),    # padded pool1 out
            pltpu.VMEM((H2 * W2, 9 * _LANE), jnp.float32),    # conv2 im2col
            pltpu.VMEM((1, H4 * W4 * _LANE), jnp.float32),    # flattened feats
        ],
        compiler_params=pltpu.CompilerParams(
            dimension_semantics=("parallel",)),
    )(x, kp["w1"], kp["b1"], kp["w2p"], kp["b2"],
      kp["fc1wp"], kp["fc1b"], kp["fctw"], kp["fctb"])
    return out.reshape(B, 1)


# ----------------------------------------------------------------------------
# Deterministic synthetic parameters and a pure-JAX reference for checking.
# ----------------------------------------------------------------------------
def init_params(H, W, seed=42):
    keys = jax.random.split(jax.random.PRNGKey(seed), 12)
    flat_dim = 64 * (H // 4) * (W // 4)   # what the lazy fc1 would see

    def nrm(k, shape, s=0.1):
        return (s * jax.random.normal(k, shape)).astype(jnp.float32)

    return {
        "conv1_w": nrm(keys[0], (3, 3, 1, 32)),
        "conv1_b": nrm(keys[1], (32,)),
        "bn1_gamma": 1.0 + nrm(keys[2], (32,)),
        "bn1_beta": nrm(keys[3], (32,)),
        "bn1_mean": nrm(keys[2], (32,), 0.05),
        "bn1_var": 0.5 + jnp.abs(nrm(keys[3], (32,), 0.2)),
        "conv2_w": nrm(keys[4], (3, 3, 32, 64), 0.05),
        "conv2_b": nrm(keys[5], (64,)),
        "bn2_gamma": 1.0 + nrm(keys[6], (64,)),
        "bn2_beta": nrm(keys[7], (64,)),
        "bn2_mean": nrm(keys[6], (64,), 0.05),
        "bn2_var": 0.5 + jnp.abs(nrm(keys[7], (64,), 0.2)),
        "fc1_w": nrm(keys[8], (flat_dim, 128), 0.02),
        "fc1_b": nrm(keys[9], (128,)),
        "fct_w": nrm(keys[10], (128, 1)),
        "fct_b": nrm(keys[11], (1,)),
    }


def reference_forward(x_nchw, p, eps=1e-5):
    def conv(x, w_hwio, b):
        w_oihw = jnp.transpose(w_hwio, (3, 2, 0, 1))
        y = lax.conv_general_dilated(
            x, w_oihw, (1, 1), ((1, 1), (1, 1)),
            dimension_numbers=("NCHW", "OIHW", "NCHW"))
        return y + b[None, :, None, None]

    def bn(x, g, be, m, v):
        return (g[None, :, None, None] * (x - m[None, :, None, None])
                / jnp.sqrt(v[None, :, None, None] + eps)
                + be[None, :, None, None])

    def pool(x):
        return lax.reduce_window(x, -jnp.inf, lax.max,
                                 (1, 1, 2, 2), (1, 1, 2, 2), "VALID")

    x = pool(jnp.maximum(bn(conv(x_nchw, p["conv1_w"], p["conv1_b"]),
                            p["bn1_gamma"], p["bn1_beta"],
                            p["bn1_mean"], p["bn1_var"]), 0.0))
    x = pool(jnp.maximum(bn(conv(x, p["conv2_w"], p["conv2_b"]),
                            p["bn2_gamma"], p["bn2_beta"],
                            p["bn2_mean"], p["bn2_var"]), 0.0))
    x = x.reshape(x.shape[0], -1)
    x = jnp.maximum(x @ p["fc1_w"] + p["fc1_b"], 0.0)
    return x @ p["fct_w"] + p["fct_b"]


if __name__ == "__main__":
    B, C, H, W = 2, 1, 16, 16
    x = jax.random.normal(jax.random.PRNGKey(0), (B, C, H, W), jnp.float32)
    params = init_params(H, W)
    kparams = prepare_kernel_params(params, H, W)

    fwd = jax.jit(spectrogram_arrival_cnn)
    out = jax.block_until_ready(fwd(x, kparams))

    ref = jax.block_until_ready(reference_forward(x, params))
    np.testing.assert_allclose(np.asarray(out), np.asarray(ref),
                               rtol=1e-4, atol=1e-4)
    assert out.shape == (B, 1)
    print("KERNEL_OK")
</pallas_src>

<mosaic_0001>
module attributes {stable_mosaic.version = 11 : i64} {
  func.func @_fused_cnn_kernel(%arg0: i32, %arg1: memref<1x16x16x1xf32, #tpu.memory_space<vmem>>, %arg2: memref<9x32xf32, #tpu.memory_space<vmem>>, %arg3: memref<1x32xf32, #tpu.memory_space<vmem>>, %arg4: memref<1152x64xf32, #tpu.memory_space<vmem>>, %arg5: memref<1x64xf32, #tpu.memory_space<vmem>>, %arg6: memref<2048x128xf32, #tpu.memory_space<vmem>>, %arg7: memref<1x128xf32, #tpu.memory_space<vmem>>, %arg8: memref<1x128xf32, #tpu.memory_space<vmem>>, %arg9: memref<1x1xf32, #tpu.memory_space<vmem>>, %arg10: memref<1x1x1xf32, #tpu.memory_space<vmem>>, %arg11: memref<18x18x1xf32, #tpu.memory_space<vmem>>, %arg12: memref<10x10x32xf32, #tpu.memory_space<vmem>>, %arg13: memref<64x1152xf32, #tpu.memory_space<vmem>>, %arg14: memref<1x2048xf32, #tpu.memory_space<vmem>>) attributes {dimension_semantics = [#tpu.dimension_semantics<parallel>], iteration_bounds = array<i64: 2>, scalar_prefetch = 0 : i64, scratch_operands = 4 : i64, tpu.core_type = #tpu.core_type<tc>, window_params = [{transform_indices = @transform_0, window_bounds = array<i64: 1, 16, 16, 1>}, {pipeline_mode = #tpu.pipeline_mode<synchronous>, transform_indices = @transform_1, window_bounds = array<i64: 9, 32>}, {pipeline_mode = #tpu.pipeline_mode<synchronous>, transform_indices = @transform_2, window_bounds = array<i64: 1, 32>}, {pipeline_mode = #tpu.pipeline_mode<synchronous>, transform_indices = @transform_3, window_bounds = array<i64: 1152, 64>}, {pipeline_mode = #tpu.pipeline_mode<synchronous>, transform_indices = @transform_4, window_bounds = array<i64: 1, 64>}, {pipeline_mode = #tpu.pipeline_mode<synchronous>, transform_indices = @transform_5, window_bounds = array<i64: 2048, 128>}, {pipeline_mode = #tpu.pipeline_mode<synchronous>, transform_indices = @transform_6, window_bounds = array<i64: 1, 128>}, {pipeline_mode = #tpu.pipeline_mode<synchronous>, transform_indices = @transform_7, window_bounds = array<i64: 1, 128>}, {pipeline_mode = #tpu.pipeline_mode<synchronous>, transform_indices = @transform_8, window_bounds = array<i64: 1, 1>}, {transform_indices = @transform_9, window_bounds = array<i64: 1, 1, 1>}]} {
    %cst = arith.constant 0.000000e+00 : f32
    %0 = vector.broadcast %cst : f32 to vector<18x18x1xf32>
    %c0 = arith.constant 0 : index
    %c0_0 = arith.constant 0 : index
    %c0_1 = arith.constant 0 : index
    %1 = vector.load %arg11[%c0, %c0_0, %c0_1] : memref<18x18x1xf32, #tpu.memory_space<vmem>>, vector<18x18x1xf32>
    tpu.vector_store %arg11[%c0, %c0_0, %c0_1], %0 {strides = array<i32>} : memref<18x18x1xf32, #tpu.memory_space<vmem>>, vector<18x18x1xf32>,
    %c0_2 = arith.constant 0 : index
    %c0_3 = arith.constant 0 : index
    %c0_4 = arith.constant 0 : index
    %c0_5 = arith.constant 0 : index
    %2 = vector.load %arg1[%c0_2, %c0_3, %c0_4, %c0_5] : memref<1x16x16x1xf32, #tpu.memory_space<vmem>>, vector<1x16x16x1xf32>
    %3 = vector.shape_cast %2 : vector<1x16x16x1xf32> to vector<16x16x1xf32>
    %c1 = arith.constant 1 : index
    %c1_6 = arith.constant 1 : index
    %c0_7 = arith.constant 0 : index
    %4 = vector.load %arg11[%c1, %c1_6, %c0_7] : memref<18x18x1xf32, #tpu.memory_space<vmem>>, vector<16x16x1xf32>
    tpu.vector_store %arg11[%c1, %c1_6, %c0_7], %3 {strides = array<i32>} : memref<18x18x1xf32, #tpu.memory_space<vmem>>, vector<16x16x1xf32>,
    %cst_8 = arith.constant 0.000000e+00 : f32
    %5 = vector.broadcast %cst_8 : f32 to vector<256x32xf32>
    %c0_9 = arith.constant 0 : index
    %c0_10 = arith.constant 0 : index
    %c0_11 = arith.constant 0 : index
    %6 = vector.load %arg11[%c0_9, %c0_10, %c0_11] : memref<18x18x1xf32, #tpu.memory_space<vmem>>, vector<16x16x1xf32>
    %7 = vector.shape_cast %6 : vector<16x16x1xf32> to vector<256x1xf32>
    %c0_12 = arith.constant 0 : index
    %c0_13 = arith.constant 0 : index
    %8 = vector.load %arg2[%c0_12, %c0_13] : memref<9x32xf32, #tpu.memory_space<vmem>>, vector<1x32xf32>
    %9 = vector.broadcast %7 : vector<256x1xf32> to vector<256x32xf32>
    %10 = vector.broadcast %8 : vector<1x32xf32> to vector<256x32xf32>
    %11 = arith.mulf %9, %10 : vector<256x32xf32>
    %12 = arith.addf %5, %11 : vector<256x32xf32>
    %c0_14 = arith.constant 0 : index
    %c1_15 = arith.constant 1 : index
    %c0_16 = arith.constant 0 : index
    %13 = vector.load %arg11[%c0_14, %c1_15, %c0_16] : memref<18x18x1xf32, #tpu.memory_space<vmem>>, vector<16x16x1xf32>
    %14 = vector.shape_cast %13 : vector<16x16x1xf32> to vector<256x1xf32>
    %c1_17 = arith.constant 1 : index
    %c0_18 = arith.constant 0 : index
    %15 = vector.load %arg2[%c1_17, %c0_18] : memref<9x32xf32, #tpu.memory_space<vmem>>, vector<1x32xf32>
    %16 = vector.broadcast %14 : vector<256x1xf32> to vector<256x32xf32>
    %17 = vector.broadcast %15 : vector<1x32xf32> to vector<256x32xf32>
    %18 = arith.mulf %16, %17 : vector<256x32xf32>
    %19 = arith.addf %12, %18 : vector<256x32xf32>
    %c0_19 = arith.constant 0 : index
    %c2 = arith.constant 2 : index
    %c0_20 = arith.constant 0 : index
    %20 = vector.load %arg11[%c0_19, %c2, %c0_20] : memref<18x18x1xf32, #tpu.memory_space<vmem>>, vector<16x16x1xf32>
    %21 = vector.shape_cast %20 : vector<16x16x1xf32> to vector<256x1xf32>
    %c2_21 = arith.constant 2 : index
    %c0_22 = arith.constant 0 : index
    %22 = vector.load %arg2[%c2_21, %c0_22] : memref<9x32xf32, #tpu.memory_space<vmem>>, vector<1x32xf32>
    %23 = vector.broadcast %21 : vector<256x1xf32> to vector<256x32xf32>
    %24 = vector.broadcast %22 : vector<1x32xf32> to vector<256x32xf32>
    %25 = arith.mulf %23, %24 : vector<256x32xf32>
    %26 = arith.addf %19, %25 : vector<256x32xf32>
    %c1_23 = arith.constant 1 : index
    %c0_24 = arith.constant 0 : index
    %c0_25 = arith.constant 0 : index
    %27 = vector.load %arg11[%c1_23, %c0_24, %c0_25] : memref<18x18x1xf32, #tpu.memory_space<vmem>>, vector<16x16x1xf32>
    %28 = vector.shape_cast %27 : vector<16x16x1xf32> to vector<256x1xf32>
    %c3 = arith.constant 3 : index
    %c0_26 = arith.constant 0 : index
    %29 = vector.load %arg2[%c3, %c0_26] : memref<9x32xf32, #tpu.memory_space<vmem>>, vector<1x32xf32>
    %30 = vector.broadcast %28 : vector<256x1xf32> to vector<256x32xf32>
    %31 = vector.broadcast %29 : vector<1x32xf32> to vector<256x32xf32>
    %32 = arith.mulf %30, %31 : vector<256x32xf32>
    %33 = arith.addf %26, %32 : vector<256x32xf32>
    %c1_27 = arith.constant 1 : index
    %c1_28 = arith.constant 1 : index
    %c0_29 = arith.constant 0 : index
    %34 = vector.load %arg11[%c1_27, %c1_28, %c0_29] : memref<18x18x1xf32, #tpu.memory_space<vmem>>, vector<16x16x1xf32>
    %35 = vector.shape_cast %34 : vector<16x16x1xf32> to vector<256x1xf32>
    %c4 = arith.constant 4 : index
    %c0_30 = arith.constant 0 : index
    %36 = vector.load %arg2[%c4, %c0_30] : memref<9x32xf32, #tpu.memory_space<vmem>>, vector<1x32xf32>
    %37 = vector.broadcast %35 : vector<256x1xf32> to vector<256x32xf32>
    %38 = vector.broadcast %36 : vector<1x32xf32> to vector<256x32xf32>
    %39 = arith.mulf %37, %38 : vector<256x32xf32>
    %40 = arith.addf %33, %39 : vector<256x32xf32>
    %c1_31 = arith.constant 1 : index
    %c2_32 = arith.constant 2 : index
    %c0_33 = arith.constant 0 : index
    %41 = vector.load %arg11[%c1_31, %c2_32, %c0_33] : memref<18x18x1xf32, #tpu.memory_space<vmem>>, vector<16x16x1xf32>
    %42 = vector.shape_cast %41 : vector<16x16x1xf32> to vector<256x1xf32>
    %c5 = arith.constant 5 : index
    %c0_34 = arith.constant 0 : index
    %43 = vector.load %arg2[%c5, %c0_34] : memref<9x32xf32, #tpu.memory_space<vmem>>, vector<1x32xf32>
    %44 = vector.broadcast %42 : vector<256x1xf32> to vector<256x32xf32>
    %45 = vector.broadcast %43 : vector<1x32xf32> to vector<256x32xf32>
    %46 = arith.mulf %44, %45 : vector<256x32xf32>
    %47 = arith.addf %40, %46 : vector<256x32xf32>
    %c2_35 = arith.constant 2 : index
    %c0_36 = arith.constant 0 : index
    %c0_37 = arith.constant 0 : index
    %48 = vector.load %arg11[%c2_35, %c0_36, %c0_37] : memref<18x18x1xf32, #tpu.memory_space<vmem>>, vector<16x16x1xf32>
    %49 = vector.shape_cast %48 : vector<16x16x1xf32> to vector<256x1xf32>
    %c6 = arith.constant 6 : index
    %c0_38 = arith.constant 0 : index
    %50 = vector.load %arg2[%c6, %c0_38] : memref<9x32xf32, #tpu.memory_space<vmem>>, vector<1x32xf32>
    %51 = vector.broadcast %49 : vector<256x1xf32> to vector<256x32xf32>
    %52 = vector.broadcast %50 : vector<1x32xf32> to vector<256x32xf32>
    %53 = arith.mulf %51, %52 : vector<256x32xf32>
    %54 = arith.addf %47, %53 : vector<256x32xf32>
    %c2_39 = arith.constant 2 : index
    %c1_40 = arith.constant 1 : index
    %c0_41 = arith.constant 0 : index
    %55 = vector.load %arg11[%c2_39, %c1_40, %c0_41] : memref<18x18x1xf32, #tpu.memory_space<vmem>>, vector<16x16x1xf32>
    %56 = vector.shape_cast %55 : vector<16x16x1xf32> to vector<256x1xf32>
    %c7 = arith.constant 7 : index
    %c0_42 = arith.constant 0 : index
    %57 = vector.load %arg2[%c7, %c0_42] : memref<9x32xf32, #tpu.memory_space<vmem>>, vector<1x32xf32>
    %58 = vector.broadcast %56 : vector<256x1xf32> to vector<256x32xf32>
    %59 = vector.broadcast %57 : vector<1x32xf32> to vector<256x32xf32>
    %60 = arith.mulf %58, %59 : vector<256x32xf32>
    %61 = arith.addf %54, %60 : vector<256x32xf32>
    %c2_43 = arith.constant 2 : index
    %c2_44 = arith.constant 2 : index
    %c0_45 = arith.constant 0 : index
    %62 = vector.load %arg11[%c2_43, %c2_44, %c0_45] : memref<18x18x1xf32, #tpu.memory_space<vmem>>, vector<16x16x1xf32>
    %63 = vector.shape_cast %62 : vector<16x16x1xf32> to vector<256x1xf32>
    %c8 = arith.constant 8 : index
    %c0_46 = arith.constant 0 : index
    %64 = vector.load %arg2[%c8, %c0_46] : memref<9x32xf32, #tpu.memory_space<vmem>>, vector<1x32xf32>
    %65 = vector.broadcast %63 : vector<256x1xf32> to vector<256x32xf32>
    %66 = vector.broadcast %64 : vector<1x32xf32> to vector<256x32xf32>
    %67 = arith.mulf %65, %66 : vector<256x32xf32>
    %68 = arith.addf %61, %67 : vector<256x32xf32>
    %c0_47 = arith.constant 0 : index
    %c0_48 = arith.constant 0 : index
    %69 = vector.load %arg3[%c0_47, %c0_48] : memref<1x32xf32, #tpu.memory_space<vmem>>, vector<1x32xf32>
    %70 = vector.broadcast %69 : vector<1x32xf32> to vector<256x32xf32>
    %71 = arith.addf %68, %70 : vector<256x32xf32>
    %cst_49 = arith.constant 0.000000e+00 : f32
    %72 = vector.broadcast %cst_49 : f32 to vector<256x32xf32>
    %73 = arith.maximumf %71, %72 : vector<256x32xf32>
    %74 = vector.shape_cast %73 : vector<256x32xf32> to vector<16x8x2x32xf32>
    %75 = vector.extract_strided_slice %74 {offsets = [0, 0, 0, 0], sizes = [16, 8, 1, 32], strides = [1, 1, 1, 1]} : vector<16x8x2x32xf32> to vector<16x8x1x32xf32>
    %76 = vector.shape_cast %75 : vector<16x8x1x32xf32> to vector<16x8x32xf32>
    %77 = vector.extract_strided_slice %74 {offsets = [0, 0, 1, 0], sizes = [16, 8, 1, 32], strides = [1, 1, 1, 1]} : vector<16x8x2x32xf32> to vector<16x8x1x32xf32>
    %78 = vector.shape_cast %77 : vector<16x8x1x32xf32> to vector<16x8x32xf32>
    %79 = arith.maximumf %76, %78 : vector<16x8x32xf32>
    %80 = vector.shape_cast %79 : vector<16x8x32xf32> to vector<8x2x8x32xf32>
    %81 = vector.extract_strided_slice %80 {offsets = [0, 0, 0, 0], sizes = [8, 1, 8, 32], strides = [1, 1, 1, 1]} : vector<8x2x8x32xf32> to vector<8x1x8x32xf32>
    %82 = vector.shape_cast %81 : vector<8x1x8x32xf32> to vector<8x8x32xf32>
    %83 = vector.extract_strided_slice %80 {offsets = [0, 1, 0, 0], sizes = [8, 1, 8, 32], strides = [1, 1, 1, 1]} : vector<8x2x8x32xf32> to vector<8x1x8x32xf32>
    %84 = vector.shape_cast %83 : vector<8x1x8x32xf32> to vector<8x8x32xf32>
    %85 = arith.maximumf %82, %84 : vector<8x8x32xf32>
    %cst_50 = arith.constant 0.000000e+00 : f32
    %86 = vector.broadcast %cst_50 : f32 to vector<10x10x32xf32>
    %c0_51 = arith.constant 0 : index
    %c0_52 = arith.constant 0 : index
    %c0_53 = arith.constant 0 : index
    %87 = vector.load %arg12[%c0_51, %c0_52, %c0_53] : memref<10x10x32xf32, #tpu.memory_space<vmem>>, vector<10x10x32xf32>
    tpu.vector_store %arg12[%c0_51, %c0_52, %c0_53], %86 {strides = array<i32>} : memref<10x10x32xf32, #tpu.memory_space<vmem>>, vector<10x10x32xf32>,
    %c1_54 = arith.constant 1 : index
    %c1_55 = arith.constant 1 : index
    %c0_56 = arith.constant 0 : index
    %88 = vector.load %arg12[%c1_54, %c1_55, %c0_56] : memref<10x10x32xf32, #tpu.memory_space<vmem>>, vector<8x8x32xf32>
    tpu.vector_store %arg12[%c1_54, %c1_55, %c0_56], %85 {strides = array<i32>} : memref<10x10x32xf32, #tpu.memory_space<vmem>>, vector<8x8x32xf32>,
    %cst_57 = arith.constant 0.000000e+00 : f32
    %89 = vector.broadcast %cst_57 : f32 to vector<64x1152xf32>
    %c0_58 = arith.constant 0 : index
    %c0_59 = arith.constant 0 : index
    %90 = vector.load %arg13[%c0_58, %c0_59] : memref<64x1152xf32, #tpu.memory_space<vmem>>, vector<64x1152xf32>
    tpu.vector_store %arg13[%c0_58, %c0_59], %89 {strides = array<i32>} : memref<64x1152xf32, #tpu.memory_space<vmem>>, vector<64x1152xf32>,
    %c0_60 = arith.constant 0 : index
    %c0_61 = arith.constant 0 : index
    %c0_62 = arith.constant 0 : index
    %91 = vector.load %arg12[%c0_60, %c0_61, %c0_62] : memref<10x10x32xf32, #tpu.memory_space<vmem>>, vector<8x8x32xf32>
    %92 = vector.shape_cast %91 : vector<8x8x32xf32> to vector<64x32xf32>
    %c0_63 = arith.constant 0 : index
    %c0_64 = arith.constant 0 : index
    %93 = vector.load %arg13[%c0_63, %c0_64] : memref<64x1152xf32, #tpu.memory_space<vmem>>, vector<64x32xf32>
    tpu.vector_store %arg13[%c0_63, %c0_64], %92 {strides = array<i32>} : memref<64x1152xf32, #tpu.memory_space<vmem>>, vector<64x32xf32>,
    %c0_65 = arith.constant 0 : index
    %c1_66 = arith.constant 1 : index
    %c0_67 = arith.constant 0 : index
    %94 = vector.load %arg12[%c0_65, %c1_66, %c0_67] : memref<10x10x32xf32, #tpu.memory_space<vmem>>, vector<8x8x32xf32>
    %95 = vector.shape_cast %94 : vector<8x8x32xf32> to vector<64x32xf32>
    %c0_68 = arith.constant 0 : index
    %c128 = arith.constant 128 : index
    %96 = vector.load %arg13[%c0_68, %c128] : memref<64x1152xf32, #tpu.memory_space<vmem>>, vector<64x32xf32>
    tpu.vector_store %arg13[%c0_68, %c128], %95 {strides = array<i32>} : memref<64x1152xf32, #tpu.memory_space<vmem>>, vector<64x32xf32>,
    %c0_69 = arith.constant 0 : index
    %c2_70 = arith.constant 2 : index
    %c0_71 = arith.constant 0 : index
    %97 = vector.load %arg12[%c0_69, %c2_70, %c0_71] : memref<10x10x32xf32, #tpu.memory_space<vmem>>, vector<8x8x32xf32>
    %98 = vector.shape_cast %97 : vector<8x8x32xf32> to vector<64x32xf32>
    %c0_72 = arith.constant 0 : index
    %c256 = arith.constant 256 : index
    %99 = vector.load %arg13[%c0_72, %c256] : memref<64x1152xf32, #tpu.memory_space<vmem>>, vector<64x32xf32>
    tpu.vector_store %arg13[%c0_72, %c256], %98 {strides = array<i32>} : memref<64x1152xf32, #tpu.memory_space<vmem>>, vector<64x32xf32>,
    %c1_73 = arith.constant 1 : index
    %c0_74 = arith.constant 0 : index
    %c0_75 = arith.constant 0 : index
    %100 = vector.load %arg12[%c1_73, %c0_74, %c0_75] : memref<10x10x32xf32, #tpu.memory_space<vmem>>, vector<8x8x32xf32>
    %101 = vector.shape_cast %100 : vector<8x8x32xf32> to vector<64x32xf32>
    %c0_76 = arith.constant 0 : index
    %c384 = arith.constant 384 : index
    %102 = vector.load %arg13[%c0_76, %c384] : memref<64x1152xf32, #tpu.memory_space<vmem>>, vector<64x32xf32>
    tpu.vector_store %arg13[%c0_76, %c384], %101 {strides = array<i32>} : memref<64x1152xf32, #tpu.memory_space<vmem>>, vector<64x32xf32>,
    %c1_77 = arith.constant 1 : index
    %c1_78 = arith.constant 1 : index
    %c0_79 = arith.constant 0 : index
    %103 = vector.load %arg12[%c1_77, %c1_78, %c0_79] : memref<10x10x32xf32, #tpu.memory_space<vmem>>, vector<8x8x32xf32>
    %104 = vector.shape_cast %103 : vector<8x8x32xf32> to vector<64x32xf32>
    %c0_80 = arith.constant 0 : index
    %c512 = arith.constant 512 : index
    %105 = vector.load %arg13[%c0_80, %c512] : memref<64x1152xf32, #tpu.memory_space<vmem>>, vector<64x32xf32>
    tpu.vector_store %arg13[%c0_80, %c512], %104 {strides = array<i32>} : memref<64x1152xf32, #tpu.memory_space<vmem>>, vector<64x32xf32>,
    %c1_81 = arith.constant 1 : index
    %c2_82 = arith.constant 2 : index
    %c0_83 = arith.constant 0 : index
    %106 = vector.load %arg12[%c1_81, %c2_82, %c0_83] : memref<10x10x32xf32, #tpu.memory_space<vmem>>, vector<8x8x32xf32>
    %107 = vector.shape_cast %106 : vector<8x8x32xf32> to vector<64x32xf32>
    %c0_84 = arith.constant 0 : index
    %c640 = arith.constant 640 : index
    %108 = vector.load %arg13[%c0_84, %c640] : memref<64x1152xf32, #tpu.memory_space<vmem>>, vector<64x32xf32>
    tpu.vector_store %arg13[%c0_84, %c640], %107 {strides = array<i32>} : memref<64x1152xf32, #tpu.memory_space<vmem>>, vector<64x32xf32>,
    %c2_85 = arith.constant 2 : index
    %c0_86 = arith.constant 0 : index
    %c0_87 = arith.constant 0 : index
    %109 = vector.load %arg12[%c2_85, %c0_86, %c0_87] : memref<10x10x32xf32, #tpu.memory_space<vmem>>, vector<8x8x32xf32>
    %110 = vector.shape_cast %109 : vector<8x8x32xf32> to vector<64x32xf32>
    %c0_88 = arith.constant 0 : index
    %c768 = arith.constant 768 : index
    %111 = vector.load %arg13[%c0_88, %c768] : memref<64x1152xf32, #tpu.memory_space<vmem>>, vector<64x32xf32>
    tpu.vector_store %arg13[%c0_88, %c768], %110 {strides = array<i32>} : memref<64x1152xf32, #tpu.memory_space<vmem>>, vector<64x32xf32>,
    %c2_89 = arith.constant 2 : index
    %c1_90 = arith.constant 1 : index
    %c0_91 = arith.constant 0 : index
    %112 = vector.load %arg12[%c2_89, %c1_90, %c0_91] : memref<10x10x32xf32, #tpu.memory_space<vmem>>, vector<8x8x32xf32>
    %113 = vector.shape_cast %112 : vector<8x8x32xf32> to vector<64x32xf32>
    %c0_92 = arith.constant 0 : index
    %c896 = arith.constant 896 : index
    %114 = vector.load %arg13[%c0_92, %c896] : memref<64x1152xf32, #tpu.memory_space<vmem>>, vector<64x32xf32>
    tpu.vector_store %arg13[%c0_92, %c896], %113 {strides = array<i32>} : memref<64x1152xf32, #tpu.memory_space<vmem>>, vector<64x32xf32>,
    %c2_93 = arith.constant 2 : index
    %c2_94 = arith.constant 2 : index
    %c0_95 = arith.constant 0 : index
    %115 = vector.load %arg12[%c2_93, %c2_94, %c0_95] : memref<10x10x32xf32, #tpu.memory_space<vmem>>, vector<8x8x32xf32>
    %116 = vector.shape_cast %115 : vector<8x8x32xf32> to vector<64x32xf32>
    %c0_96 = arith.constant 0 : index
    %c1024 = arith.constant 1024 : index
    %117 = vector.load %arg13[%c0_96, %c1024] : memref<64x1152xf32, #tpu.memory_space<vmem>>, vector<64x32xf32>
    tpu.vector_store %arg13[%c0_96, %c1024], %116 {strides = array<i32>} : memref<64x1152xf32, #tpu.memory_space<vmem>>, vector<64x32xf32>,
    %c0_97 = arith.constant 0 : index
    %c0_98 = arith.constant 0 : index
    %118 = vector.load %arg13[%c0_97, %c0_98] : memref<64x1152xf32, #tpu.memory_space<vmem>>, vector<64x1152xf32>
    %c0_99 = arith.constant 0 : index
    %c0_100 = arith.constant 0 : index
    %119 = vector.load %arg4[%c0_99, %c0_100] : memref<1152x64xf32, #tpu.memory_space<vmem>>, vector<1152x64xf32>
    %cst_101 = arith.constant dense<0.000000e+00> : vector<64x64xf32>
    %120 = tpu.matmul %118, %119, %cst_101 {dimension_numbers = #tpu.dot_dimension_numbers<[1], [0], [0], [1], [0, 0, 1, 1], [], []>} : vector<64x1152xf32>, vector<1152x64xf32>, vector<64x64xf32> -> vector<64x64xf32>
    %c0_102 = arith.constant 0 : index
    %c0_103 = arith.constant 0 : index
    %121 = vector.load %arg5[%c0_102, %c0_103] : memref<1x64xf32, #tpu.memory_space<vmem>>, vector<1x64xf32>
    %122 = vector.broadcast %121 : vector<1x64xf32> to vector<64x64xf32>
    %123 = arith.addf %120, %122 : vector<64x64xf32>
    %cst_104 = arith.constant 0.000000e+00 : f32
    %124 = vector.broadcast %cst_104 : f32 to vector<64x64xf32>
    %125 = arith.maximumf %123, %124 : vector<64x64xf32>
    %126 = vector.shape_cast %125 : vector<64x64xf32> to vector<8x4x2x64xf32>
    %127 = vector.extract_strided_slice %126 {offsets = [0, 0, 0, 0], sizes = [8, 4, 1, 64], strides = [1, 1, 1, 1]} : vector<8x4x2x64xf32> to vector<8x4x1x64xf32>
    %128 = vector.shape_cast %127 : vector<8x4x1x64xf32> to vector<8x4x64xf32>
    %129 = vector.extract_strided_slice %126 {offsets = [0, 0, 1, 0], sizes = [8, 4, 1, 64], strides = [1, 1, 1, 1]} : vector<8x4x2x64xf32> to vector<8x4x1x64xf32>
    %130 = vector.shape_cast %129 : vector<8x4x1x64xf32> to vector<8x4x64xf32>
    %131 = arith.maximumf %128, %130 : vector<8x4x64xf32>
    %132 = vector.shape_cast %131 : vector<8x4x64xf32> to vector<4x2x4x64xf32>
    %133 = vector.extract_strided_slice %132 {offsets = [0, 0, 0, 0], sizes = [4, 1, 4, 64], strides = [1, 1, 1, 1]} : vector<4x2x4x64xf32> to vector<4x1x4x64xf32>
    %134 = vector.shape_cast %133 : vector<4x1x4x64xf32> to vector<4x4x64xf32>
    %135 = vector.extract_strided_slice %132 {offsets = [0, 1, 0, 0], sizes = [4, 1, 4, 64], strides = [1, 1, 1, 1]} : vector<4x2x4x64xf32> to vector<4x1x4x64xf32>
    %136 = vector.shape_cast %135 : vector<4x1x4x64xf32> to vector<4x4x64xf32>
    %137 = arith.maximumf %134, %136 : vector<4x4x64xf32>
    %138 = vector.shape_cast %137 : vector<4x4x64xf32> to vector<16x64xf32>
    %cst_105 = arith.constant 0.000000e+00 : f32
    %139 = vector.broadcast %cst_105 : f32 to vector<1x2048xf32>
    %c0_106 = arith.constant 0 : index
    %c0_107 = arith.constant 0 : index
    %140 = vector.load %arg14[%c0_106, %c0_107] : memref<1x2048xf32, #tpu.memory_space<vmem>>, vector<1x2048xf32>
    tpu.vector_store %arg14[%c0_106, %c0_107], %139 {strides = array<i32>} : memref<1x2048xf32, #tpu.memory_space<vmem>>, vector<1x2048xf32>,
    %141 = vector.extract_strided_slice %138 {offsets = [0, 0], sizes = [1, 64], strides = [1, 1]} : vector<16x64xf32> to vector<1x64xf32>
    %c0_108 = arith.constant 0 : index
    %c0_109 = arith.constant 0 : index
    %142 = vector.load %arg14[%c0_108, %c0_109] : memref<1x2048xf32, #tpu.memory_space<vmem>>, vector<1x64xf32>
    tpu.vector_store %arg14[%c0_108, %c0_109], %141 {strides = array<i32>} : memref<1x2048xf32, #tpu.memory_space<vmem>>, vector<1x64xf32>,
    %143 = vector.extract_strided_slice %138 {offsets = [1, 0], sizes = [1, 64], strides = [1, 1]} : vector<16x64xf32> to vector<1x64xf32>
    %c0_110 = arith.constant 0 : index
    %c128_111 = arith.constant 128 : index
    %144 = vector.load %arg14[%c0_110, %c128_111] : memref<1x2048xf32, #tpu.memory_space<vmem>>, vector<1x64xf32>
    tpu.vector_store %arg14[%c0_110, %c128_111], %143 {strides = array<i32>} : memref<1x2048xf32, #tpu.memory_space<vmem>>, vector<1x64xf32>,
    %145 = vector.extract_strided_slice %138 {offsets = [2, 0], sizes = [1, 64], strides = [1, 1]} : vector<16x64xf32> to vector<1x64xf32>
    %c0_112 = arith.constant 0 : index
    %c256_113 = arith.constant 256 : index
    %146 = vector.load %arg14[%c0_112, %c256_113] : memref<1x2048xf32, #tpu.memory_space<vmem>>, vector<1x64xf32>
    tpu.vector_store %arg14[%c0_112, %c256_113], %145 {strides = array<i32>} : memref<1x2048xf32, #tpu.memory_space<vmem>>, vector<1x64xf32>,
    %147 = vector.extract_strided_slice %138 {offsets = [3, 0], sizes = [1, 64], strides = [1, 1]} : vector<16x64xf32> to vector<1x64xf32>
    %c0_114 = arith.constant 0 : index
    %c384_115 = arith.constant 384 : index
    %148 = vector.load %arg14[%c0_114, %c384_115] : memref<1x2048xf32, #tpu.memory_space<vmem>>, vector<1x64xf32>
    tpu.vector_store %arg14[%c0_114, %c384_115], %147 {strides = array<i32>} : memref<1x2048xf32, #tpu.memory_space<vmem>>, vector<1x64xf32>,
    %149 = vector.extract_strided_slice %138 {offsets = [4, 0], sizes = [1, 64], strides = [1, 1]} : vector<16x64xf32> to vector<1x64xf32>
    %c0_116 = arith.constant 0 : index
    %c512_117 = arith.constant 512 : index
    %150 = vector.load %arg14[%c0_116, %c512_117] : memref<1x2048xf32, #tpu.memory_space<vmem>>, vector<1x64xf32>
    tpu.vector_store %arg14[%c0_116, %c512_117], %149 {strides = array<i32>} : memref<1x2048xf32, #tpu.memory_space<vmem>>, vector<1x64xf32>,
    %151 = vector.extract_strided_slice %138 {offsets = [5, 0], sizes = [1, 64], strides = [1, 1]} : vector<16x64xf32> to vector<1x64xf32>
    %c0_118 = arith.constant 0 : index
    %c640_119 = arith.constant 640 : index
    %152 = vector.load %arg14[%c0_118, %c640_119] : memref<1x2048xf32, #tpu.memory_space<vmem>>, vector<1x64xf32>
    tpu.vector_store %arg14[%c0_118, %c640_119], %151 {strides = array<i32>} : memref<1x2048xf32, #tpu.memory_space<vmem>>, vector<1x64xf32>,
    %153 = vector.extract_strided_slice %138 {offsets = [6, 0], sizes = [1, 64], strides = [1, 1]} : vector<16x64xf32> to vector<1x64xf32>
    %c0_120 = arith.constant 0 : index
    %c768_121 = arith.constant 768 : index
    %154 = vector.load %arg14[%c0_120, %c768_121] : memref<1x2048xf32, #tpu.memory_space<vmem>>, vector<1x64xf32>
    tpu.vector_store %arg14[%c0_120, %c768_121], %153 {strides = array<i32>} : memref<1x2048xf32, #tpu.memory_space<vmem>>, vector<1x64xf32>,
    %155 = vector.extract_strided_slice %138 {offsets = [7, 0], sizes = [1, 64], strides = [1, 1]} : vector<16x64xf32> to vector<1x64xf32>
    %c0_122 = arith.constant 0 : index
    %c896_123 = arith.constant 896 : index
    %156 = vector.load %arg14[%c0_122, %c896_123] : memref<1x2048xf32, #tpu.memory_space<vmem>>, vector<1x64xf32>
    tpu.vector_store %arg14[%c0_122, %c896_123], %155 {strides = array<i32>} : memref<1x2048xf32, #tpu.memory_space<vmem>>, vector<1x64xf32>,
    %157 = vector.extract_strided_slice %138 {offsets = [8, 0], sizes = [1, 64], strides = [1, 1]} : vector<16x64xf32> to vector<1x64xf32>
    %c0_124 = arith.constant 0 : index
    %c1024_125 = arith.constant 1024 : index
    %158 = vector.load %arg14[%c0_124, %c1024_125] : memref<1x2048xf32, #tpu.memory_space<vmem>>, vector<1x64xf32>
    tpu.vector_store %arg14[%c0_124, %c1024_125], %157 {strides = array<i32>} : memref<1x2048xf32, #tpu.memory_space<vmem>>, vector<1x64xf32>,
    %159 = vector.extract_strided_slice %138 {offsets = [9, 0], sizes = [1, 64], strides = [1, 1]} : vector<16x64xf32> to vector<1x64xf32>
    %c0_126 = arith.constant 0 : index
    %c1152 = arith.constant 1152 : index
    %160 = vector.load %arg14[%c0_126, %c1152] : memref<1x2048xf32, #tpu.memory_space<vmem>>, vector<1x64xf32>
    tpu.vector_store %arg14[%c0_126, %c1152], %159 {strides = array<i32>} : memref<1x2048xf32, #tpu.memory_space<vmem>>, vector<1x64xf32>,
    %161 = vector.extract_strided_slice %138 {offsets = [10, 0], sizes = [1, 64], strides = [1, 1]} : vector<16x64xf32> to vector<1x64xf32>
    %c0_127 = arith.constant 0 : index
    %c1280 = arith.constant 1280 : index
    %162 = vector.load %arg14[%c0_127, %c1280] : memref<1x2048xf32, #tpu.memory_space<vmem>>, vector<1x64xf32>
    tpu.vector_store %arg14[%c0_127, %c1280], %161 {strides = array<i32>} : memref<1x2048xf32, #tpu.memory_space<vmem>>, vector<1x64xf32>,
    %163 = vector.extract_strided_slice %138 {offsets = [11, 0], sizes = [1, 64], strides = [1, 1]} : vector<16x64xf32> to vector<1x64xf32>
    %c0_128 = arith.constant 0 : index
    %c1408 = arith.constant 1408 : index
    %164 = vector.load %arg14[%c0_128, %c1408] : memref<1x2048xf32, #tpu.memory_space<vmem>>, vector<1x64xf32>
    tpu.vector_store %arg14[%c0_128, %c1408], %163 {strides = array<i32>} : memref<1x2048xf32, #tpu.memory_space<vmem>>, vector<1x64xf32>,
    %165 = vector.extract_strided_slice %138 {offsets = [12, 0], sizes = [1, 64], strides = [1, 1]} : vector<16x64xf32> to vector<1x64xf32>
    %c0_129 = arith.constant 0 : index
    %c1536 = arith.constant 1536 : index
    %166 = vector.load %arg14[%c0_129, %c1536] : memref<1x2048xf32, #tpu.memory_space<vmem>>, vector<1x64xf32>
    tpu.vector_store %arg14[%c0_129, %c1536], %165 {strides = array<i32>} : memref<1x2048xf32, #tpu.memory_space<vmem>>, vector<1x64xf32>,
    %167 = vector.extract_strided_slice %138 {offsets = [13, 0], sizes = [1, 64], strides = [1, 1]} : vector<16x64xf32> to vector<1x64xf32>
    %c0_130 = arith.constant 0 : index
    %c1664 = arith.constant 1664 : index
    %168 = vector.load %arg14[%c0_130, %c1664] : memref<1x2048xf32, #tpu.memory_space<vmem>>, vector<1x64xf32>
    tpu.vector_store %arg14[%c0_130, %c1664], %167 {strides = array<i32>} : memref<1x2048xf32, #tpu.memory_space<vmem>>, vector<1x64xf32>,
    %169 = vector.extract_strided_slice %138 {offsets = [14, 0], sizes = [1, 64], strides = [1, 1]} : vector<16x64xf32> to vector<1x64xf32>
    %c0_131 = arith.constant 0 : index
    %c1792 = arith.constant 1792 : index
    %170 = vector.load %arg14[%c0_131, %c1792] : memref<1x2048xf32, #tpu.memory_space<vmem>>, vector<1x64xf32>
    tpu.vector_store %arg14[%c0_131, %c1792], %169 {strides = array<i32>} : memref<1x2048xf32, #tpu.memory_space<vmem>>, vector<1x64xf32>,
    %171 = vector.extract_strided_slice %138 {offsets = [15, 0], sizes = [1, 64], strides = [1, 1]} : vector<16x64xf32> to vector<1x64xf32>
    %c0_132 = arith.constant 0 : index
    %c1920 = arith.constant 1920 : index
    %172 = vector.load %arg14[%c0_132, %c1920] : memref<1x2048xf32, #tpu.memory_space<vmem>>, vector<1x64xf32>
    tpu.vector_store %arg14[%c0_132, %c1920], %171 {strides = array<i32>} : memref<1x2048xf32, #tpu.memory_space<vmem>>, vector<1x64xf32>,
    %c0_133 = arith.constant 0 : index
    %c0_134 = arith.constant 0 : index
    %173 = vector.load %arg14[%c0_133, %c0_134] : memref<1x2048xf32, #tpu.memory_space<vmem>>, vector<1x2048xf32>
    %c0_135 = arith.constant 0 : index
    %c0_136 = arith.constant 0 : index
    %174 = vector.load %arg6[%c0_135, %c0_136] : memref<2048x128xf32, #tpu.memory_space<vmem>>, vector<2048x128xf32>
    %cst_137 = arith.constant dense<0.000000e+00> : vector<1x128xf32>
    %175 = tpu.matmul %173, %174, %cst_137 {dimension_numbers = #tpu.dot_dimension_numbers<[1], [0], [0], [1], [0, 0, 1, 1], [], []>} : vector<1x2048xf32>, vector<2048x128xf32>, vector<1x128xf32> -> vector<1x128xf32>
    %c0_138 = arith.constant 0 : index
    %c0_139 = arith.constant 0 : index
    %176 = vector.load %arg7[%c0_138, %c0_139] : memref<1x128xf32, #tpu.memory_space<vmem>>, vector<1x128xf32>
    %177 = arith.addf %175, %176 : vector<1x128xf32>
    %cst_140 = arith.constant 0.000000e+00 : f32
    %178 = vector.broadcast %cst_140 : f32 to vector<1x128xf32>
    %179 = arith.maximumf %177, %178 : vector<1x128xf32>
    %c0_141 = arith.constant 0 : index
    %c0_142 = arith.constant 0 : index
    %180 = vector.load %arg8[%c0_141, %c0_142] : memref<1x128xf32, #tpu.memory_space<vmem>>, vector<1x128xf32>
    %181 = arith.mulf %179, %180 : vector<1x128xf32>
    %cst_143 = arith.constant dense<0.000000e+00> : vector<1xf32>
    %182 = vector.multi_reduction <add>, %181, %cst_143 [1] : vector<1x128xf32> to vector<1xf32>
    %183 = vector.shape_cast %182 : vector<1xf32> to vector<1x1xf32>
    %c0_144 = arith.constant 0 : index
    %c0_145 = arith.constant 0 : index
    %184 = vector.load %arg9[%c0_144, %c0_145] : memref<1x1xf32, #tpu.memory_space<vmem>>, vector<1x1xf32>
    %185 = arith.addf %183, %184 : vector<1x1xf32>
    %186 = vector.shape_cast %185 : vector<1x1xf32> to vector<1x1x1xf32>
    %c0_146 = arith.constant 0 : index
    %c0_147 = arith.constant 0 : index
    %c0_148 = arith.constant 0 : index
    %187 = vector.load %arg10[%c0_146, %c0_147, %c0_148] : memref<1x1x1xf32, #tpu.memory_space<vmem>>, vector<1x1x1xf32>
    tpu.vector_store %arg10[%c0_146, %c0_147, %c0_148], %186 {strides = array<i32>} : memref<1x1x1xf32, #tpu.memory_space<vmem>>, vector<1x1x1xf32>,
    return
  }
  func.func @transform_0(%arg0: i32) -> (i32, i32, i32, i32) {
    %c0_i32 = arith.constant 0 : i32
    %c0_i32_0 = arith.constant 0 : i32
    %c0_i32_1 = arith.constant 0 : i32
    %c0_i32_2 = arith.constant 0 : i32
    return %arg0, %c0_i32, %c0_i32_0, %c0_i32_1 : i32, i32, i32, i32
  }
  func.func @transform_1(%arg0: i32) -> (i32, i32) {
    %c0_i32 = arith.constant 0 : i32
    %c0_i32_0 = arith.constant 0 : i32
    %c0_i32_1 = arith.constant 0 : i32
    return %c0_i32, %c0_i32_0 : i32, i32
  }
  func.func @transform_2(%arg0: i32) -> (i32, i32) {
    %c0_i32 = arith.constant 0 : i32
    %c0_i32_0 = arith.constant 0 : i32
    %c0_i32_1 = arith.constant 0 : i32
    return %c0_i32, %c0_i32_0 : i32, i32
  }
  func.func @transform_3(%arg0: i32) -> (i32, i32) {
    %c0_i32 = arith.constant 0 : i32
    %c0_i32_0 = arith.constant 0 : i32
    %c0_i32_1 = arith.constant 0 : i32
    return %c0_i32, %c0_i32_0 : i32, i32
  }
  func.func @transform_4(%arg0: i32) -> (i32, i32) {
    %c0_i32 = arith.constant 0 : i32
    %c0_i32_0 = arith.constant 0 : i32
    %c0_i32_1 = arith.constant 0 : i32
    return %c0_i32, %c0_i32_0 : i32, i32
  }
  func.func @transform_5(%arg0: i32) -> (i32, i32) {
    %c0_i32 = arith.constant 0 : i32
    %c0_i32_0 = arith.constant 0 : i32
    %c0_i32_1 = arith.constant 0 : i32
    return %c0_i32, %c0_i32_0 : i32, i32
  }
  func.func @transform_6(%arg0: i32) -> (i32, i32) {
    %c0_i32 = arith.constant 0 : i32
    %c0_i32_0 = arith.constant 0 : i32
    %c0_i32_1 = arith.constant 0 : i32
    return %c0_i32, %c0_i32_0 : i32, i32
  }
  func.func @transform_7(%arg0: i32) -> (i32, i32) {
    %c0_i32 = arith.constant 0 : i32
    %c0_i32_0 = arith.constant 0 : i32
    %c0_i32_1 = arith.constant 0 : i32
    return %c0_i32, %c0_i32_0 : i32, i32
  }
  func.func @transform_8(%arg0: i32) -> (i32, i32) {
    %c0_i32 = arith.constant 0 : i32
    %c0_i32_0 = arith.constant 0 : i32
    %c0_i32_1 = arith.constant 0 : i32
    return %c0_i32, %c0_i32_0 : i32, i32
  }
  func.func @transform_9(%arg0: i32) -> (i32, i32, i32) {
    %c0_i32 = arith.constant 0 : i32
    %c0_i32_0 = arith.constant 0 : i32
    %c0_i32_1 = arith.constant 0 : i32
    return %arg0, %c0_i32, %c0_i32_0 : i32, i32, i32
  }
}

</mosaic_0001>

<llo_original>
// kernel: spectrogram_arrival_cnn.1
$region0: #{spectrogram_arrival_cnn.1}
  #allocation0 [shape = 'u32[]', space=smem, size = 0x4, offset = 0x4, fixed_abs, tag = 'smem constant byte address 0x4 - core index']
  #allocation1 [shape = 'u32[144,128]{1,0:T(1,128)}', space=vmem, size = 0x12000, scoped, tag = 'internal scratch']
  #allocation2 [shape = 'f32[18,18,1]{2,1,0:T(8,128)}', space=vmem, size = 0x36000, scoped, tag = 'scratch operand']
  #allocation3 [shape = 'f32[10,10,32]{2,1,0:T(8,128)}', space=vmem, size = 0x14000, scoped, tag = 'scratch operand']
  #allocation4 [shape = 'f32[64,1152]{1,0:T(8,128)}', space=vmem, size = 0x48000, scoped, tag = 'scratch operand']
  #allocation5 [shape = 'f32[1,2048]{1,0:T(1,128)}', space=vmem, size = 0x2000, scoped, tag = 'scratch operand']
  #allocation6 [shape = 'f32[1,1]{1,0:T(1,128)S(1)}', space=vmem, size = 0x200, scoped, tag = 'scoped memory for spectrogram_arrival_cnn.1']
  %s0 = inlined_call_operand.vmem [shape: f32[2,16,16,1], index: 0, kind: input, shape index: {}]
  %s1 = inlined_call_operand.vmem [shape: f32[9,32], index: 1, kind: input, shape index: {}]
  %s2 = inlined_call_operand.vmem [shape: f32[1,32], index: 2, kind: input, shape index: {}]
  %s3 = inlined_call_operand.vmem [shape: f32[1152,64], index: 3, kind: input, shape index: {}]
  %s4 = inlined_call_operand.vmem [shape: f32[1,64], index: 4, kind: input, shape index: {}]
  %s5 = inlined_call_operand.vmem [shape: f32[2048,128], index: 5, kind: input, shape index: {}]
  %s6 = inlined_call_operand.vmem [shape: f32[1,128], index: 6, kind: input, shape index: {}]
  %s7 = inlined_call_operand.vmem [shape: f32[1,128], index: 7, kind: input, shape index: {}]
  %s8 = inlined_call_operand.<no memory space> [shape: f32[1,1], index: 8, kind: input, shape index: {}]
  %s9 = inlined_call_operand.vmem [shape: f32[2,1,1], index: 9, kind: output, shape index: {}]
  %s10 = sld [smem:[#allocation0]]
  $region69: #{spectrogram_arrival_cnn.1} parent=0
    _
  %s12 = ssub.s32 1, %s10
  %s13 = scalar_select 0, %s12, %s10
  %v14 = vstv %s8
  %15 = vst [vmem:[#allocation6] sm:$0x1] %v14
  loop: start=0, step=1, limit=4
  $region2: #{spectrogram_arrival_cnn.1} parent=0 // loop_pre_header
    _
  $region3: #{spectrogram_arrival_cnn.1} parent=0 // loop_header
    %s17 = sphi 0, %s21
    %p18 = scmp.ge.s32.totalorder %s17, 4
    %s27 = sphi 0, %s29
    %s30 = sphi 0, %s27
    %s31 = sphi 0, %s30
    %s47 = sphi 0, %s31
    %s51 = sphi 0, %s51
    %s53 = sphi 0, %s51
    %s54 = sphi 0, %s53
    %s68 = sphi 0, %s54
    %s72 = sphi 0, %s72
    %s74 = sphi 0, %s72
    %s75 = sphi 0, %s74
    %s89 = sphi 0, %s75
    %s93 = sphi 0, %s93
    %s95 = sphi 0, %s93
    %s96 = sphi 0, %s95
    %s110 = sphi 0, %s96
    %s114 = sphi 0, %s114
    %s116 = sphi 0, %s114
    %s117 = sphi 0, %s116
    %s131 = sphi 0, %s117
    %s135 = sphi 0, %s135
    %s137 = sphi 0, %s135
    %s138 = sphi 0, %s137
    %s152 = sphi 0, %s138
    %s156 = sphi 0, %s156
    %s158 = sphi 0, %s156
    %s159 = sphi 0, %s158
    %s173 = sphi 0, %s159
    %s177 = sphi 0, %s177
    %s179 = sphi 0, %s177
    %s180 = sphi 0, %s179
    %s194 = sphi 0, %s180
    %s198 = sphi 0, %s198
    %s200 = sphi 0, %s198
    %s201 = sphi 0, %s200
    %s215 = sphi 0, %s201
    %s221 = sphi 0, %s223
    %s224 = sphi 0, %s221
    %s225 = sphi 0, %s224
    %s241 = sphi 0, %s225
  $region4: #{spectrogram_arrival_cnn.1} parent=0 // loop_header_branch
    %20 = sbr.rel (%p18) target = $region8
  $region5: #{spectrogram_arrival_cnn.1} parent=0 // loop_body
    %s22 = ssub.s32 %s17, 1
    %s23 = ssub.s32 %s17, 2
    %s24 = sadd.s32 %s17, 1
    %s25 = ssub.s32 %s17, %s24
    %p26 = scmp.eq.s32.totalorder %s25, 0
    %s28 = sadd.s32 %s27, 1
    %s29 = scalar_select %p26, %s27, %s28
    %p32 = pneg %p26
    %p33 = scmp.eq.s32.totalorder %s17, 1
    %p34 = por %p32, %p33
    %p35 = scmp.ne.s32.totalorder %s27, %s30
    %p36 = scmp.eq.s32.totalorder %s17, 0
    %p37 = por %p35, %p36
    %p38 = scmp.ne.s32.totalorder %s27, %s30
    %p39 = scmp.eq.s32.totalorder %s22, 1
    %p40 = por %p38, %p39
    %p41 = scmp.ne.s32.totalorder %s30, %s31
    %p42 = scmp.eq.s32.totalorder %s22, 0
    %p43 = por %p41, %p42
    %p44 = scmp.ne.s32.totalorder %s30, %s31
    %p45 = scmp.eq.s32.totalorder %s23, 1
    %p46 = por %p44, %p45
    %p48 = scmp.ne.s32.totalorder %s31, %s47
    %p49 = scmp.eq.s32.totalorder %s23, 0
    %p50 = por %p48, %p49
    %s52 = sadd.s32 %s51, 1
    %p55 = scmp.eq.s32.totalorder %s17, 1
    %p56 = scmp.ne.s32.totalorder %s51, %s53
    %p57 = scmp.eq.s32.totalorder %s17, 0
    %p58 = por %p56, %p57
    %p59 = scmp.ne.s32.totalorder %s51, %s53
    %p60 = scmp.eq.s32.totalorder %s22, 1
    %p61 = por %p59, %p60
    %p62 = scmp.ne.s32.totalorder %s53, %s54
    %p63 = scmp.eq.s32.totalorder %s22, 0
    %p64 = por %p62, %p63
    %p65 = scmp.ne.s32.totalorder %s53, %s54
    %p66 = scmp.eq.s32.totalorder %s23, 1
    %p67 = por %p65, %p66
    %p69 = scmp.ne.s32.totalorder %s54, %s68
    %p70 = scmp.eq.s32.totalorder %s23, 0
    %p71 = por %p69, %p70
    %s73 = sadd.s32 %s72, 1
    %p76 = scmp.eq.s32.totalorder %s17, 1
    %p77 = scmp.ne.s32.totalorder %s72, %s74
    %p78 = scmp.eq.s32.totalorder %s17, 0
    %p79 = por %p77, %p78
    %p80 = scmp.ne.s32.totalorder %s72, %s74
    %p81 = scmp.eq.s32.totalorder %s22, 1
    %p82 = por %p80, %p81
    %p83 = scmp.ne.s32.totalorder %s74, %s75
    %p84 = scmp.eq.s32.totalorder %s22, 0
    %p85 = por %p83, %p84
    %p86 = scmp.ne.s32.totalorder %s74, %s75
    %p87 = scmp.eq.s32.totalorder %s23, 1
    %p88 = por %p86, %p87
    %p90 = scmp.ne.s32.totalorder %s75, %s89
    %p91 = scmp.eq.s32.totalorder %s23, 0
    %p92 = por %p90, %p91
    %s94 = sadd.s32 %s93, 1
    %p97 = scmp.eq.s32.totalorder %s17, 1
    %p98 = scmp.ne.s32.totalorder %s93, %s95
    %p99 = scmp.eq.s32.totalorder %s17, 0
    %p100 = por %p98, %p99
    %p101 = scmp.ne.s32.totalorder %s93, %s95
    %p102 = scmp.eq.s32.totalorder %s22, 1
    %p103 = por %p101, %p102
    %p104 = scmp.ne.s32.totalorder %s95, %s96
    %p105 = scmp.eq.s32.totalorder %s22, 0
    %p106 = por %p104, %p105
    %p107 = scmp.ne.s32.totalorder %s95, %s96
    %p108 = scmp.eq.s32.totalorder %s23, 1
    %p109 = por %p107, %p108
    %p111 = scmp.ne.s32.totalorder %s96, %s110
    %p112 = scmp.eq.s32.totalorder %s23, 0
    %p113 = por %p111, %p112
    %s115 = sadd.s32 %s114, 1
    %p118 = scmp.eq.s32.totalorder %s17, 1
    %p119 = scmp.ne.s32.totalorder %s114, %s116
    %p120 = scmp.eq.s32.totalorder %s17, 0
    %p121 = por %p119, %p120
    %p122 = scmp.ne.s32.totalorder %s114, %s116
    %p123 = scmp.eq.s32.totalorder %s22, 1
    %p124 = por %p122, %p123
    %p125 = scmp.ne.s32.totalorder %s116, %s117
    %p126 = scmp.eq.s32.totalorder %s22, 0
    %p127 = por %p125, %p126
    %p128 = scmp.ne.s32.totalorder %s116, %s117
    %p129 = scmp.eq.s32.totalorder %s23, 1
    %p130 = por %p128, %p129
    %p132 = scmp.ne.s32.totalorder %s117, %s131
    %p133 = scmp.eq.s32.totalorder %s23, 0
    %p134 = por %p132, %p133
    %s136 = sadd.s32 %s135, 1
    %p139 = scmp.eq.s32.totalorder %s17, 1
    %p140 = scmp.ne.s32.totalorder %s135, %s137
    %p141 = scmp.eq.s32.totalorder %s17, 0
    %p142 = por %p140, %p141
    %p143 = scmp.ne.s32.totalorder %s135, %s137
    %p144 = scmp.eq.s32.totalorder %s22, 1
    %p145 = por %p143, %p144
    %p146 = scmp.ne.s32.totalorder %s137, %s138
    %p147 = scmp.eq.s32.totalorder %s22, 0
    %p148 = por %p146, %p147
    %p149 = scmp.ne.s32.totalorder %s137, %s138
    %p150 = scmp.eq.s32.totalorder %s23, 1
    %p151 = por %p149, %p150
    %p153 = scmp.ne.s32.totalorder %s138, %s152
    %p154 = scmp.eq.s32.totalorder %s23, 0
    %p155 = por %p153, %p154
    %s157 = sadd.s32 %s156, 1
    %p160 = scmp.eq.s32.totalorder %s17, 1
    %p161 = scmp.ne.s32.totalorder %s156, %s158
    %p162 = scmp.eq.s32.totalorder %s17, 0
    %p163 = por %p161, %p162
    %p164 = scmp.ne.s32.totalorder %s156, %s158
    %p165 = scmp.eq.s32.totalorder %s22, 1
    %p166 = por %p164, %p165
    %p167 = scmp.ne.s32.totalorder %s158, %s159
    %p168 = scmp.eq.s32.totalorder %s22, 0
    %p169 = por %p167, %p168
    %p170 = scmp.ne.s32.totalorder %s158, %s159
    %p171 = scmp.eq.s32.totalorder %s23, 1
    %p172 = por %p170, %p171
    %p174 = scmp.ne.s32.totalorder %s159, %s173
    %p175 = scmp.eq.s32.totalorder %s23, 0
    %p176 = por %p174, %p175
    %s178 = sadd.s32 %s177, 1
    %p181 = scmp.eq.s32.totalorder %s17, 1
    %p182 = scmp.ne.s32.totalorder %s177, %s179
    %p183 = scmp.eq.s32.totalorder %s17, 0
    %p184 = por %p182, %p183
    %p185 = scmp.ne.s32.totalorder %s177, %s179
    %p186 = scmp.eq.s32.totalorder %s22, 1
    %p187 = por %p185, %p186
    %p188 = scmp.ne.s32.totalorder %s179, %s180
    %p189 = scmp.eq.s32.totalorder %s22, 0
    %p190 = por %p188, %p189
    %p191 = scmp.ne.s32.totalorder %s179, %s180
    %p192 = scmp.eq.s32.totalorder %s23, 1
    %p193 = por %p191, %p192
    %p195 = scmp.ne.s32.totalorder %s180, %s194
    %p196 = scmp.eq.s32.totalorder %s23, 0
    %p197 = por %p195, %p196
    %s199 = sadd.s32 %s198, 1
    %p202 = scmp.eq.s32.totalorder %s17, 1
    %p203 = scmp.ne.s32.totalorder %s198, %s200
    %p204 = scmp.eq.s32.totalorder %s17, 0
    %p205 = por %p203, %p204
    %p206 = scmp.ne.s32.totalorder %s198, %s200
    %p207 = scmp.eq.s32.totalorder %s22, 1
    %p208 = por %p206, %p207
    %p209 = scmp.ne.s32.totalorder %s200, %s201
    %p210 = scmp.eq.s32.totalorder %s22, 0
    %p211 = por %p209, %p210
    %p212 = scmp.ne.s32.totalorder %s200, %s201
    %p213 = scmp.eq.s32.totalorder %s23, 1
    %p214 = por %p212, %p213
    %p216 = scmp.ne.s32.totalorder %s201, %s215
    %p217 = scmp.eq.s32.totalorder %s23, 0
    %p218 = por %p216, %p217
    %s219 = ssub.s32 %s17, %s24
    %p220 = scmp.eq.s32.totalorder %s219, 0
    %s222 = sadd.s32 %s221, 1
    %s223 = scalar_select %p220, %s221, %s222
    %p226 = pneg %p220
    %p227 = scmp.eq.s32.totalorder %s17, 1
    %p228 = por %p226, %p227
    %p229 = scmp.ne.s32.totalorder %s221, %s224
    %p230 = scmp.eq.s32.totalorder %s17, 0
    %p231 = por %p229, %p230
    %p232 = scmp.ne.s32.totalorder %s221, %s224
    %p233 = scmp.eq.s32.totalorder %s22, 1
    %p234 = por %p232, %p233
    %p235 = scmp.ne.s32.totalorder %s224, %s225
    %p236 = scmp.eq.s32.totalorder %s22, 0
    %p237 = por %p235, %p236
    %p238 = scmp.ne.s32.totalorder %s224, %s225
    %p239 = scmp.eq.s32.totalorder %s23, 1
    %p240 = por %p238, %p239
    %p242 = scmp.ne.s32.totalorder %s225, %s241
    %p243 = scmp.eq.s32.totalorder %s23, 0
    %p244 = por %p242, %p243
    %p245 = scmp.le.s32.totalorder 1, %s17
    %p246 = scmp.lt.s32.totalorder %s17, 3
    %p247 = pnand %p245, %p246
    %p248 = pneg %p247
    // Predicated region
    $region9: #{spectrogram_arrival_cnn.1} parent=5 // pred_check
      _
    $region10: #{spectrogram_arrival_cnn.1} parent=5 // pred_check_branch
      %250 = sbr.rel (%p247) target = $region12
    $region11: #{spectrogram_arrival_cnn.1} parent=5 // pred_region
      %s251 = ssub.s32 %s17, 1
      // Predicated region
      $region13: #{spectrogram_arrival_cnn.1} parent=11 // pred_check
        %p252 = pneg %p64
      $region14: #{spectrogram_arrival_cnn.1} parent=11 // pred_check_branch
        %254 = sbr.rel (%p252) target = $region16
      $region15: #{spectrogram_arrival_cnn.1} parent=11 // pred_region
        _
      $region16: #{spectrogram_arrival_cnn.1} parent=11 // pred_fallthru
        _
      // Predicated region
      $region17: #{spectrogram_arrival_cnn.1} parent=11 // pred_check
        %p255 = pneg %p85
      $region18: #{spectrogram_arrival_cnn.1} parent=11 // pred_check_branch
        %257 = sbr.rel (%p255) target = $region20
      $region19: #{spectrogram_arrival_cnn.1} parent=11 // pred_region
        _
      $region20: #{spectrogram_arrival_cnn.1} parent=11 // pred_fallthru
        _
      // Predicated region
      $region21: #{spectrogram_arrival_cnn.1} parent=11 // pred_check
        %p258 = pneg %p106
      $region22: #{spectrogram_arrival_cnn.1} parent=11 // pred_check_branch
        %260 = sbr.rel (%p258) target = $region24
      $region23: #{spectrogram_arrival_cnn.1} parent=11 // pred_region
        _
      $region24: #{spectrogram_arrival_cnn.1} parent=11 // pred_fallthru
        _
      // Predicated region
      $region25: #{spectrogram_arrival_cnn.1} parent=11 // pred_check
        %p261 = pneg %p127
      $region26: #{spectrogram_arrival_cnn.1} parent=11 // pred_check_branch
        %263 = sbr.rel (%p261) target = $region28
      $region27: #{spectrogram_arrival_cnn.1} parent=11 // pred_region
        _
      $region28: #{spectrogram_arrival_cnn.1} parent=11 // pred_fallthru
        _
      // Predicated region
      $region29: #{spectrogram_arrival_cnn.1} parent=11 // pred_check
        %p264 = pneg %p148
      $region30: #{spectrogram_arrival_cnn.1} parent=11 // pred_check_branch
        %266 = sbr.rel (%p264) target = $region32
      $region31: #{spectrogram_arrival_cnn.1} parent=11 // pred_region
        _
      $region32: #{spectrogram_arrival_cnn.1} parent=11 // pred_fallthru
        _
      // Predicated region
      $region33: #{spectrogram_arrival_cnn.1} parent=11 // pred_check
        %p267 = pneg %p169
      $region34: #{spectrogram_arrival_cnn.1} parent=11 // pred_check_branch
        %269 = sbr.rel (%p267) target = $region36
      $region35: #{spectrogram_arrival_cnn.1} parent=11 // pred_region
        _
      $region36: #{spectrogram_arrival_cnn.1} parent=11 // pred_fallthru
        _
      // Predicated region
      $region37: #{spectrogram_arrival_cnn.1} parent=11 // pred_check
        %p270 = pneg %p190
      $region38: #{spectrogram_arrival_cnn.1} parent=11 // pred_check_branch
        %272 = sbr.rel (%p270) target = $region40
      $region39: #{spectrogram_arrival_cnn.1} parent=11 // pred_region
        _
      $region40: #{spectrogram_arrival_cnn.1} parent=11 // pred_fallthru
        _
      // Predicated region
      $region41: #{spectrogram_arrival_cnn.1} parent=11 // pred_check
        %p273 = pneg %p211
      $region42: #{spectrogram_arrival_cnn.1} parent=11 // pred_check_branch
        %275 = sbr.rel (%p273) target = $region44
      $region43: #{spectrogram_arrival_cnn.1} parent=11 // pred_region
        _
      $region44: #{spectrogram_arrival_cnn.1} parent=11 // pred_fallthru
        _
    $region12: #{spectrogram_arrival_cnn.1} parent=5 // pred_fallthru
      _
    %p276 = scmp.lt.s32.totalorder %s17, 2
    // Predicated region
    $region45: #{spectrogram_arrival_cnn.1} parent=5 // pred_check
      %p277 = pneg %p276
    $region46: #{spectrogram_arrival_cnn.1} parent=5 // pred_check_branch
      %279 = sbr.rel (%p277) target = $region48
    $region47: #{spectrogram_arrival_cnn.1} parent=5 // pred_region
      // Predicated region
      $region49: #{spectrogram_arrival_cnn.1} parent=47 // pred_check
        %p280 = pneg %p37
      $region50: #{spectrogram_arrival_cnn.1} parent=47 // pred_check_branch
        %282 = sbr.rel (%p280) target = $region52
      $region51: #{spectrogram_arrival_cnn.1} parent=47 // pred_region
        %p283 = scmp.lt.s32.totalorder %s17, 1
        %s284 = scalar_select %p283, %s17, 1
        %s285 = smul.addr %s284, 32
        %s286 = smul.addr %s285, 8
        %s287 = scalar_lea.vmem %s0, %s286
      $region52: #{spectrogram_arrival_cnn.1} parent=47 // pred_fallthru
        _
    $region48: #{spectrogram_arrival_cnn.1} parent=5 // pred_fallthru
      _
    %p288 = scmp.le.s32.totalorder 1, %s17
    %p289 = scmp.lt.s32.totalorder %s17, 3
    %p290 = pnand %p288, %p289
    %p291 = pneg %p290
    // Predicated region
    $region53: #{spectrogram_arrival_cnn.1} parent=5 // pred_check
      _
    $region54: #{spectrogram_arrival_cnn.1} parent=5 // pred_check_branch
      %293 = sbr.rel (%p290) target = $region56
    $region55: #{spectrogram_arrival_cnn.1} parent=5 // pred_region
      %s294 = ssub.s32 %s17, 1
      %p295 = scmp.lt.s32.totalorder %s22, 1
      %s296 = scalar_select %p295, %s22, 1
      %s297 = smul.addr %s296, 32
      %s298 = smul.addr %s297, 8
      %s299 = scalar_lea.vmem %s0, %s298
      %p300 = pneg %p43
      %p301 = pneg %p40
      %p302 = pneg %p64
      %p303 = pneg %p61
      %p304 = pneg %p85
      %p305 = pneg %p82
      %p306 = pneg %p106
      %p307 = pneg %p103
      %p308 = pneg %p127
      %p309 = pneg %p124
      %p310 = pneg %p148
      %p311 = pneg %p145
      %p312 = pneg %p169
      %p313 = pneg %p166
      %p314 = pneg %p190
      %p315 = pneg %p187
      %p316 = pneg %p211
      %p317 = pneg %p208
      %p318 = pneg %p237
      %p319 = pneg %p234
      %p320 = scmp.lt.s32.totalorder %s22, 1
      %s321 = scalar_select %p320, %s22, 1
      %s322 = scalar_lea.vmem %s9, %s321
      %p323 = scmp.lt.s32.totalorder %s22, 1
      %s324 = scalar_select %p323, %s22, 1
      %s325 = smul.addr %s324, 32
      %s326 = smul.addr %s325, 8
      %s327 = scalar_lea.vmem %s0, %s326
      %p328 = scmp.lt.s32.totalorder %s22, 1
      %s329 = scalar_select %p328, %s22, 1
      %s330 = scalar_lea.vmem %s9, %s329
      %vm331 = vcmask 7168
      %332 = vst.msk [vmem:[#allocation2] sm:$0xff] %vm331, 0.0
      %333 = vst.msk [vmem:[#allocation2 + $0x8] sm:$0xff] %vm331, 0.0
      %vm334 = vcmask 1024
      %335 = vst.msk [vmem:[#allocation2 + $0x10] sm:$0x3] %vm334, 0.0
      %336 = vst.msk [vmem:[#allocation2 + $0x18] sm:$0xff] %vm331, 0.0
      %337 = vst.msk [vmem:[#allocation2 + $0x20] sm:$0xff] %vm331, 0.0
      %338 = vst.msk [vmem:[#allocation2 + $0x28] sm:$0x3] %vm334, 0.0
      %339 = vst.msk [vmem:[#allocation2 + $0x30] sm:$0xff] %vm331, 0.0
      %340 = vst.msk [vmem:[#allocation2 + $0x38] sm:$0xff] %vm331, 0.0
      %341 = vst.msk [vmem:[#allocation2 + $0x40] sm:$0x3] %vm334, 0.0
      %342 = vst.msk [vmem:[#allocation2 + $0x48] sm:$0xff] %vm331, 0.0
      %343 = vst.msk [vmem:[#allocation2 + $0x50] sm:$0xff] %vm331, 0.0
      %344 = vst.msk [vmem:[#allocation2 + $0x58] sm:$0x3] %vm334, 0.0
      %345 = vst.msk [vmem:[#allocation2 + $0x60] sm:$0xff] %vm331, 0.0
      %346 = vst.msk [vmem:[#allocation2 + $0x68] sm:$0xff] %vm331, 0.0
      %347 = vst.msk [vmem:[#allocation2 + $0x70] sm:$0x3] %vm334, 0.0
      %348 = vst.msk [vmem:[#allocation2 + $0x78] sm:$0xff] %vm331, 0.0
      %349 = vst.msk [vmem:[#allocation2 + $0x80] sm:$0xff] %vm331, 0.0
      %350 = vst.msk [vmem:[#allocation2 + $0x88] sm:$0x3] %vm334, 0.0
      %351 = vst.msk [vmem:[#allocation2 + $0x90] sm:$0xff] %vm331, 0.0
      %352 = vst.msk [vmem:[#allocation2 + $0x98] sm:$0xff] %vm331, 0.0
      %353 = vst.msk [vmem:[#allocation2 + $0xa0] sm:$0x3] %vm334, 0.0
      %354 = vst.msk [vmem:[#allocation2 + $0xa8] sm:$0xff] %vm331, 0.0
      %355 = vst.msk [vmem:[#allocation2 + $0xb0] sm:$0xff] %vm331, 0.0
      %356 = vst.msk [vmem:[#allocation2 + $0xb8] sm:$0x3] %vm334, 0.0
      %357 = vst.msk [vmem:[#allocation2 + $0xc0] sm:$0xff] %vm331, 0.0
      %358 = vst.msk [vmem:[#allocation2 + $0xc8] sm:$0xff] %vm331, 0.0
      %359 = vst.msk [vmem:[#allocation2 + $0xd0] sm:$0x3] %vm334, 0.0
      %360 = vst.msk [vmem:[#allocation2 + $0xd8] sm:$0xff] %vm331, 0.0
      %361 = vst.msk [vmem:[#allocation2 + $0xe0] sm:$0xff] %vm331, 0.0
      %362 = vst.msk [vmem:[#allocation2 + $0xe8] sm:$0x3] %vm334, 0.0
      %363 = vst.msk [vmem:[#allocation2 + $0xf0] sm:$0xff] %vm331, 0.0
      %364 = vst.msk [vmem:[#allocation2 + $0xf8] sm:$0xff] %vm331, 0.0
      %365 = vst.msk [vmem:[#allocation2 + $0x100] sm:$0x3] %vm334, 0.0
      %366 = vst.msk [vmem:[#allocation2 + $0x108] sm:$0xff] %vm331, 0.0
      %367 = vst.msk [vmem:[#allocation2 + $0x110] sm:$0xff] %vm331, 0.0
      %368 = vst.msk [vmem:[#allocation2 + $0x118] sm:$0x3] %vm334, 0.0
      %369 = vst.msk [vmem:[#allocation2 + $0x120] sm:$0xff] %vm331, 0.0
      %370 = vst.msk [vmem:[#allocation2 + $0x128] sm:$0xff] %vm331, 0.0
      %371 = vst.msk [vmem:[#allocation2 + $0x130] sm:$0x3] %vm334, 0.0
      %372 = vst.msk [vmem:[#allocation2 + $0x138] sm:$0xff] %vm331, 0.0
      %373 = vst.msk [vmem:[#allocation2 + $0x140] sm:$0xff] %vm331, 0.0
      %374 = vst.msk [vmem:[#allocation2 + $0x148] sm:$0x3] %vm334, 0.0
      %375 = vst.msk [vmem:[#allocation2 + $0x150] sm:$0xff] %vm331, 0.0
      %376 = vst.msk [vmem:[#allocation2 + $0x158] sm:$0xff] %vm331, 0.0
      %377 = vst.msk [vmem:[#allocation2 + $0x160] sm:$0x3] %vm334, 0.0
      %378 = vst.msk [vmem:[#allocation2 + $0x168] sm:$0xff] %vm331, 0.0
      %379 = vst.msk [vmem:[#allocation2 + $0x170] sm:$0xff] %vm331, 0.0
      %380 = vst.msk [vmem:[#allocation2 + $0x178] sm:$0x3] %vm334, 0.0
      %381 = vst.msk [vmem:[#allocation2 + $0x180] sm:$0xff] %vm331, 0.0
      %382 = vst.msk [vmem:[#allocation2 + $0x188] sm:$0xff] %vm331, 0.0
      %383 = vst.msk [vmem:[#allocation2 + $0x190] sm:$0x3] %vm334, 0.0
      %384 = vst.msk [vmem:[#allocation2 + $0x198] sm:$0xff] %vm331, 0.0
      %385 = vst.msk [vmem:[#allocation2 + $0x1a0] sm:$0xff] %vm331, 0.0
      %386 = vst.msk [vmem:[#allocation2 + $0x1a8] sm:$0x3] %vm334, 0.0
      %v387 = vld [vmem:[%s327] sm:$0xff]
      %v388 = vld [vmem:[%s327 + $0x8] sm:$0xff]
      %v389 = vld [vmem:[%s327 + $0x10] sm:$0xff]
      %v390 = vld [vmem:[%s327 + $0x18] sm:$0xff]
      %v391 = vld [vmem:[%s327 + $0x20] sm:$0xff]
      %v392 = vld [vmem:[%s327 + $0x28] sm:$0xff]
      %v393 = vld [vmem:[%s327 + $0x30] sm:$0xff]
      %v394 = vld [vmem:[%s327 + $0x38] sm:$0xff]
      %v395 = vld [vmem:[%s327 + $0x40] sm:$0xff]
      %v396 = vld [vmem:[%s327 + $0x48] sm:$0xff]
      %v397 = vld [vmem:[%s327 + $0x50] sm:$0xff]
      %v398 = vld [vmem:[%s327 + $0x58] sm:$0xff]
      %v399 = vld [vmem:[%s327 + $0x60] sm:$0xff]
      %v400 = vld [vmem:[%s327 + $0x68] sm:$0xff]
      %v401 = vld [vmem:[%s327 + $0x70] sm:$0xff]
      %v402 = vld [vmem:[%s327 + $0x78] sm:$0xff]
      %v403 = vld [vmem:[%s327 + $0x80] sm:$0xff]
      %v404 = vld [vmem:[%s327 + $0x88] sm:$0xff]
      %v405 = vld [vmem:[%s327 + $0x90] sm:$0xff]
      %v406 = vld [vmem:[%s327 + $0x98] sm:$0xff]
      %v407 = vld [vmem:[%s327 + $0xa0] sm:$0xff]
      %v408 = vld [vmem:[%s327 + $0xa8] sm:$0xff]
      %v409 = vld [vmem:[%s327 + $0xb0] sm:$0xff]
      %v410 = vld [vmem:[%s327 + $0xb8] sm:$0xff]
      %v411 = vld [vmem:[%s327 + $0xc0] sm:$0xff]
      %v412 = vld [vmem:[%s327 + $0xc8] sm:$0xff]
      %v413 = vld [vmem:[%s327 + $0xd0] sm:$0xff]
      %v414 = vld [vmem:[%s327 + $0xd8] sm:$0xff]
      %v415 = vld [vmem:[%s327 + $0xe0] sm:$0xff]
      %v416 = vld [vmem:[%s327 + $0xe8] sm:$0xff]
      %v417 = vld [vmem:[%s327 + $0xf0] sm:$0xff]
      %v418 = vld [vmem:[%s327 + $0xf8] sm:$0xff]
      %s419 = scalar_lea.vmem [#allocation2], 24
      %420 = vst.msk [vmem:[%s419 + $0x1] sm:$0xff] %vm331, %v387
      %421 = vst.msk [vmem:[%s419 + $0x9] sm:$0xff] %vm331, %v388
      %422 = vst.msk [vmem:[%s419 + $0x19] sm:$0xff] %vm331, %v389
      %423 = vst.msk [vmem:[%s419 + $0x21] sm:$0xff] %vm331, %v390
      %424 = vst.msk [vmem:[%s419 + $0x31] sm:$0xff] %vm331, %v391
      %425 = vst.msk [vmem:[%s419 + $0x39] sm:$0xff] %vm331, %v392
      %426 = vst.msk [vmem:[%s419 + $0x49] sm:$0xff] %vm331, %v393
      %427 = vst.msk [vmem:[%s419 + $0x51] sm:$0xff] %vm331, %v394
      %428 = vst.msk [vmem:[%s419 + $0x61] sm:$0xff] %vm331, %v395
      %429 = vst.msk [vmem:[%s419 + $0x69] sm:$0xff] %vm331, %v396
      %430 = vst.msk [vmem:[%s419 + $0x79] sm:$0xff] %vm331, %v397
      %431 = vst.msk [vmem:[%s419 + $0x81] sm:$0xff] %vm331, %v398
      %432 = vst.msk [vmem:[%s419 + $0x91] sm:$0xff] %vm331, %v399
      %433 = vst.msk [vmem:[%s419 + $0x99] sm:$0xff] %vm331, %v400
      %434 = vst.msk [vmem:[%s419 + $0xa9] sm:$0xff] %vm331, %v401
      %435 = vst.msk [vmem:[%s419 + $0xb1] sm:$0xff] %vm331, %v402
      %436 = vst.msk [vmem:[%s419 + $0xc1] sm:$0xff] %vm331, %v403
      %437 = vst.msk [vmem:[%s419 + $0xc9] sm:$0xff] %vm331, %v404
      %438 = vst.msk [vmem:[%s419 + $0xd9] sm:$0xff] %vm331, %v405
      %439 = vst.msk [vmem:[%s419 + $0xe1] sm:$0xff] %vm331, %v406
      %440 = vst.msk [vmem:[%s419 + $0xf1] sm:$0xff] %vm331, %v407
      %441 = vst.msk [vmem:[%s419 + $0xf9] sm:$0xff] %vm331, %v408
      %442 = vst.msk [vmem:[%s419 + $0x109] sm:$0xff] %vm331, %v409
      %443 = vst.msk [vmem:[%s419 + $0x111] sm:$0xff] %vm331, %v410
      %444 = vst.msk [vmem:[%s419 + $0x121] sm:$0xff] %vm331, %v411
      %445 = vst.msk [vmem:[%s419 + $0x129] sm:$0xff] %vm331, %v412
      %446 = vst.msk [vmem:[%s419 + $0x139] sm:$0xff] %vm331, %v413
      %447 = vst.msk [vmem:[%s419 + $0x141] sm:$0xff] %vm331, %v414
      %448 = vst.msk [vmem:[%s419 + $0x151] sm:$0xff] %vm331, %v415
      %449 = vst.msk [vmem:[%s419 + $0x159] sm:$0xff] %vm331, %v416
      %450 = vst.msk [vmem:[%s419 + $0x169] sm:$0xff] %vm331, %v417
      %451 = vst.msk [vmem:[%s419 + $0x171] sm:$0xff] %vm331, %v418
      %v452 = vld [vmem:[#allocation2] sm:$0xff]
      %v453 = vld [vmem:[#allocation2 + $0x8] sm:$0xff]
      %v454 = vld [vmem:[#allocation2 + $0x18] sm:$0xff]
      %v455 = vld [vmem:[#allocation2 + $0x20] sm:$0xff]
      %v456 = vld [vmem:[#allocation2 + $0x30] sm:$0xff]
      %v457 = vld [vmem:[#allocation2 + $0x38] sm:$0xff]
      %v458 = vld [vmem:[#allocation2 + $0x48] sm:$0xff]
      %v459 = vld [vmem:[#allocation2 + $0x50] sm:$0xff]
      %v460 = vld [vmem:[#allocation2 + $0x60] sm:$0xff]
      %v461 = vld [vmem:[#allocation2 + $0x68] sm:$0xff]
      %v462 = vld [vmem:[#allocation2 + $0x78] sm:$0xff]
      %v463 = vld [vmem:[#allocation2 + $0x80] sm:$0xff]
      %v464 = vld [vmem:[#allocation2 + $0x90] sm:$0xff]
      %v465 = vld [vmem:[#allocation2 + $0x98] sm:$0xff]
      %v466 = vld [vmem:[#allocation2 + $0xa8] sm:$0xff]
      %v467 = vld [vmem:[#allocation2 + $0xb0] sm:$0xff]
      %v468 = vld [vmem:[#allocation2 + $0xc0] sm:$0xff]
      %v469 = vld [vmem:[#allocation2 + $0xc8] sm:$0xff]
      %v470 = vld [vmem:[#allocation2 + $0xd8] sm:$0xff]
      %v471 = vld [vmem:[#allocation2 + $0xe0] sm:$0xff]
      %v472 = vld [vmem:[#allocation2 + $0xf0] sm:$0xff]
      %v473 = vld [vmem:[#allocation2 + $0xf8] sm:$0xff]
      %v474 = vld [vmem:[#allocation2 + $0x108] sm:$0xff]
      %v475 = vld [vmem:[#allocation2 + $0x110] sm:$0xff]
      %v476 = vld [vmem:[#allocation2 + $0x120] sm:$0xff]
      %v477 = vld [vmem:[#allocation2 + $0x128] sm:$0xff]
      %v478 = vld [vmem:[#allocation2 + $0x138] sm:$0xff]
      %v479 = vld [vmem:[#allocation2 + $0x140] sm:$0xff]
      %v480 = vld [vmem:[#allocation2 + $0x150] sm:$0xff]
      %v481 = vld [vmem:[#allocation2 + $0x158] sm:$0xff]
      %v482 = vld [vmem:[#allocation2 + $0x168] sm:$0xff]
      %v483 = vld [vmem:[#allocation2 + $0x170] sm:$0xff]
      %v484 = vld [vmem:[%s1] sm:$0x1]
      %486 = vset.pattern.permute.xlu0 0
      %487 = vperm.xlu0 %486, %v452
      %v488 = vpop.permute.xlu0 %487
      %491 = vset.pattern.permute.xlu0 0
      %492 = vperm.xlu0 %491, %v453
      %v493 = vpop.permute.xlu0 %492
      %496 = vset.pattern.permute.xlu0 0
      %497 = vperm.xlu0 %496, %v454
      %v498 = vpop.permute.xlu0 %497
      %501 = vset.pattern.permute.xlu0 0
      %502 = vperm.xlu0 %501, %v455
      %v503 = vpop.permute.xlu0 %502
      %506 = vset.pattern.permute.xlu0 0
      %507 = vperm.xlu0 %506, %v456
      %v508 = vpop.permute.xlu0 %507
      %511 = vset.pattern.permute.xlu0 0
      %512 = vperm.xlu0 %511, %v457
      %v513 = vpop.permute.xlu0 %512
      %516 = vset.pattern.permute.xlu0 0
      %517 = vperm.xlu0 %516, %v458
      %v518 = vpop.permute.xlu0 %517
      %521 = vset.pattern.permute.xlu0 0
      %522 = vperm.xlu0 %521, %v459
      %v523 = vpop.permute.xlu0 %522
      %526 = vset.pattern.permute.xlu0 0
      %527 = vperm.xlu0 %526, %v460
      %v528 = vpop.permute.xlu0 %527
      %531 = vset.pattern.permute.xlu0 0
      %532 = vperm.xlu0 %531, %v461
      %v533 = vpop.permute.xlu0 %532
      %536 = vset.pattern.permute.xlu0 0
      %537 = vperm.xlu0 %536, %v462
      %v538 = vpop.permute.xlu0 %537
      %541 = vset.pattern.permute.xlu0 0
      %542 = vperm.xlu0 %541, %v463
      %v543 = vpop.permute.xlu0 %542
      %546 = vset.pattern.permute.xlu0 0
      %547 = vperm.xlu0 %546, %v464
      %v548 = vpop.permute.xlu0 %547
      %551 = vset.pattern.permute.xlu0 0
      %552 = vperm.xlu0 %551, %v465
      %v553 = vpop.permute.xlu0 %552
      %556 = vset.pattern.permute.xlu0 0
      %557 = vperm.xlu0 %556, %v466
      %v558 = vpop.permute.xlu0 %557
      %561 = vset.pattern.permute.xlu0 0
      %562 = vperm.xlu0 %561, %v467
      %v563 = vpop.permute.xlu0 %562
      %566 = vset.pattern.permute.xlu0 0
      %567 = vperm.xlu0 %566, %v468
      %v568 = vpop.permute.xlu0 %567
      %571 = vset.pattern.permute.xlu0 0
      %572 = vperm.xlu0 %571, %v469
      %v573 = vpop.permute.xlu0 %572
      %576 = vset.pattern.permute.xlu0 0
      %577 = vperm.xlu0 %576, %v470
      %v578 = vpop.permute.xlu0 %577
      %581 = vset.pattern.permute.xlu0 0
      %582 = vperm.xlu0 %581, %v471
      %v583 = vpop.permute.xlu0 %582
      %586 = vset.pattern.permute.xlu0 0
      %587 = vperm.xlu0 %586, %v472
      %v588 = vpop.permute.xlu0 %587
      %591 = vset.pattern.permute.xlu0 0
      %592 = vperm.xlu0 %591, %v473
      %v593 = vpop.permute.xlu0 %592
      %596 = vset.pattern.permute.xlu0 0
      %597 = vperm.xlu0 %596, %v474
      %v598 = vpop.permute.xlu0 %597
      %601 = vset.pattern.permute.xlu0 0
      %602 = vperm.xlu0 %601, %v475
      %v603 = vpop.permute.xlu0 %602
      %606 = vset.pattern.permute.xlu0 0
      %607 = vperm.xlu0 %606, %v476
      %v608 = vpop.permute.xlu0 %607
      %611 = vset.pattern.permute.xlu0 0
      %612 = vperm.xlu0 %611, %v477
      %v613 = vpop.permute.xlu0 %612
      %616 = vset.pattern.permute.xlu0 0
      %617 = vperm.xlu0 %616, %v478
      %v618 = vpop.permute.xlu0 %617
      %621 = vset.pattern.permute.xlu0 0
      %622 = vperm.xlu0 %621, %v479
      %v623 = vpop.permute.xlu0 %622
      %626 = vset.pattern.permute.xlu0 0
      %627 = vperm.xlu0 %626, %v480
      %v628 = vpop.permute.xlu0 %627
      %631 = vset.pattern.permute.xlu0 0
      %632 = vperm.xlu0 %631, %v481
      %v633 = vpop.permute.xlu0 %632
      %636 = vset.pattern.permute.xlu0 0
      %637 = vperm.xlu0 %636, %v482
      %v638 = vpop.permute.xlu0 %637
      %641 = vset.pattern.permute.xlu0 0
      %642 = vperm.xlu0 %641, %v483
      %v643 = vpop.permute.xlu0 %642
      %v645 = vlaneseq
      %v646 = vshrl.u32 %v645, 7
      %v647 = vsub.s32 0, %v646
      %v648 = vrot.slane %v484, %v647
      %v649 = vmul.f32 %v488, %v648
      %v650 = vmul.f32 %v493, %v648
      %v651 = vmul.f32 %v498, %v648
      %v652 = vmul.f32 %v503, %v648
      %v653 = vmul.f32 %v508, %v648
      %v654 = vmul.f32 %v513, %v648
      %v655 = vmul.f32 %v518, %v648
      %v656 = vmul.f32 %v523, %v648
      %v657 = vmul.f32 %v528, %v648
      %v658 = vmul.f32 %v533, %v648
      %v659 = vmul.f32 %v538, %v648
      %v660 = vmul.f32 %v543, %v648
      %v661 = vmul.f32 %v548, %v648
      %v662 = vmul.f32 %v553, %v648
      %v663 = vmul.f32 %v558, %v648
      %v664 = vmul.f32 %v563, %v648
      %v665 = vmul.f32 %v568, %v648
      %v666 = vmul.f32 %v573, %v648
      %v667 = vmul.f32 %v578, %v648
      %v668 = vmul.f32 %v583, %v648
      %v669 = vmul.f32 %v588, %v648
      %v670 = vmul.f32 %v593, %v648
      %v671 = vmul.f32 %v598, %v648
      %v672 = vmul.f32 %v603, %v648
      %v673 = vmul.f32 %v608, %v648
      %v674 = vmul.f32 %v613, %v648
      %v675 = vmul.f32 %v618, %v648
      %v676 = vmul.f32 %v623, %v648
      %v677 = vmul.f32 %v628, %v648
      %v678 = vmul.f32 %v633, %v648
      %v679 = vmul.f32 %v638, %v648
      %v680 = vmul.f32 %v643, %v648
      %v681 = vadd.f32 %v649, 0.0
      %v682 = vadd.f32 %v650, 0.0
      %v683 = vadd.f32 %v651, 0.0
      %v684 = vadd.f32 %v652, 0.0
      %v685 = vadd.f32 %v653, 0.0
      %v686 = vadd.f32 %v654, 0.0
      %v687 = vadd.f32 %v655, 0.0
      %v688 = vadd.f32 %v656, 0.0
      %v689 = vadd.f32 %v657, 0.0
      %v690 = vadd.f32 %v658, 0.0
      %v691 = vadd.f32 %v659, 0.0
      %v692 = vadd.f32 %v660, 0.0
      %v693 = vadd.f32 %v661, 0.0
      %v694 = vadd.f32 %v662, 0.0
      %v695 = vadd.f32 %v663, 0.0
      %v696 = vadd.f32 %v664, 0.0
      %v697 = vadd.f32 %v665, 0.0
      %v698 = vadd.f32 %v666, 0.0
      %v699 = vadd.f32 %v667, 0.0
      %v700 = vadd.f32 %v668, 0.0
      %v701 = vadd.f32 %v669, 0.0
      %v702 = vadd.f32 %v670, 0.0
      %v703 = vadd.f32 %v671, 0.0
      %v704 = vadd.f32 %v672, 0.0
      %v705 = vadd.f32 %v673, 0.0
      %v706 = vadd.f32 %v674, 0.0
      %v707 = vadd.f32 %v675, 0.0
      %v708 = vadd.f32 %v676, 0.0
      %v709 = vadd.f32 %v677, 0.0
      %v710 = vadd.f32 %v678, 0.0
      %v711 = vadd.f32 %v679, 0.0
      %v712 = vadd.f32 %v680, 0.0
      %v713 = vld [vmem:[#allocation2 + $0x1] sm:$0xff]
      %v714 = vld [vmem:[#allocation2 + $0x9] sm:$0xff]
      %v715 = vld [vmem:[#allocation2 + $0x19] sm:$0xff]
      %v716 = vld [vmem:[#allocation2 + $0x21] sm:$0xff]
      %v717 = vld [vmem:[#allocation2 + $0x31] sm:$0xff]
      %v718 = vld [vmem:[#allocation2 + $0x39] sm:$0xff]
      %v719 = vld [vmem:[#allocation2 + $0x49] sm:$0xff]
      %v720 = vld [vmem:[#allocation2 + $0x51] sm:$0xff]
      %v721 = vld [vmem:[#allocation2 + $0x61] sm:$0xff]
      %v722 = vld [vmem:[#allocation2 + $0x69] sm:$0xff]
      %v723 = vld [vmem:[#allocation2 + $0x79] sm:$0xff]
      %v724 = vld [vmem:[#allocation2 + $0x81] sm:$0xff]
      %v725 = vld [vmem:[#allocation2 + $0x91] sm:$0xff]
      %v726 = vld [vmem:[#allocation2 + $0x99] sm:$0xff]
      %v727 = vld [vmem:[#allocation2 + $0xa9] sm:$0xff]
      %v728 = vld [vmem:[#allocation2 + $0xb1] sm:$0xff]
      %v729 = vld [vmem:[#allocation2 + $0xc1] sm:$0xff]
      %v730 = vld [vmem:[#allocation2 + $0xc9] sm:$0xff]
      %v731 = vld [vmem:[#allocation2 + $0xd9] sm:$0xff]
      %v732 = vld [vmem:[#allocation2 + $0xe1] sm:$0xff]
      %v733 = vld [vmem:[#allocation2 + $0xf1] sm:$0xff]
      %v734 = vld [vmem:[#allocation2 + $0xf9] sm:$0xff]
      %v735 = vld [vmem:[#allocation2 + $0x109] sm:$0xff]
      %v736 = vld [vmem:[#allocation2 + $0x111] sm:$0xff]
      %v737 = vld [vmem:[#allocation2 + $0x121] sm:$0xff]
      %v738 = vld [vmem:[#allocation2 + $0x129] sm:$0xff]
      %v739 = vld [vmem:[#allocation2 + $0x139] sm:$0xff]
      %v740 = vld [vmem:[#allocation2 + $0x141] sm:$0xff]
      %v741 = vld [vmem:[#allocation2 + $0x151] sm:$0xff]
      %v742 = vld [vmem:[#allocation2 + $0x159] sm:$0xff]
      %v743 = vld [vmem:[#allocation2 + $0x169] sm:$0xff]
      %v744 = vld [vmem:[#allocation2 + $0x171] sm:$0xff]
      %v745 = vld [vmem:[%s1 + $0x1] sm:$0x1]
      %747 = vset.pattern.permute.xlu0 0
      %748 = vperm.xlu0 %747, %v713
      %v749 = vpop.permute.xlu0 %748
      %752 = vset.pattern.permute.xlu0 0
      %753 = vperm.xlu0 %752, %v714
      %v754 = vpop.permute.xlu0 %753
      %757 = vset.pattern.permute.xlu0 0
      %758 = vperm.xlu0 %757, %v715
      %v759 = vpop.permute.xlu0 %758
      %762 = vset.pattern.permute.xlu0 0
      %763 = vperm.xlu0 %762, %v716
      %v764 = vpop.permute.xlu0 %763
      %767 = vset.pattern.permute.xlu0 0
      %768 = vperm.xlu0 %767, %v717
      %v769 = vpop.permute.xlu0 %768
      %772 = vset.pattern.permute.xlu0 0
      %773 = vperm.xlu0 %772, %v718
      %v774 = vpop.permute.xlu0 %773
      %777 = vset.pattern.permute.xlu0 0
      %778 = vperm.xlu0 %777, %v719
      %v779 = vpop.permute.xlu0 %778
      %782 = vset.pattern.permute.xlu0 0
      %783 = vperm.xlu0 %782, %v720
      %v784 = vpop.permute.xlu0 %783
      %787 = vset.pattern.permute.xlu0 0
      %788 = vperm.xlu0 %787, %v721
      %v789 = vpop.permute.xlu0 %788
      %792 = vset.pattern.permute.xlu0 0
      %793 = vperm.xlu0 %792, %v722
      %v794 = vpop.permute.xlu0 %793
      %797 = vset.pattern.permute.xlu0 0
      %798 = vperm.xlu0 %797, %v723
      %v799 = vpop.permute.xlu0 %798
      %802 = vset.pattern.permute.xlu0 0
      %803 = vperm.xlu0 %802, %v724
      %v804 = vpop.permute.xlu0 %803
      %807 = vset.pattern.permute.xlu0 0
      %808 = vperm.xlu0 %807, %v725
      %v809 = vpop.permute.xlu0 %808
      %812 = vset.pattern.permute.xlu0 0
      %813 = vperm.xlu0 %812, %v726
      %v814 = vpop.permute.xlu0 %813
      %817 = vset.pattern.permute.xlu0 0
      %818 = vperm.xlu0 %817, %v727
      %v819 = vpop.permute.xlu0 %818
      %822 = vset.pattern.permute.xlu0 0
      %823 = vperm.xlu0 %822, %v728
      %v824 = vpop.permute.xlu0 %823
      %827 = vset.pattern.permute.xlu0 0
      %828 = vperm.xlu0 %827, %v729
      %v829 = vpop.permute.xlu0 %828
      %832 = vset.pattern.permute.xlu0 0
      %833 = vperm.xlu0 %832, %v730
      %v834 = vpop.permute.xlu0 %833
      %837 = vset.pattern.permute.xlu0 0
      %838 = vperm.xlu0 %837, %v731
      %v839 = vpop.permute.xlu0 %838
      %842 = vset.pattern.permute.xlu0 0
      %843 = vperm.xlu0 %842, %v732
      %v844 = vpop.permute.xlu0 %843
      %847 = vset.pattern.permute.xlu0 0
      %848 = vperm.xlu0 %847, %v733
      %v849 = vpop.permute.xlu0 %848
      %852 = vset.pattern.permute.xlu0 0
      %853 = vperm.xlu0 %852, %v734
      %v854 = vpop.permute.xlu0 %853
      %857 = vset.pattern.permute.xlu0 0
      %858 = vperm.xlu0 %857, %v735
      %v859 = vpop.permute.xlu0 %858
      %862 = vset.pattern.permute.xlu0 0
      %863 = vperm.xlu0 %862, %v736
      %v864 = vpop.permute.xlu0 %863
      %867 = vset.pattern.permute.xlu0 0
      %868 = vperm.xlu0 %867, %v737
      %v869 = vpop.permute.xlu0 %868
      %872 = vset.pattern.permute.xlu0 0
      %873 = vperm.xlu0 %872, %v738
      %v874 = vpop.permute.xlu0 %873
      %877 = vset.pattern.permute.xlu0 0
      %878 = vperm.xlu0 %877, %v739
      %v879 = vpop.permute.xlu0 %878
      %882 = vset.pattern.permute.xlu0 0
      %883 = vperm.xlu0 %882, %v740
      %v884 = vpop.permute.xlu0 %883
      %887 = vset.pattern.permute.xlu0 0
      %888 = vperm.xlu0 %887, %v741
      %v889 = vpop.permute.xlu0 %888
      %892 = vset.pattern.permute.xlu0 0
      %893 = vperm.xlu0 %892, %v742
      %v894 = vpop.permute.xlu0 %893
      %897 = vset.pattern.permute.xlu0 0
      %898 = vperm.xlu0 %897, %v743
      %v899 = vpop.permute.xlu0 %898
      %902 = vset.pattern.permute.xlu0 0
      %903 = vperm.xlu0 %902, %v744
      %v904 = vpop.permute.xlu0 %903
      %v906 = vlaneseq
      %v907 = vshrl.u32 %v906, 7
      %v908 = vsub.s32 0, %v907
      %v909 = vrot.slane %v745, %v908
      %v910 = vmul.f32 %v749, %v909
      %v911 = vmul.f32 %v754, %v909
      %v912 = vmul.f32 %v759, %v909
      %v913 = vmul.f32 %v764, %v909
      %v914 = vmul.f32 %v769, %v909
      %v915 = vmul.f32 %v774, %v909
      %v916 = vmul.f32 %v779, %v909
      %v917 = vmul.f32 %v784, %v909
      %v918 = vmul.f32 %v789, %v909
      %v919 = vmul.f32 %v794, %v909
      %v920 = vmul.f32 %v799, %v909
      %v921 = vmul.f32 %v804, %v909
      %v922 = vmul.f32 %v809, %v909
      %v923 = vmul.f32 %v814, %v909
      %v924 = vmul.f32 %v819, %v909
      %v925 = vmul.f32 %v824, %v909
      %v926 = vmul.f32 %v829, %v909
      %v927 = vmul.f32 %v834, %v909
      %v928 = vmul.f32 %v839, %v909
      %v929 = vmul.f32 %v844, %v909
      %v930 = vmul.f32 %v849, %v909
      %v931 = vmul.f32 %v854, %v909
      %v932 = vmul.f32 %v859, %v909
      %v933 = vmul.f32 %v864, %v909
      %v934 = vmul.f32 %v869, %v909
      %v935 = vmul.f32 %v874, %v909
      %v936 = vmul.f32 %v879, %v909
      %v937 = vmul.f32 %v884, %v909
      %v938 = vmul.f32 %v889, %v909
      %v939 = vmul.f32 %v894, %v909
      %v940 = vmul.f32 %v899, %v909
      %v941 = vmul.f32 %v904, %v909
      %v942 = vadd.f32 %v681, %v910
      %v943 = vadd.f32 %v682, %v911
      %v944 = vadd.f32 %v683, %v912
      %v945 = vadd.f32 %v684, %v913
      %v946 = vadd.f32 %v685, %v914
      %v947 = vadd.f32 %v686, %v915
      %v948 = vadd.f32 %v687, %v916
      %v949 = vadd.f32 %v688, %v917
      %v950 = vadd.f32 %v689, %v918
      %v951 = vadd.f32 %v690, %v919
      %v952 = vadd.f32 %v691, %v920
      %v953 = vadd.f32 %v692, %v921
      %v954 = vadd.f32 %v693, %v922
      %v955 = vadd.f32 %v694, %v923
      %v956 = vadd.f32 %v695, %v924
      %v957 = vadd.f32 %v696, %v925
      %v958 = vadd.f32 %v697, %v926
      %v959 = vadd.f32 %v698, %v927
      %v960 = vadd.f32 %v699, %v928
      %v961 = vadd.f32 %v700, %v929
      %v962 = vadd.f32 %v701, %v930
      %v963 = vadd.f32 %v702, %v931
      %v964 = vadd.f32 %v703, %v932
      %v965 = vadd.f32 %v704, %v933
      %v966 = vadd.f32 %v705, %v934
      %v967 = vadd.f32 %v706, %v935
      %v968 = vadd.f32 %v707, %v936
      %v969 = vadd.f32 %v708, %v937
      %v970 = vadd.f32 %v709, %v938
      %v971 = vadd.f32 %v710, %v939
      %v972 = vadd.f32 %v711, %v940
      %v973 = vadd.f32 %v712, %v941
      %v974 = vld [vmem:[#allocation2 + $0x2] sm:$0xff]
      %v975 = vld [vmem:[#allocation2 + $0xa] sm:$0xff]
      %v976 = vld [vmem:[#allocation2 + $0x1a] sm:$0xff]
      %v977 = vld [vmem:[#allocation2 + $0x22] sm:$0xff]
      %v978 = vld [vmem:[#allocation2 + $0x32] sm:$0xff]
      %v979 = vld [vmem:[#allocation2 + $0x3a] sm:$0xff]
      %v980 = vld [vmem:[#allocation2 + $0x4a] sm:$0xff]
      %v981 = vld [vmem:[#allocation2 + $0x52] sm:$0xff]
      %v982 = vld [vmem:[#allocation2 + $0x62] sm:$0xff]
      %v983 = vld [vmem:[#allocation2 + $0x6a] sm:$0xff]
      %v984 = vld [vmem:[#allocation2 + $0x7a] sm:$0xff]
      %v985 = vld [vmem:[#allocation2 + $0x82] sm:$0xff]
      %v986 = vld [vmem:[#allocation2 + $0x92] sm:$0xff]
      %v987 = vld [vmem:[#allocation2 + $0x9a] sm:$0xff]
      %v988 = vld [vmem:[#allocation2 + $0xaa] sm:$0xff]
      %v989 = vld [vmem:[#allocation2 + $0xb2] sm:$0xff]
      %v990 = vld [vmem:[#allocation2 + $0xc2] sm:$0xff]
      %v991 = vld [vmem:[#allocation2 + $0xca] sm:$0xff]
      %v992 = vld [vmem:[#allocation2 + $0xda] sm:$0xff]
      %v993 = vld [vmem:[#allocation2 + $0xe2] sm:$0xff]
      %v994 = vld [vmem:[#allocation2 + $0xf2] sm:$0xff]
      %v995 = vld [vmem:[#allocation2 + $0xfa] sm:$0xff]
      %v996 = vld [vmem:[#allocation2 + $0x10a] sm:$0xff]
      %v997 = vld [vmem:[#allocation2 + $0x112] sm:$0xff]
      %v998 = vld [vmem:[#allocation2 + $0x122] sm:$0xff]
      %v999 = vld [vmem:[#allocation2 + $0x12a] sm:$0xff]
      %v1000 = vld [vmem:[#allocation2 + $0x13a] sm:$0xff]
      %v1001 = vld [vmem:[#allocation2 + $0x142] sm:$0xff]
      %v1002 = vld [vmem:[#allocation2 + $0x152] sm:$0xff]
      %v1003 = vld [vmem:[#allocation2 + $0x15a] sm:$0xff]
      %v1004 = vld [vmem:[#allocation2 + $0x16a] sm:$0xff]
      %v1005 = vld [vmem:[#allocation2 + $0x172] sm:$0xff]
      %v1006 = vld [vmem:[%s1 + $0x2] sm:$0x1]
      %1008 = vset.pattern.permute.xlu0 0
      %1009 = vperm.xlu0 %1008, %v974
      %v1010 = vpop.permute.xlu0 %1009
      %1013 = vset.pattern.permute.xlu0 0
      %1014 = vperm.xlu0 %1013, %v975
      %v1015 = vpop.permute.xlu0 %1014
      %1018 = vset.pattern.permute.xlu0 0
      %1019 = vperm.xlu0 %1018, %v976
      %v1020 = vpop.permute.xlu0 %1019
      %1023 = vset.pattern.permute.xlu0 0
      %1024 = vperm.xlu0 %1023, %v977
      %v1025 = vpop.permute.xlu0 %1024
      %1028 = vset.pattern.permute.xlu0 0
      %1029 = vperm.xlu0 %1028, %v978
      %v1030 = vpop.permute.xlu0 %1029
      %1033 = vset.pattern.permute.xlu0 0
      %1034 = vperm.xlu0 %1033, %v979
      %v1035 = vpop.permute.xlu0 %1034
      %1038 = vset.pattern.permute.xlu0 0
      %1039 = vperm.xlu0 %1038, %v980
      %v1040 = vpop.permute.xlu0 %1039
      %1043 = vset.pattern.permute.xlu0 0
      %1044 = vperm.xlu0 %1043, %v981
      %v1045 = vpop.permute.xlu0 %1044
      %1048 = vset.pattern.permute.xlu0 0
      %1049 = vperm.xlu0 %1048, %v982
      %v1050 = vpop.permute.xlu0 %1049
      %1053 = vset.pattern.permute.xlu0 0
      %1054 = vperm.xlu0 %1053, %v983
      %v1055 = vpop.permute.xlu0 %1054
      %1058 = vset.pattern.permute.xlu0 0
      %1059 = vperm.xlu0 %1058, %v984
      %v1060 = vpop.permute.xlu0 %1059
      %1063 = vset.pattern.permute.xlu0 0
      %1064 = vperm.xlu0 %1063, %v985
      %v1065 = vpop.permute.xlu0 %1064
      %1068 = vset.pattern.permute.xlu0 0
      %1069 = vperm.xlu0 %1068, %v986
      %v1070 = vpop.permute.xlu0 %1069
      %1073 = vset.pattern.permute.xlu0 0
      %1074 = vperm.xlu0 %1073, %v987
      %v1075 = vpop.permute.xlu0 %1074
      %1078 = vset.pattern.permute.xlu0 0
      %1079 = vperm.xlu0 %1078, %v988
      %v1080 = vpop.permute.xlu0 %1079
      %1083 = vset.pattern.permute.xlu0 0
      %1084 = vperm.xlu0 %1083, %v989
      %v1085 = vpop.permute.xlu0 %1084
      %1088 = vset.pattern.permute.xlu0 0
      %1089 = vperm.xlu0 %1088, %v990
      %v1090 = vpop.permute.xlu0 %1089
      %1093 = vset.pattern.permute.xlu0 0
      %1094 = vperm.xlu0 %1093, %v991
      %v1095 = vpop.permute.xlu0 %1094
      %1098 = vset.pattern.permute.xlu0 0
      %1099 = vperm.xlu0 %1098, %v992
      %v1100 = vpop.permute.xlu0 %1099
      %1103 = vset.pattern.permute.xlu0 0
      %1104 = vperm.xlu0 %1103, %v993
      %v1105 = vpop.permute.xlu0 %1104
      %1108 = vset.pattern.permute.xlu0 0
      %1109 = vperm.xlu0 %1108, %v994
      %v1110 = vpop.permute.xlu0 %1109
      %1113 = vset.pattern.permute.xlu0 0
      %1114 = vperm.xlu0 %1113, %v995
      %v1115 = vpop.permute.xlu0 %1114
      %1118 = vset.pattern.permute.xlu0 0
      %1119 = vperm.xlu0 %1118, %v996
      %v1120 = vpop.permute.xlu0 %1119
      %1123 = vset.pattern.permute.xlu0 0
      %1124 = vperm.xlu0 %1123, %v997
      %v1125 = vpop.permute.xlu0 %1124
      %1128 = vset.pattern.permute.xlu0 0
      %1129 = vperm.xlu0 %1128, %v998
      %v1130 = vpop.permute.xlu0 %1129
      %1133 = vset.pattern.permute.xlu0 0
      %1134 = vperm.xlu0 %1133, %v999
      %v1135 = vpop.permute.xlu0 %1134
      %1138 = vset.pattern.permute.xlu0 0
      %1139 = vperm.xlu0 %1138, %v1000
      %v1140 = vpop.permute.xlu0 %1139
      %1143 = vset.pattern.permute.xlu0 0
      %1144 = vperm.xlu0 %1143, %v1001
      %v1145 = vpop.permute.xlu0 %1144
      %1148 = vset.pattern.permute.xlu0 0
      %1149 = vperm.xlu0 %1148, %v1002
      %v1150 = vpop.permute.xlu0 %1149
      %1153 = vset.pattern.permute.xlu0 0
      %1154 = vperm.xlu0 %1153, %v1003
      %v1155 = vpop.permute.xlu0 %1154
      %1158 = vset.pattern.permute.xlu0 0
      %1159 = vperm.xlu0 %1158, %v1004
      %v1160 = vpop.permute.xlu0 %1159
      %1163 = vset.pattern.permute.xlu0 0
      %1164 = vperm.xlu0 %1163, %v1005
      %v1165 = vpop.permute.xlu0 %1164
      %v1167 = vlaneseq
      %v1168 = vshrl.u32 %v1167, 7
      %v1169 = vsub.s32 0, %v1168
      %v1170 = vrot.slane %v1006, %v1169
      %v1171 = vmul.f32 %v1010, %v1170
      %v1172 = vmul.f32 %v1015, %v1170
      %v1173 = vmul.f32 %v1020, %v1170
      %v1174 = vmul.f32 %v1025, %v1170
      %v1175 = vmul.f32 %v1030, %v1170
      %v1176 = vmul.f32 %v1035, %v1170
      %v1177 = vmul.f32 %v1040, %v1170
      %v1178 = vmul.f32 %v1045, %v1170
      %v1179 = vmul.f32 %v1050, %v1170
      %v1180 = vmul.f32 %v1055, %v1170
      %v1181 = vmul.f32 %v1060, %v1170
      %v1182 = vmul.f32 %v1065, %v1170
      %v1183 = vmul.f32 %v1070, %v1170
      %v1184 = vmul.f32 %v1075, %v1170
      %v1185 = vmul.f32 %v1080, %v1170
      %v1186 = vmul.f32 %v1085, %v1170
      %v1187 = vmul.f32 %v1090, %v1170
      %v1188 = vmul.f32 %v1095, %v1170
      %v1189 = vmul.f32 %v1100, %v1170
      %v1190 = vmul.f32 %v1105, %v1170
      %v1191 = vmul.f32 %v1110, %v1170
      %v1192 = vmul.f32 %v1115, %v1170
      %v1193 = vmul.f32 %v1120, %v1170
      %v1194 = vmul.f32 %v1125, %v1170
      %v1195 = vmul.f32 %v1130, %v1170
      %v1196 = vmul.f32 %v1135, %v1170
      %v1197 = vmul.f32 %v1140, %v1170
      %v1198 = vmul.f32 %v1145, %v1170
      %v1199 = vmul.f32 %v1150, %v1170
      %v1200 = vmul.f32 %v1155, %v1170
      %v1201 = vmul.f32 %v1160, %v1170
      %v1202 = vmul.f32 %v1165, %v1170
      %v1203 = vadd.f32 %v942, %v1171
      %v1204 = vadd.f32 %v943, %v1172
      %v1205 = vadd.f32 %v944, %v1173
      %v1206 = vadd.f32 %v945, %v1174
      %v1207 = vadd.f32 %v946, %v1175
      %v1208 = vadd.f32 %v947, %v1176
      %v1209 = vadd.f32 %v948, %v1177
      %v1210 = vadd.f32 %v949, %v1178
      %v1211 = vadd.f32 %v950, %v1179
      %v1212 = vadd.f32 %v951, %v1180
      %v1213 = vadd.f32 %v952, %v1181
      %v1214 = vadd.f32 %v953, %v1182
      %v1215 = vadd.f32 %v954, %v1183
      %v1216 = vadd.f32 %v955, %v1184
      %v1217 = vadd.f32 %v956, %v1185
      %v1218 = vadd.f32 %v957, %v1186
      %v1219 = vadd.f32 %v958, %v1187
      %v1220 = vadd.f32 %v959, %v1188
      %v1221 = vadd.f32 %v960, %v1189
      %v1222 = vadd.f32 %v961, %v1190
      %v1223 = vadd.f32 %v962, %v1191
      %v1224 = vadd.f32 %v963, %v1192
      %v1225 = vadd.f32 %v964, %v1193
      %v1226 = vadd.f32 %v965, %v1194
      %v1227 = vadd.f32 %v966, %v1195
      %v1228 = vadd.f32 %v967, %v1196
      %v1229 = vadd.f32 %v968, %v1197
      %v1230 = vadd.f32 %v969, %v1198
      %v1231 = vadd.f32 %v970, %v1199
      %v1232 = vadd.f32 %v971, %v1200
      %v1233 = vadd.f32 %v972, %v1201
      %v1234 = vadd.f32 %v973, %v1202
      %v1235 = vld [vmem:[%s419] sm:$0xff]
      %v1236 = vld [vmem:[%s419 + $0x8] sm:$0xff]
      %v1237 = vld [vmem:[%s419 + $0x18] sm:$0xff]
      %v1238 = vld [vmem:[%s419 + $0x20] sm:$0xff]
      %v1239 = vld [vmem:[%s419 + $0x30] sm:$0xff]
      %v1240 = vld [vmem:[%s419 + $0x38] sm:$0xff]
      %v1241 = vld [vmem:[%s419 + $0x48] sm:$0xff]
      %v1242 = vld [vmem:[%s419 + $0x50] sm:$0xff]
      %v1243 = vld [vmem:[%s419 + $0x60] sm:$0xff]
      %v1244 = vld [vmem:[%s419 + $0x68] sm:$0xff]
      %v1245 = vld [vmem:[%s419 + $0x78] sm:$0xff]
      %v1246 = vld [vmem:[%s419 + $0x80] sm:$0xff]
      %v1247 = vld [vmem:[%s419 + $0x90] sm:$0xff]
      %v1248 = vld [vmem:[%s419 + $0x98] sm:$0xff]
      %v1249 = vld [vmem:[%s419 + $0xa8] sm:$0xff]
      %v1250 = vld [vmem:[%s419 + $0xb0] sm:$0xff]
      %v1251 = vld [vmem:[%s419 + $0xc0] sm:$0xff]
      %v1252 = vld [vmem:[%s419 + $0xc8] sm:$0xff]
      %v1253 = vld [vmem:[%s419 + $0xd8] sm:$0xff]
      %v1254 = vld [vmem:[%s419 + $0xe0] sm:$0xff]
      %v1255 = vld [vmem:[%s419 + $0xf0] sm:$0xff]
      %v1256 = vld [vmem:[%s419 + $0xf8] sm:$0xff]
      %v1257 = vld [vmem:[%s419 + $0x108] sm:$0xff]
      %v1258 = vld [vmem:[%s419 + $0x110] sm:$0xff]
      %v1259 = vld [vmem:[%s419 + $0x120] sm:$0xff]
      %v1260 = vld [vmem:[%s419 + $0x128] sm:$0xff]
      %v1261 = vld [vmem:[%s419 + $0x138] sm:$0xff]
      %v1262 = vld [vmem:[%s419 + $0x140] sm:$0xff]
      %v1263 = vld [vmem:[%s419 + $0x150] sm:$0xff]
      %v1264 = vld [vmem:[%s419 + $0x158] sm:$0xff]
      %v1265 = vld [vmem:[%s419 + $0x168] sm:$0xff]
      %v1266 = vld [vmem:[%s419 + $0x170] sm:$0xff]
      %v1267 = vld [vmem:[%s1 + $0x3] sm:$0x1]
      %1269 = vset.pattern.permute.xlu0 0
      %1270 = vperm.xlu0 %1269, %v1235
      %v1271 = vpop.permute.xlu0 %1270
      %1274 = vset.pattern.permute.xlu0 0
      %1275 = vperm.xlu0 %1274, %v1236
      %v1276 = vpop.permute.xlu0 %1275
      %1279 = vset.pattern.permute.xlu0 0
      %1280 = vperm.xlu0 %1279, %v1237
      %v1281 = vpop.permute.xlu0 %1280
      %1284 = vset.pattern.permute.xlu0 0
      %1285 = vperm.xlu0 %1284, %v1238
      %v1286 = vpop.permute.xlu0 %1285
      %1289 = vset.pattern.permute.xlu0 0
      %1290 = vperm.xlu0 %1289, %v1239
      %v1291 = vpop.permute.xlu0 %1290
      %1294 = vset.pattern.permute.xlu0 0
      %1295 = vperm.xlu0 %1294, %v1240
      %v1296 = vpop.permute.xlu0 %1295
      %1299 = vset.pattern.permute.xlu0 0
      %1300 = vperm.xlu0 %1299, %v1241
      %v1301 = vpop.permute.xlu0 %1300
      %1304 = vset.pattern.permute.xlu0 0
      %1305 = vperm.xlu0 %1304, %v1242
      %v1306 = vpop.permute.xlu0 %1305
      %1309 = vset.pattern.permute.xlu0 0
      %1310 = vperm.xlu0 %1309, %v1243
      %v1311 = vpop.permute.xlu0 %1310
      %1314 = vset.pattern.permute.xlu0 0
      %1315 = vperm.xlu0 %1314, %v1244
      %v1316 = vpop.permute.xlu0 %1315
      %1319 = vset.pattern.permute.xlu0 0
      %1320 = vperm.xlu0 %1319, %v1245
      %v1321 = vpop.permute.xlu0 %1320
      %1324 = vset.pattern.permute.xlu0 0
      %1325 = vperm.xlu0 %1324, %v1246
      %v1326 = vpop.permute.xlu0 %1325
      %1329 = vset.pattern.permute.xlu0 0
      %1330 = vperm.xlu0 %1329, %v1247
      %v1331 = vpop.permute.xlu0 %1330
      %1334 = vset.pattern.permute.xlu0 0
      %1335 = vperm.xlu0 %1334, %v1248
      %v1336 = vpop.permute.xlu0 %1335
      %1339 = vset.pattern.permute.xlu0 0
      %1340 = vperm.xlu0 %1339, %v1249
      %v1341 = vpop.permute.xlu0 %1340
      %1344 = vset.pattern.permute.xlu0 0
      %1345 = vperm.xlu0 %1344, %v1250
      %v1346 = vpop.permute.xlu0 %1345
      %1349 = vset.pattern.permute.xlu0 0
      %1350 = vperm.xlu0 %1349, %v1251
      %v1351 = vpop.permute.xlu0 %1350
      %1354 = vset.pattern.permute.xlu0 0
      %1355 = vperm.xlu0 %1354, %v1252
      %v1356 = vpop.permute.xlu0 %1355
      %1359 = vset.pattern.permute.xlu0 0
      %1360 = vperm.xlu0 %1359, %v1253
      %v1361 = vpop.permute.xlu0 %1360
      %1364 = vset.pattern.permute.xlu0 0
      %1365 = vperm.xlu0 %1364, %v1254
      %v1366 = vpop.permute.xlu0 %1365
      %1369 = vset.pattern.permute.xlu0 0
      %1370 = vperm.xlu0 %1369, %v1255
      %v1371 = vpop.permute.xlu0 %1370
      %1374 = vset.pattern.permute.xlu0 0
      %1375 = vperm.xlu0 %1374, %v1256
      %v1376 = vpop.permute.xlu0 %1375
      %1379 = vset.pattern.permute.xlu0 0
      %1380 = vperm.xlu0 %1379, %v1257
      %v1381 = vpop.permute.xlu0 %1380
      %1384 = vset.pattern.permute.xlu0 0
      %1385 = vperm.xlu0 %1384, %v1258
      %v1386 = vpop.permute.xlu0 %1385
      %1389 = vset.pattern.permute.xlu0 0
      %1390 = vperm.xlu0 %1389, %v1259
      %v1391 = vpop.permute.xlu0 %1390
      %1394 = vset.pattern.permute.xlu0 0
      %1395 = vperm.xlu0 %1394, %v1260
      %v1396 = vpop.permute.xlu0 %1395
      %1399 = vset.pattern.permute.xlu0 0
      %1400 = vperm.xlu0 %1399, %v1261
      %v1401 = vpop.permute.xlu0 %1400
      %1404 = vset.pattern.permute.xlu0 0
      %1405 = vperm.xlu0 %1404, %v1262
      %v1406 = vpop.permute.xlu0 %1405
      %1409 = vset.pattern.permute.xlu0 0
      %1410 = vperm.xlu0 %1409, %v1263
      %v1411 = vpop.permute.xlu0 %1410
      %1414 = vset.pattern.permute.xlu0 0
      %1415 = vperm.xlu0 %1414, %v1264
      %v1416 = vpop.permute.xlu0 %1415
      %1419 = vset.pattern.permute.xlu0 0
      %1420 = vperm.xlu0 %1419, %v1265
      %v1421 = vpop.permute.xlu0 %1420
      %1424 = vset.pattern.permute.xlu0 0
      %1425 = vperm.xlu0 %1424, %v1266
      %v1426 = vpop.permute.xlu0 %1425
      %v1428 = vlaneseq
      %v1429 = vshrl.u32 %v1428, 7
      %v1430 = vsub.s32 0, %v1429
      %v1431 = vrot.slane %v1267, %v1430
      %v1432 = vmul.f32 %v1271, %v1431
      %v1433 = vmul.f32 %v1276, %v1431
      %v1434 = vmul.f32 %v1281, %v1431
      %v1435 = vmul.f32 %v1286, %v1431
      %v1436 = vmul.f32 %v1291, %v1431
      %v1437 = vmul.f32 %v1296, %v1431
      %v1438 = vmul.f32 %v1301, %v1431
      %v1439 = vmul.f32 %v1306, %v1431
      %v1440 = vmul.f32 %v1311, %v1431
      %v1441 = vmul.f32 %v1316, %v1431
      %v1442 = vmul.f32 %v1321, %v1431
      %v1443 = vmul.f32 %v1326, %v1431
      %v1444 = vmul.f32 %v1331, %v1431
      %v1445 = vmul.f32 %v1336, %v1431
      %v1446 = vmul.f32 %v1341, %v1431
      %v1447 = vmul.f32 %v1346, %v1431
      %v1448 = vmul.f32 %v1351, %v1431
      %v1449 = vmul.f32 %v1356, %v1431
      %v1450 = vmul.f32 %v1361, %v1431
      %v1451 = vmul.f32 %v1366, %v1431
      %v1452 = vmul.f32 %v1371, %v1431
      %v1453 = vmul.f32 %v1376, %v1431
      %v1454 = vmul.f32 %v1381, %v1431
      %v1455 = vmul.f32 %v1386, %v1431
      %v1456 = vmul.f32 %v1391, %v1431
      %v1457 = vmul.f32 %v1396, %v1431
      %v1458 = vmul.f32 %v1401, %v1431
      %v1459 = vmul.f32 %v1406, %v1431
      %v1460 = vmul.f32 %v1411, %v1431
      %v1461 = vmul.f32 %v1416, %v1431
      %v1462 = vmul.f32 %v1421, %v1431
      %v1463 = vmul.f32 %v1426, %v1431
      %v1464 = vadd.f32 %v1203, %v1432
      %v1465 = vadd.f32 %v1204, %v1433
      %v1466 = vadd.f32 %v1205, %v1434
      %v1467 = vadd.f32 %v1206, %v1435
      %v1468 = vadd.f32 %v1207, %v1436
      %v1469 = vadd.f32 %v1208, %v1437
      %v1470 = vadd.f32 %v1209, %v1438
      %v1471 = vadd.f32 %v1210, %v1439
      %v1472 = vadd.f32 %v1211, %v1440
      %v1473 = vadd.f32 %v1212, %v1441
      %v1474 = vadd.f32 %v1213, %v1442
      %v1475 = vadd.f32 %v1214, %v1443
      %v1476 = vadd.f32 %v1215, %v1444
      %v1477 = vadd.f32 %v1216, %v1445
      %v1478 = vadd.f32 %v1217, %v1446
      %v1479 = vadd.f32 %v1218, %v1447
      %v1480 = vadd.f32 %v1219, %v1448
      %v1481 = vadd.f32 %v1220, %v1449
      %v1482 = vadd.f32 %v1221, %v1450
      %v1483 = vadd.f32 %v1222, %v1451
      %v1484 = vadd.f32 %v1223, %v1452
      %v1485 = vadd.f32 %v1224, %v1453
      %v1486 = vadd.f32 %v1225, %v1454
      %v1487 = vadd.f32 %v1226, %v1455
      %v1488 = vadd.f32 %v1227, %v1456
      %v1489 = vadd.f32 %v1228, %v1457
      %v1490 = vadd.f32 %v1229, %v1458
      %v1491 = vadd.f32 %v1230, %v1459
      %v1492 = vadd.f32 %v1231, %v1460
      %v1493 = vadd.f32 %v1232, %v1461
      %v1494 = vadd.f32 %v1233, %v1462
      %v1495 = vadd.f32 %v1234, %v1463
      %v1496 = vld [vmem:[%s419 + $0x1] sm:$0xff]
      %v1497 = vld [vmem:[%s419 + $0x9] sm:$0xff]
      %v1498 = vld [vmem:[%s419 + $0x19] sm:$0xff]
      %v1499 = vld [vmem:[%s419 + $0x21] sm:$0xff]
      %v1500 = vld [vmem:[%s419 + $0x31] sm:$0xff]
      %v1501 = vld [vmem:[%s419 + $0x39] sm:$0xff]
      %v1502 = vld [vmem:[%s419 + $0x49] sm:$0xff]
      %v1503 = vld [vmem:[%s419 + $0x51] sm:$0xff]
      %v1504 = vld [vmem:[%s419 + $0x61] sm:$0xff]
      %v1505 = vld [vmem:[%s419 + $0x69] sm:$0xff]
      %v1506 = vld [vmem:[%s419 + $0x79] sm:$0xff]
      %v1507 = vld [vmem:[%s419 + $0x81] sm:$0xff]
      %v1508 = vld [vmem:[%s419 + $0x91] sm:$0xff]
      %v1509 = vld [vmem:[%s419 + $0x99] sm:$0xff]
      %v1510 = vld [vmem:[%s419 + $0xa9] sm:$0xff]
      %v1511 = vld [vmem:[%s419 + $0xb1] sm:$0xff]
      %v1512 = vld [vmem:[%s419 + $0xc1] sm:$0xff]
      %v1513 = vld [vmem:[%s419 + $0xc9] sm:$0xff]
      %v1514 = vld [vmem:[%s419 + $0xd9] sm:$0xff]
      %v1515 = vld [vmem:[%s419 + $0xe1] sm:$0xff]
      %v1516 = vld [vmem:[%s419 + $0xf1] sm:$0xff]
      %v1517 = vld [vmem:[%s419 + $0xf9] sm:$0xff]
      %v1518 = vld [vmem:[%s419 + $0x109] sm:$0xff]
      %v1519 = vld [vmem:[%s419 + $0x111] sm:$0xff]
      %v1520 = vld [vmem:[%s419 + $0x121] sm:$0xff]
      %v1521 = vld [vmem:[%s419 + $0x129] sm:$0xff]
      %v1522 = vld [vmem:[%s419 + $0x139] sm:$0xff]
      %v1523 = vld [vmem:[%s419 + $0x141] sm:$0xff]
      %v1524 = vld [vmem:[%s419 + $0x151] sm:$0xff]
      %v1525 = vld [vmem:[%s419 + $0x159] sm:$0xff]
      %v1526 = vld [vmem:[%s419 + $0x169] sm:$0xff]
      %v1527 = vld [vmem:[%s419 + $0x171] sm:$0xff]
      %v1528 = vld [vmem:[%s1 + $0x4] sm:$0x1]
      %1530 = vset.pattern.permute.xlu0 0
      %1531 = vperm.xlu0 %1530, %v1496
      %v1532 = vpop.permute.xlu0 %1531
      %1535 = vset.pattern.permute.xlu0 0
      %1536 = vperm.xlu0 %1535, %v1497
      %v1537 = vpop.permute.xlu0 %1536
      %1540 = vset.pattern.permute.xlu0 0
      %1541 = vperm.xlu0 %1540, %v1498
      %v1542 = vpop.permute.xlu0 %1541
      %1545 = vset.pattern.permute.xlu0 0
      %1546 = vperm.xlu0 %1545, %v1499
      %v1547 = vpop.permute.xlu0 %1546
      %1550 = vset.pattern.permute.xlu0 0
      %1551 = vperm.xlu0 %1550, %v1500
      %v1552 = vpop.permute.xlu0 %1551
      %1555 = vset.pattern.permute.xlu0 0
      %1556 = vperm.xlu0 %1555, %v1501
      %v1557 = vpop.permute.xlu0 %1556
      %1560 = vset.pattern.permute.xlu0 0
      %1561 = vperm.xlu0 %1560, %v1502
      %v1562 = vpop.permute.xlu0 %1561
      %1565 = vset.pattern.permute.xlu0 0
      %1566 = vperm.xlu0 %1565, %v1503
      %v1567 = vpop.permute.xlu0 %1566
      %1570 = vset.pattern.permute.xlu0 0
      %1571 = vperm.xlu0 %1570, %v1504
      %v1572 = vpop.permute.xlu0 %1571
      %1575 = vset.pattern.permute.xlu0 0
      %1576 = vperm.xlu0 %1575, %v1505
      %v1577 = vpop.permute.xlu0 %1576
      %1580 = vset.pattern.permute.xlu0 0
      %1581 = vperm.xlu0 %1580, %v1506
      %v1582 = vpop.permute.xlu0 %1581
      %1585 = vset.pattern.permute.xlu0 0
      %1586 = vperm.xlu0 %1585, %v1507
      %v1587 = vpop.permute.xlu0 %1586
      %1590 = vset.pattern.permute.xlu0 0
      %1591 = vperm.xlu0 %1590, %v1508
      %v1592 = vpop.permute.xlu0 %1591
      %1595 = vset.pattern.permute.xlu0 0
      %1596 = vperm.xlu0 %1595, %v1509
      %v1597 = vpop.permute.xlu0 %1596
      %1600 = vset.pattern.permute.xlu0 0
      %1601 = vperm.xlu0 %1600, %v1510
      %v1602 = vpop.permute.xlu0 %1601
      %1605 = vset.pattern.permute.xlu0 0
      %1606 = vperm.xlu0 %1605, %v1511
      %v1607 = vpop.permute.xlu0 %1606
      %1610 = vset.pattern.permute.xlu0 0
      %1611 = vperm.xlu0 %1610, %v1512
      %v1612 = vpop.permute.xlu0 %1611
      %1615 = vset.pattern.permute.xlu0 0
      %1616 = vperm.xlu0 %1615, %v1513
      %v1617 = vpop.permute.xlu0 %1616
      %1620 = vset.pattern.permute.xlu0 0
      %1621 = vperm.xlu0 %1620, %v1514
      %v1622 = vpop.permute.xlu0 %1621
      %1625 = vset.pattern.permute.xlu0 0
      %1626 = vperm.xlu0 %1625, %v1515
      %v1627 = vpop.permute.xlu0 %1626
      %1630 = vset.pattern.permute.xlu0 0
      %1631 = vperm.xlu0 %1630, %v1516
      %v1632 = vpop.permute.xlu0 %1631
      %1635 = vset.pattern.permute.xlu0 0
      %1636 = vperm.xlu0 %1635, %v1517
      %v1637 = vpop.permute.xlu0 %1636
      %1640 = vset.pattern.permute.xlu0 0
      %1641 = vperm.xlu0 %1640, %v1518
      %v1642 = vpop.permute.xlu0 %1641
      %1645 = vset.pattern.permute.xlu0 0
      %1646 = vperm.xlu0 %1645, %v1519
      %v1647 = vpop.permute.xlu0 %1646
      %1650 = vset.pattern.permute.xlu0 0
      %1651 = vperm.xlu0 %1650, %v1520
      %v1652 = vpop.permute.xlu0 %1651
      %1655 = vset.pattern.permute.xlu0 0
      %1656 = vperm.xlu0 %1655, %v1521
      %v1657 = vpop.permute.xlu0 %1656
      %1660 = vset.pattern.permute.xlu0 0
      %1661 = vperm.xlu0 %1660, %v1522
      %v1662 = vpop.permute.xlu0 %1661
      %1665 = vset.pattern.permute.xlu0 0
      %1666 = vperm.xlu0 %1665, %v1523
      %v1667 = vpop.permute.xlu0 %1666
      %1670 = vset.pattern.permute.xlu0 0
      %1671 = vperm.xlu0 %1670, %v1524
      %v1672 = vpop.permute.xlu0 %1671
      %1675 = vset.pattern.permute.xlu0 0
      %1676 = vperm.xlu0 %1675, %v1525
      %v1677 = vpop.permute.xlu0 %1676
      %1680 = vset.pattern.permute.xlu0 0
      %1681 = vperm.xlu0 %1680, %v1526
      %v1682 = vpop.permute.xlu0 %1681
      %1685 = vset.pattern.permute.xlu0 0
      %1686 = vperm.xlu0 %1685, %v1527
      %v1687 = vpop.permute.xlu0 %1686
      %v1689 = vlaneseq
      %v1690 = vshrl.u32 %v1689, 7
      %v1691 = vsub.s32 0, %v1690
      %v1692 = vrot.slane %v1528, %v1691
      %v1693 = vmul.f32 %v1532, %v1692
      %v1694 = vmul.f32 %v1537, %v1692
      %v1695 = vmul.f32 %v1542, %v1692
      %v1696 = vmul.f32 %v1547, %v1692
      %v1697 = vmul.f32 %v1552, %v1692
      %v1698 = vmul.f32 %v1557, %v1692
      %v1699 = vmul.f32 %v1562, %v1692
      %v1700 = vmul.f32 %v1567, %v1692
      %v1701 = vmul.f32 %v1572, %v1692
      %v1702 = vmul.f32 %v1577, %v1692
      %v1703 = vmul.f32 %v1582, %v1692
      %v1704 = vmul.f32 %v1587, %v1692
      %v1705 = vmul.f32 %v1592, %v1692
      %v1706 = vmul.f32 %v1597, %v1692
      %v1707 = vmul.f32 %v1602, %v1692
      %v1708 = vmul.f32 %v1607, %v1692
      %v1709 = vmul.f32 %v1612, %v1692
      %v1710 = vmul.f32 %v1617, %v1692
      %v1711 = vmul.f32 %v1622, %v1692
      %v1712 = vmul.f32 %v1627, %v1692
      %v1713 = vmul.f32 %v1632, %v1692
      %v1714 = vmul.f32 %v1637, %v1692
      %v1715 = vmul.f32 %v1642, %v1692
      %v1716 = vmul.f32 %v1647, %v1692
      %v1717 = vmul.f32 %v1652, %v1692
      %v1718 = vmul.f32 %v1657, %v1692
      %v1719 = vmul.f32 %v1662, %v1692
      %v1720 = vmul.f32 %v1667, %v1692
      %v1721 = vmul.f32 %v1672, %v1692
      %v1722 = vmul.f32 %v1677, %v1692
      %v1723 = vmul.f32 %v1682, %v1692
      %v1724 = vmul.f32 %v1687, %v1692
      %v1725 = vadd.f32 %v1464, %v1693
      %v1726 = vadd.f32 %v1465, %v1694
      %v1727 = vadd.f32 %v1466, %v1695
      %v1728 = vadd.f32 %v1467, %v1696
      %v1729 = vadd.f32 %v1468, %v1697
      %v1730 = vadd.f32 %v1469, %v1698
      %v1731 = vadd.f32 %v1470, %v1699
      %v1732 = vadd.f32 %v1471, %v1700
      %v1733 = vadd.f32 %v1472, %v1701
      %v1734 = vadd.f32 %v1473, %v1702
      %v1735 = vadd.f32 %v1474, %v1703
      %v1736 = vadd.f32 %v1475, %v1704
      %v1737 = vadd.f32 %v1476, %v1705
      %v1738 = vadd.f32 %v1477, %v1706
      %v1739 = vadd.f32 %v1478, %v1707
      %v1740 = vadd.f32 %v1479, %v1708
      %v1741 = vadd.f32 %v1480, %v1709
      %v1742 = vadd.f32 %v1481, %v1710
      %v1743 = vadd.f32 %v1482, %v1711
      %v1744 = vadd.f32 %v1483, %v1712
      %v1745 = vadd.f32 %v1484, %v1713
      %v1746 = vadd.f32 %v1485, %v1714
      %v1747 = vadd.f32 %v1486, %v1715
      %v1748 = vadd.f32 %v1487, %v1716
      %v1749 = vadd.f32 %v1488, %v1717
      %v1750 = vadd.f32 %v1489, %v1718
      %v1751 = vadd.f32 %v1490, %v1719
      %v1752 = vadd.f32 %v1491, %v1720
      %v1753 = vadd.f32 %v1492, %v1721
      %v1754 = vadd.f32 %v1493, %v1722
      %v1755 = vadd.f32 %v1494, %v1723
      %v1756 = vadd.f32 %v1495, %v1724
      %v1757 = vld [vmem:[%s419 + $0x2] sm:$0xff]
      %v1758 = vld [vmem:[%s419 + $0xa] sm:$0xff]
      %v1759 = vld [vmem:[%s419 + $0x1a] sm:$0xff]
      %v1760 = vld [vmem:[%s419 + $0x22] sm:$0xff]
      %v1761 = vld [vmem:[%s419 + $0x32] sm:$0xff]
      %v1762 = vld [vmem:[%s419 + $0x3a] sm:$0xff]
      %v1763 = vld [vmem:[%s419 + $0x4a] sm:$0xff]
      %v1764 = vld [vmem:[%s419 + $0x52] sm:$0xff]
      %v1765 = vld [vmem:[%s419 + $0x62] sm:$0xff]
      %v1766 = vld [vmem:[%s419 + $0x6a] sm:$0xff]
      %v1767 = vld [vmem:[%s419 + $0x7a] sm:$0xff]
      %v1768 = vld [vmem:[%s419 + $0x82] sm:$0xff]
      %v1769 = vld [vmem:[%s419 + $0x92] sm:$0xff]
      %v1770 = vld [vmem:[%s419 + $0x9a] sm:$0xff]
      %v1771 = vld [vmem:[%s419 + $0xaa] sm:$0xff]
      %v1772 = vld [vmem:[%s419 + $0xb2] sm:$0xff]
      %v1773 = vld [vmem:[%s419 + $0xc2] sm:$0xff]
      %v1774 = vld [vmem:[%s419 + $0xca] sm:$0xff]
      %v1775 = vld [vmem:[%s419 + $0xda] sm:$0xff]
      %v1776 = vld [vmem:[%s419 + $0xe2] sm:$0xff]
      %v1777 = vld [vmem:[%s419 + $0xf2] sm:$0xff]
      %v1778 = vld [vmem:[%s419 + $0xfa] sm:$0xff]
      %v1779 = vld [vmem:[%s419 + $0x10a] sm:$0xff]
      %v1780 = vld [vmem:[%s419 + $0x112] sm:$0xff]
      %v1781 = vld [vmem:[%s419 + $0x122] sm:$0xff]
      %v1782 = vld [vmem:[%s419 + $0x12a] sm:$0xff]
      %v1783 = vld [vmem:[%s419 + $0x13a] sm:$0xff]
      %v1784 = vld [vmem:[%s419 + $0x142] sm:$0xff]
      %v1785 = vld [vmem:[%s419 + $0x152] sm:$0xff]
      %v1786 = vld [vmem:[%s419 + $0x15a] sm:$0xff]
      %v1787 = vld [vmem:[%s419 + $0x16a] sm:$0xff]
      %v1788 = vld [vmem:[%s419 + $0x172] sm:$0xff]
      %v1789 = vld [vmem:[%s1 + $0x5] sm:$0x1]
      %1791 = vset.pattern.permute.xlu0 0
      %1792 = vperm.xlu0 %1791, %v1757
      %v1793 = vpop.permute.xlu0 %1792
      %1796 = vset.pattern.permute.xlu0 0
      %1797 = vperm.xlu0 %1796, %v1758
      %v1798 = vpop.permute.xlu0 %1797
      %1801 = vset.pattern.permute.xlu0 0
      %1802 = vperm.xlu0 %1801, %v1759
      %v1803 = vpop.permute.xlu0 %1802
      %1806 = vset.pattern.permute.xlu0 0
      %1807 = vperm.xlu0 %1806, %v1760
      %v1808 = vpop.permute.xlu0 %1807
      %1811 = vset.pattern.permute.xlu0 0
      %1812 = vperm.xlu0 %1811, %v1761
      %v1813 = vpop.permute.xlu0 %1812
      %1816 = vset.pattern.permute.xlu0 0
      %1817 = vperm.xlu0 %1816, %v1762
      %v1818 = vpop.permute.xlu0 %1817
      %1821 = vset.pattern.permute.xlu0 0
      %1822 = vperm.xlu0 %1821, %v1763
      %v1823 = vpop.permute.xlu0 %1822
      %1826 = vset.pattern.permute.xlu0 0
      %1827 = vperm.xlu0 %1826, %v1764
      %v1828 = vpop.permute.xlu0 %1827
      %1831 = vset.pattern.permute.xlu0 0
      %1832 = vperm.xlu0 %1831, %v1765
      %v1833 = vpop.permute.xlu0 %1832
      %1836 = vset.pattern.permute.xlu0 0
      %1837 = vperm.xlu0 %1836, %v1766
      %v1838 = vpop.permute.xlu0 %1837
      %1841 = vset.pattern.permute.xlu0 0
      %1842 = vperm.xlu0 %1841, %v1767
      %v1843 = vpop.permute.xlu0 %1842
      %1846 = vset.pattern.permute.xlu0 0
      %1847 = vperm.xlu0 %1846, %v1768
      %v1848 = vpop.permute.xlu0 %1847
      %1851 = vset.pattern.permute.xlu0 0
      %1852 = vperm.xlu0 %1851, %v1769
      %v1853 = vpop.permute.xlu0 %1852
      %1856 = vset.pattern.permute.xlu0 0
      %1857 = vperm.xlu0 %1856, %v1770
      %v1858 = vpop.permute.xlu0 %1857
      %1861 = vset.pattern.permute.xlu0 0
      %1862 = vperm.xlu0 %1861, %v1771
      %v1863 = vpop.permute.xlu0 %1862
      %1866 = vset.pattern.permute.xlu0 0
      %1867 = vperm.xlu0 %1866, %v1772
      %v1868 = vpop.permute.xlu0 %1867
      %1871 = vset.pattern.permute.xlu0 0
      %1872 = vperm.xlu0 %1871, %v1773
      %v1873 = vpop.permute.xlu0 %1872
      %1876 = vset.pattern.permute.xlu0 0
      %1877 = vperm.xlu0 %1876, %v1774
      %v1878 = vpop.permute.xlu0 %1877
      %1881 = vset.pattern.permute.xlu0 0
      %1882 = vperm.xlu0 %1881, %v1775
      %v1883 = vpop.permute.xlu0 %1882
      %1886 = vset.pattern.permute.xlu0 0
      %1887 = vperm.xlu0 %1886, %v1776
      %v1888 = vpop.permute.xlu0 %1887
      %1891 = vset.pattern.permute.xlu0 0
      %1892 = vperm.xlu0 %1891, %v1777
      %v1893 = vpop.permute.xlu0 %1892
      %1896 = vset.pattern.permute.xlu0 0
      %1897 = vperm.xlu0 %1896, %v1778
      %v1898 = vpop.permute.xlu0 %1897
      %1901 = vset.pattern.permute.xlu0 0
      %1902 = vperm.xlu0 %1901, %v1779
      %v1903 = vpop.permute.xlu0 %1902
      %1906 = vset.pattern.permute.xlu0 0
      %1907 = vperm.xlu0 %1906, %v1780
      %v1908 = vpop.permute.xlu0 %1907
      %1911 = vset.pattern.permute.xlu0 0
      %1912 = vperm.xlu0 %1911, %v1781
      %v1913 = vpop.permute.xlu0 %1912
      %1916 = vset.pattern.permute.xlu0 0
      %1917 = vperm.xlu0 %1916, %v1782
      %v1918 = vpop.permute.xlu0 %1917
      %1921 = vset.pattern.permute.xlu0 0
      %1922 = vperm.xlu0 %1921, %v1783
      %v1923 = vpop.permute.xlu0 %1922
      %1926 = vset.pattern.permute.xlu0 0
      %1927 = vperm.xlu0 %1926, %v1784
      %v1928 = vpop.permute.xlu0 %1927
      %1931 = vset.pattern.permute.xlu0 0
      %1932 = vperm.xlu0 %1931, %v1785
      %v1933 = vpop.permute.xlu0 %1932
      %1936 = vset.pattern.permute.xlu0 0
      %1937 = vperm.xlu0 %1936, %v1786
      %v1938 = vpop.permute.xlu0 %1937
      %1941 = vset.pattern.permute.xlu0 0
      %1942 = vperm.xlu0 %1941, %v1787
      %v1943 = vpop.permute.xlu0 %1942
      %1946 = vset.pattern.permute.xlu0 0
      %1947 = vperm.xlu0 %1946, %v1788
      %v1948 = vpop.permute.xlu0 %1947
      %v1950 = vlaneseq
      %v1951 = vshrl.u32 %v1950, 7
      %v1952 = vsub.s32 0, %v1951
      %v1953 = vrot.slane %v1789, %v1952
      %v1954 = vmul.f32 %v1793, %v1953
      %v1955 = vmul.f32 %v1798, %v1953
      %v1956 = vmul.f32 %v1803, %v1953
      %v1957 = vmul.f32 %v1808, %v1953
      %v1958 = vmul.f32 %v1813, %v1953
      %v1959 = vmul.f32 %v1818, %v1953
      %v1960 = vmul.f32 %v1823, %v1953
      %v1961 = vmul.f32 %v1828, %v1953
      %v1962 = vmul.f32 %v1833, %v1953
      %v1963 = vmul.f32 %v1838, %v1953
      %v1964 = vmul.f32 %v1843, %v1953
      %v1965 = vmul.f32 %v1848, %v1953
      %v1966 = vmul.f32 %v1853, %v1953
      %v1967 = vmul.f32 %v1858, %v1953
      %v1968 = vmul.f32 %v1863, %v1953
      %v1969 = vmul.f32 %v1868, %v1953
      %v1970 = vmul.f32 %v1873, %v1953
      %v1971 = vmul.f32 %v1878, %v1953
      %v1972 = vmul.f32 %v1883, %v1953
      %v1973 = vmul.f32 %v1888, %v1953
      %v1974 = vmul.f32 %v1893, %v1953
      %v1975 = vmul.f32 %v1898, %v1953
      %v1976 = vmul.f32 %v1903, %v1953
      %v1977 = vmul.f32 %v1908, %v1953
      %v1978 = vmul.f32 %v1913, %v1953
      %v1979 = vmul.f32 %v1918, %v1953
      %v1980 = vmul.f32 %v1923, %v1953
      %v1981 = vmul.f32 %v1928, %v1953
      %v1982 = vmul.f32 %v1933, %v1953
      %v1983 = vmul.f32 %v1938, %v1953
      %v1984 = vmul.f32 %v1943, %v1953
      %v1985 = vmul.f32 %v1948, %v1953
      %v1986 = vadd.f32 %v1725, %v1954
      %v1987 = vadd.f32 %v1726, %v1955
      %v1988 = vadd.f32 %v1727, %v1956
      %v1989 = vadd.f32 %v1728, %v1957
      %v1990 = vadd.f32 %v1729, %v1958
      %v1991 = vadd.f32 %v1730, %v1959
      %v1992 = vadd.f32 %v1731, %v1960
      %v1993 = vadd.f32 %v1732, %v1961
      %v1994 = vadd.f32 %v1733, %v1962
      %v1995 = vadd.f32 %v1734, %v1963
      %v1996 = vadd.f32 %v1735, %v1964
      %v1997 = vadd.f32 %v1736, %v1965
      %v1998 = vadd.f32 %v1737, %v1966
      %v1999 = vadd.f32 %v1738, %v1967
      %v2000 = vadd.f32 %v1739, %v1968
      %v2001 = vadd.f32 %v1740, %v1969
      %v2002 = vadd.f32 %v1741, %v1970
      %v2003 = vadd.f32 %v1742, %v1971
      %v2004 = vadd.f32 %v1743, %v1972
      %v2005 = vadd.f32 %v1744, %v1973
      %v2006 = vadd.f32 %v1745, %v1974
      %v2007 = vadd.f32 %v1746, %v1975
      %v2008 = vadd.f32 %v1747, %v1976
      %v2009 = vadd.f32 %v1748, %v1977
      %v2010 = vadd.f32 %v1749, %v1978
      %v2011 = vadd.f32 %v1750, %v1979
      %v2012 = vadd.f32 %v1751, %v1980
      %v2013 = vadd.f32 %v1752, %v1981
      %v2014 = vadd.f32 %v1753, %v1982
      %v2015 = vadd.f32 %v1754, %v1983
      %v2016 = vadd.f32 %v1755, %v1984
      %v2017 = vadd.f32 %v1756, %v1985
      %s2018 = scalar_lea.vmem [#allocation2], 48
      %v2019 = vld [vmem:[%s2018] sm:$0xff]
      %v2020 = vld [vmem:[%s2018 + $0x8] sm:$0xff]
      %v2021 = vld [vmem:[%s2018 + $0x18] sm:$0xff]
      %v2022 = vld [vmem:[%s2018 + $0x20] sm:$0xff]
      %v2023 = vld [vmem:[%s2018 + $0x30] sm:$0xff]
      %v2024 = vld [vmem:[%s2018 + $0x38] sm:$0xff]
      %v2025 = vld [vmem:[%s2018 + $0x48] sm:$0xff]
      %v2026 = vld [vmem:[%s2018 + $0x50] sm:$0xff]
      %v2027 = vld [vmem:[%s2018 + $0x60] sm:$0xff]
      %v2028 = vld [vmem:[%s2018 + $0x68] sm:$0xff]
      %v2029 = vld [vmem:[%s2018 + $0x78] sm:$0xff]
      %v2030 = vld [vmem:[%s2018 + $0x80] sm:$0xff]
      %v2031 = vld [vmem:[%s2018 + $0x90] sm:$0xff]
      %v2032 = vld [vmem:[%s2018 + $0x98] sm:$0xff]
      %v2033 = vld [vmem:[%s2018 + $0xa8] sm:$0xff]
      %v2034 = vld [vmem:[%s2018 + $0xb0] sm:$0xff]
      %v2035 = vld [vmem:[%s2018 + $0xc0] sm:$0xff]
      %v2036 = vld [vmem:[%s2018 + $0xc8] sm:$0xff]
      %v2037 = vld [vmem:[%s2018 + $0xd8] sm:$0xff]
      %v2038 = vld [vmem:[%s2018 + $0xe0] sm:$0xff]
      %v2039 = vld [vmem:[%s2018 + $0xf0] sm:$0xff]
      %v2040 = vld [vmem:[%s2018 + $0xf8] sm:$0xff]
      %v2041 = vld [vmem:[%s2018 + $0x108] sm:$0xff]
      %v2042 = vld [vmem:[%s2018 + $0x110] sm:$0xff]
      %v2043 = vld [vmem:[%s2018 + $0x120] sm:$0xff]
      %v2044 = vld [vmem:[%s2018 + $0x128] sm:$0xff]
      %v2045 = vld [vmem:[%s2018 + $0x138] sm:$0xff]
      %v2046 = vld [vmem:[%s2018 + $0x140] sm:$0xff]
      %v2047 = vld [vmem:[%s2018 + $0x150] sm:$0xff]
      %v2048 = vld [vmem:[%s2018 + $0x158] sm:$0xff]
      %v2049 = vld [vmem:[%s2018 + $0x168] sm:$0xff]
      %v2050 = vld [vmem:[%s2018 + $0x170] sm:$0xff]
      %v2051 = vld [vmem:[%s1 + $0x6] sm:$0x1]
      %2053 = vset.pattern.permute.xlu0 0
      %2054 = vperm.xlu0 %2053, %v2019
      %v2055 = vpop.permute.xlu0 %2054
      %2058 = vset.pattern.permute.xlu0 0
      %2059 = vperm.xlu0 %2058, %v2020
      %v2060 = vpop.permute.xlu0 %2059
      %2063 = vset.pattern.permute.xlu0 0
      %2064 = vperm.xlu0 %2063, %v2021
      %v2065 = vpop.permute.xlu0 %2064
      %2068 = vset.pattern.permute.xlu0 0
      %2069 = vperm.xlu0 %2068, %v2022
      %v2070 = vpop.permute.xlu0 %2069
      %2073 = vset.pattern.permute.xlu0 0
      %2074 = vperm.xlu0 %2073, %v2023
      %v2075 = vpop.permute.xlu0 %2074
      %2078 = vset.pattern.permute.xlu0 0
      %2079 = vperm.xlu0 %2078, %v2024
      %v2080 = vpop.permute.xlu0 %2079
      %2083 = vset.pattern.permute.xlu0 0
      %2084 = vperm.xlu0 %2083, %v2025
      %v2085 = vpop.permute.xlu0 %2084
      %2088 = vset.pattern.permute.xlu0 0
      %2089 = vperm.xlu0 %2088, %v2026
      %v2090 = vpop.permute.xlu0 %2089
      %2093 = vset.pattern.permute.xlu0 0
      %2094 = vperm.xlu0 %2093, %v2027
      %v2095 = vpop.permute.xlu0 %2094
      %2098 = vset.pattern.permute.xlu0 0
      %2099 = vperm.xlu0 %2098, %v2028
      %v2100 = vpop.permute.xlu0 %2099
      %2103 = vset.pattern.permute.xlu0 0
      %2104 = vperm.xlu0 %2103, %v2029
      %v2105 = vpop.permute.xlu0 %2104
      %2108 = vset.pattern.permute.xlu0 0
      %2109 = vperm.xlu0 %2108, %v2030
      %v2110 = vpop.permute.xlu0 %2109
      %2113 = vset.pattern.permute.xlu0 0
      %2114 = vperm.xlu0 %2113, %v2031
      %v2115 = vpop.permute.xlu0 %2114
      %2118 = vset.pattern.permute.xlu0 0
      %2119 = vperm.xlu0 %2118, %v2032
      %v2120 = vpop.permute.xlu0 %2119
      %2123 = vset.pattern.permute.xlu0 0
      %2124 = vperm.xlu0 %2123, %v2033
      %v2125 = vpop.permute.xlu0 %2124
      %2128 = vset.pattern.permute.xlu0 0
      %2129 = vperm.xlu0 %2128, %v2034
      %v2130 = vpop.permute.xlu0 %2129
      %2133 = vset.pattern.permute.xlu0 0
      %2134 = vperm.xlu0 %2133, %v2035
      %v2135 = vpop.permute.xlu0 %2134
      %2138 = vset.pattern.permute.xlu0 0
      %2139 = vperm.xlu0 %2138, %v2036
      %v2140 = vpop.permute.xlu0 %2139
      %2143 = vset.pattern.permute.xlu0 0
      %2144 = vperm.xlu0 %2143, %v2037
      %v2145 = vpop.permute.xlu0 %2144
      %2148 = vset.pattern.permute.xlu0 0
      %2149 = vperm.xlu0 %2148, %v2038
      %v2150 = vpop.permute.xlu0 %2149
      %2153 = vset.pattern.permute.xlu0 0
      %2154 = vperm.xlu0 %2153, %v2039
      %v2155 = vpop.permute.xlu0 %2154
      %2158 = vset.pattern.permute.xlu0 0
      %2159 = vperm.xlu0 %2158, %v2040
      %v2160 = vpop.permute.xlu0 %2159
      %2163 = vset.pattern.permute.xlu0 0
      %2164 = vperm.xlu0 %2163, %v2041
      %v2165 = vpop.permute.xlu0 %2164
      %2168 = vset.pattern.permute.xlu0 0
      %2169 = vperm.xlu0 %2168, %v2042
      %v2170 = vpop.permute.xlu0 %2169
      %2173 = vset.pattern.permute.xlu0 0
      %2174 = vperm.xlu0 %2173, %v2043
      %v2175 = vpop.permute.xlu0 %2174
      %2178 = vset.pattern.permute.xlu0 0
      %2179 = vperm.xlu0 %2178, %v2044
      %v2180 = vpop.permute.xlu0 %2179
      %2183 = vset.pattern.permute.xlu0 0
      %2184 = vperm.xlu0 %2183, %v2045
      %v2185 = vpop.permute.xlu0 %2184
      %2188 = vset.pattern.permute.xlu0 0
      %2189 = vperm.xlu0 %2188, %v2046
      %v2190 = vpop.permute.xlu0 %2189
      %2193 = vset.pattern.permute.xlu0 0
      %2194 = vperm.xlu0 %2193, %v2047
      %v2195 = vpop.permute.xlu0 %2194
      %2198 = vset.pattern.permute.xlu0 0
      %2199 = vperm.xlu0 %2198, %v2048
      %v2200 = vpop.permute.xlu0 %2199
      %2203 = vset.pattern.permute.xlu0 0
      %2204 = vperm.xlu0 %2203, %v2049
      %v2205 = vpop.permute.xlu0 %2204
      %2208 = vset.pattern.permute.xlu0 0
      %2209 = vperm.xlu0 %2208, %v2050
      %v2210 = vpop.permute.xlu0 %2209
      %v2212 = vlaneseq
      %v2213 = vshrl.u32 %v2212, 7
      %v2214 = vsub.s32 0, %v2213
      %v2215 = vrot.slane %v2051, %v2214
      %v2216 = vmul.f32 %v2055, %v2215
      %v2217 = vmul.f32 %v2060, %v2215
      %v2218 = vmul.f32 %v2065, %v2215
      %v2219 = vmul.f32 %v2070, %v2215
      %v2220 = vmul.f32 %v2075, %v2215
      %v2221 = vmul.f32 %v2080, %v2215
      %v2222 = vmul.f32 %v2085, %v2215
      %v2223 = vmul.f32 %v2090, %v2215
      %v2224 = vmul.f32 %v2095, %v2215
      %v2225 = vmul.f32 %v2100, %v2215
      %v2226 = vmul.f32 %v2105, %v2215
      %v2227 = vmul.f32 %v2110, %v2215
      %v2228 = vmul.f32 %v2115, %v2215
      %v2229 = vmul.f32 %v2120, %v2215
      %v2230 = vmul.f32 %v2125, %v2215
      %v2231 = vmul.f32 %v2130, %v2215
      %v2232 = vmul.f32 %v2135, %v2215
      %v2233 = vmul.f32 %v2140, %v2215
      %v2234 = vmul.f32 %v2145, %v2215
      %v2235 = vmul.f32 %v2150, %v2215
      %v2236 = vmul.f32 %v2155, %v2215
      %v2237 = vmul.f32 %v2160, %v2215
      %v2238 = vmul.f32 %v2165, %v2215
      %v2239 = vmul.f32 %v2170, %v2215
      %v2240 = vmul.f32 %v2175, %v2215
      %v2241 = vmul.f32 %v2180, %v2215
      %v2242 = vmul.f32 %v2185, %v2215
      %v2243 = vmul.f32 %v2190, %v2215
      %v2244 = vmul.f32 %v2195, %v2215
      %v2245 = vmul.f32 %v2200, %v2215
      %v2246 = vmul.f32 %v2205, %v2215
      %v2247 = vmul.f32 %v2210, %v2215
      %v2248 = vadd.f32 %v1986, %v2216
      %v2249 = vadd.f32 %v1987, %v2217
      %v2250 = vadd.f32 %v1988, %v2218
      %v2251 = vadd.f32 %v1989, %v2219
      %v2252 = vadd.f32 %v1990, %v2220
      %v2253 = vadd.f32 %v1991, %v2221
      %v2254 = vadd.f32 %v1992, %v2222
      %v2255 = vadd.f32 %v1993, %v2223
      %v2256 = vadd.f32 %v1994, %v2224
      %v2257 = vadd.f32 %v1995, %v2225
      %v2258 = vadd.f32 %v1996, %v2226
      %v2259 = vadd.f32 %v1997, %v2227
      %v2260 = vadd.f32 %v1998, %v2228
      %v2261 = vadd.f32 %v1999, %v2229
      %v2262 = vadd.f32 %v2000, %v2230
      %v2263 = vadd.f32 %v2001, %v2231
      %v2264 = vadd.f32 %v2002, %v2232
      %v2265 = vadd.f32 %v2003, %v2233
      %v2266 = vadd.f32 %v2004, %v2234
      %v2267 = vadd.f32 %v2005, %v2235
      %v2268 = vadd.f32 %v2006, %v2236
      %v2269 = vadd.f32 %v2007, %v2237
      %v2270 = vadd.f32 %v2008, %v2238
      %v2271 = vadd.f32 %v2009, %v2239
      %v2272 = vadd.f32 %v2010, %v2240
      %v2273 = vadd.f32 %v2011, %v2241
      %v2274 = vadd.f32 %v2012, %v2242
      %v2275 = vadd.f32 %v2013, %v2243
      %v2276 = vadd.f32 %v2014, %v2244
      %v2277 = vadd.f32 %v2015, %v2245
      %v2278 = vadd.f32 %v2016, %v2246
      %v2279 = vadd.f32 %v2017, %v2247
      %v2280 = vld [vmem:[%s2018 + $0x1] sm:$0xff]
      %v2281 = vld [vmem:[%s2018 + $0x9] sm:$0xff]
      %v2282 = vld [vmem:[%s2018 + $0x19] sm:$0xff]
      %v2283 = vld [vmem:[%s2018 + $0x21] sm:$0xff]
      %v2284 = vld [vmem:[%s2018 + $0x31] sm:$0xff]
      %v2285 = vld [vmem:[%s2018 + $0x39] sm:$0xff]
      %v2286 = vld [vmem:[%s2018 + $0x49] sm:$0xff]
      %v2287 = vld [vmem:[%s2018 + $0x51] sm:$0xff]
      %v2288 = vld [vmem:[%s2018 + $0x61] sm:$0xff]
      %v2289 = vld [vmem:[%s2018 + $0x69] sm:$0xff]
      %v2290 = vld [vmem:[%s2018 + $0x79] sm:$0xff]
      %v2291 = vld [vmem:[%s2018 + $0x81] sm:$0xff]
      %v2292 = vld [vmem:[%s2018 + $0x91] sm:$0xff]
      %v2293 = vld [vmem:[%s2018 + $0x99] sm:$0xff]
      %v2294 = vld [vmem:[%s2018 + $0xa9] sm:$0xff]
      %v2295 = vld [vmem:[%s2018 + $0xb1] sm:$0xff]
      %v2296 = vld [vmem:[%s2018 + $0xc1] sm:$0xff]
      %v2297 = vld [vmem:[%s2018 + $0xc9] sm:$0xff]
      %v2298 = vld [vmem:[%s2018 + $0xd9] sm:$0xff]
      %v2299 = vld [vmem:[%s2018 + $0xe1] sm:$0xff]
      %v2300 = vld [vmem:[%s2018 + $0xf1] sm:$0xff]
      %v2301 = vld [vmem:[%s2018 + $0xf9] sm:$0xff]
      %v2302 = vld [vmem:[%s2018 + $0x109] sm:$0xff]
      %v2303 = vld [vmem:[%s2018 + $0x111] sm:$0xff]
      %v2304 = vld [vmem:[%s2018 + $0x121] sm:$0xff]
      %v2305 = vld [vmem:[%s2018 + $0x129] sm:$0xff]
      %v2306 = vld [vmem:[%s2018 + $0x139] sm:$0xff]
      %v2307 = vld [vmem:[%s2018 + $0x141] sm:$0xff]
      %v2308 = vld [vmem:[%s2018 + $0x151] sm:$0xff]
      %v2309 = vld [vmem:[%s2018 + $0x159] sm:$0xff]
      %v2310 = vld [vmem:[%s2018 + $0x169] sm:$0xff]
      %v2311 = vld [vmem:[%s2018 + $0x171] sm:$0xff]
      %v2312 = vld [vmem:[%s1 + $0x7] sm:$0x1]
      %2314 = vset.pattern.permute.xlu0 0
      %2315 = vperm.xlu0 %2314, %v2280
      %v2316 = vpop.permute.xlu0 %2315
      %2319 = vset.pattern.permute.xlu0 0
      %2320 = vperm.xlu0 %2319, %v2281
      %v2321 = vpop.permute.xlu0 %2320
      %2324 = vset.pattern.permute.xlu0 0
      %2325 = vperm.xlu0 %2324, %v2282
      %v2326 = vpop.permute.xlu0 %2325
      %2329 = vset.pattern.permute.xlu0 0
      %2330 = vperm.xlu0 %2329, %v2283
      %v2331 = vpop.permute.xlu0 %2330
      %2334 = vset.pattern.permute.xlu0 0
      %2335 = vperm.xlu0 %2334, %v2284
      %v2336 = vpop.permute.xlu0 %2335
      %2339 = vset.pattern.permute.xlu0 0
      %2340 = vperm.xlu0 %2339, %v2285
      %v2341 = vpop.permute.xlu0 %2340
      %2344 = vset.pattern.permute.xlu0 0
      %2345 = vperm.xlu0 %2344, %v2286
      %v2346 = vpop.permute.xlu0 %2345
      %2349 = vset.pattern.permute.xlu0 0
      %2350 = vperm.xlu0 %2349, %v2287
      %v2351 = vpop.permute.xlu0 %2350
      %2354 = vset.pattern.permute.xlu0 0
      %2355 = vperm.xlu0 %2354, %v2288
      %v2356 = vpop.permute.xlu0 %2355
      %2359 = vset.pattern.permute.xlu0 0
      %2360 = vperm.xlu0 %2359, %v2289
      %v2361 = vpop.permute.xlu0 %2360
      %2364 = vset.pattern.permute.xlu0 0
      %2365 = vperm.xlu0 %2364, %v2290
      %v2366 = vpop.permute.xlu0 %2365
      %2369 = vset.pattern.permute.xlu0 0
      %2370 = vperm.xlu0 %2369, %v2291
      %v2371 = vpop.permute.xlu0 %2370
      %2374 = vset.pattern.permute.xlu0 0
      %2375 = vperm.xlu0 %2374, %v2292
      %v2376 = vpop.permute.xlu0 %2375
      %2379 = vset.pattern.permute.xlu0 0
      %2380 = vperm.xlu0 %2379, %v2293
      %v2381 = vpop.permute.xlu0 %2380
      %2384 = vset.pattern.permute.xlu0 0
      %2385 = vperm.xlu0 %2384, %v2294
      %v2386 = vpop.permute.xlu0 %2385
      %2389 = vset.pattern.permute.xlu0 0
      %2390 = vperm.xlu0 %2389, %v2295
      %v2391 = vpop.permute.xlu0 %2390
      %2394 = vset.pattern.permute.xlu0 0
      %2395 = vperm.xlu0 %2394, %v2296
      %v2396 = vpop.permute.xlu0 %2395
      %2399 = vset.pattern.permute.xlu0 0
      %2400 = vperm.xlu0 %2399, %v2297
      %v2401 = vpop.permute.xlu0 %2400
      %2404 = vset.pattern.permute.xlu0 0
      %2405 = vperm.xlu0 %2404, %v2298
      %v2406 = vpop.permute.xlu0 %2405
      %2409 = vset.pattern.permute.xlu0 0
      %2410 = vperm.xlu0 %2409, %v2299
      %v2411 = vpop.permute.xlu0 %2410
      %2414 = vset.pattern.permute.xlu0 0
      %2415 = vperm.xlu0 %2414, %v2300
      %v2416 = vpop.permute.xlu0 %2415
      %2419 = vset.pattern.permute.xlu0 0
      %2420 = vperm.xlu0 %2419, %v2301
      %v2421 = vpop.permute.xlu0 %2420
      %2424 = vset.pattern.permute.xlu0 0
      %2425 = vperm.xlu0 %2424, %v2302
      %v2426 = vpop.permute.xlu0 %2425
      %2429 = vset.pattern.permute.xlu0 0
      %2430 = vperm.xlu0 %2429, %v2303
      %v2431 = vpop.permute.xlu0 %2430
      %2434 = vset.pattern.permute.xlu0 0
      %2435 = vperm.xlu0 %2434, %v2304
      %v2436 = vpop.permute.xlu0 %2435
      %2439 = vset.pattern.permute.xlu0 0
      %2440 = vperm.xlu0 %2439, %v2305
      %v2441 = vpop.permute.xlu0 %2440
      %2444 = vset.pattern.permute.xlu0 0
      %2445 = vperm.xlu0 %2444, %v2306
      %v2446 = vpop.permute.xlu0 %2445
      %2449 = vset.pattern.permute.xlu0 0
      %2450 = vperm.xlu0 %2449, %v2307
      %v2451 = vpop.permute.xlu0 %2450
      %2454 = vset.pattern.permute.xlu0 0
      %2455 = vperm.xlu0 %2454, %v2308
      %v2456 = vpop.permute.xlu0 %2455
      %2459 = vset.pattern.permute.xlu0 0
      %2460 = vperm.xlu0 %2459, %v2309
      %v2461 = vpop.permute.xlu0 %2460
      %2464 = vset.pattern.permute.xlu0 0
      %2465 = vperm.xlu0 %2464, %v2310
      %v2466 = vpop.permute.xlu0 %2465
      %2469 = vset.pattern.permute.xlu0 0
      %2470 = vperm.xlu0 %2469, %v2311
      %v2471 = vpop.permute.xlu0 %2470
      %v2473 = vlaneseq
      %v2474 = vshrl.u32 %v2473, 7
      %v2475 = vsub.s32 0, %v2474
      %v2476 = vrot.slane %v2312, %v2475
      %v2477 = vmul.f32 %v2316, %v2476
      %v2478 = vmul.f32 %v2321, %v2476
      %v2479 = vmul.f32 %v2326, %v2476
      %v2480 = vmul.f32 %v2331, %v2476
      %v2481 = vmul.f32 %v2336, %v2476
      %v2482 = vmul.f32 %v2341, %v2476
      %v2483 = vmul.f32 %v2346, %v2476
      %v2484 = vmul.f32 %v2351, %v2476
      %v2485 = vmul.f32 %v2356, %v2476
      %v2486 = vmul.f32 %v2361, %v2476
      %v2487 = vmul.f32 %v2366, %v2476
      %v2488 = vmul.f32 %v2371, %v2476
      %v2489 = vmul.f32 %v2376, %v2476
      %v2490 = vmul.f32 %v2381, %v2476
      %v2491 = vmul.f32 %v2386, %v2476
      %v2492 = vmul.f32 %v2391, %v2476
      %v2493 = vmul.f32 %v2396, %v2476
      %v2494 = vmul.f32 %v2401, %v2476
      %v2495 = vmul.f32 %v2406, %v2476
      %v2496 = vmul.f32 %v2411, %v2476
      %v2497 = vmul.f32 %v2416, %v2476
      %v2498 = vmul.f32 %v2421, %v2476
      %v2499 = vmul.f32 %v2426, %v2476
      %v2500 = vmul.f32 %v2431, %v2476
      %v2501 = vmul.f32 %v2436, %v2476
      %v2502 = vmul.f32 %v2441, %v2476
      %v2503 = vmul.f32 %v2446, %v2476
      %v2504 = vmul.f32 %v2451, %v2476
      %v2505 = vmul.f32 %v2456, %v2476
      %v2506 = vmul.f32 %v2461, %v2476
      %v2507 = vmul.f32 %v2466, %v2476
      %v2508 = vmul.f32 %v2471, %v2476
      %v2509 = vadd.f32 %v2248, %v2477
      %v2510 = vadd.f32 %v2249, %v2478
      %v2511 = vadd.f32 %v2250, %v2479
      %v2512 = vadd.f32 %v2251, %v2480
      %v2513 = vadd.f32 %v2252, %v2481
      %v2514 = vadd.f32 %v2253, %v2482
      %v2515 = vadd.f32 %v2254, %v2483
      %v2516 = vadd.f32 %v2255, %v2484
      %v2517 = vadd.f32 %v2256, %v2485
      %v2518 = vadd.f32 %v2257, %v2486
      %v2519 = vadd.f32 %v2258, %v2487
      %v2520 = vadd.f32 %v2259, %v2488
      %v2521 = vadd.f32 %v2260, %v2489
      %v2522 = vadd.f32 %v2261, %v2490
      %v2523 = vadd.f32 %v2262, %v2491
      %v2524 = vadd.f32 %v2263, %v2492
      %v2525 = vadd.f32 %v2264, %v2493
      %v2526 = vadd.f32 %v2265, %v2494
      %v2527 = vadd.f32 %v2266, %v2495
      %v2528 = vadd.f32 %v2267, %v2496
      %v2529 = vadd.f32 %v2268, %v2497
      %v2530 = vadd.f32 %v2269, %v2498
      %v2531 = vadd.f32 %v2270, %v2499
      %v2532 = vadd.f32 %v2271, %v2500
      %v2533 = vadd.f32 %v2272, %v2501
      %v2534 = vadd.f32 %v2273, %v2502
      %v2535 = vadd.f32 %v2274, %v2503
      %v2536 = vadd.f32 %v2275, %v2504
      %v2537 = vadd.f32 %v2276, %v2505
      %v2538 = vadd.f32 %v2277, %v2506
      %v2539 = vadd.f32 %v2278, %v2507
      %v2540 = vadd.f32 %v2279, %v2508
      %v2541 = vld [vmem:[%s2018 + $0x2] sm:$0xff]
      %v2542 = vld [vmem:[%s2018 + $0xa] sm:$0xff]
      %v2543 = vld [vmem:[%s2018 + $0x1a] sm:$0xff]
      %v2544 = vld [vmem:[%s2018 + $0x22] sm:$0xff]
      %v2545 = vld [vmem:[%s2018 + $0x32] sm:$0xff]
      %v2546 = vld [vmem:[%s2018 + $0x3a] sm:$0xff]
      %v2547 = vld [vmem:[%s2018 + $0x4a] sm:$0xff]
      %v2548 = vld [vmem:[%s2018 + $0x52] sm:$0xff]
      %v2549 = vld [vmem:[%s2018 + $0x62] sm:$0xff]
      %v2550 = vld [vmem:[%s2018 + $0x6a] sm:$0xff]
      %v2551 = vld [vmem:[%s2018 + $0x7a] sm:$0xff]
      %v2552 = vld [vmem:[%s2018 + $0x82] sm:$0xff]
      %v2553 = vld [vmem:[%s2018 + $0x92] sm:$0xff]
      %v2554 = vld [vmem:[%s2018 + $0x9a] sm:$0xff]
      %v2555 = vld [vmem:[%s2018 + $0xaa] sm:$0xff]
      %v2556 = vld [vmem:[%s2018 + $0xb2] sm:$0xff]
      %v2557 = vld [vmem:[%s2018 + $0xc2] sm:$0xff]
      %v2558 = vld [vmem:[%s2018 + $0xca] sm:$0xff]
      %v2559 = vld [vmem:[%s2018 + $0xda] sm:$0xff]
      %v2560 = vld [vmem:[%s2018 + $0xe2] sm:$0xff]
      %v2561 = vld [vmem:[%s2018 + $0xf2] sm:$0xff]
      %v2562 = vld [vmem:[%s2018 + $0xfa] sm:$0xff]
      %v2563 = vld [vmem:[%s2018 + $0x10a] sm:$0xff]
      %v2564 = vld [vmem:[%s2018 + $0x112] sm:$0xff]
      %v2565 = vld [vmem:[%s2018 + $0x122] sm:$0xff]
      %v2566 = vld [vmem:[%s2018 + $0x12a] sm:$0xff]
      %v2567 = vld [vmem:[%s2018 + $0x13a] sm:$0xff]
      %v2568 = vld [vmem:[%s2018 + $0x142] sm:$0xff]
      %v2569 = vld [vmem:[%s2018 + $0x152] sm:$0xff]
      %v2570 = vld [vmem:[%s2018 + $0x15a] sm:$0xff]
      %v2571 = vld [vmem:[%s2018 + $0x16a] sm:$0xff]
      %v2572 = vld [vmem:[%s2018 + $0x172] sm:$0xff]
      %v2573 = vld [vmem:[%s1 + $0x8] sm:$0x1]
      %2575 = vset.pattern.permute.xlu0 0
      %2576 = vperm.xlu0 %2575, %v2541
      %v2577 = vpop.permute.xlu0 %2576
      %2580 = vset.pattern.permute.xlu0 0
      %2581 = vperm.xlu0 %2580, %v2542
      %v2582 = vpop.permute.xlu0 %2581
      %2585 = vset.pattern.permute.xlu0 0
      %2586 = vperm.xlu0 %2585, %v2543
      %v2587 = vpop.permute.xlu0 %2586
      %2590 = vset.pattern.permute.xlu0 0
      %2591 = vperm.xlu0 %2590, %v2544
      %v2592 = vpop.permute.xlu0 %2591
      %2595 = vset.pattern.permute.xlu0 0
      %2596 = vperm.xlu0 %2595, %v2545
      %v2597 = vpop.permute.xlu0 %2596
      %2600 = vset.pattern.permute.xlu0 0
      %2601 = vperm.xlu0 %2600, %v2546
      %v2602 = vpop.permute.xlu0 %2601
      %2605 = vset.pattern.permute.xlu0 0
      %2606 = vperm.xlu0 %2605, %v2547
      %v2607 = vpop.permute.xlu0 %2606
      %2610 = vset.pattern.permute.xlu0 0
      %2611 = vperm.xlu0 %2610, %v2548
      %v2612 = vpop.permute.xlu0 %2611
      %2615 = vset.pattern.permute.xlu0 0
      %2616 = vperm.xlu0 %2615, %v2549
      %v2617 = vpop.permute.xlu0 %2616
      %2620 = vset.pattern.permute.xlu0 0
      %2621 = vperm.xlu0 %2620, %v2550
      %v2622 = vpop.permute.xlu0 %2621
      %2625 = vset.pattern.permute.xlu0 0
      %2626 = vperm.xlu0 %2625, %v2551
      %v2627 = vpop.permute.xlu0 %2626
      %2630 = vset.pattern.permute.xlu0 0
      %2631 = vperm.xlu0 %2630, %v2552
      %v2632 = vpop.permute.xlu0 %2631
      %2635 = vset.pattern.permute.xlu0 0
      %2636 = vperm.xlu0 %2635, %v2553
      %v2637 = vpop.permute.xlu0 %2636
      %2640 = vset.pattern.permute.xlu0 0
      %2641 = vperm.xlu0 %2640, %v2554
      %v2642 = vpop.permute.xlu0 %2641
      %2645 = vset.pattern.permute.xlu0 0
      %2646 = vperm.xlu0 %2645, %v2555
      %v2647 = vpop.permute.xlu0 %2646
      %2650 = vset.pattern.permute.xlu0 0
      %2651 = vperm.xlu0 %2650, %v2556
      %v2652 = vpop.permute.xlu0 %2651
      %2655 = vset.pattern.permute.xlu0 0
      %2656 = vperm.xlu0 %2655, %v2557
      %v2657 = vpop.permute.xlu0 %2656
      %2660 = vset.pattern.permute.xlu0 0
      %2661 = vperm.xlu0 %2660, %v2558
      %v2662 = vpop.permute.xlu0 %2661
      %2665 = vset.pattern.permute.xlu0 0
      %2666 = vperm.xlu0 %2665, %v2559
      %v2667 = vpop.permute.xlu0 %2666
      %2670 = vset.pattern.permute.xlu0 0
      %2671 = vperm.xlu0 %2670, %v2560
      %v2672 = vpop.permute.xlu0 %2671
      %2675 = vset.pattern.permute.xlu0 0
      %2676 = vperm.xlu0 %2675, %v2561
      %v2677 = vpop.permute.xlu0 %2676
      %2680 = vset.pattern.permute.xlu0 0
      %2681 = vperm.xlu0 %2680, %v2562
      %v2682 = vpop.permute.xlu0 %2681
      %2685 = vset.pattern.permute.xlu0 0
      %2686 = vperm.xlu0 %2685, %v2563
      %v2687 = vpop.permute.xlu0 %2686
      %2690 = vset.pattern.permute.xlu0 0
      %2691 = vperm.xlu0 %2690, %v2564
      %v2692 = vpop.permute.xlu0 %2691
      %2695 = vset.pattern.permute.xlu0 0
      %2696 = vperm.xlu0 %2695, %v2565
      %v2697 = vpop.permute.xlu0 %2696
      %2700 = vset.pattern.permute.xlu0 0
      %2701 = vperm.xlu0 %2700, %v2566
      %v2702 = vpop.permute.xlu0 %2701
      %2705 = vset.pattern.permute.xlu0 0
      %2706 = vperm.xlu0 %2705, %v2567
      %v2707 = vpop.permute.xlu0 %2706
      %2710 = vset.pattern.permute.xlu0 0
      %2711 = vperm.xlu0 %2710, %v2568
      %v2712 = vpop.permute.xlu0 %2711
      %2715 = vset.pattern.permute.xlu0 0
      %2716 = vperm.xlu0 %2715, %v2569
      %v2717 = vpop.permute.xlu0 %2716
      %2720 = vset.pattern.permute.xlu0 0
      %2721 = vperm.xlu0 %2720, %v2570
      %v2722 = vpop.permute.xlu0 %2721
      %2725 = vset.pattern.permute.xlu0 0
      %2726 = vperm.xlu0 %2725, %v2571
      %v2727 = vpop.permute.xlu0 %2726
      %2730 = vset.pattern.permute.xlu0 0
      %2731 = vperm.xlu0 %2730, %v2572
      %v2732 = vpop.permute.xlu0 %2731
      %v2734 = vlaneseq
      %v2735 = vshrl.u32 %v2734, 7
      %v2736 = vsub.s32 0, %v2735
      %v2737 = vrot.slane %v2573, %v2736
      %v2738 = vmul.f32 %v2577, %v2737
      %v2739 = vmul.f32 %v2582, %v2737
      %v2740 = vmul.f32 %v2587, %v2737
      %v2741 = vmul.f32 %v2592, %v2737
      %v2742 = vmul.f32 %v2597, %v2737
      %v2743 = vmul.f32 %v2602, %v2737
      %v2744 = vmul.f32 %v2607, %v2737
      %v2745 = vmul.f32 %v2612, %v2737
      %v2746 = vmul.f32 %v2617, %v2737
      %v2747 = vmul.f32 %v2622, %v2737
      %v2748 = vmul.f32 %v2627, %v2737
      %v2749 = vmul.f32 %v2632, %v2737
      %v2750 = vmul.f32 %v2637, %v2737
      %v2751 = vmul.f32 %v2642, %v2737
      %v2752 = vmul.f32 %v2647, %v2737
      %v2753 = vmul.f32 %v2652, %v2737
      %v2754 = vmul.f32 %v2657, %v2737
      %v2755 = vmul.f32 %v2662, %v2737
      %v2756 = vmul.f32 %v2667, %v2737
      %v2757 = vmul.f32 %v2672, %v2737
      %v2758 = vmul.f32 %v2677, %v2737
      %v2759 = vmul.f32 %v2682, %v2737
      %v2760 = vmul.f32 %v2687, %v2737
      %v2761 = vmul.f32 %v2692, %v2737
      %v2762 = vmul.f32 %v2697, %v2737
      %v2763 = vmul.f32 %v2702, %v2737
      %v2764 = vmul.f32 %v2707, %v2737
      %v2765 = vmul.f32 %v2712, %v2737
      %v2766 = vmul.f32 %v2717, %v2737
      %v2767 = vmul.f32 %v2722, %v2737
      %v2768 = vmul.f32 %v2727, %v2737
      %v2769 = vmul.f32 %v2732, %v2737
      %v2770 = vadd.f32 %v2509, %v2738
      %v2771 = vadd.f32 %v2510, %v2739
      %v2772 = vadd.f32 %v2511, %v2740
      %v2773 = vadd.f32 %v2512, %v2741
      %v2774 = vadd.f32 %v2513, %v2742
      %v2775 = vadd.f32 %v2514, %v2743
      %v2776 = vadd.f32 %v2515, %v2744
      %v2777 = vadd.f32 %v2516, %v2745
      %v2778 = vadd.f32 %v2517, %v2746
      %v2779 = vadd.f32 %v2518, %v2747
      %v2780 = vadd.f32 %v2519, %v2748
      %v2781 = vadd.f32 %v2520, %v2749
      %v2782 = vadd.f32 %v2521, %v2750
      %v2783 = vadd.f32 %v2522, %v2751
      %v2784 = vadd.f32 %v2523, %v2752
      %v2785 = vadd.f32 %v2524, %v2753
      %v2786 = vadd.f32 %v2525, %v2754
      %v2787 = vadd.f32 %v2526, %v2755
      %v2788 = vadd.f32 %v2527, %v2756
      %v2789 = vadd.f32 %v2528, %v2757
      %v2790 = vadd.f32 %v2529, %v2758
      %v2791 = vadd.f32 %v2530, %v2759
      %v2792 = vadd.f32 %v2531, %v2760
      %v2793 = vadd.f32 %v2532, %v2761
      %v2794 = vadd.f32 %v2533, %v2762
      %v2795 = vadd.f32 %v2534, %v2763
      %v2796 = vadd.f32 %v2535, %v2764
      %v2797 = vadd.f32 %v2536, %v2765
      %v2798 = vadd.f32 %v2537, %v2766
      %v2799 = vadd.f32 %v2538, %v2767
      %v2800 = vadd.f32 %v2539, %v2768
      %v2801 = vadd.f32 %v2540, %v2769
      %v2802 = vld [vmem:[%s2] sm:$0x1]
      %v2804 = vlaneseq
      %v2805 = vshrl.u32 %v2804, 7
      %v2806 = vsub.s32 0, %v2805
      %v2807 = vrot.slane %v2802, %v2806
      %v2809 = vadd.f32 %v2770, %v2807
      %v2810 = vadd.f32 %v2771, %v2807
      %v2811 = vadd.f32 %v2772, %v2807
      %v2812 = vadd.f32 %v2773, %v2807
      %v2813 = vadd.f32 %v2774, %v2807
      %v2814 = vadd.f32 %v2775, %v2807
      %v2815 = vadd.f32 %v2776, %v2807
      %v2816 = vadd.f32 %v2777, %v2807
      %v2817 = vadd.f32 %v2778, %v2807
      %v2818 = vadd.f32 %v2779, %v2807
      %v2819 = vadd.f32 %v2780, %v2807
      %v2820 = vadd.f32 %v2781, %v2807
      %v2821 = vadd.f32 %v2782, %v2807
      %v2822 = vadd.f32 %v2783, %v2807
      %v2823 = vadd.f32 %v2784, %v2807
      %v2824 = vadd.f32 %v2785, %v2807
      %v2825 = vadd.f32 %v2786, %v2807
      %v2826 = vadd.f32 %v2787, %v2807
      %v2827 = vadd.f32 %v2788, %v2807
      %v2828 = vadd.f32 %v2789, %v2807
      %v2829 = vadd.f32 %v2790, %v2807
      %v2830 = vadd.f32 %v2791, %v2807
      %v2831 = vadd.f32 %v2792, %v2807
      %v2832 = vadd.f32 %v2793, %v2807
      %v2833 = vadd.f32 %v2794, %v2807
      %v2834 = vadd.f32 %v2795, %v2807
      %v2835 = vadd.f32 %v2796, %v2807
      %v2836 = vadd.f32 %v2797, %v2807
      %v2837 = vadd.f32 %v2798, %v2807
      %v2838 = vadd.f32 %v2799, %v2807
      %v2839 = vadd.f32 %v2800, %v2807
      %v2840 = vadd.f32 %v2801, %v2807
      %v2841 = vmax.f32 %v2809, 0.0
      %v2842 = vmax.f32 %v2810, 0.0
      %v2843 = vmax.f32 %v2811, 0.0
      %v2844 = vmax.f32 %v2812, 0.0
      %v2845 = vmax.f32 %v2813, 0.0
      %v2846 = vmax.f32 %v2814, 0.0
      %v2847 = vmax.f32 %v2815, 0.0
      %v2848 = vmax.f32 %v2816, 0.0
      %v2849 = vmax.f32 %v2817, 0.0
      %v2850 = vmax.f32 %v2818, 0.0
      %v2851 = vmax.f32 %v2819, 0.0
      %v2852 = vmax.f32 %v2820, 0.0
      %v2853 = vmax.f32 %v2821, 0.0
      %v2854 = vmax.f32 %v2822, 0.0
      %v2855 = vmax.f32 %v2823, 0.0
      %v2856 = vmax.f32 %v2824, 0.0
      %v2857 = vmax.f32 %v2825, 0.0
      %v2858 = vmax.f32 %v2826, 0.0
      %v2859 = vmax.f32 %v2827, 0.0
      %v2860 = vmax.f32 %v2828, 0.0
      %v2861 = vmax.f32 %v2829, 0.0
      %v2862 = vmax.f32 %v2830, 0.0
      %v2863 = vmax.f32 %v2831, 0.0
      %v2864 = vmax.f32 %v2832, 0.0
      %v2865 = vmax.f32 %v2833, 0.0
      %v2866 = vmax.f32 %v2834, 0.0
      %v2867 = vmax.f32 %v2835, 0.0
      %v2868 = vmax.f32 %v2836, 0.0
      %v2869 = vmax.f32 %v2837, 0.0
      %v2870 = vmax.f32 %v2838, 0.0
      %v2871 = vmax.f32 %v2839, 0.0
      %v2872 = vmax.f32 %v2840, 0.0
      %v2905 = vcombine.high %v2841, %v2841
      %v2907 = vunpack.c.l.s4 1983009808
      %v2908 = vunpack.c.0.s8 %v2907
      %v2909 = vlaneseq
      %v2910 = vshrl.u32 %v2909, 7
      %v2911 = vsub.s32 %v2908, %v2910
      %v2912 = vrot.slane %v2841, %v2911
      %v2914 = vunpack.c.l.s4 1983009808
      %v2915 = vunpack.c.0.s8 %v2914
      %v2916 = vlaneseq
      %v2917 = vshrl.u32 %v2916, 7
      %v2918 = vsub.s32 %v2915, %v2917
      %v2919 = vrot.slane %v2905, %v2918
      %v2920 = vcombine.high %v2912, %v2912
      %v2921 = vcombine.high %v2919, %v2919
      %v2922 = vcombine.high %v2842, %v2842
      %v2924 = vunpack.c.l.s4 1983009808
      %v2925 = vunpack.c.0.s8 %v2924
      %v2926 = vlaneseq
      %v2927 = vshrl.u32 %v2926, 7
      %v2928 = vsub.s32 %v2925, %v2927
      %v2929 = vrot.slane %v2842, %v2928
      %v2931 = vunpack.c.l.s4 1983009808
      %v2932 = vunpack.c.0.s8 %v2931
      %v2933 = vlaneseq
      %v2934 = vshrl.u32 %v2933, 7
      %v2935 = vsub.s32 %v2932, %v2934
      %v2936 = vrot.slane %v2922, %v2935
      %v2937 = vcombine.high %v2929, %v2929
      %v2938 = vcombine.high %v2936, %v2936
      %v2939 = vcombine.high %v2843, %v2843
      %v2941 = vunpack.c.l.s4 1983009808
      %v2942 = vunpack.c.0.s8 %v2941
      %v2943 = vlaneseq
      %v2944 = vshrl.u32 %v2943, 7
      %v2945 = vsub.s32 %v2942, %v2944
      %v2946 = vrot.slane %v2843, %v2945
      %v2948 = vunpack.c.l.s4 1983009808
      %v2949 = vunpack.c.0.s8 %v2948
      %v2950 = vlaneseq
      %v2951 = vshrl.u32 %v2950, 7
      %v2952 = vsub.s32 %v2949, %v2951
      %v2953 = vrot.slane %v2939, %v2952
      %v2954 = vcombine.high %v2946, %v2946
      %v2955 = vcombine.high %v2953, %v2953
      %v2956 = vcombine.high %v2844, %v2844
      %v2958 = vunpack.c.l.s4 1983009808
      %v2959 = vunpack.c.0.s8 %v2958
      %v2960 = vlaneseq
      %v2961 = vshrl.u32 %v2960, 7
      %v2962 = vsub.s32 %v2959, %v2961
      %v2963 = vrot.slane %v2844, %v2962
      %v2965 = vunpack.c.l.s4 1983009808
      %v2966 = vunpack.c.0.s8 %v2965
      %v2967 = vlaneseq
      %v2968 = vshrl.u32 %v2967, 7
      %v2969 = vsub.s32 %v2966, %v2968
      %v2970 = vrot.slane %v2956, %v2969
      %v2971 = vcombine.high %v2963, %v2963
      %v2972 = vcombine.high %v2970, %v2970
      %v2973 = vcombine.high %v2845, %v2845
      %v2975 = vunpack.c.l.s4 1983009808
      %v2976 = vunpack.c.0.s8 %v2975
      %v2977 = vlaneseq
      %v2978 = vshrl.u32 %v2977, 7
      %v2979 = vsub.s32 %v2976, %v2978
      %v2980 = vrot.slane %v2845, %v2979
      %v2982 = vunpack.c.l.s4 1983009808
      %v2983 = vunpack.c.0.s8 %v2982
      %v2984 = vlaneseq
      %v2985 = vshrl.u32 %v2984, 7
      %v2986 = vsub.s32 %v2983, %v2985
      %v2987 = vrot.slane %v2973, %v2986
      %v2988 = vcombine.high %v2980, %v2980
      %v2989 = vcombine.high %v2987, %v2987
      %v2990 = vcombine.high %v2846, %v2846
      %v2992 = vunpack.c.l.s4 1983009808
      %v2993 = vunpack.c.0.s8 %v2992
      %v2994 = vlaneseq
      %v2995 = vshrl.u32 %v2994, 7
      %v2996 = vsub.s32 %v2993, %v2995
      %v2997 = vrot.slane %v2846, %v2996
      %v2999 = vunpack.c.l.s4 1983009808
      %v3000 = vunpack.c.0.s8 %v2999
      %v3001 = vlaneseq
      %v3002 = vshrl.u32 %v3001, 7
      %v3003 = vsub.s32 %v3000, %v3002
      %v3004 = vrot.slane %v2990, %v3003
      %v3005 = vcombine.high %v2997, %v2997
      %v3006 = vcombine.high %v3004, %v3004
      %v3007 = vcombine.high %v2847, %v2847
      %v3009 = vunpack.c.l.s4 1983009808
      %v3010 = vunpack.c.0.s8 %v3009
      %v3011 = vlaneseq
      %v3012 = vshrl.u32 %v3011, 7
      %v3013 = vsub.s32 %v3010, %v3012
      %v3014 = vrot.slane %v2847, %v3013
      %v3016 = vunpack.c.l.s4 1983009808
      %v3017 = vunpack.c.0.s8 %v3016
      %v3018 = vlaneseq
      %v3019 = vshrl.u32 %v3018, 7
      %v3020 = vsub.s32 %v3017, %v3019
      %v3021 = vrot.slane %v3007, %v3020
      %v3022 = vcombine.high %v3014, %v3014
      %v3023 = vcombine.high %v3021, %v3021
      %v3024 = vcombine.high %v2848, %v2848
      %v3026 = vunpack.c.l.s4 1983009808
      %v3027 = vunpack.c.0.s8 %v3026
      %v3028 = vlaneseq
      %v3029 = vshrl.u32 %v3028, 7
      %v3030 = vsub.s32 %v3027, %v3029
      %v3031 = vrot.slane %v2848, %v3030
      %v3033 = vunpack.c.l.s4 1983009808
      %v3034 = vunpack.c.0.s8 %v3033
      %v3035 = vlaneseq
      %v3036 = vshrl.u32 %v3035, 7
      %v3037 = vsub.s32 %v3034, %v3036
      %v3038 = vrot.slane %v3024, %v3037
      %v3039 = vcombine.high %v3031, %v3031
      %v3040 = vcombine.high %v3038, %v3038
      %v3041 = vcombine.high %v2849, %v2849
      %v3043 = vunpack.c.l.s4 1983009808
      %v3044 = vunpack.c.0.s8 %v3043
      %v3045 = vlaneseq
      %v3046 = vshrl.u32 %v3045, 7
      %v3047 = vsub.s32 %v3044, %v3046
      %v3048 = vrot.slane %v2849, %v3047
      %v3050 = vunpack.c.l.s4 1983009808
      %v3051 = vunpack.c.0.s8 %v3050
      %v3052 = vlaneseq
      %v3053 = vshrl.u32 %v3052, 7
      %v3054 = vsub.s32 %v3051, %v3053
      %v3055 = vrot.slane %v3041, %v3054
      %v3056 = vcombine.high %v3048, %v3048
      %v3057 = vcombine.high %v3055, %v3055
      %v3058 = vcombine.high %v2850, %v2850
      %v3060 = vunpack.c.l.s4 1983009808
      %v3061 = vunpack.c.0.s8 %v3060
      %v3062 = vlaneseq
      %v3063 = vshrl.u32 %v3062, 7
      %v3064 = vsub.s32 %v3061, %v3063
      %v3065 = vrot.slane %v2850, %v3064
      %v3067 = vunpack.c.l.s4 1983009808
      %v3068 = vunpack.c.0.s8 %v3067
      %v3069 = vlaneseq
      %v3070 = vshrl.u32 %v3069, 7
      %v3071 = vsub.s32 %v3068, %v3070
      %v3072 = vrot.slane %v3058, %v3071
      %v3073 = vcombine.high %v3065, %v3065
      %v3074 = vcombine.high %v3072, %v3072
      %v3075 = vcombine.high %v2851, %v2851
      %v3077 = vunpack.c.l.s4 1983009808
      %v3078 = vunpack.c.0.s8 %v3077
      %v3079 = vlaneseq
      %v3080 = vshrl.u32 %v3079, 7
      %v3081 = vsub.s32 %v3078, %v3080
      %v3082 = vrot.slane %v2851, %v3081
      %v3084 = vunpack.c.l.s4 1983009808
      %v3085 = vunpack.c.0.s8 %v3084
      %v3086 = vlaneseq
      %v3087 = vshrl.u32 %v3086, 7
      %v3088 = vsub.s32 %v3085, %v3087
      %v3089 = vrot.slane %v3075, %v3088
      %v3090 = vcombine.high %v3082, %v3082
      %v3091 = vcombine.high %v3089, %v3089
      %v3092 = vcombine.high %v2852, %v2852
      %v3094 = vunpack.c.l.s4 1983009808
      %v3095 = vunpack.c.0.s8 %v3094
      %v3096 = vlaneseq
      %v3097 = vshrl.u32 %v3096, 7
      %v3098 = vsub.s32 %v3095, %v3097
      %v3099 = vrot.slane %v2852, %v3098
      %v3101 = vunpack.c.l.s4 1983009808
      %v3102 = vunpack.c.0.s8 %v3101
      %v3103 = vlaneseq
      %v3104 = vshrl.u32 %v3103, 7
      %v3105 = vsub.s32 %v3102, %v3104
      %v3106 = vrot.slane %v3092, %v3105
      %v3107 = vcombine.high %v3099, %v3099
      %v3108 = vcombine.high %v3106, %v3106
      %v3109 = vcombine.high %v2853, %v2853
      %v3111 = vunpack.c.l.s4 1983009808
      %v3112 = vunpack.c.0.s8 %v3111
      %v3113 = vlaneseq
      %v3114 = vshrl.u32 %v3113, 7
      %v3115 = vsub.s32 %v3112, %v3114
      %v3116 = vrot.slane %v2853, %v3115
      %v3118 = vunpack.c.l.s4 1983009808
      %v3119 = vunpack.c.0.s8 %v3118
      %v3120 = vlaneseq
      %v3121 = vshrl.u32 %v3120, 7
      %v3122 = vsub.s32 %v3119, %v3121
      %v3123 = vrot.slane %v3109, %v3122
      %v3124 = vcombine.high %v3116, %v3116
      %v3125 = vcombine.high %v3123, %v3123
      %v3126 = vcombine.high %v2854, %v2854
      %v3128 = vunpack.c.l.s4 1983009808
      %v3129 = vunpack.c.0.s8 %v3128
      %v3130 = vlaneseq
      %v3131 = vshrl.u32 %v3130, 7
      %v3132 = vsub.s32 %v3129, %v3131
      %v3133 = vrot.slane %v2854, %v3132
      %v3135 = vunpack.c.l.s4 1983009808
      %v3136 = vunpack.c.0.s8 %v3135
      %v3137 = vlaneseq
      %v3138 = vshrl.u32 %v3137, 7
      %v3139 = vsub.s32 %v3136, %v3138
      %v3140 = vrot.slane %v3126, %v3139
      %v3141 = vcombine.high %v3133, %v3133
      %v3142 = vcombine.high %v3140, %v3140
      %v3143 = vcombine.high %v2855, %v2855
      %v3145 = vunpack.c.l.s4 1983009808
      %v3146 = vunpack.c.0.s8 %v3145
      %v3147 = vlaneseq
      %v3148 = vshrl.u32 %v3147, 7
      %v3149 = vsub.s32 %v3146, %v3148
      %v3150 = vrot.slane %v2855, %v3149
      %v3152 = vunpack.c.l.s4 1983009808
      %v3153 = vunpack.c.0.s8 %v3152
      %v3154 = vlaneseq
      %v3155 = vshrl.u32 %v3154, 7
      %v3156 = vsub.s32 %v3153, %v3155
      %v3157 = vrot.slane %v3143, %v3156
      %v3158 = vcombine.high %v3150, %v3150
      %v3159 = vcombine.high %v3157, %v3157
      %v3160 = vcombine.high %v2856, %v2856
      %v3162 = vunpack.c.l.s4 1983009808
      %v3163 = vunpack.c.0.s8 %v3162
      %v3164 = vlaneseq
      %v3165 = vshrl.u32 %v3164, 7
      %v3166 = vsub.s32 %v3163, %v3165
      %v3167 = vrot.slane %v2856, %v3166
      %v3169 = vunpack.c.l.s4 1983009808
      %v3170 = vunpack.c.0.s8 %v3169
      %v3171 = vlaneseq
      %v3172 = vshrl.u32 %v3171, 7
      %v3173 = vsub.s32 %v3170, %v3172
      %v3174 = vrot.slane %v3160, %v3173
      %v3175 = vcombine.high %v3167, %v3167
      %v3176 = vcombine.high %v3174, %v3174
      %v3177 = vcombine.high %v2857, %v2857
      %v3179 = vunpack.c.l.s4 1983009808
      %v3180 = vunpack.c.0.s8 %v3179
      %v3181 = vlaneseq
      %v3182 = vshrl.u32 %v3181, 7
      %v3183 = vsub.s32 %v3180, %v3182
      %v3184 = vrot.slane %v2857, %v3183
      %v3186 = vunpack.c.l.s4 1983009808
      %v3187 = vunpack.c.0.s8 %v3186
      %v3188 = vlaneseq
      %v3189 = vshrl.u32 %v3188, 7
      %v3190 = vsub.s32 %v3187, %v3189
      %v3191 = vrot.slane %v3177, %v3190
      %v3192 = vcombine.high %v3184, %v3184
      %v3193 = vcombine.high %v3191, %v3191
      %v3194 = vcombine.high %v2858, %v2858
      %v3196 = vunpack.c.l.s4 1983009808
      %v3197 = vunpack.c.0.s8 %v3196
      %v3198 = vlaneseq
      %v3199 = vshrl.u32 %v3198, 7
      %v3200 = vsub.s32 %v3197, %v3199
      %v3201 = vrot.slane %v2858, %v3200
      %v3203 = vunpack.c.l.s4 1983009808
      %v3204 = vunpack.c.0.s8 %v3203
      %v3205 = vlaneseq
      %v3206 = vshrl.u32 %v3205, 7
      %v3207 = vsub.s32 %v3204, %v3206
      %v3208 = vrot.slane %v3194, %v3207
      %v3209 = vcombine.high %v3201, %v3201
      %v3210 = vcombine.high %v3208, %v3208
      %v3211 = vcombine.high %v2859, %v2859
      %v3213 = vunpack.c.l.s4 1983009808
      %v3214 = vunpack.c.0.s8 %v3213
      %v3215 = vlaneseq
      %v3216 = vshrl.u32 %v3215, 7
      %v3217 = vsub.s32 %v3214, %v3216
      %v3218 = vrot.slane %v2859, %v3217
      %v3220 = vunpack.c.l.s4 1983009808
      %v3221 = vunpack.c.0.s8 %v3220
      %v3222 = vlaneseq
      %v3223 = vshrl.u32 %v3222, 7
      %v3224 = vsub.s32 %v3221, %v3223
      %v3225 = vrot.slane %v3211, %v3224
      %v3226 = vcombine.high %v3218, %v3218
      %v3227 = vcombine.high %v3225, %v3225
      %v3228 = vcombine.high %v2860, %v2860
      %v3230 = vunpack.c.l.s4 1983009808
      %v3231 = vunpack.c.0.s8 %v3230
      %v3232 = vlaneseq
      %v3233 = vshrl.u32 %v3232, 7
      %v3234 = vsub.s32 %v3231, %v3233
      %v3235 = vrot.slane %v2860, %v3234
      %v3237 = vunpack.c.l.s4 1983009808
      %v3238 = vunpack.c.0.s8 %v3237
      %v3239 = vlaneseq
      %v3240 = vshrl.u32 %v3239, 7
      %v3241 = vsub.s32 %v3238, %v3240
      %v3242 = vrot.slane %v3228, %v3241
      %v3243 = vcombine.high %v3235, %v3235
      %v3244 = vcombine.high %v3242, %v3242
      %v3245 = vcombine.high %v2861, %v2861
      %v3247 = vunpack.c.l.s4 1983009808
      %v3248 = vunpack.c.0.s8 %v3247
      %v3249 = vlaneseq
      %v3250 = vshrl.u32 %v3249, 7
      %v3251 = vsub.s32 %v3248, %v3250
      %v3252 = vrot.slane %v2861, %v3251
      %v3254 = vunpack.c.l.s4 1983009808
      %v3255 = vunpack.c.0.s8 %v3254
      %v3256 = vlaneseq
      %v3257 = vshrl.u32 %v3256, 7
      %v3258 = vsub.s32 %v3255, %v3257
      %v3259 = vrot.slane %v3245, %v3258
      %v3260 = vcombine.high %v3252, %v3252
      %v3261 = vcombine.high %v3259, %v3259
      %v3262 = vcombine.high %v2862, %v2862
      %v3264 = vunpack.c.l.s4 1983009808
      %v3265 = vunpack.c.0.s8 %v3264
      %v3266 = vlaneseq
      %v3267 = vshrl.u32 %v3266, 7
      %v3268 = vsub.s32 %v3265, %v3267
      %v3269 = vrot.slane %v2862, %v3268
      %v3271 = vunpack.c.l.s4 1983009808
      %v3272 = vunpack.c.0.s8 %v3271
      %v3273 = vlaneseq
      %v3274 = vshrl.u32 %v3273, 7
      %v3275 = vsub.s32 %v3272, %v3274
      %v3276 = vrot.slane %v3262, %v3275
      %v3277 = vcombine.high %v3269, %v3269
      %v3278 = vcombine.high %v3276, %v3276
      %v3279 = vcombine.high %v2863, %v2863
      %v3281 = vunpack.c.l.s4 1983009808
      %v3282 = vunpack.c.0.s8 %v3281
      %v3283 = vlaneseq
      %v3284 = vshrl.u32 %v3283, 7
      %v3285 = vsub.s32 %v3282, %v3284
      %v3286 = vrot.slane %v2863, %v3285
      %v3288 = vunpack.c.l.s4 1983009808
      %v3289 = vunpack.c.0.s8 %v3288
      %v3290 = vlaneseq
      %v3291 = vshrl.u32 %v3290, 7
      %v3292 = vsub.s32 %v3289, %v3291
      %v3293 = vrot.slane %v3279, %v3292
      %v3294 = vcombine.high %v3286, %v3286
      %v3295 = vcombine.high %v3293, %v3293
      %v3296 = vcombine.high %v2864, %v2864
      %v3298 = vunpack.c.l.s4 1983009808
      %v3299 = vunpack.c.0.s8 %v3298
      %v3300 = vlaneseq
      %v3301 = vshrl.u32 %v3300, 7
      %v3302 = vsub.s32 %v3299, %v3301
      %v3303 = vrot.slane %v2864, %v3302
      %v3305 = vunpack.c.l.s4 1983009808
      %v3306 = vunpack.c.0.s8 %v3305
      %v3307 = vlaneseq
      %v3308 = vshrl.u32 %v3307, 7
      %v3309 = vsub.s32 %v3306, %v3308
      %v3310 = vrot.slane %v3296, %v3309
      %v3311 = vcombine.high %v3303, %v3303
      %v3312 = vcombine.high %v3310, %v3310
      %v3313 = vcombine.high %v2865, %v2865
      %v3315 = vunpack.c.l.s4 1983009808
      %v3316 = vunpack.c.0.s8 %v3315
      %v3317 = vlaneseq
      %v3318 = vshrl.u32 %v3317, 7
      %v3319 = vsub.s32 %v3316, %v3318
      %v3320 = vrot.slane %v2865, %v3319
      %v3322 = vunpack.c.l.s4 1983009808
      %v3323 = vunpack.c.0.s8 %v3322
      %v3324 = vlaneseq
      %v3325 = vshrl.u32 %v3324, 7
      %v3326 = vsub.s32 %v3323, %v3325
      %v3327 = vrot.slane %v3313, %v3326
      %v3328 = vcombine.high %v3320, %v3320
      %v3329 = vcombine.high %v3327, %v3327
      %v3330 = vcombine.high %v2866, %v2866
      %v3332 = vunpack.c.l.s4 1983009808
      %v3333 = vunpack.c.0.s8 %v3332
      %v3334 = vlaneseq
      %v3335 = vshrl.u32 %v3334, 7
      %v3336 = vsub.s32 %v3333, %v3335
      %v3337 = vrot.slane %v2866, %v3336
      %v3339 = vunpack.c.l.s4 1983009808
      %v3340 = vunpack.c.0.s8 %v3339
      %v3341 = vlaneseq
      %v3342 = vshrl.u32 %v3341, 7
      %v3343 = vsub.s32 %v3340, %v3342
      %v3344 = vrot.slane %v3330, %v3343
      %v3345 = vcombine.high %v3337, %v3337
      %v3346 = vcombine.high %v3344, %v3344
      %v3347 = vcombine.high %v2867, %v2867
      %v3349 = vunpack.c.l.s4 1983009808
      %v3350 = vunpack.c.0.s8 %v3349
      %v3351 = vlaneseq
      %v3352 = vshrl.u32 %v3351, 7
      %v3353 = vsub.s32 %v3350, %v3352
      %v3354 = vrot.slane %v2867, %v3353
      %v3356 = vunpack.c.l.s4 1983009808
      %v3357 = vunpack.c.0.s8 %v3356
      %v3358 = vlaneseq
      %v3359 = vshrl.u32 %v3358, 7
      %v3360 = vsub.s32 %v3357, %v3359
      %v3361 = vrot.slane %v3347, %v3360
      %v3362 = vcombine.high %v3354, %v3354
      %v3363 = vcombine.high %v3361, %v3361
      %v3364 = vcombine.high %v2868, %v2868
      %v3366 = vunpack.c.l.s4 1983009808
      %v3367 = vunpack.c.0.s8 %v3366
      %v3368 = vlaneseq
      %v3369 = vshrl.u32 %v3368, 7
      %v3370 = vsub.s32 %v3367, %v3369
      %v3371 = vrot.slane %v2868, %v3370
      %v3373 = vunpack.c.l.s4 1983009808
      %v3374 = vunpack.c.0.s8 %v3373
      %v3375 = vlaneseq
      %v3376 = vshrl.u32 %v3375, 7
      %v3377 = vsub.s32 %v3374, %v3376
      %v3378 = vrot.slane %v3364, %v3377
      %v3379 = vcombine.high %v3371, %v3371
      %v3380 = vcombine.high %v3378, %v3378
      %v3381 = vcombine.high %v2869, %v2869
      %v3383 = vunpack.c.l.s4 1983009808
      %v3384 = vunpack.c.0.s8 %v3383
      %v3385 = vlaneseq
      %v3386 = vshrl.u32 %v3385, 7
      %v3387 = vsub.s32 %v3384, %v3386
      %v3388 = vrot.slane %v2869, %v3387
      %v3390 = vunpack.c.l.s4 1983009808
      %v3391 = vunpack.c.0.s8 %v3390
      %v3392 = vlaneseq
      %v3393 = vshrl.u32 %v3392, 7
      %v3394 = vsub.s32 %v3391, %v3393
      %v3395 = vrot.slane %v3381, %v3394
      %v3396 = vcombine.high %v3388, %v3388
      %v3397 = vcombine.high %v3395, %v3395
      %v3398 = vcombine.high %v2870, %v2870
      %v3400 = vunpack.c.l.s4 1983009808
      %v3401 = vunpack.c.0.s8 %v3400
      %v3402 = vlaneseq
      %v3403 = vshrl.u32 %v3402, 7
      %v3404 = vsub.s32 %v3401, %v3403
      %v3405 = vrot.slane %v2870, %v3404
      %v3407 = vunpack.c.l.s4 1983009808
      %v3408 = vunpack.c.0.s8 %v3407
      %v3409 = vlaneseq
      %v3410 = vshrl.u32 %v3409, 7
      %v3411 = vsub.s32 %v3408, %v3410
      %v3412 = vrot.slane %v3398, %v3411
      %v3413 = vcombine.high %v3405, %v3405
      %v3414 = vcombine.high %v3412, %v3412
      %v3415 = vcombine.high %v2871, %v2871
      %v3417 = vunpack.c.l.s4 1983009808
      %v3418 = vunpack.c.0.s8 %v3417
      %v3419 = vlaneseq
      %v3420 = vshrl.u32 %v3419, 7
      %v3421 = vsub.s32 %v3418, %v3420
      %v3422 = vrot.slane %v2871, %v3421
      %v3424 = vunpack.c.l.s4 1983009808
      %v3425 = vunpack.c.0.s8 %v3424
      %v3426 = vlaneseq
      %v3427 = vshrl.u32 %v3426, 7
      %v3428 = vsub.s32 %v3425, %v3427
      %v3429 = vrot.slane %v3415, %v3428
      %v3430 = vcombine.high %v3422, %v3422
      %v3431 = vcombine.high %v3429, %v3429
      %v3432 = vcombine.high %v2872, %v2872
      %v3434 = vunpack.c.l.s4 1983009808
      %v3435 = vunpack.c.0.s8 %v3434
      %v3436 = vlaneseq
      %v3437 = vshrl.u32 %v3436, 7
      %v3438 = vsub.s32 %v3435, %v3437
      %v3439 = vrot.slane %v2872, %v3438
      %v3441 = vunpack.c.l.s4 1983009808
      %v3442 = vunpack.c.0.s8 %v3441
      %v3443 = vlaneseq
      %v3444 = vshrl.u32 %v3443, 7
      %v3445 = vsub.s32 %v3442, %v3444
      %v3446 = vrot.slane %v3432, %v3445
      %v3447 = vcombine.high %v3439, %v3439
      %v3448 = vcombine.high %v3446, %v3446
      %v3577 = vrot.slane %v2912, 7
      %v3578 = vrot.slane %v3577, 2
      %v3579 = vrot.slane %v2920, 7
      %v3580 = vrot.slane %v3579, 2
      %v3581 = vrot.slane %v2919, 7
      %v3582 = vrot.slane %v3581, 2
      %v3583 = vrot.slane %v2921, 7
      %v3584 = vrot.slane %v3583, 2
      %v3585 = vrot.slane %v2929, 7
      %v3586 = vrot.slane %v3585, 2
      %v3587 = vrot.slane %v2937, 7
      %v3588 = vrot.slane %v3587, 2
      %v3589 = vrot.slane %v2936, 7
      %v3590 = vrot.slane %v3589, 2
      %v3591 = vrot.slane %v2938, 7
      %v3592 = vrot.slane %v3591, 2
      %v3593 = vrot.slane %v2946, 7
      %v3594 = vrot.slane %v3593, 2
      %v3595 = vrot.slane %v2954, 7
      %v3596 = vrot.slane %v3595, 2
      %v3597 = vrot.slane %v2953, 7
      %v3598 = vrot.slane %v3597, 2
      %v3599 = vrot.slane %v2955, 7
      %v3600 = vrot.slane %v3599, 2
      %v3601 = vrot.slane %v2963, 7
      %v3602 = vrot.slane %v3601, 2
      %v3603 = vrot.slane %v2971, 7
      %v3604 = vrot.slane %v3603, 2
      %v3605 = vrot.slane %v2970, 7
      %v3606 = vrot.slane %v3605, 2
      %v3607 = vrot.slane %v2972, 7
      %v3608 = vrot.slane %v3607, 2
      %v3609 = vrot.slane %v2980, 7
      %v3610 = vrot.slane %v3609, 2
      %v3611 = vrot.slane %v2988, 7
      %v3612 = vrot.slane %v3611, 2
      %v3613 = vrot.slane %v2987, 7
      %v3614 = vrot.slane %v3613, 2
      %v3615 = vrot.slane %v2989, 7
      %v3616 = vrot.slane %v3615, 2
      %v3617 = vrot.slane %v2997, 7
      %v3618 = vrot.slane %v3617, 2
      %v3619 = vrot.slane %v3005, 7
      %v3620 = vrot.slane %v3619, 2
      %v3621 = vrot.slane %v3004, 7
      %v3622 = vrot.slane %v3621, 2
      %v3623 = vrot.slane %v3006, 7
      %v3624 = vrot.slane %v3623, 2
      %v3625 = vrot.slane %v3014, 7
      %v3626 = vrot.slane %v3625, 2
      %v3627 = vrot.slane %v3022, 7
      %v3628 = vrot.slane %v3627, 2
      %v3629 = vrot.slane %v3021, 7
      %v3630 = vrot.slane %v3629, 2
      %v3631 = vrot.slane %v3023, 7
      %v3632 = vrot.slane %v3631, 2
      %v3633 = vrot.slane %v3031, 7
      %v3634 = vrot.slane %v3633, 2
      %v3635 = vrot.slane %v3039, 7
      %v3636 = vrot.slane %v3635, 2
      %v3637 = vrot.slane %v3038, 7
      %v3638 = vrot.slane %v3637, 2
      %v3639 = vrot.slane %v3040, 7
      %v3640 = vrot.slane %v3639, 2
      %v3641 = vrot.slane %v3048, 7
      %v3642 = vrot.slane %v3641, 2
      %v3643 = vrot.slane %v3056, 7
      %v3644 = vrot.slane %v3643, 2
      %v3645 = vrot.slane %v3055, 7
      %v3646 = vrot.slane %v3645, 2
      %v3647 = vrot.slane %v3057, 7
      %v3648 = vrot.slane %v3647, 2
      %v3649 = vrot.slane %v3065, 7
      %v3650 = vrot.slane %v3649, 2
      %v3651 = vrot.slane %v3073, 7
      %v3652 = vrot.slane %v3651, 2
      %v3653 = vrot.slane %v3072, 7
      %v3654 = vrot.slane %v3653, 2
      %v3655 = vrot.slane %v3074, 7
      %v3656 = vrot.slane %v3655, 2
      %v3657 = vrot.slane %v3082, 7
      %v3658 = vrot.slane %v3657, 2
      %v3659 = vrot.slane %v3090, 7
      %v3660 = vrot.slane %v3659, 2
      %v3661 = vrot.slane %v3089, 7
      %v3662 = vrot.slane %v3661, 2
      %v3663 = vrot.slane %v3091, 7
      %v3664 = vrot.slane %v3663, 2
      %v3665 = vrot.slane %v3099, 7
      %v3666 = vrot.slane %v3665, 2
      %v3667 = vrot.slane %v3107, 7
      %v3668 = vrot.slane %v3667, 2
      %v3669 = vrot.slane %v3106, 7
      %v3670 = vrot.slane %v3669, 2
      %v3671 = vrot.slane %v3108, 7
      %v3672 = vrot.slane %v3671, 2
      %v3673 = vrot.slane %v3116, 7
      %v3674 = vrot.slane %v3673, 2
      %v3675 = vrot.slane %v3124, 7
      %v3676 = vrot.slane %v3675, 2
      %v3677 = vrot.slane %v3123, 7
      %v3678 = vrot.slane %v3677, 2
      %v3679 = vrot.slane %v3125, 7
      %v3680 = vrot.slane %v3679, 2
      %v3681 = vrot.slane %v3133, 7
      %v3682 = vrot.slane %v3681, 2
      %v3683 = vrot.slane %v3141, 7
      %v3684 = vrot.slane %v3683, 2
      %v3685 = vrot.slane %v3140, 7
      %v3686 = vrot.slane %v3685, 2
      %v3687 = vrot.slane %v3142, 7
      %v3688 = vrot.slane %v3687, 2
      %v3689 = vrot.slane %v3150, 7
      %v3690 = vrot.slane %v3689, 2
      %v3691 = vrot.slane %v3158, 7
      %v3692 = vrot.slane %v3691, 2
      %v3693 = vrot.slane %v3157, 7
      %v3694 = vrot.slane %v3693, 2
      %v3695 = vrot.slane %v3159, 7
      %v3696 = vrot.slane %v3695, 2
      %v3697 = vrot.slane %v3167, 7
      %v3698 = vrot.slane %v3697, 2
      %v3699 = vrot.slane %v3175, 7
      %v3700 = vrot.slane %v3699, 2
      %v3701 = vrot.slane %v3174, 7
      %v3702 = vrot.slane %v3701, 2
      %v3703 = vrot.slane %v3176, 7
      %v3704 = vrot.slane %v3703, 2
      %v3705 = vrot.slane %v3184, 7
      %v3706 = vrot.slane %v3705, 2
      %v3707 = vrot.slane %v3192, 7
      %v3708 = vrot.slane %v3707, 2
      %v3709 = vrot.slane %v3191, 7
      %v3710 = vrot.slane %v3709, 2
      %v3711 = vrot.slane %v3193, 7
      %v3712 = vrot.slane %v3711, 2
      %v3713 = vrot.slane %v3201, 7
      %v3714 = vrot.slane %v3713, 2
      %v3715 = vrot.slane %v3209, 7
      %v3716 = vrot.slane %v3715, 2
      %v3717 = vrot.slane %v3208, 7
      %v3718 = vrot.slane %v3717, 2
      %v3719 = vrot.slane %v3210, 7
      %v3720 = vrot.slane %v3719, 2
      %v3721 = vrot.slane %v3218, 7
      %v3722 = vrot.slane %v3721, 2
      %v3723 = vrot.slane %v3226, 7
      %v3724 = vrot.slane %v3723, 2
      %v3725 = vrot.slane %v3225, 7
      %v3726 = vrot.slane %v3725, 2
      %v3727 = vrot.slane %v3227, 7
      %v3728 = vrot.slane %v3727, 2
      %v3729 = vrot.slane %v3235, 7
      %v3730 = vrot.slane %v3729, 2
      %v3731 = vrot.slane %v3243, 7
      %v3732 = vrot.slane %v3731, 2
      %v3733 = vrot.slane %v3242, 7
      %v3734 = vrot.slane %v3733, 2
      %v3735 = vrot.slane %v3244, 7
      %v3736 = vrot.slane %v3735, 2
      %v3737 = vrot.slane %v3252, 7
      %v3738 = vrot.slane %v3737, 2
      %v3739 = vrot.slane %v3260, 7
      %v3740 = vrot.slane %v3739, 2
      %v3741 = vrot.slane %v3259, 7
      %v3742 = vrot.slane %v3741, 2
      %v3743 = vrot.slane %v3261, 7
      %v3744 = vrot.slane %v3743, 2
      %v3745 = vrot.slane %v3269, 7
      %v3746 = vrot.slane %v3745, 2
      %v3747 = vrot.slane %v3277, 7
      %v3748 = vrot.slane %v3747, 2
      %v3749 = vrot.slane %v3276, 7
      %v3750 = vrot.slane %v3749, 2
      %v3751 = vrot.slane %v3278, 7
      %v3752 = vrot.slane %v3751, 2
      %v3753 = vrot.slane %v3286, 7
      %v3754 = vrot.slane %v3753, 2
      %v3755 = vrot.slane %v3294, 7
      %v3756 = vrot.slane %v3755, 2
      %v3757 = vrot.slane %v3293, 7
      %v3758 = vrot.slane %v3757, 2
      %v3759 = vrot.slane %v3295, 7
      %v3760 = vrot.slane %v3759, 2
      %v3761 = vrot.slane %v3303, 7
      %v3762 = vrot.slane %v3761, 2
      %v3763 = vrot.slane %v3311, 7
      %v3764 = vrot.slane %v3763, 2
      %v3765 = vrot.slane %v3310, 7
      %v3766 = vrot.slane %v3765, 2
      %v3767 = vrot.slane %v3312, 7
      %v3768 = vrot.slane %v3767, 2
      %v3769 = vrot.slane %v3320, 7
      %v3770 = vrot.slane %v3769, 2
      %v3771 = vrot.slane %v3328, 7
      %v3772 = vrot.slane %v3771, 2
      %v3773 = vrot.slane %v3327, 7
      %v3774 = vrot.slane %v3773, 2
      %v3775 = vrot.slane %v3329, 7
      %v3776 = vrot.slane %v3775, 2
      %v3777 = vrot.slane %v3337, 7
      %v3778 = vrot.slane %v3777, 2
      %v3779 = vrot.slane %v3345, 7
      %v3780 = vrot.slane %v3779, 2
      %v3781 = vrot.slane %v3344, 7
      %v3782 = vrot.slane %v3781, 2
      %v3783 = vrot.slane %v3346, 7
      %v3784 = vrot.slane %v3783, 2
      %v3785 = vrot.slane %v3354, 7
      %v3786 = vrot.slane %v3785, 2
      %v3787 = vrot.slane %v3362, 7
      %v3788 = vrot.slane %v3787, 2
      %v3789 = vrot.slane %v3361, 7
      %v3790 = vrot.slane %v3789, 2
      %v3791 = vrot.slane %v3363, 7
      %v3792 = vrot.slane %v3791, 2
      %v3793 = vrot.slane %v3371, 7
      %v3794 = vrot.slane %v3793, 2
      %v3795 = vrot.slane %v3379, 7
      %v3796 = vrot.slane %v3795, 2
      %v3797 = vrot.slane %v3378, 7
      %v3798 = vrot.slane %v3797, 2
      %v3799 = vrot.slane %v3380, 7
      %v3800 = vrot.slane %v3799, 2
      %v3801 = vrot.slane %v3388, 7
      %v3802 = vrot.slane %v3801, 2
      %v3803 = vrot.slane %v3396, 7
      %v3804 = vrot.slane %v3803, 2
      %v3805 = vrot.slane %v3395, 7
      %v3806 = vrot.slane %v3805, 2
      %v3807 = vrot.slane %v3397, 7
      %v3808 = vrot.slane %v3807, 2
      %v3809 = vrot.slane %v3405, 7
      %v3810 = vrot.slane %v3809, 2
      %v3811 = vrot.slane %v3413, 7
      %v3812 = vrot.slane %v3811, 2
      %v3813 = vrot.slane %v3412, 7
      %v3814 = vrot.slane %v3813, 2
      %v3815 = vrot.slane %v3414, 7
      %v3816 = vrot.slane %v3815, 2
      %v3817 = vrot.slane %v3422, 7
      %v3818 = vrot.slane %v3817, 2
      %v3819 = vrot.slane %v3430, 7
      %v3820 = vrot.slane %v3819, 2
      %v3821 = vrot.slane %v3429, 7
      %v3822 = vrot.slane %v3821, 2
      %v3823 = vrot.slane %v3431, 7
      %v3824 = vrot.slane %v3823, 2
      %v3825 = vrot.slane %v3439, 7
      %v3826 = vrot.slane %v3825, 2
      %v3827 = vrot.slane %v3447, 7
      %v3828 = vrot.slane %v3827, 2
      %v3829 = vrot.slane %v3446, 7
      %v3830 = vrot.slane %v3829, 2
      %v3831 = vrot.slane %v3448, 7
      %v3832 = vrot.slane %v3831, 2
      %v3961 = vmax.f32 %v2912, %v3578
      %v3962 = vmax.f32 %v2920, %v3580
      %v3963 = vmax.f32 %v2919, %v3582
      %v3964 = vmax.f32 %v2921, %v3584
      %v3965 = vmax.f32 %v2929, %v3586
      %v3966 = vmax.f32 %v2937, %v3588
      %v3967 = vmax.f32 %v2936, %v3590
      %v3968 = vmax.f32 %v2938, %v3592
      %v3969 = vmax.f32 %v2946, %v3594
      %v3970 = vmax.f32 %v2954, %v3596
      %v3971 = vmax.f32 %v2953, %v3598
      %v3972 = vmax.f32 %v2955, %v3600
      %v3973 = vmax.f32 %v2963, %v3602
      %v3974 = vmax.f32 %v2971, %v3604
      %v3975 = vmax.f32 %v2970, %v3606
      %v3976 = vmax.f32 %v2972, %v3608
      %v3977 = vmax.f32 %v2980, %v3610
      %v3978 = vmax.f32 %v2988, %v3612
      %v3979 = vmax.f32 %v2987, %v3614
      %v3980 = vmax.f32 %v2989, %v3616
      %v3981 = vmax.f32 %v2997, %v3618
      %v3982 = vmax.f32 %v3005, %v3620
      %v3983 = vmax.f32 %v3004, %v3622
      %v3984 = vmax.f32 %v3006, %v3624
      %v3985 = vmax.f32 %v3014, %v3626
      %v3986 = vmax.f32 %v3022, %v3628
      %v3987 = vmax.f32 %v3021, %v3630
      %v3988 = vmax.f32 %v3023, %v3632
      %v3989 = vmax.f32 %v3031, %v3634
      %v3990 = vmax.f32 %v3039, %v3636
      %v3991 = vmax.f32 %v3038, %v3638
      %v3992 = vmax.f32 %v3040, %v3640
      %v3993 = vmax.f32 %v3048, %v3642
      %v3994 = vmax.f32 %v3056, %v3644
      %v3995 = vmax.f32 %v3055, %v3646
      %v3996 = vmax.f32 %v3057, %v3648
      %v3997 = vmax.f32 %v3065, %v3650
      %v3998 = vmax.f32 %v3073, %v3652
      %v3999 = vmax.f32 %v3072, %v3654
      %v4000 = vmax.f32 %v3074, %v3656
      %v4001 = vmax.f32 %v3082, %v3658
      %v4002 = vmax.f32 %v3090, %v3660
      %v4003 = vmax.f32 %v3089, %v3662
      %v4004 = vmax.f32 %v3091, %v3664
      %v4005 = vmax.f32 %v3099, %v3666
      %v4006 = vmax.f32 %v3107, %v3668
      %v4007 = vmax.f32 %v3106, %v3670
      %v4008 = vmax.f32 %v3108, %v3672
      %v4009 = vmax.f32 %v3116, %v3674
      %v4010 = vmax.f32 %v3124, %v3676
      %v4011 = vmax.f32 %v3123, %v3678
      %v4012 = vmax.f32 %v3125, %v3680
      %v4013 = vmax.f32 %v3133, %v3682
      %v4014 = vmax.f32 %v3141, %v3684
      %v4015 = vmax.f32 %v3140, %v3686
      %v4016 = vmax.f32 %v3142, %v3688
      %v4017 = vmax.f32 %v3150, %v3690
      %v4018 = vmax.f32 %v3158, %v3692
      %v4019 = vmax.f32 %v3157, %v3694
      %v4020 = vmax.f32 %v3159, %v3696
      %v4021 = vmax.f32 %v3167, %v3698
      %v4022 = vmax.f32 %v3175, %v3700
      %v4023 = vmax.f32 %v3174, %v3702
      %v4024 = vmax.f32 %v3176, %v3704
      %v4025 = vmax.f32 %v3184, %v3706
      %v4026 = vmax.f32 %v3192, %v3708
      %v4027 = vmax.f32 %v3191, %v3710
      %v4028 = vmax.f32 %v3193, %v3712
      %v4029 = vmax.f32 %v3201, %v3714
      %v4030 = vmax.f32 %v3209, %v3716
      %v4031 = vmax.f32 %v3208, %v3718
      %v4032 = vmax.f32 %v3210, %v3720
      %v4033 = vmax.f32 %v3218, %v3722
      %v4034 = vmax.f32 %v3226, %v3724
      %v4035 = vmax.f32 %v3225, %v3726
      %v4036 = vmax.f32 %v3227, %v3728
      %v4037 = vmax.f32 %v3235, %v3730
      %v4038 = vmax.f32 %v3243, %v3732
      %v4039 = vmax.f32 %v3242, %v3734
      %v4040 = vmax.f32 %v3244, %v3736
      %v4041 = vmax.f32 %v3252, %v3738
      %v4042 = vmax.f32 %v3260, %v3740
      %v4043 = vmax.f32 %v3259, %v3742
      %v4044 = vmax.f32 %v3261, %v3744
      %v4045 = vmax.f32 %v3269, %v3746
      %v4046 = vmax.f32 %v3277, %v3748
      %v4047 = vmax.f32 %v3276, %v3750
      %v4048 = vmax.f32 %v3278, %v3752
      %v4049 = vmax.f32 %v3286, %v3754
      %v4050 = vmax.f32 %v3294, %v3756
      %v4051 = vmax.f32 %v3293, %v3758
      %v4052 = vmax.f32 %v3295, %v3760
      %v4053 = vmax.f32 %v3303, %v3762
      %v4054 = vmax.f32 %v3311, %v3764
      %v4055 = vmax.f32 %v3310, %v3766
      %v4056 = vmax.f32 %v3312, %v3768
      %v4057 = vmax.f32 %v3320, %v3770
      %v4058 = vmax.f32 %v3328, %v3772
      %v4059 = vmax.f32 %v3327, %v3774
      %v4060 = vmax.f32 %v3329, %v3776
      %v4061 = vmax.f32 %v3337, %v3778
      %v4062 = vmax.f32 %v3345, %v3780
      %v4063 = vmax.f32 %v3344, %v3782
      %v4064 = vmax.f32 %v3346, %v3784
      %v4065 = vmax.f32 %v3354, %v3786
      %v4066 = vmax.f32 %v3362, %v3788
      %v4067 = vmax.f32 %v3361, %v3790
      %v4068 = vmax.f32 %v3363, %v3792
      %v4069 = vmax.f32 %v3371, %v3794
      %v4070 = vmax.f32 %v3379, %v3796
      %v4071 = vmax.f32 %v3378, %v3798
      %v4072 = vmax.f32 %v3380, %v3800
      %v4073 = vmax.f32 %v3388, %v3802
      %v4074 = vmax.f32 %v3396, %v3804
      %v4075 = vmax.f32 %v3395, %v3806
      %v4076 = vmax.f32 %v3397, %v3808
      %v4077 = vmax.f32 %v3405, %v3810
      %v4078 = vmax.f32 %v3413, %v3812
      %v4079 = vmax.f32 %v3412, %v3814
      %v4080 = vmax.f32 %v3414, %v3816
      %v4081 = vmax.f32 %v3422, %v3818
      %v4082 = vmax.f32 %v3430, %v3820
      %v4083 = vmax.f32 %v3429, %v3822
      %v4084 = vmax.f32 %v3431, %v3824
      %v4085 = vmax.f32 %v3439, %v3826
      %v4086 = vmax.f32 %v3447, %v3828
      %v4087 = vmax.f32 %v3446, %v3830
      %v4088 = vmax.f32 %v3448, %v3832
      %v4089 = vmax.f32 %v3961, %v3969
      %v4090 = vmax.f32 %v3962, %v3970
      %v4091 = vmax.f32 %v3963, %v3971
      %v4092 = vmax.f32 %v3964, %v3972
      %v4093 = vmax.f32 %v3965, %v3973
      %v4094 = vmax.f32 %v3966, %v3974
      %v4095 = vmax.f32 %v3967, %v3975
      %v4096 = vmax.f32 %v3968, %v3976
      %v4097 = vmax.f32 %v3977, %v3985
      %v4098 = vmax.f32 %v3978, %v3986
      %v4099 = vmax.f32 %v3979, %v3987
      %v4100 = vmax.f32 %v3980, %v3988
      %v4101 = vmax.f32 %v3981, %v3989
      %v4102 = vmax.f32 %v3982, %v3990
      %v4103 = vmax.f32 %v3983, %v3991
      %v4104 = vmax.f32 %v3984, %v3992
      %v4105 = vmax.f32 %v3993, %v4001
      %v4106 = vmax.f32 %v3994, %v4002
      %v4107 = vmax.f32 %v3995, %v4003
      %v4108 = vmax.f32 %v3996, %v4004
      %v4109 = vmax.f32 %v3997, %v4005
      %v4110 = vmax.f32 %v3998, %v4006
      %v4111 = vmax.f32 %v3999, %v4007
      %v4112 = vmax.f32 %v4000, %v4008
      %v4113 = vmax.f32 %v4009, %v4017
      %v4114 = vmax.f32 %v4010, %v4018
      %v4115 = vmax.f32 %v4011, %v4019
      %v4116 = vmax.f32 %v4012, %v4020
      %v4117 = vmax.f32 %v4013, %v4021
      %v4118 = vmax.f32 %v4014, %v4022
      %v4119 = vmax.f32 %v4015, %v4023
      %v4120 = vmax.f32 %v4016, %v4024
      %v4121 = vmax.f32 %v4025, %v4033
      %v4122 = vmax.f32 %v4026, %v4034
      %v4123 = vmax.f32 %v4027, %v4035
      %v4124 = vmax.f32 %v4028, %v4036
      %v4125 = vmax.f32 %v4029, %v4037
      %v4126 = vmax.f32 %v4030, %v4038
      %v4127 = vmax.f32 %v4031, %v4039
      %v4128 = vmax.f32 %v4032, %v4040
      %v4129 = vmax.f32 %v4041, %v4049
      %v4130 = vmax.f32 %v4042, %v4050
      %v4131 = vmax.f32 %v4043, %v4051
      %v4132 = vmax.f32 %v4044, %v4052
      %v4133 = vmax.f32 %v4045, %v4053
      %v4134 = vmax.f32 %v4046, %v4054
      %v4135 = vmax.f32 %v4047, %v4055
      %v4136 = vmax.f32 %v4048, %v4056
      %v4137 = vmax.f32 %v4057, %v4065
      %v4138 = vmax.f32 %v4058, %v4066
      %v4139 = vmax.f32 %v4059, %v4067
      %v4140 = vmax.f32 %v4060, %v4068
      %v4141 = vmax.f32 %v4061, %v4069
      %v4142 = vmax.f32 %v4062, %v4070
      %v4143 = vmax.f32 %v4063, %v4071
      %v4144 = vmax.f32 %v4064, %v4072
      %v4145 = vmax.f32 %v4073, %v4081
      %v4146 = vmax.f32 %v4074, %v4082
      %v4147 = vmax.f32 %v4075, %v4083
      %v4148 = vmax.f32 %v4076, %v4084
      %v4149 = vmax.f32 %v4077, %v4085
      %v4150 = vmax.f32 %v4078, %v4086
      %v4151 = vmax.f32 %v4079, %v4087
      %v4152 = vmax.f32 %v4080, %v4088
      %vm4153 = vcmask 261120
      %4154 = vst.msk [vmem:[#allocation3] sm:$0xff] %vm4153, 0.0
      %vm4155 = vcmask 254976
      %4156 = vst.msk [vmem:[#allocation3 + $0x8] sm:$0x3] %vm4155, 0.0
      %4157 = vst.msk [vmem:[#allocation3 + $0x10] sm:$0xff] %vm4153, 0.0
      %4158 = vst.msk [vmem:[#allocation3 + $0x18] sm:$0x3] %vm4155, 0.0
      %4159 = vst.msk [vmem:[#allocation3 + $0x20] sm:$0xff] %vm4153, 0.0
      %4160 = vst.msk [vmem:[#allocation3 + $0x28] sm:$0x3] %vm4155, 0.0
      %4161 = vst.msk [vmem:[#allocation3 + $0x30] sm:$0xff] %vm4153, 0.0
      %4162 = vst.msk [vmem:[#allocation3 + $0x38] sm:$0x3] %vm4155, 0.0
      %4163 = vst.msk [vmem:[#allocation3 + $0x40] sm:$0xff] %vm4153, 0.0
      %4164 = vst.msk [vmem:[#allocation3 + $0x48] sm:$0x3] %vm4155, 0.0
      %4165 = vst.msk [vmem:[#allocation3 + $0x50] sm:$0xff] %vm4153, 0.0
      %4166 = vst.msk [vmem:[#allocation3 + $0x58] sm:$0x3] %vm4155, 0.0
      %4167 = vst.msk [vmem:[#allocation3 + $0x60] sm:$0xff] %vm4153, 0.0
      %4168 = vst.msk [vmem:[#allocation3 + $0x68] sm:$0x3] %vm4155, 0.0
      %4169 = vst.msk [vmem:[#allocation3 + $0x70] sm:$0xff] %vm4153, 0.0
      %4170 = vst.msk [vmem:[#allocation3 + $0x78] sm:$0x3] %vm4155, 0.0
      %4171 = vst.msk [vmem:[#allocation3 + $0x80] sm:$0xff] %vm4153, 0.0
      %4172 = vst.msk [vmem:[#allocation3 + $0x88] sm:$0x3] %vm4155, 0.0
      %4173 = vst.msk [vmem:[#allocation3 + $0x90] sm:$0xff] %vm4153, 0.0
      %4174 = vst.msk [vmem:[#allocation3 + $0x98] sm:$0x3] %vm4155, 0.0
      %v4239 = vlaneseq
      %v4240 = vshrl.u32 %v4239, 7
      %v4241 = vsub.s32 0, %v4240
      %v4242 = vrot.slane %v4089, %v4241
      %v4243 = vlaneseq
      %v4244 = vshrl.u32 %v4243, 7
      %v4245 = vsub.s32 0, %v4244
      %v4246 = vrot.slane %v4090, %v4245
      %v4247 = vlaneseq
      %v4248 = vshrl.u32 %v4247, 7
      %v4249 = vsub.s32 0, %v4248
      %v4250 = vrot.slane %v4091, %v4249
      %v4251 = vlaneseq
      %v4252 = vshrl.u32 %v4251, 7
      %v4253 = vsub.s32 0, %v4252
      %v4254 = vrot.slane %v4092, %v4253
      %v4255 = vlaneseq
      %v4256 = vshrl.u32 %v4255, 7
      %v4257 = vsub.s32 0, %v4256
      %v4258 = vrot.slane %v4093, %v4257
      %v4259 = vlaneseq
      %v4260 = vshrl.u32 %v4259, 7
      %v4261 = vsub.s32 0, %v4260
      %v4262 = vrot.slane %v4094, %v4261
      %v4263 = vlaneseq
      %v4264 = vshrl.u32 %v4263, 7
      %v4265 = vsub.s32 0, %v4264
      %v4266 = vrot.slane %v4095, %v4265
      %v4267 = vlaneseq
      %v4268 = vshrl.u32 %v4267, 7
      %v4269 = vsub.s32 0, %v4268
      %v4270 = vrot.slane %v4096, %v4269
      %v4271 = vlaneseq
      %v4272 = vshrl.u32 %v4271, 7
      %v4273 = vsub.s32 0, %v4272
      %v4274 = vrot.slane %v4097, %v4273
      %v4275 = vlaneseq
      %v4276 = vshrl.u32 %v4275, 7
      %v4277 = vsub.s32 0, %v4276
      %v4278 = vrot.slane %v4098, %v4277
      %v4279 = vlaneseq
      %v4280 = vshrl.u32 %v4279, 7
      %v4281 = vsub.s32 0, %v4280
      %v4282 = vrot.slane %v4099, %v4281
      %v4283 = vlaneseq
      %v4284 = vshrl.u32 %v4283, 7
      %v4285 = vsub.s32 0, %v4284
      %v4286 = vrot.slane %v4100, %v4285
      %v4287 = vlaneseq
      %v4288 = vshrl.u32 %v4287, 7
      %v4289 = vsub.s32 0, %v4288
      %v4290 = vrot.slane %v4101, %v4289
      %v4291 = vlaneseq
      %v4292 = vshrl.u32 %v4291, 7
      %v4293 = vsub.s32 0, %v4292
      %v4294 = vrot.slane %v4102, %v4293
      %v4295 = vlaneseq
      %v4296 = vshrl.u32 %v4295, 7
      %v4297 = vsub.s32 0, %v4296
      %v4298 = vrot.slane %v4103, %v4297
      %v4299 = vlaneseq
      %v4300 = vshrl.u32 %v4299, 7
      %v4301 = vsub.s32 0, %v4300
      %v4302 = vrot.slane %v4104, %v4301
      %v4303 = vlaneseq
      %v4304 = vshrl.u32 %v4303, 7
      %v4305 = vsub.s32 0, %v4304
      %v4306 = vrot.slane %v4105, %v4305
      %v4307 = vlaneseq
      %v4308 = vshrl.u32 %v4307, 7
      %v4309 = vsub.s32 0, %v4308
      %v4310 = vrot.slane %v4106, %v4309
      %v4311 = vlaneseq
      %v4312 = vshrl.u32 %v4311, 7
      %v4313 = vsub.s32 0, %v4312
      %v4314 = vrot.slane %v4107, %v4313
      %v4315 = vlaneseq
      %v4316 = vshrl.u32 %v4315, 7
      %v4317 = vsub.s32 0, %v4316
      %v4318 = vrot.slane %v4108, %v4317
      %v4319 = vlaneseq
      %v4320 = vshrl.u32 %v4319, 7
      %v4321 = vsub.s32 0, %v4320
      %v4322 = vrot.slane %v4109, %v4321
      %v4323 = vlaneseq
      %v4324 = vshrl.u32 %v4323, 7
      %v4325 = vsub.s32 0, %v4324
      %v4326 = vrot.slane %v4110, %v4325
      %v4327 = vlaneseq
      %v4328 = vshrl.u32 %v4327, 7
      %v4329 = vsub.s32 0, %v4328
      %v4330 = vrot.slane %v4111, %v4329
      %v4331 = vlaneseq
      %v4332 = vshrl.u32 %v4331, 7
      %v4333 = vsub.s32 0, %v4332
      %v4334 = vrot.slane %v4112, %v4333
      %v4335 = vlaneseq
      %v4336 = vshrl.u32 %v4335, 7
      %v4337 = vsub.s32 0, %v4336
      %v4338 = vrot.slane %v4113, %v4337
      %v4339 = vlaneseq
      %v4340 = vshrl.u32 %v4339, 7
      %v4341 = vsub.s32 0, %v4340
      %v4342 = vrot.slane %v4114, %v4341
      %v4343 = vlaneseq
      %v4344 = vshrl.u32 %v4343, 7
      %v4345 = vsub.s32 0, %v4344
      %v4346 = vrot.slane %v4115, %v4345
      %v4347 = vlaneseq
      %v4348 = vshrl.u32 %v4347, 7
      %v4349 = vsub.s32 0, %v4348
      %v4350 = vrot.slane %v4116, %v4349
      %v4351 = vlaneseq
      %v4352 = vshrl.u32 %v4351, 7
      %v4353 = vsub.s32 0, %v4352
      %v4354 = vrot.slane %v4117, %v4353
      %v4355 = vlaneseq
      %v4356 = vshrl.u32 %v4355, 7
      %v4357 = vsub.s32 0, %v4356
      %v4358 = vrot.slane %v4118, %v4357
      %v4359 = vlaneseq
      %v4360 = vshrl.u32 %v4359, 7
      %v4361 = vsub.s32 0, %v4360
      %v4362 = vrot.slane %v4119, %v4361
      %v4363 = vlaneseq
      %v4364 = vshrl.u32 %v4363, 7
      %v4365 = vsub.s32 0, %v4364
      %v4366 = vrot.slane %v4120, %v4365
      %v4367 = vlaneseq
      %v4368 = vshrl.u32 %v4367, 7
      %v4369 = vsub.s32 0, %v4368
      %v4370 = vrot.slane %v4121, %v4369
      %v4371 = vlaneseq
      %v4372 = vshrl.u32 %v4371, 7
      %v4373 = vsub.s32 0, %v4372
      %v4374 = vrot.slane %v4122, %v4373
      %v4375 = vlaneseq
      %v4376 = vshrl.u32 %v4375, 7
      %v4377 = vsub.s32 0, %v4376
      %v4378 = vrot.slane %v4123, %v4377
      %v4379 = vlaneseq
      %v4380 = vshrl.u32 %v4379, 7
      %v4381 = vsub.s32 0, %v4380
      %v4382 = vrot.slane %v4124, %v4381
      %v4383 = vlaneseq
      %v4384 = vshrl.u32 %v4383, 7
      %v4385 = vsub.s32 0, %v4384
      %v4386 = vrot.slane %v4125, %v4385
      %v4387 = vlaneseq
      %v4388 = vshrl.u32 %v4387, 7
      %v4389 = vsub.s32 0, %v4388
      %v4390 = vrot.slane %v4126, %v4389
      %v4391 = vlaneseq
      %v4392 = vshrl.u32 %v4391, 7
      %v4393 = vsub.s32 0, %v4392
      %v4394 = vrot.slane %v4127, %v4393
      %v4395 = vlaneseq
      %v4396 = vshrl.u32 %v4395, 7
      %v4397 = vsub.s32 0, %v4396
      %v4398 = vrot.slane %v4128, %v4397
      %v4399 = vlaneseq
      %v4400 = vshrl.u32 %v4399, 7
      %v4401 = vsub.s32 0, %v4400
      %v4402 = vrot.slane %v4129, %v4401
      %v4403 = vlaneseq
      %v4404 = vshrl.u32 %v4403, 7
      %v4405 = vsub.s32 0, %v4404
      %v4406 = vrot.slane %v4130, %v4405
      %v4407 = vlaneseq
      %v4408 = vshrl.u32 %v4407, 7
      %v4409 = vsub.s32 0, %v4408
      %v4410 = vrot.slane %v4131, %v4409
      %v4411 = vlaneseq
      %v4412 = vshrl.u32 %v4411, 7
      %v4413 = vsub.s32 0, %v4412
      %v4414 = vrot.slane %v4132, %v4413
      %v4415 = vlaneseq
      %v4416 = vshrl.u32 %v4415, 7
      %v4417 = vsub.s32 0, %v4416
      %v4418 = vrot.slane %v4133, %v4417
      %v4419 = vlaneseq
      %v4420 = vshrl.u32 %v4419, 7
      %v4421 = vsub.s32 0, %v4420
      %v4422 = vrot.slane %v4134, %v4421
      %v4423 = vlaneseq
      %v4424 = vshrl.u32 %v4423, 7
      %v4425 = vsub.s32 0, %v4424
      %v4426 = vrot.slane %v4135, %v4425
      %v4427 = vlaneseq
      %v4428 = vshrl.u32 %v4427, 7
      %v4429 = vsub.s32 0, %v4428
      %v4430 = vrot.slane %v4136, %v4429
      %v4431 = vlaneseq
      %v4432 = vshrl.u32 %v4431, 7
      %v4433 = vsub.s32 0, %v4432
      %v4434 = vrot.slane %v4137, %v4433
      %v4435 = vlaneseq
      %v4436 = vshrl.u32 %v4435, 7
      %v4437 = vsub.s32 0, %v4436
      %v4438 = vrot.slane %v4138, %v4437
      %v4439 = vlaneseq
      %v4440 = vshrl.u32 %v4439, 7
      %v4441 = vsub.s32 0, %v4440
      %v4442 = vrot.slane %v4139, %v4441
      %v4443 = vlaneseq
      %v4444 = vshrl.u32 %v4443, 7
      %v4445 = vsub.s32 0, %v4444
      %v4446 = vrot.slane %v4140, %v4445
      %v4447 = vlaneseq
      %v4448 = vshrl.u32 %v4447, 7
      %v4449 = vsub.s32 0, %v4448
      %v4450 = vrot.slane %v4141, %v4449
      %v4451 = vlaneseq
      %v4452 = vshrl.u32 %v4451, 7
      %v4453 = vsub.s32 0, %v4452
      %v4454 = vrot.slane %v4142, %v4453
      %v4455 = vlaneseq
      %v4456 = vshrl.u32 %v4455, 7
      %v4457 = vsub.s32 0, %v4456
      %v4458 = vrot.slane %v4143, %v4457
      %v4459 = vlaneseq
      %v4460 = vshrl.u32 %v4459, 7
      %v4461 = vsub.s32 0, %v4460
      %v4462 = vrot.slane %v4144, %v4461
      %v4463 = vlaneseq
      %v4464 = vshrl.u32 %v4463, 7
      %v4465 = vsub.s32 0, %v4464
      %v4466 = vrot.slane %v4145, %v4465
      %v4467 = vlaneseq
      %v4468 = vshrl.u32 %v4467, 7
      %v4469 = vsub.s32 0, %v4468
      %v4470 = vrot.slane %v4146, %v4469
      %v4471 = vlaneseq
      %v4472 = vshrl.u32 %v4471, 7
      %v4473 = vsub.s32 0, %v4472
      %v4474 = vrot.slane %v4147, %v4473
      %v4475 = vlaneseq
      %v4476 = vshrl.u32 %v4475, 7
      %v4477 = vsub.s32 0, %v4476
      %v4478 = vrot.slane %v4148, %v4477
      %v4479 = vlaneseq
      %v4480 = vshrl.u32 %v4479, 7
      %v4481 = vsub.s32 0, %v4480
      %v4482 = vrot.slane %v4149, %v4481
      %v4483 = vlaneseq
      %v4484 = vshrl.u32 %v4483, 7
      %v4485 = vsub.s32 0, %v4484
      %v4486 = vrot.slane %v4150, %v4485
      %v4487 = vlaneseq
      %v4488 = vshrl.u32 %v4487, 7
      %v4489 = vsub.s32 0, %v4488
      %v4490 = vrot.slane %v4151, %v4489
      %v4491 = vlaneseq
      %v4492 = vshrl.u32 %v4491, 7
      %v4493 = vsub.s32 0, %v4492
      %v4494 = vrot.slane %v4152, %v4493
      %vm4495 = vcmask 1041409
      %v4496 = vsel %vm4495, %v4246, %v4242
      %vm4497 = vcmask 1042434
      %v4498 = vsel %vm4497, %v4250, %v4496
      %vm4499 = vcmask 1043459
      %v4500 = vsel %vm4499, %v4254, %v4498
      %vm4501 = vcmask 1044484
      %v4502 = vsel %vm4501, %v4258, %v4500
      %vm4503 = vcmask 1045509
      %v4504 = vsel %vm4503, %v4262, %v4502
      %vm4505 = vcmask 1046534
      %v4506 = vsel %vm4505, %v4266, %v4504
      %vm4507 = vcmask 1047559
      %v4508 = vsel %vm4507, %v4270, %v4506
      %v4509 = vsel %vm4495, %v4278, %v4274
      %v4510 = vsel %vm4497, %v4282, %v4509
      %v4511 = vsel %vm4499, %v4286, %v4510
      %v4512 = vsel %vm4501, %v4290, %v4511
      %v4513 = vsel %vm4503, %v4294, %v4512
      %v4514 = vsel %vm4505, %v4298, %v4513
      %v4515 = vsel %vm4507, %v4302, %v4514
      %v4516 = vsel %vm4495, %v4310, %v4306
      %v4517 = vsel %vm4497, %v4314, %v4516
      %v4518 = vsel %vm4499, %v4318, %v4517
      %v4519 = vsel %vm4501, %v4322, %v4518
      %v4520 = vsel %vm4503, %v4326, %v4519
      %v4521 = vsel %vm4505, %v4330, %v4520
      %v4522 = vsel %vm4507, %v4334, %v4521
      %v4523 = vsel %vm4495, %v4342, %v4338
      %v4524 = vsel %vm4497, %v4346, %v4523
      %v4525 = vsel %vm4499, %v4350, %v4524
      %v4526 = vsel %vm4501, %v4354, %v4525
      %v4527 = vsel %vm4503, %v4358, %v4526
      %v4528 = vsel %vm4505, %v4362, %v4527
      %v4529 = vsel %vm4507, %v4366, %v4528
      %v4530 = vsel %vm4495, %v4374, %v4370
      %v4531 = vsel %vm4497, %v4378, %v4530
      %v4532 = vsel %vm4499, %v4382, %v4531
      %v4533 = vsel %vm4501, %v4386, %v4532
      %v4534 = vsel %vm4503, %v4390, %v4533
      %v4535 = vsel %vm4505, %v4394, %v4534
      %v4536 = vsel %vm4507, %v4398, %v4535
      %v4537 = vsel %vm4495, %v4406, %v4402
      %v4538 = vsel %vm4497, %v4410, %v4537
      %v4539 = vsel %vm4499, %v4414, %v4538
      %v4540 = vsel %vm4501, %v4418, %v4539
      %v4541 = vsel %vm4503, %v4422, %v4540
      %v4542 = vsel %vm4505, %v4426, %v4541
      %v4543 = vsel %vm4507, %v4430, %v4542
      %v4544 = vsel %vm4495, %v4438, %v4434
      %v4545 = vsel %vm4497, %v4442, %v4544
      %v4546 = vsel %vm4499, %v4446, %v4545
      %v4547 = vsel %vm4501, %v4450, %v4546
      %v4548 = vsel %vm4503, %v4454, %v4547
      %v4549 = vsel %vm4505, %v4458, %v4548
      %v4550 = vsel %vm4507, %v4462, %v4549
      %v4551 = vsel %vm4495, %v4470, %v4466
      %v4552 = vsel %vm4497, %v4474, %v4551
      %v4553 = vsel %vm4499, %v4478, %v4552
      %v4554 = vsel %vm4501, %v4482, %v4553
      %v4555 = vsel %vm4503, %v4486, %v4554
      %v4556 = vsel %vm4505, %v4490, %v4555
      %v4557 = vsel %vm4507, %v4494, %v4556
      %s4566 = scalar_lea.vmem [#allocation3], 16
      %4567 = vst.msk [vmem:[%s4566 + $0x1] sm:$0xff] %vm4153, %v4508
      %4568 = vst.msk [vmem:[%s4566 + $0x11] sm:$0xff] %vm4153, %v4515
      %4569 = vst.msk [vmem:[%s4566 + $0x21] sm:$0xff] %vm4153, %v4522
      %4570 = vst.msk [vmem:[%s4566 + $0x31] sm:$0xff] %vm4153, %v4529
      %4571 = vst.msk [vmem:[%s4566 + $0x41] sm:$0xff] %vm4153, %v4536
      %4572 = vst.msk [vmem:[%s4566 + $0x51] sm:$0xff] %vm4153, %v4543
      %4573 = vst.msk [vmem:[%s4566 + $0x61] sm:$0xff] %vm4153, %v4550
      %4574 = vst.msk [vmem:[%s4566 + $0x71] sm:$0xff] %vm4153, %v4557
      %4575 = vst [vmem:[#allocation4] sm:$0xff] 0.0
      %4576 = vst [vmem:[#allocation4 + $0x8] sm:$0xff] 0.0
      %4577 = vst [vmem:[#allocation4 + $0x10] sm:$0xff] 0.0
      %4578 = vst [vmem:[#allocation4 + $0x18] sm:$0xff] 0.0
      %4579 = vst [vmem:[#allocation4 + $0x20] sm:$0xff] 0.0
      %4580 = vst [vmem:[#allocation4 + $0x28] sm:$0xff] 0.0
      %4581 = vst [vmem:[#allocation4 + $0x30] sm:$0xff] 0.0
      %4582 = vst [vmem:[#allocation4 + $0x38] sm:$0xff] 0.0
      %4583 = vst [vmem:[#allocation4 + $0x40] sm:$0xff] 0.0
      %4584 = vst [vmem:[#allocation4 + $0x48] sm:$0xff] 0.0
      %4585 = vst [vmem:[#allocation4 + $0x50] sm:$0xff] 0.0
      %4586 = vst [vmem:[#allocation4 + $0x58] sm:$0xff] 0.0
      %4587 = vst [vmem:[#allocation4 + $0x60] sm:$0xff] 0.0
      %4588 = vst [vmem:[#allocation4 + $0x68] sm:$0xff] 0.0
      %4589 = vst [vmem:[#allocation4 + $0x70] sm:$0xff] 0.0
      %4590 = vst [vmem:[#allocation4 + $0x78] sm:$0xff] 0.0
      %4591 = vst [vmem:[#allocation4 + $0x80] sm:$0xff] 0.0
      %4592 = vst [vmem:[#allocation4 + $0x88] sm:$0xff] 0.0
      %4593 = vst [vmem:[#allocation4 + $0x90] sm:$0xff] 0.0
      %4594 = vst [vmem:[#allocation4 + $0x98] sm:$0xff] 0.0
      %4595 = vst [vmem:[#allocation4 + $0xa0] sm:$0xff] 0.0
      %4596 = vst [vmem:[#allocation4 + $0xa8] sm:$0xff] 0.0
      %4597 = vst [vmem:[#allocation4 + $0xb0] sm:$0xff] 0.0
      %4598 = vst [vmem:[#allocation4 + $0xb8] sm:$0xff] 0.0
      %4599 = vst [vmem:[#allocation4 + $0xc0] sm:$0xff] 0.0
      %4600 = vst [vmem:[#allocation4 + $0xc8] sm:$0xff] 0.0
      %4601 = vst [vmem:[#allocation4 + $0xd0] sm:$0xff] 0.0
      %4602 = vst [vmem:[#allocation4 + $0xd8] sm:$0xff] 0.0
      %4603 = vst [vmem:[#allocation4 + $0xe0] sm:$0xff] 0.0
      %4604 = vst [vmem:[#allocation4 + $0xe8] sm:$0xff] 0.0
      %4605 = vst [vmem:[#allocation4 + $0xf0] sm:$0xff] 0.0
      %4606 = vst [vmem:[#allocation4 + $0xf8] sm:$0xff] 0.0
      %4607 = vst [vmem:[#allocation4 + $0x100] sm:$0xff] 0.0
      %4608 = vst [vmem:[#allocation4 + $0x108] sm:$0xff] 0.0
      %4609 = vst [vmem:[#allocation4 + $0x110] sm:$0xff] 0.0
      %4610 = vst [vmem:[#allocation4 + $0x118] sm:$0xff] 0.0
      %4611 = vst [vmem:[#allocation4 + $0x120] sm:$0xff] 0.0
      %4612 = vst [vmem:[#allocation4 + $0x128] sm:$0xff] 0.0
      %4613 = vst [vmem:[#allocation4 + $0x130] sm:$0xff] 0.0
      %4614 = vst [vmem:[#allocation4 + $0x138] sm:$0xff] 0.0
      %4615 = vst [vmem:[#allocation4 + $0x140] sm:$0xff] 0.0
      %4616 = vst [vmem:[#allocation4 + $0x148] sm:$0xff] 0.0
      %4617 = vst [vmem:[#allocation4 + $0x150] sm:$0xff] 0.0
      %4618 = vst [vmem:[#allocation4 + $0x158] sm:$0xff] 0.0
      %4619 = vst [vmem:[#allocation4 + $0x160] sm:$0xff] 0.0
      %4620 = vst [vmem:[#allocation4 + $0x168] sm:$0xff] 0.0
      %4621 = vst [vmem:[#allocation4 + $0x170] sm:$0xff] 0.0
      %4622 = vst [vmem:[#allocation4 + $0x178] sm:$0xff] 0.0
      %4623 = vst [vmem:[#allocation4 + $0x180] sm:$0xff] 0.0
      %4624 = vst [vmem:[#allocation4 + $0x188] sm:$0xff] 0.0
      %4625 = vst [vmem:[#allocation4 + $0x190] sm:$0xff] 0.0
      %4626 = vst [vmem:[#allocation4 + $0x198] sm:$0xff] 0.0
      %4627 = vst [vmem:[#allocation4 + $0x1a0] sm:$0xff] 0.0
      %4628 = vst [vmem:[#allocation4 + $0x1a8] sm:$0xff] 0.0
      %4629 = vst [vmem:[#allocation4 + $0x1b0] sm:$0xff] 0.0
      %4630 = vst [vmem:[#allocation4 + $0x1b8] sm:$0xff] 0.0
      %4631 = vst [vmem:[#allocation4 + $0x1c0] sm:$0xff] 0.0
      %4632 = vst [vmem:[#allocation4 + $0x1c8] sm:$0xff] 0.0
      %4633 = vst [vmem:[#allocation4 + $0x1d0] sm:$0xff] 0.0
      %4634 = vst [vmem:[#allocation4 + $0x1d8] sm:$0xff] 0.0
      %4635 = vst [vmem:[#allocation4 + $0x1e0] sm:$0xff] 0.0
      %4636 = vst [vmem:[#allocation4 + $0x1e8] sm:$0xff] 0.0
      %4637 = vst [vmem:[#allocation4 + $0x1f0] sm:$0xff] 0.0
      %4638 = vst [vmem:[#allocation4 + $0x1f8] sm:$0xff] 0.0
      %4639 = vst [vmem:[#allocation4 + $0x200] sm:$0xff] 0.0
      %4640 = vst [vmem:[#allocation4 + $0x208] sm:$0xff] 0.0
      %4641 = vst [vmem:[#allocation4 + $0x210] sm:$0xff] 0.0
      %4642 = vst [vmem:[#allocation4 + $0x218] sm:$0xff] 0.0
      %4643 = vst [vmem:[#allocation4 + $0x220] sm:$0xff] 0.0
      %4644 = vst [vmem:[#allocation4 + $0x228] sm:$0xff] 0.0
      %4645 = vst [vmem:[#allocation4 + $0x230] sm:$0xff] 0.0
      %4646 = vst [vmem:[#allocation4 + $0x238] sm:$0xff] 0.0
      %v4647 = vld [vmem:[#allocation3] sm:$0xff]
      %v4648 = vld [vmem:[#allocation3 + $0x10] sm:$0xff]
      %v4649 = vld [vmem:[#allocation3 + $0x20] sm:$0xff]
      %v4650 = vld [vmem:[#allocation3 + $0x30] sm:$0xff]
      %v4651 = vld [vmem:[#allocation3 + $0x40] sm:$0xff]
      %v4652 = vld [vmem:[#allocation3 + $0x50] sm:$0xff]
      %v4653 = vld [vmem:[#allocation3 + $0x60] sm:$0xff]
      %v4654 = vld [vmem:[#allocation3 + $0x70] sm:$0xff]
      %4655 = vst.msk [vmem:[#allocation4] sm:$0xff] %vm4153, %v4647
      %4656 = vst.msk [vmem:[#allocation4 + $0x48] sm:$0xff] %vm4153, %v4648
      %4657 = vst.msk [vmem:[#allocation4 + $0x90] sm:$0xff] %vm4153, %v4649
      %4658 = vst.msk [vmem:[#allocation4 + $0xd8] sm:$0xff] %vm4153, %v4650
      %4659 = vst.msk [vmem:[#allocation4 + $0x120] sm:$0xff] %vm4153, %v4651
      %4660 = vst.msk [vmem:[#allocation4 + $0x168] sm:$0xff] %vm4153, %v4652
      %4661 = vst.msk [vmem:[#allocation4 + $0x1b0] sm:$0xff] %vm4153, %v4653
      %4662 = vst.msk [vmem:[#allocation4 + $0x1f8] sm:$0xff] %vm4153, %v4654
      %v4663 = vld [vmem:[#allocation3 + $0x1] sm:$0xff]
      %v4664 = vld [vmem:[#allocation3 + $0x11] sm:$0xff]
      %v4665 = vld [vmem:[#allocation3 + $0x21] sm:$0xff]
      %v4666 = vld [vmem:[#allocation3 + $0x31] sm:$0xff]
      %v4667 = vld [vmem:[#allocation3 + $0x41] sm:$0xff]
      %v4668 = vld [vmem:[#allocation3 + $0x51] sm:$0xff]
      %v4669 = vld [vmem:[#allocation3 + $0x61] sm:$0xff]
      %v4670 = vld [vmem:[#allocation3 + $0x71] sm:$0xff]
      %4671 = vst.msk [vmem:[#allocation4 + $0x8] sm:$0xff] %vm4153, %v4663
      %4672 = vst.msk [vmem:[#allocation4 + $0x50] sm:$0xff] %vm4153, %v4664
      %4673 = vst.msk [vmem:[#allocation4 + $0x98] sm:$0xff] %vm4153, %v4665
      %4674 = vst.msk [vmem:[#allocation4 + $0xe0] sm:$0xff] %vm4153, %v4666
      %4675 = vst.msk [vmem:[#allocation4 + $0x128] sm:$0xff] %vm4153, %v4667
      %4676 = vst.msk [vmem:[#allocation4 + $0x170] sm:$0xff] %vm4153, %v4668
      %4677 = vst.msk [vmem:[#allocation4 + $0x1b8] sm:$0xff] %vm4153, %v4669
      %4678 = vst.msk [vmem:[#allocation4 + $0x200] sm:$0xff] %vm4153, %v4670
      %v4679 = vld [vmem:[#allocation3 + $0x2] sm:$0xff]
      %v4680 = vld [vmem:[#allocation3 + $0x12] sm:$0xff]
      %v4681 = vld [vmem:[#allocation3 + $0x22] sm:$0xff]
      %v4682 = vld [vmem:[#allocation3 + $0x32] sm:$0xff]
      %v4683 = vld [vmem:[#allocation3 + $0x42] sm:$0xff]
      %v4684 = vld [vmem:[#allocation3 + $0x52] sm:$0xff]
      %v4685 = vld [vmem:[#allocation3 + $0x62] sm:$0xff]
      %v4686 = vld [vmem:[#allocation3 + $0x72] sm:$0xff]
      %4687 = vst.msk [vmem:[#allocation4 + $0x10] sm:$0xff] %vm4153, %v4679
      %4688 = vst.msk [vmem:[#allocation4 + $0x58] sm:$0xff] %vm4153, %v4680
      %4689 = vst.msk [vmem:[#allocation4 + $0xa0] sm:$0xff] %vm4153, %v4681
      %4690 = vst.msk [vmem:[#allocation4 + $0xe8] sm:$0xff] %vm4153, %v4682
      %4691 = vst.msk [vmem:[#allocation4 + $0x130] sm:$0xff] %vm4153, %v4683
      %4692 = vst.msk [vmem:[#allocation4 + $0x178] sm:$0xff] %vm4153, %v4684
      %4693 = vst.msk [vmem:[#allocation4 + $0x1c0] sm:$0xff] %vm4153, %v4685
      %4694 = vst.msk [vmem:[#allocation4 + $0x208] sm:$0xff] %vm4153, %v4686
      %v4695 = vld [vmem:[%s4566] sm:$0xff]
      %v4696 = vld [vmem:[%s4566 + $0x10] sm:$0xff]
      %v4697 = vld [vmem:[%s4566 + $0x20] sm:$0xff]
      %v4698 = vld [vmem:[%s4566 + $0x30] sm:$0xff]
      %v4699 = vld [vmem:[%s4566 + $0x40] sm:$0xff]
      %v4700 = vld [vmem:[%s4566 + $0x50] sm:$0xff]
      %v4701 = vld [vmem:[%s4566 + $0x60] sm:$0xff]
      %v4702 = vld [vmem:[%s4566 + $0x70] sm:$0xff]
      %4703 = vst.msk [vmem:[#allocation4 + $0x18] sm:$0xff] %vm4153, %v4695
      %4704 = vst.msk [vmem:[#allocation4 + $0x60] sm:$0xff] %vm4153, %v4696
      %4705 = vst.msk [vmem:[#allocation4 + $0xa8] sm:$0xff] %vm4153, %v4697
      %4706 = vst.msk [vmem:[#allocation4 + $0xf0] sm:$0xff] %vm4153, %v4698
      %4707 = vst.msk [vmem:[#allocation4 + $0x138] sm:$0xff] %vm4153, %v4699
      %4708 = vst.msk [vmem:[#allocation4 + $0x180] sm:$0xff] %vm4153, %v4700
      %4709 = vst.msk [vmem:[#allocation4 + $0x1c8] sm:$0xff] %vm4153, %v4701
      %4710 = vst.msk [vmem:[#allocation4 + $0x210] sm:$0xff] %vm4153, %v4702
      %v4711 = vld [vmem:[%s4566 + $0x1] sm:$0xff]
      %v4712 = vld [vmem:[%s4566 + $0x11] sm:$0xff]
      %v4713 = vld [vmem:[%s4566 + $0x21] sm:$0xff]
      %v4714 = vld [vmem:[%s4566 + $0x31] sm:$0xff]
      %v4715 = vld [vmem:[%s4566 + $0x41] sm:$0xff]
      %v4716 = vld [vmem:[%s4566 + $0x51] sm:$0xff]
      %v4717 = vld [vmem:[%s4566 + $0x61] sm:$0xff]
      %v4718 = vld [vmem:[%s4566 + $0x71] sm:$0xff]
      %4719 = vst.msk [vmem:[#allocation4 + $0x20] sm:$0xff] %vm4153, %v4711
      %4720 = vst.msk [vmem:[#allocation4 + $0x68] sm:$0xff] %vm4153, %v4712
      %4721 = vst.msk [vmem:[#allocation4 + $0xb0] sm:$0xff] %vm4153, %v4713
      %4722 = vst.msk [vmem:[#allocation4 + $0xf8] sm:$0xff] %vm4153, %v4714
      %4723 = vst.msk [vmem:[#allocation4 + $0x140] sm:$0xff] %vm4153, %v4715
      %4724 = vst.msk [vmem:[#allocation4 + $0x188] sm:$0xff] %vm4153, %v4716
      %4725 = vst.msk [vmem:[#allocation4 + $0x1d0] sm:$0xff] %vm4153, %v4717
      %4726 = vst.msk [vmem:[#allocation4 + $0x218] sm:$0xff] %vm4153, %v4718
      %v4727 = vld [vmem:[%s4566 + $0x2] sm:$0xff]
      %v4728 = vld [vmem:[%s4566 + $0x12] sm:$0xff]
      %v4729 = vld [vmem:[%s4566 + $0x22] sm:$0xff]
      %v4730 = vld [vmem:[%s4566 + $0x32] sm:$0xff]
      %v4731 = vld [vmem:[%s4566 + $0x42] sm:$0xff]
      %v4732 = vld [vmem:[%s4566 + $0x52] sm:$0xff]
      %v4733 = vld [vmem:[%s4566 + $0x62] sm:$0xff]
      %v4734 = vld [vmem:[%s4566 + $0x72] sm:$0xff]
      %4735 = vst.msk [vmem:[#allocation4 + $0x28] sm:$0xff] %vm4153, %v4727
      %4736 = vst.msk [vmem:[#allocation4 + $0x70] sm:$0xff] %vm4153, %v4728
      %4737 = vst.msk [vmem:[#allocation4 + $0xb8] sm:$0xff] %vm4153, %v4729
      %4738 = vst.msk [vmem:[#allocation4 + $0x100] sm:$0xff] %vm4153, %v4730
      %4739 = vst.msk [vmem:[#allocation4 + $0x148] sm:$0xff] %vm4153, %v4731
      %4740 = vst.msk [vmem:[#allocation4 + $0x190] sm:$0xff] %vm4153, %v4732
      %4741 = vst.msk [vmem:[#allocation4 + $0x1d8] sm:$0xff] %vm4153, %v4733
      %4742 = vst.msk [vmem:[#allocation4 + $0x220] sm:$0xff] %vm4153, %v4734
      %s4743 = scalar_lea.vmem [#allocation3], 32
      %v4744 = vld [vmem:[%s4743] sm:$0xff]
      %v4745 = vld [vmem:[%s4743 + $0x10] sm:$0xff]
      %v4746 = vld [vmem:[%s4743 + $0x20] sm:$0xff]
      %v4747 = vld [vmem:[%s4743 + $0x30] sm:$0xff]
      %v4748 = vld [vmem:[%s4743 + $0x40] sm:$0xff]
      %v4749 = vld [vmem:[%s4743 + $0x50] sm:$0xff]
      %v4750 = vld [vmem:[%s4743 + $0x60] sm:$0xff]
      %v4751 = vld [vmem:[%s4743 + $0x70] sm:$0xff]
      %4752 = vst.msk [vmem:[#allocation4 + $0x30] sm:$0xff] %vm4153, %v4744
      %4753 = vst.msk [vmem:[#allocation4 + $0x78] sm:$0xff] %vm4153, %v4745
      %4754 = vst.msk [vmem:[#allocation4 + $0xc0] sm:$0xff] %vm4153, %v4746
      %4755 = vst.msk [vmem:[#allocation4 + $0x108] sm:$0xff] %vm4153, %v4747
      %4756 = vst.msk [vmem:[#allocation4 + $0x150] sm:$0xff] %vm4153, %v4748
      %4757 = vst.msk [vmem:[#allocation4 + $0x198] sm:$0xff] %vm4153, %v4749
      %4758 = vst.msk [vmem:[#allocation4 + $0x1e0] sm:$0xff] %vm4153, %v4750
      %4759 = vst.msk [vmem:[#allocation4 + $0x228] sm:$0xff] %vm4153, %v4751
      %v4760 = vld [vmem:[%s4743 + $0x1] sm:$0xff]
      %v4761 = vld [vmem:[%s4743 + $0x11] sm:$0xff]
      %v4762 = vld [vmem:[%s4743 + $0x21] sm:$0xff]
      %v4763 = vld [vmem:[%s4743 + $0x31] sm:$0xff]
      %v4764 = vld [vmem:[%s4743 + $0x41] sm:$0xff]
      %v4765 = vld [vmem:[%s4743 + $0x51] sm:$0xff]
      %v4766 = vld [vmem:[%s4743 + $0x61] sm:$0xff]
      %v4767 = vld [vmem:[%s4743 + $0x71] sm:$0xff]
      %4768 = vst.msk [vmem:[#allocation4 + $0x38] sm:$0xff] %vm4153, %v4760
      %4769 = vst.msk [vmem:[#allocation4 + $0x80] sm:$0xff] %vm4153, %v4761
      %4770 = vst.msk [vmem:[#allocation4 + $0xc8] sm:$0xff] %vm4153, %v4762
      %4771 = vst.msk [vmem:[#allocation4 + $0x110] sm:$0xff] %vm4153, %v4763
      %4772 = vst.msk [vmem:[#allocation4 + $0x158] sm:$0xff] %vm4153, %v4764
      %4773 = vst.msk [vmem:[#allocation4 + $0x1a0] sm:$0xff] %vm4153, %v4765
      %4774 = vst.msk [vmem:[#allocation4 + $0x1e8] sm:$0xff] %vm4153, %v4766
      %4775 = vst.msk [vmem:[#allocation4 + $0x230] sm:$0xff] %vm4153, %v4767
      %v4776 = vld [vmem:[%s4743 + $0x2] sm:$0xff]
      %v4777 = vld [vmem:[%s4743 + $0x12] sm:$0xff]
      %v4778 = vld [vmem:[%s4743 + $0x22] sm:$0xff]
      %v4779 = vld [vmem:[%s4743 + $0x32] sm:$0xff]
      %v4780 = vld [vmem:[%s4743 + $0x42] sm:$0xff]
      %v4781 = vld [vmem:[%s4743 + $0x52] sm:$0xff]
      %v4782 = vld [vmem:[%s4743 + $0x62] sm:$0xff]
      %v4783 = vld [vmem:[%s4743 + $0x72] sm:$0xff]
      %4784 = vst.msk [vmem:[#allocation4 + $0x40] sm:$0xff] %vm4153, %v4776
      %4785 = vst.msk [vmem:[#allocation4 + $0x88] sm:$0xff] %vm4153, %v4777
      %4786 = vst.msk [vmem:[#allocation4 + $0xd0] sm:$0xff] %vm4153, %v4778
      %4787 = vst.msk [vmem:[#allocation4 + $0x118] sm:$0xff] %vm4153, %v4779
      %4788 = vst.msk [vmem:[#allocation4 + $0x160] sm:$0xff] %vm4153, %v4780
      %4789 = vst.msk [vmem:[#allocation4 + $0x1a8] sm:$0xff] %vm4153, %v4781
      %4790 = vst.msk [vmem:[#allocation4 + $0x1f0] sm:$0xff] %vm4153, %v4782
      %4791 = vst.msk [vmem:[#allocation4 + $0x238] sm:$0xff] %vm4153, %v4783
      %v4792 = vld [vmem:[#allocation4] sm:$0xff]
      %v4793 = vld [vmem:[#allocation4 + $0x8] sm:$0xff]
      %v4794 = vld [vmem:[#allocation4 + $0x10] sm:$0xff]
      %v4795 = vld [vmem:[#allocation4 + $0x18] sm:$0xff]
      %v4796 = vld [vmem:[#allocation4 + $0x20] sm:$0xff]
      %v4797 = vld [vmem:[#allocation4 + $0x28] sm:$0xff]
      %v4798 = vld [vmem:[#allocation4 + $0x30] sm:$0xff]
      %v4799 = vld [vmem:[#allocation4 + $0x38] sm:$0xff]
      %v4800 = vld [vmem:[#allocation4 + $0x40] sm:$0xff]
      %v4801 = vld [vmem:[#allocation4 + $0x48] sm:$0xff]
      %v4802 = vld [vmem:[#allocation4 + $0x50] sm:$0xff]
      %v4803 = vld [vmem:[#allocation4 + $0x58] sm:$0xff]
      %v4804 = vld [vmem:[#allocation4 + $0x60] sm:$0xff]
      %v4805 = vld [vmem:[#allocation4 + $0x68] sm:$0xff]
      %v4806 = vld [vmem:[#allocation4 + $0x70] sm:$0xff]
      %v4807 = vld [vmem:[#allocation4 + $0x78] sm:$0xff]
      %v4808 = vld [vmem:[#allocation4 + $0x80] sm:$0xff]
      %v4809 = vld [vmem:[#allocation4 + $0x88] sm:$0xff]
      %v4810 = vld [vmem:[#allocation4 + $0x90] sm:$0xff]
      %v4811 = vld [vmem:[#allocation4 + $0x98] sm:$0xff]
      %v4812 = vld [vmem:[#allocation4 + $0xa0] sm:$0xff]
      %v4813 = vld [vmem:[#allocation4 + $0xa8] sm:$0xff]
      %v4814 = vld [vmem:[#allocation4 + $0xb0] sm:$0xff]
      %v4815 = vld [vmem:[#allocation4 + $0xb8] sm:$0xff]
      %v4816 = vld [vmem:[#allocation4 + $0xc0] sm:$0xff]
      %v4817 = vld [vmem:[#allocation4 + $0xc8] sm:$0xff]
      %v4818 = vld [vmem:[#allocation4 + $0xd0] sm:$0xff]
      %v4819 = vld [vmem:[#allocation4 + $0xd8] sm:$0xff]
      %v4820 = vld [vmem:[#allocation4 + $0xe0] sm:$0xff]
      %v4821 = vld [vmem:[#allocation4 + $0xe8] sm:$0xff]
      %v4822 = vld [vmem:[#allocation4 + $0xf0] sm:$0xff]
      %v4823 = vld [vmem:[#allocation4 + $0xf8] sm:$0xff]
      %v4824 = vld [vmem:[#allocation4 + $0x100] sm:$0xff]
      %v4825 = vld [vmem:[#allocation4 + $0x108] sm:$0xff]
      %v4826 = vld [vmem:[#allocation4 + $0x110] sm:$0xff]
      %v4827 = vld [vmem:[#allocation4 + $0x118] sm:$0xff]
      %v4828 = vld [vmem:[#allocation4 + $0x120] sm:$0xff]
      %v4829 = vld [vmem:[#allocation4 + $0x128] sm:$0xff]
      %v4830 = vld [vmem:[#allocation4 + $0x130] sm:$0xff]
      %v4831 = vld [vmem:[#allocation4 + $0x138] sm:$0xff]
      %v4832 = vld [vmem:[#allocation4 + $0x140] sm:$0xff]
      %v4833 = vld [vmem:[#allocation4 + $0x148] sm:$0xff]
      %v4834 = vld [vmem:[#allocation4 + $0x150] sm:$0xff]
      %v4835 = vld [vmem:[#allocation4 + $0x158] sm:$0xff]
      %v4836 = vld [vmem:[#allocation4 + $0x160] sm:$0xff]
      %v4837 = vld [vmem:[#allocation4 + $0x168] sm:$0xff]
      %v4838 = vld [vmem:[#allocation4 + $0x170] sm:$0xff]
      %v4839 = vld [vmem:[#allocation4 + $0x178] sm:$0xff]
      %v4840 = vld [vmem:[#allocation4 + $0x180] sm:$0xff]
      %v4841 = vld [vmem:[#allocation4 + $0x188] sm:$0xff]
      %v4842 = vld [vmem:[#allocation4 + $0x190] sm:$0xff]
      %v4843 = vld [vmem:[#allocation4 + $0x198] sm:$0xff]
      %v4844 = vld [vmem:[#allocation4 + $0x1a0] sm:$0xff]
      %v4845 = vld [vmem:[#allocation4 + $0x1a8] sm:$0xff]
      %v4846 = vld [vmem:[#allocation4 + $0x1b0] sm:$0xff]
      %v4847 = vld [vmem:[#allocation4 + $0x1b8] sm:$0xff]
      %v4848 = vld [vmem:[#allocation4 + $0x1c0] sm:$0xff]
      %v4849 = vld [vmem:[#allocation4 + $0x1c8] sm:$0xff]
      %v4850 = vld [vmem:[#allocation4 + $0x1d0] sm:$0xff]
      %v4851 = vld [vmem:[#allocation4 + $0x1d8] sm:$0xff]
      %v4852 = vld [vmem:[#allocation4 + $0x1e0] sm:$0xff]
      %v4853 = vld [vmem:[#allocation4 + $0x1e8] sm:$0xff]
      %v4854 = vld [vmem:[#allocation4 + $0x1f0] sm:$0xff]
      %v4855 = vld [vmem:[#allocation4 + $0x1f8] sm:$0xff]
      %v4856 = vld [vmem:[#allocation4 + $0x200] sm:$0xff]
      %v4857 = vld [vmem:[#allocation4 + $0x208] sm:$0xff]
      %v4858 = vld [vmem:[#allocation4 + $0x210] sm:$0xff]
      %v4859 = vld [vmem:[#allocation4 + $0x218] sm:$0xff]
      %v4860 = vld [vmem:[#allocation4 + $0x220] sm:$0xff]
      %v4861 = vld [vmem:[#allocation4 + $0x228] sm:$0xff]
      %v4862 = vld [vmem:[#allocation4 + $0x230] sm:$0xff]
      %v4863 = vld [vmem:[#allocation4 + $0x238] sm:$0xff]
      %v4864 = vld [vmem:[%s3] sm:$0xff]
      %v4865 = vld [vmem:[%s3 + $0x8] sm:$0xff]
      %v4866 = vld [vmem:[%s3 + $0x10] sm:$0xff]
      %v4867 = vld [vmem:[%s3 + $0x18] sm:$0xff]
      %v4868 = vld [vmem:[%s3 + $0x20] sm:$0xff]
      %v4869 = vld [vmem:[%s3 + $0x28] sm:$0xff]
      %v4870 = vld [vmem:[%s3 + $0x30] sm:$0xff]
      %v4871 = vld [vmem:[%s3 + $0x38] sm:$0xff]
      %v4872 = vld [vmem:[%s3 + $0x40] sm:$0xff]
      %v4873 = vld [vmem:[%s3 + $0x48] sm:$0xff]
      %v4874 = vld [vmem:[%s3 + $0x50] sm:$0xff]
      %v4875 = vld [vmem:[%s3 + $0x58] sm:$0xff]
      %v4876 = vld [vmem:[%s3 + $0x60] sm:$0xff]
      %v4877 = vld [vmem:[%s3 + $0x68] sm:$0xff]
      %v4878 = vld [vmem:[%s3 + $0x70] sm:$0xff]
      %v4879 = vld [vmem:[%s3 + $0x78] sm:$0xff]
      %v4880 = vld [vmem:[%s3 + $0x80] sm:$0xff]
      %v4881 = vld [vmem:[%s3 + $0x88] sm:$0xff]
      %v4882 = vld [vmem:[%s3 + $0x90] sm:$0xff]
      %v4883 = vld [vmem:[%s3 + $0x98] sm:$0xff]
      %v4884 = vld [vmem:[%s3 + $0xa0] sm:$0xff]
      %v4885 = vld [vmem:[%s3 + $0xa8] sm:$0xff]
      %v4886 = vld [vmem:[%s3 + $0xb0] sm:$0xff]
      %v4887 = vld [vmem:[%s3 + $0xb8] sm:$0xff]
      %v4888 = vld [vmem:[%s3 + $0xc0] sm:$0xff]
      %v4889 = vld [vmem:[%s3 + $0xc8] sm:$0xff]
      %v4890 = vld [vmem:[%s3 + $0xd0] sm:$0xff]
      %v4891 = vld [vmem:[%s3 + $0xd8] sm:$0xff]
      %v4892 = vld [vmem:[%s3 + $0xe0] sm:$0xff]
      %v4893 = vld [vmem:[%s3 + $0xe8] sm:$0xff]
      %v4894 = vld [vmem:[%s3 + $0xf0] sm:$0xff]
      %v4895 = vld [vmem:[%s3 + $0xf8] sm:$0xff]
      %v4896 = vld [vmem:[%s3 + $0x100] sm:$0xff]
      %v4897 = vld [vmem:[%s3 + $0x108] sm:$0xff]
      %v4898 = vld [vmem:[%s3 + $0x110] sm:$0xff]
      %v4899 = vld [vmem:[%s3 + $0x118] sm:$0xff]
      %v4900 = vld [vmem:[%s3 + $0x120] sm:$0xff]
      %v4901 = vld [vmem:[%s3 + $0x128] sm:$0xff]
      %v4902 = vld [vmem:[%s3 + $0x130] sm:$0xff]
      %v4903 = vld [vmem:[%s3 + $0x138] sm:$0xff]
      %v4904 = vld [vmem:[%s3 + $0x140] sm:$0xff]
      %v4905 = vld [vmem:[%s3 + $0x148] sm:$0xff]
      %v4906 = vld [vmem:[%s3 + $0x150] sm:$0xff]
      %v4907 = vld [vmem:[%s3 + $0x158] sm:$0xff]
      %v4908 = vld [vmem:[%s3 + $0x160] sm:$0xff]
      %v4909 = vld [vmem:[%s3 + $0x168] sm:$0xff]
      %v4910 = vld [vmem:[%s3 + $0x170] sm:$0xff]
      %v4911 = vld [vmem:[%s3 + $0x178] sm:$0xff]
      %v4912 = vld [vmem:[%s3 + $0x180] sm:$0xff]
      %v4913 = vld [vmem:[%s3 + $0x188] sm:$0xff]
      %v4914 = vld [vmem:[%s3 + $0x190] sm:$0xff]
      %v4915 = vld [vmem:[%s3 + $0x198] sm:$0xff]
      %v4916 = vld [vmem:[%s3 + $0x1a0] sm:$0xff]
      %v4917 = vld [vmem:[%s3 + $0x1a8] sm:$0xff]
      %v4918 = vld [vmem:[%s3 + $0x1b0] sm:$0xff]
      %v4919 = vld [vmem:[%s3 + $0x1b8] sm:$0xff]
      %v4920 = vld [vmem:[%s3 + $0x1c0] sm:$0xff]
      %v4921 = vld [vmem:[%s3 + $0x1c8] sm:$0xff]
      %v4922 = vld [vmem:[%s3 + $0x1d0] sm:$0xff]
      %v4923 = vld [vmem:[%s3 + $0x1d8] sm:$0xff]
      %v4924 = vld [vmem:[%s3 + $0x1e0] sm:$0xff]
      %v4925 = vld [vmem:[%s3 + $0x1e8] sm:$0xff]
      %v4926 = vld [vmem:[%s3 + $0x1f0] sm:$0xff]
      %v4927 = vld [vmem:[%s3 + $0x1f8] sm:$0xff]
      %v4928 = vld [vmem:[%s3 + $0x200] sm:$0xff]
      %v4929 = vld [vmem:[%s3 + $0x208] sm:$0xff]
      %v4930 = vld [vmem:[%s3 + $0x210] sm:$0xff]
      %v4931 = vld [vmem:[%s3 + $0x218] sm:$0xff]
      %v4932 = vld [vmem:[%s3 + $0x220] sm:$0xff]
      %v4933 = vld [vmem:[%s3 + $0x228] sm:$0xff]
      %v4934 = vld [vmem:[%s3 + $0x230] sm:$0xff]
      %v4935 = vld [vmem:[%s3 + $0x238] sm:$0xff]
      %v4936 = vld [vmem:[%s3 + $0x240] sm:$0xff]
      %v4937 = vld [vmem:[%s3 + $0x248] sm:$0xff]
      %v4938 = vld [vmem:[%s3 + $0x250] sm:$0xff]
      %v4939 = vld [vmem:[%s3 + $0x258] sm:$0xff]
      %v4940 = vld [vmem:[%s3 + $0x260] sm:$0xff]
      %v4941 = vld [vmem:[%s3 + $0x268] sm:$0xff]
      %v4942 = vld [vmem:[%s3 + $0x270] sm:$0xff]
      %v4943 = vld [vmem:[%s3 + $0x278] sm:$0xff]
      %v4944 = vld [vmem:[%s3 + $0x280] sm:$0xff]
      %v4945 = vld [vmem:[%s3 + $0x288] sm:$0xff]
      %v4946 = vld [vmem:[%s3 + $0x290] sm:$0xff]
      %v4947 = vld [vmem:[%s3 + $0x298] sm:$0xff]
      %v4948 = vld [vmem:[%s3 + $0x2a0] sm:$0xff]
      %v4949 = vld [vmem:[%s3 + $0x2a8] sm:$0xff]
      %v4950 = vld [vmem:[%s3 + $0x2b0] sm:$0xff]
      %v4951 = vld [vmem:[%s3 + $0x2b8] sm:$0xff]
      %v4952 = vld [vmem:[%s3 + $0x2c0] sm:$0xff]
      %v4953 = vld [vmem:[%s3 + $0x2c8] sm:$0xff]
      %v4954 = vld [vmem:[%s3 + $0x2d0] sm:$0xff]
      %v4955 = vld [vmem:[%s3 + $0x2d8] sm:$0xff]
      %v4956 = vld [vmem:[%s3 + $0x2e0] sm:$0xff]
      %v4957 = vld [vmem:[%s3 + $0x2e8] sm:$0xff]
      %v4958 = vld [vmem:[%s3 + $0x2f0] sm:$0xff]
      %v4959 = vld [vmem:[%s3 + $0x2f8] sm:$0xff]
      %v4960 = vld [vmem:[%s3 + $0x300] sm:$0xff]
      %v4961 = vld [vmem:[%s3 + $0x308] sm:$0xff]
      %v4962 = vld [vmem:[%s3 + $0x310] sm:$0xff]
      %v4963 = vld [vmem:[%s3 + $0x318] sm:$0xff]
      %v4964 = vld [vmem:[%s3 + $0x320] sm:$0xff]
      %v4965 = vld [vmem:[%s3 + $0x328] sm:$0xff]
      %v4966 = vld [vmem:[%s3 + $0x330] sm:$0xff]
      %v4967 = vld [vmem:[%s3 + $0x338] sm:$0xff]
      %v4968 = vld [vmem:[%s3 + $0x340] sm:$0xff]
      %v4969 = vld [vmem:[%s3 + $0x348] sm:$0xff]
      %v4970 = vld [vmem:[%s3 + $0x350] sm:$0xff]
      %v4971 = vld [vmem:[%s3 + $0x358] sm:$0xff]
      %v4972 = vld [vmem:[%s3 + $0x360] sm:$0xff]
      %v4973 = vld [vmem:[%s3 + $0x368] sm:$0xff]
      %v4974 = vld [vmem:[%s3 + $0x370] sm:$0xff]
      %v4975 = vld [vmem:[%s3 + $0x378] sm:$0xff]
      %v4976 = vld [vmem:[%s3 + $0x380] sm:$0xff]
      %v4977 = vld [vmem:[%s3 + $0x388] sm:$0xff]
      %v4978 = vld [vmem:[%s3 + $0x390] sm:$0xff]
      %v4979 = vld [vmem:[%s3 + $0x398] sm:$0xff]
      %v4980 = vld [vmem:[%s3 + $0x3a0] sm:$0xff]
      %v4981 = vld [vmem:[%s3 + $0x3a8] sm:$0xff]
      %v4982 = vld [vmem:[%s3 + $0x3b0] sm:$0xff]
      %v4983 = vld [vmem:[%s3 + $0x3b8] sm:$0xff]
      %v4984 = vld [vmem:[%s3 + $0x3c0] sm:$0xff]
      %v4985 = vld [vmem:[%s3 + $0x3c8] sm:$0xff]
      %v4986 = vld [vmem:[%s3 + $0x3d0] sm:$0xff]
      %v4987 = vld [vmem:[%s3 + $0x3d8] sm:$0xff]
      %v4988 = vld [vmem:[%s3 + $0x3e0] sm:$0xff]
      %v4989 = vld [vmem:[%s3 + $0x3e8] sm:$0xff]
      %v4990 = vld [vmem:[%s3 + $0x3f0] sm:$0xff]
      %v4991 = vld [vmem:[%s3 + $0x3f8] sm:$0xff]
      %v4992 = vld [vmem:[%s3 + $0x400] sm:$0xff]
      %v4993 = vld [vmem:[%s3 + $0x408] sm:$0xff]
      %v4994 = vld [vmem:[%s3 + $0x410] sm:$0xff]
      %v4995 = vld [vmem:[%s3 + $0x418] sm:$0xff]
      %v4996 = vld [vmem:[%s3 + $0x420] sm:$0xff]
      %v4997 = vld [vmem:[%s3 + $0x428] sm:$0xff]
      %v4998 = vld [vmem:[%s3 + $0x430] sm:$0xff]
      %v4999 = vld [vmem:[%s3 + $0x438] sm:$0xff]
      %v5000 = vld [vmem:[%s3 + $0x440] sm:$0xff]
      %v5001 = vld [vmem:[%s3 + $0x448] sm:$0xff]
      %v5002 = vld [vmem:[%s3 + $0x450] sm:$0xff]
      %v5003 = vld [vmem:[%s3 + $0x458] sm:$0xff]
      %v5004 = vld [vmem:[%s3 + $0x460] sm:$0xff]
      %v5005 = vld [vmem:[%s3 + $0x468] sm:$0xff]
      %v5006 = vld [vmem:[%s3 + $0x470] sm:$0xff]
      %v5007 = vld [vmem:[%s3 + $0x478] sm:$0xff]
      %v5008 = vld [vmem:[%s4] sm:$0x1]
      %v5010 = vlaneseq
      %v5011 = vshrl.u32 %v5010, 7
      %v5012 = vsub.s32 0, %v5011
      %v5013 = vrot.slane %v5008, %v5012
      %5015 = vmatprep.subr.mxu0 0.0
      %5016 = vmatpush1.msra.mxu0 %v4864
      %5017 = vmatprep.subr.mxu0 0.0
      %5018 = vmatpush1.msra.mxu0 %v4865
      %5019 = vmatprep.subr.mxu0 0.0
      %5020 = vmatpush1.msra.mxu0 %v4866
      %5021 = vmatprep.subr.mxu0 0.0
      %5022 = vmatpush1.msra.mxu0 %v4867
      %5023 = vmatprep.subr.mxu0 0.0
      %5024 = vmatpush1.msra.mxu0 %v4868
      %5025 = vmatprep.subr.mxu0 0.0
      %5026 = vmatpush1.msra.mxu0 %v4869
      %5027 = vmatprep.subr.mxu0 0.0
      %5028 = vmatpush1.msra.mxu0 %v4870
      %5029 = vmatprep.subr.mxu0 0.0
      %5030 = vmatpush1.msra.mxu0 %v4871
      %5031 = vmatprep.subr.mxu0 0.0
      %5032 = vmatpush1.msra.mxu0 %v4872
      %5033 = vmatprep.subr.mxu0 0.0
      %5034 = vmatpush1.msra.mxu0 %v4873
      %5035 = vmatprep.subr.mxu0 0.0
      %5036 = vmatpush1.msra.mxu0 %v4874
      %5037 = vmatprep.subr.mxu0 0.0
      %5038 = vmatpush1.msra.mxu0 %v4875
      %5039 = vmatprep.subr.mxu0 0.0
      %5040 = vmatpush1.msra.mxu0 %v4876
      %5041 = vmatprep.subr.mxu0 0.0
      %5042 = vmatpush1.msra.mxu0 %v4877
      %5043 = vmatprep.subr.mxu0 0.0
      %5044 = vmatpush1.msra.mxu0 %v4878
      %5045 = vmatprep.subr.mxu0 0.0
      %5046 = vmatpush1.msra.mxu0 %v4879
      %5047 = vmatprep.subr.mxu0 0.0
      %5048 = vmatpush1.msra.mxu0 %v4880
      %5049 = vmatprep.subr.mxu0 0.0
      %5050 = vmatpush1.msra.mxu0 %v4881
      %5051 = vmatprep.subr.mxu0 0.0
      %5052 = vmatpush1.msra.mxu0 %v4882
      %5053 = vmatprep.subr.mxu0 0.0
      %5054 = vmatpush1.msra.mxu0 %v4883
      %5055 = vmatprep.subr.mxu0 0.0
      %5056 = vmatpush1.msra.mxu0 %v4884
      %5057 = vmatprep.subr.mxu0 0.0
      %5058 = vmatpush1.msra.mxu0 %v4885
      %5059 = vmatprep.subr.mxu0 0.0
      %5060 = vmatpush1.msra.mxu0 %v4886
      %5061 = vmatprep.subr.mxu0 0.0
      %5062 = vmatpush1.msra.mxu0 %v4887
      %5063 = vmatprep.subr.mxu0 0.0
      %5064 = vmatpush1.msra.mxu0 %v4888
      %5065 = vmatprep.subr.mxu0 0.0
      %5066 = vmatpush1.msra.mxu0 %v4889
      %5067 = vmatprep.subr.mxu0 0.0
      %5068 = vmatpush1.msra.mxu0 %v4890
      %5069 = vmatprep.subr.mxu0 0.0
      %5070 = vmatpush1.msra.mxu0 %v4891
      %5071 = vmatprep.subr.mxu0 0.0
      %5072 = vmatpush1.msra.mxu0 %v4892
      %5073 = vmatprep.subr.mxu0 0.0
      %5074 = vmatpush1.msra.mxu0 %v4893
      %5075 = vmatprep.subr.mxu0 0.0
      %5076 = vmatpush1.msra.mxu0 %v4894
      %5077 = vmatprep.subr.mxu0 0.0
      %5078 = vmatpush1.msra.mxu0 %v4895
      %5079 = vmatprep.mubr.f32.mxu0 %v4793
      %5080 = vmatmul.mubr.f32.gmra.mrb[0].mxu0 %v4792
      %v5081 = vpop.f32.mrb[0].mxu0
      %v5082 = vadd.f32 %v5013, %v5081
      %v5083 = vpop.f32.mrb[0].mxu0
      %5084 = vmatprep.mubr.f32.mxu0 %v4802
      %5085 = vmatmul.mubr.f32.gmra.mrb[0].mxu0 %v4801
      %v5086 = vpop.f32.mrb[0].mxu0
      %v5087 = vadd.f32 %v5013, %v5086
      %v5088 = vpop.f32.mrb[0].mxu0
      %5089 = vmatprep.mubr.f32.mxu0 %v4811
      %5090 = vmatmul.mubr.f32.gmra.mrb[0].mxu0 %v4810
      %v5091 = vpop.f32.mrb[0].mxu0
      %v5092 = vadd.f32 %v5013, %v5091
      %v5093 = vpop.f32.mrb[0].mxu0
      %5094 = vmatprep.mubr.f32.mxu0 %v4820
      %5095 = vmatmul.mubr.f32.gmra.mrb[0].mxu0 %v4819
      %v5096 = vpop.f32.mrb[0].mxu0
      %v5097 = vadd.f32 %v5013, %v5096
      %v5098 = vpop.f32.mrb[0].mxu0
      %5099 = vmatprep.mubr.f32.mxu0 %v4829
      %5100 = vmatmul.mubr.f32.gmra.mrb[0].mxu0 %v4828
      %v5101 = vpop.f32.mrb[0].mxu0
      %v5102 = vadd.f32 %v5013, %v5101
      %v5103 = vpop.f32.mrb[0].mxu0
      %5104 = vmatprep.mubr.f32.mxu0 %v4838
      %5105 = vmatmul.mubr.f32.gmra.mrb[0].mxu0 %v4837
      %v5106 = vpop.f32.mrb[0].mxu0
      %v5107 = vadd.f32 %v5013, %v5106
      %v5108 = vpop.f32.mrb[0].mxu0
      %5109 = vmatprep.mubr.f32.mxu0 %v4847
      %5110 = vmatmul.mubr.f32.gmra.mrb[0].mxu0 %v4846
      %v5111 = vpop.f32.mrb[0].mxu0
      %v5112 = vadd.f32 %v5013, %v5111
      %v5113 = vpop.f32.mrb[0].mxu0
      %5114 = vmatprep.mubr.f32.mxu0 %v4856
      %5115 = vmatmul.mubr.f32.gmra.mrb[0].mxu0 %v4855
      %v5116 = vpop.f32.mrb[0].mxu0
      %v5117 = vadd.f32 %v5013, %v5116
      %v5118 = vpop.f32.mrb[0].mxu0
      %5119 = vdwg.mxu0
      %5120 = vmatprep.subr.mxu0 0.0
      %5121 = vmatpush1.msra.mxu0 %v4896
      %5122 = vmatprep.subr.mxu0 0.0
      %5123 = vmatpush1.msra.mxu0 %v4897
      %5124 = vmatprep.subr.mxu0 0.0
      %5125 = vmatpush1.msra.mxu0 %v4898
      %5126 = vmatprep.subr.mxu0 0.0
      %5127 = vmatpush1.msra.mxu0 %v4899
      %5128 = vmatprep.subr.mxu0 0.0
      %5129 = vmatpush1.msra.mxu0 %v4900
      %5130 = vmatprep.subr.mxu0 0.0
      %5131 = vmatpush1.msra.mxu0 %v4901
      %5132 = vmatprep.subr.mxu0 0.0
      %5133 = vmatpush1.msra.mxu0 %v4902
      %5134 = vmatprep.subr.mxu0 0.0
      %5135 = vmatpush1.msra.mxu0 %v4903
      %5136 = vmatprep.subr.mxu0 0.0
      %5137 = vmatpush1.msra.mxu0 %v4904
      %5138 = vmatprep.subr.mxu0 0.0
      %5139 = vmatpush1.msra.mxu0 %v4905
      %5140 = vmatprep.subr.mxu0 0.0
      %5141 = vmatpush1.msra.mxu0 %v4906
      %5142 = vmatprep.subr.mxu0 0.0
      %5143 = vmatpush1.msra.mxu0 %v4907
      %5144 = vmatprep.subr.mxu0 0.0
      %5145 = vmatpush1.msra.mxu0 %v4908
      %5146 = vmatprep.subr.mxu0 0.0
      %5147 = vmatpush1.msra.mxu0 %v4909
      %5148 = vmatprep.subr.mxu0 0.0
      %5149 = vmatpush1.msra.mxu0 %v4910
      %5150 = vmatprep.subr.mxu0 0.0
      %5151 = vmatpush1.msra.mxu0 %v4911
      %5152 = vmatprep.subr.mxu0 0.0
      %5153 = vmatpush1.msra.mxu0 %v4912
      %5154 = vmatprep.subr.mxu0 0.0
      %5155 = vmatpush1.msra.mxu0 %v4913
      %5156 = vmatprep.subr.mxu0 0.0
      %5157 = vmatpush1.msra.mxu0 %v4914
      %5158 = vmatprep.subr.mxu0 0.0
      %5159 = vmatpush1.msra.mxu0 %v4915
      %5160 = vmatprep.subr.mxu0 0.0
      %5161 = vmatpush1.msra.mxu0 %v4916
      %5162 = vmatprep.subr.mxu0 0.0
      %5163 = vmatpush1.msra.mxu0 %v4917
      %5164 = vmatprep.subr.mxu0 0.0
      %5165 = vmatpush1.msra.mxu0 %v4918
      %5166 = vmatprep.subr.mxu0 0.0
      %5167 = vmatpush1.msra.mxu0 %v4919
      %5168 = vmatprep.subr.mxu0 0.0
      %5169 = vmatpush1.msra.mxu0 %v4920
      %5170 = vmatprep.subr.mxu0 0.0
      %5171 = vmatpush1.msra.mxu0 %v4921
      %5172 = vmatprep.subr.mxu0 0.0
      %5173 = vmatpush1.msra.mxu0 %v4922
      %5174 = vmatprep.subr.mxu0 0.0
      %5175 = vmatpush1.msra.mxu0 %v4923
      %5176 = vmatprep.subr.mxu0 0.0
      %5177 = vmatpush1.msra.mxu0 %v4924
      %5178 = vmatprep.subr.mxu0 0.0
      %5179 = vmatpush1.msra.mxu0 %v4925
      %5180 = vmatprep.subr.mxu0 0.0
      %5181 = vmatpush1.msra.mxu0 %v4926
      %5182 = vmatprep.subr.mxu0 0.0
      %5183 = vmatpush1.msra.mxu0 %v4927
      %5184 = vmatprep.mubr.f32.mxu0 %v4795
      %5185 = vmatmul.mubr.f32.gmra.mrb[0].mxu0 %v4794
      %v5186 = vpop.f32.mrb[0].mxu0
      %v5187 = vadd.f32 %v5082, %v5186
      %v5188 = vpop.f32.mrb[0].mxu0
      %5189 = vmatprep.mubr.f32.mxu0 %v4804
      %5190 = vmatmul.mubr.f32.gmra.mrb[0].mxu0 %v4803
      %v5191 = vpop.f32.mrb[0].mxu0
      %v5192 = vadd.f32 %v5087, %v5191
      %v5193 = vpop.f32.mrb[0].mxu0
      %5194 = vmatprep.mubr.f32.mxu0 %v4813
      %5195 = vmatmul.mubr.f32.gmra.mrb[0].mxu0 %v4812
      %v5196 = vpop.f32.mrb[0].mxu0
      %v5197 = vadd.f32 %v5092, %v5196
      %v5198 = vpop.f32.mrb[0].mxu0
      %5199 = vmatprep.mubr.f32.mxu0 %v4822
      %5200 = vmatmul.mubr.f32.gmra.mrb[0].mxu0 %v4821
      %v5201 = vpop.f32.mrb[0].mxu0
      %v5202 = vadd.f32 %v5097, %v5201
      %v5203 = vpop.f32.mrb[0].mxu0
      %5204 = vmatprep.mubr.f32.mxu0 %v4831
      %5205 = vmatmul.mubr.f32.gmra.mrb[0].mxu0 %v4830
      %v5206 = vpop.f32.mrb[0].mxu0
      %v5207 = vadd.f32 %v5102, %v5206
      %v5208 = vpop.f32.mrb[0].mxu0
      %5209 = vmatprep.mubr.f32.mxu0 %v4840
      %5210 = vmatmul.mubr.f32.gmra.mrb[0].mxu0 %v4839
      %v5211 = vpop.f32.mrb[0].mxu0
      %v5212 = vadd.f32 %v5107, %v5211
      %v5213 = vpop.f32.mrb[0].mxu0
      %5214 = vmatprep.mubr.f32.mxu0 %v4849
      %5215 = vmatmul.mubr.f32.gmra.mrb[0].mxu0 %v4848
      %v5216 = vpop.f32.mrb[0].mxu0
      %v5217 = vadd.f32 %v5112, %v5216
      %v5218 = vpop.f32.mrb[0].mxu0
      %5219 = vmatprep.mubr.f32.mxu0 %v4858
      %5220 = vmatmul.mubr.f32.gmra.mrb[0].mxu0 %v4857
      %v5221 = vpop.f32.mrb[0].mxu0
      %v5222 = vadd.f32 %v5117, %v5221
      %v5223 = vpop.f32.mrb[0].mxu0
      %5224 = vdwg.mxu0
      %5225 = vmatprep.subr.mxu0 0.0
      %5226 = vmatpush1.msra.mxu0 %v4928
      %5227 = vmatprep.subr.mxu0 0.0
      %5228 = vmatpush1.msra.mxu0 %v4929
      %5229 = vmatprep.subr.mxu0 0.0
      %5230 = vmatpush1.msra.mxu0 %v4930
      %5231 = vmatprep.subr.mxu0 0.0
      %5232 = vmatpush1.msra.mxu0 %v4931
      %5233 = vmatprep.subr.mxu0 0.0
      %5234 = vmatpush1.msra.mxu0 %v4932
      %5235 = vmatprep.subr.mxu0 0.0
      %5236 = vmatpush1.msra.mxu0 %v4933
      %5237 = vmatprep.subr.mxu0 0.0
      %5238 = vmatpush1.msra.mxu0 %v4934
      %5239 = vmatprep.subr.mxu0 0.0
      %5240 = vmatpush1.msra.mxu0 %v4935
      %5241 = vmatprep.subr.mxu0 0.0
      %5242 = vmatpush1.msra.mxu0 %v4936
      %5243 = vmatprep.subr.mxu0 0.0
      %5244 = vmatpush1.msra.mxu0 %v4937
      %5245 = vmatprep.subr.mxu0 0.0
      %5246 = vmatpush1.msra.mxu0 %v4938
      %5247 = vmatprep.subr.mxu0 0.0
      %5248 = vmatpush1.msra.mxu0 %v4939
      %5249 = vmatprep.subr.mxu0 0.0
      %5250 = vmatpush1.msra.mxu0 %v4940
      %5251 = vmatprep.subr.mxu0 0.0
      %5252 = vmatpush1.msra.mxu0 %v4941
      %5253 = vmatprep.subr.mxu0 0.0
      %5254 = vmatpush1.msra.mxu0 %v4942
      %5255 = vmatprep.subr.mxu0 0.0
      %5256 = vmatpush1.msra.mxu0 %v4943
      %5257 = vmatprep.subr.mxu0 0.0
      %5258 = vmatpush1.msra.mxu0 %v4944
      %5259 = vmatprep.subr.mxu0 0.0
      %5260 = vmatpush1.msra.mxu0 %v4945
      %5261 = vmatprep.subr.mxu0 0.0
      %5262 = vmatpush1.msra.mxu0 %v4946
      %5263 = vmatprep.subr.mxu0 0.0
      %5264 = vmatpush1.msra.mxu0 %v4947
      %5265 = vmatprep.subr.mxu0 0.0
      %5266 = vmatpush1.msra.mxu0 %v4948
      %5267 = vmatprep.subr.mxu0 0.0
      %5268 = vmatpush1.msra.mxu0 %v4949
      %5269 = vmatprep.subr.mxu0 0.0
      %5270 = vmatpush1.msra.mxu0 %v4950
      %5271 = vmatprep.subr.mxu0 0.0
      %5272 = vmatpush1.msra.mxu0 %v4951
      %5273 = vmatprep.subr.mxu0 0.0
      %5274 = vmatpush1.msra.mxu0 %v4952
      %5275 = vmatprep.subr.mxu0 0.0
      %5276 = vmatpush1.msra.mxu0 %v4953
      %5277 = vmatprep.subr.mxu0 0.0
      %5278 = vmatpush1.msra.mxu0 %v4954
      %5279 = vmatprep.subr.mxu0 0.0
      %5280 = vmatpush1.msra.mxu0 %v4955
      %5281 = vmatprep.subr.mxu0 0.0
      %5282 = vmatpush1.msra.mxu0 %v4956
      %5283 = vmatprep.subr.mxu0 0.0
      %5284 = vmatpush1.msra.mxu0 %v4957
      %5285 = vmatprep.subr.mxu0 0.0
      %5286 = vmatpush1.msra.mxu0 %v4958
      %5287 = vmatprep.subr.mxu0 0.0
      %5288 = vmatpush1.msra.mxu0 %v4959
      %5289 = vmatprep.mubr.f32.mxu0 %v4797
      %5290 = vmatmul.mubr.f32.gmra.mrb[0].mxu0 %v4796
      %v5291 = vpop.f32.mrb[0].mxu0
      %v5292 = vadd.f32 %v5187, %v5291
      %v5293 = vpop.f32.mrb[0].mxu0
      %5294 = vmatprep.mubr.f32.mxu0 %v4806
      %5295 = vmatmul.mubr.f32.gmra.mrb[0].mxu0 %v4805
      %v5296 = vpop.f32.mrb[0].mxu0
      %v5297 = vadd.f32 %v5192, %v5296
      %v5298 = vpop.f32.mrb[0].mxu0
      %5299 = vmatprep.mubr.f32.mxu0 %v4815
      %5300 = vmatmul.mubr.f32.gmra.mrb[0].mxu0 %v4814
      %v5301 = vpop.f32.mrb[0].mxu0
      %v5302 = vadd.f32 %v5197, %v5301
      %v5303 = vpop.f32.mrb[0].mxu0
      %5304 = vmatprep.mubr.f32.mxu0 %v4824
      %5305 = vmatmul.mubr.f32.gmra.mrb[0].mxu0 %v4823
      %v5306 = vpop.f32.mrb[0].mxu0
      %v5307 = vadd.f32 %v5202, %v5306
      %v5308 = vpop.f32.mrb[0].mxu0
      %5309 = vmatprep.mubr.f32.mxu0 %v4833
      %5310 = vmatmul.mubr.f32.gmra.mrb[0].mxu0 %v4832
      %v5311 = vpop.f32.mrb[0].mxu0
      %v5312 = vadd.f32 %v5207, %v5311
      %v5313 = vpop.f32.mrb[0].mxu0
      %5314 = vmatprep.mubr.f32.mxu0 %v4842
      %5315 = vmatmul.mubr.f32.gmra.mrb[0].mxu0 %v4841
      %v5316 = vpop.f32.mrb[0].mxu0
      %v5317 = vadd.f32 %v5212, %v5316
      %v5318 = vpop.f32.mrb[0].mxu0
      %5319 = vmatprep.mubr.f32.mxu0 %v4851
      %5320 = vmatmul.mubr.f32.gmra.mrb[0].mxu0 %v4850
      %v5321 = vpop.f32.mrb[0].mxu0
      %v5322 = vadd.f32 %v5217, %v5321
      %v5323 = vpop.f32.mrb[0].mxu0
      %5324 = vmatprep.mubr.f32.mxu0 %v4860
      %5325 = vmatmul.mubr.f32.gmra.mrb[0].mxu0 %v4859
      %v5326 = vpop.f32.mrb[0].mxu0
      %v5327 = vadd.f32 %v5222, %v5326
      %v5328 = vpop.f32.mrb[0].mxu0
      %5329 = vdwg.mxu0
      %5330 = vmatprep.subr.mxu0 0.0
      %5331 = vmatpush1.msra.mxu0 %v4960
      %5332 = vmatprep.subr.mxu0 0.0
      %5333 = vmatpush1.msra.mxu0 %v4961
      %5334 = vmatprep.subr.mxu0 0.0
      %5335 = vmatpush1.msra.mxu0 %v4962
      %5336 = vmatprep.subr.mxu0 0.0
      %5337 = vmatpush1.msra.mxu0 %v4963
      %5338 = vmatprep.subr.mxu0 0.0
      %5339 = vmatpush1.msra.mxu0 %v4964
      %5340 = vmatprep.subr.mxu0 0.0
      %5341 = vmatpush1.msra.mxu0 %v4965
      %5342 = vmatprep.subr.mxu0 0.0
      %5343 = vmatpush1.msra.mxu0 %v4966
      %5344 = vmatprep.subr.mxu0 0.0
      %5345 = vmatpush1.msra.mxu0 %v4967
      %5346 = vmatprep.subr.mxu0 0.0
      %5347 = vmatpush1.msra.mxu0 %v4968
      %5348 = vmatprep.subr.mxu0 0.0
      %5349 = vmatpush1.msra.mxu0 %v4969
      %5350 = vmatprep.subr.mxu0 0.0
      %5351 = vmatpush1.msra.mxu0 %v4970
      %5352 = vmatprep.subr.mxu0 0.0
      %5353 = vmatpush1.msra.mxu0 %v4971
      %5354 = vmatprep.subr.mxu0 0.0
      %5355 = vmatpush1.msra.mxu0 %v4972
      %5356 = vmatprep.subr.mxu0 0.0
      %5357 = vmatpush1.msra.mxu0 %v4973
      %5358 = vmatprep.subr.mxu0 0.0
      %5359 = vmatpush1.msra.mxu0 %v4974
      %5360 = vmatprep.subr.mxu0 0.0
      %5361 = vmatpush1.msra.mxu0 %v4975
      %5362 = vmatprep.subr.mxu0 0.0
      %5363 = vmatpush1.msra.mxu0 %v4976
      %5364 = vmatprep.subr.mxu0 0.0
      %5365 = vmatpush1.msra.mxu0 %v4977
      %5366 = vmatprep.subr.mxu0 0.0
      %5367 = vmatpush1.msra.mxu0 %v4978
      %5368 = vmatprep.subr.mxu0 0.0
      %5369 = vmatpush1.msra.mxu0 %v4979
      %5370 = vmatprep.subr.mxu0 0.0
      %5371 = vmatpush1.msra.mxu0 %v4980
      %5372 = vmatprep.subr.mxu0 0.0
      %5373 = vmatpush1.msra.mxu0 %v4981
      %5374 = vmatprep.subr.mxu0 0.0
      %5375 = vmatpush1.msra.mxu0 %v4982
      %5376 = vmatprep.subr.mxu0 0.0
      %5377 = vmatpush1.msra.mxu0 %v4983
      %5378 = vmatprep.subr.mxu0 0.0
      %5379 = vmatpush1.msra.mxu0 %v4984
      %5380 = vmatprep.subr.mxu0 0.0
      %5381 = vmatpush1.msra.mxu0 %v4985
      %5382 = vmatprep.subr.mxu0 0.0
      %5383 = vmatpush1.msra.mxu0 %v4986
      %5384 = vmatprep.subr.mxu0 0.0
      %5385 = vmatpush1.msra.mxu0 %v4987
      %5386 = vmatprep.subr.mxu0 0.0
      %5387 = vmatpush1.msra.mxu0 %v4988
      %5388 = vmatprep.subr.mxu0 0.0
      %5389 = vmatpush1.msra.mxu0 %v4989
      %5390 = vmatprep.subr.mxu0 0.0
      %5391 = vmatpush1.msra.mxu0 %v4990
      %5392 = vmatprep.subr.mxu0 0.0
      %5393 = vmatpush1.msra.mxu0 %v4991
      %5394 = vmatprep.mubr.f32.mxu0 %v4799
      %5395 = vmatmul.mubr.f32.gmra.mrb[0].mxu0 %v4798
      %v5396 = vpop.f32.mrb[0].mxu0
      %v5397 = vadd.f32 %v5292, %v5396
      %v5398 = vpop.f32.mrb[0].mxu0
      %5399 = vmatprep.mubr.f32.mxu0 %v4808
      %5400 = vmatmul.mubr.f32.gmra.mrb[0].mxu0 %v4807
      %v5401 = vpop.f32.mrb[0].mxu0
      %v5402 = vadd.f32 %v5297, %v5401
      %v5403 = vpop.f32.mrb[0].mxu0
      %5404 = vmatprep.mubr.f32.mxu0 %v4817
      %5405 = vmatmul.mubr.f32.gmra.mrb[0].mxu0 %v4816
      %v5406 = vpop.f32.mrb[0].mxu0
      %v5407 = vadd.f32 %v5302, %v5406
      %v5408 = vpop.f32.mrb[0].mxu0
      %5409 = vmatprep.mubr.f32.mxu0 %v4826
      %5410 = vmatmul.mubr.f32.gmra.mrb[0].mxu0 %v4825
      %v5411 = vpop.f32.mrb[0].mxu0
      %v5412 = vadd.f32 %v5307, %v5411
      %v5413 = vpop.f32.mrb[0].mxu0
      %5414 = vmatprep.mubr.f32.mxu0 %v4835
      %5415 = vmatmul.mubr.f32.gmra.mrb[0].mxu0 %v4834
      %v5416 = vpop.f32.mrb[0].mxu0
      %v5417 = vadd.f32 %v5312, %v5416
      %v5418 = vpop.f32.mrb[0].mxu0
      %5419 = vmatprep.mubr.f32.mxu0 %v4844
      %5420 = vmatmul.mubr.f32.gmra.mrb[0].mxu0 %v4843
      %v5421 = vpop.f32.mrb[0].mxu0
      %v5422 = vadd.f32 %v5317, %v5421
      %v5423 = vpop.f32.mrb[0].mxu0
      %5424 = vmatprep.mubr.f32.mxu0 %v4853
      %5425 = vmatmul.mubr.f32.gmra.mrb[0].mxu0 %v4852
      %v5426 = vpop.f32.mrb[0].mxu0
      %v5427 = vadd.f32 %v5322, %v5426
      %v5428 = vpop.f32.mrb[0].mxu0
      %5429 = vmatprep.mubr.f32.mxu0 %v4862
      %5430 = vmatmul.mubr.f32.gmra.mrb[0].mxu0 %v4861
      %v5431 = vpop.f32.mrb[0].mxu0
      %v5432 = vadd.f32 %v5327, %v5431
      %v5433 = vpop.f32.mrb[0].mxu0
      %5434 = vdwg.mxu0
      %5435 = vmatprep.subr.mxu0 0.0
      %5436 = vmatpush1.msra.mxu0 %v4992
      %5437 = vmatprep.subr.mxu0 0.0
      %5438 = vmatpush1.msra.mxu0 %v4993
      %5439 = vmatprep.subr.mxu0 0.0
      %5440 = vmatpush1.msra.mxu0 %v4994
      %5441 = vmatprep.subr.mxu0 0.0
      %5442 = vmatpush1.msra.mxu0 %v4995
      %5443 = vmatprep.subr.mxu0 0.0
      %5444 = vmatpush1.msra.mxu0 %v4996
      %5445 = vmatprep.subr.mxu0 0.0
      %5446 = vmatpush1.msra.mxu0 %v4997
      %5447 = vmatprep.subr.mxu0 0.0
      %5448 = vmatpush1.msra.mxu0 %v4998
      %5449 = vmatprep.subr.mxu0 0.0
      %5450 = vmatpush1.msra.mxu0 %v4999
      %5451 = vmatprep.subr.mxu0 0.0
      %5452 = vmatpush1.msra.mxu0 %v5000
      %5453 = vmatprep.subr.mxu0 0.0
      %5454 = vmatpush1.msra.mxu0 %v5001
      %5455 = vmatprep.subr.mxu0 0.0
      %5456 = vmatpush1.msra.mxu0 %v5002
      %5457 = vmatprep.subr.mxu0 0.0
      %5458 = vmatpush1.msra.mxu0 %v5003
      %5459 = vmatprep.subr.mxu0 0.0
      %5460 = vmatpush1.msra.mxu0 %v5004
      %5461 = vmatprep.subr.mxu0 0.0
      %5462 = vmatpush1.msra.mxu0 %v5005
      %5463 = vmatprep.subr.mxu0 0.0
      %5464 = vmatpush1.msra.mxu0 %v5006
      %5465 = vmatprep.subr.mxu0 0.0
      %5466 = vmatpush1.msra.mxu0 %v5007
      %5467 = vmatprep.subr.mxu0 0.0
      %5468 = vmatpush1.msra.mxu0 0.0
      %5469 = vmatprep.subr.mxu0 0.0
      %5470 = vmatpush1.msra.mxu0 0.0
      %5471 = vmatprep.subr.mxu0 0.0
      %5472 = vmatpush1.msra.mxu0 0.0
      %5473 = vmatprep.subr.mxu0 0.0
      %5474 = vmatpush1.msra.mxu0 0.0
      %5475 = vmatprep.subr.mxu0 0.0
      %5476 = vmatpush1.msra.mxu0 0.0
      %5477 = vmatprep.subr.mxu0 0.0
      %5478 = vmatpush1.msra.mxu0 0.0
      %5479 = vmatprep.subr.mxu0 0.0
      %5480 = vmatpush1.msra.mxu0 0.0
      %5481 = vmatprep.subr.mxu0 0.0
      %5482 = vmatpush1.msra.mxu0 0.0
      %5483 = vmatprep.subr.mxu0 0.0
      %5484 = vmatpush1.msra.mxu0 0.0
      %5485 = vmatprep.subr.mxu0 0.0
      %5486 = vmatpush1.msra.mxu0 0.0
      %5487 = vmatprep.subr.mxu0 0.0
      %5488 = vmatpush1.msra.mxu0 0.0
      %5489 = vmatprep.subr.mxu0 0.0
      %5490 = vmatpush1.msra.mxu0 0.0
      %5491 = vmatprep.subr.mxu0 0.0
      %5492 = vmatpush1.msra.mxu0 0.0
      %5493 = vmatprep.subr.mxu0 0.0
      %5494 = vmatpush1.msra.mxu0 0.0
      %5495 = vmatprep.subr.mxu0 0.0
      %5496 = vmatpush1.msra.mxu0 0.0
      %5497 = vmatprep.subr.mxu0 0.0
      %5498 = vmatpush1.msra.mxu0 0.0
      %5499 = vmatprep.mubr.f32.mxu0 0.0
      %5500 = vmatmul.mubr.f32.gmra.mrb[0].mxu0 %v4800
      %v5501 = vpop.f32.mrb[0].mxu0
      %v5502 = vadd.f32 %v5397, %v5501
      %v5503 = vpop.f32.mrb[0].mxu0
      %5504 = vmatprep.mubr.f32.mxu0 0.0
      %5505 = vmatmul.mubr.f32.gmra.mrb[0].mxu0 %v4809
      %v5506 = vpop.f32.mrb[0].mxu0
      %v5507 = vadd.f32 %v5402, %v5506
      %v5508 = vpop.f32.mrb[0].mxu0
      %5509 = vmatprep.mubr.f32.mxu0 0.0
      %5510 = vmatmul.mubr.f32.gmra.mrb[0].mxu0 %v4818
      %v5511 = vpop.f32.mrb[0].mxu0
      %v5512 = vadd.f32 %v5407, %v5511
      %v5513 = vpop.f32.mrb[0].mxu0
      %5514 = vmatprep.mubr.f32.mxu0 0.0
      %5515 = vmatmul.mubr.f32.gmra.mrb[0].mxu0 %v4827
      %v5516 = vpop.f32.mrb[0].mxu0
      %v5517 = vadd.f32 %v5412, %v5516
      %v5518 = vpop.f32.mrb[0].mxu0
      %5519 = vmatprep.mubr.f32.mxu0 0.0
      %5520 = vmatmul.mubr.f32.gmra.mrb[0].mxu0 %v4836
      %v5521 = vpop.f32.mrb[0].mxu0
      %v5522 = vadd.f32 %v5417, %v5521
      %v5523 = vpop.f32.mrb[0].mxu0
      %5524 = vmatprep.mubr.f32.mxu0 0.0
      %5525 = vmatmul.mubr.f32.gmra.mrb[0].mxu0 %v4845
      %v5526 = vpop.f32.mrb[0].mxu0
      %v5527 = vadd.f32 %v5422, %v5526
      %v5528 = vpop.f32.mrb[0].mxu0
      %5529 = vmatprep.mubr.f32.mxu0 0.0
      %5530 = vmatmul.mubr.f32.gmra.mrb[0].mxu0 %v4854
      %v5531 = vpop.f32.mrb[0].mxu0
      %v5532 = vadd.f32 %v5427, %v5531
      %v5533 = vpop.f32.mrb[0].mxu0
      %5534 = vmatprep.mubr.f32.mxu0 0.0
      %5535 = vmatmul.mubr.f32.gmra.mrb[0].mxu0 %v4863
      %v5536 = vpop.f32.mrb[0].mxu0
      %v5537 = vadd.f32 %v5432, %v5536
      %v5538 = vpop.f32.mrb[0].mxu0
      %5539 = vdwg.mxu0
      %v5540 = vmax.f32 %v5502, 0.0
      %v5541 = vmax.f32 %v5507, 0.0
      %v5542 = vmax.f32 %v5512, 0.0
      %v5543 = vmax.f32 %v5517, 0.0
      %v5544 = vmax.f32 %v5522, 0.0
      %v5545 = vmax.f32 %v5527, 0.0
      %v5546 = vmax.f32 %v5532, 0.0
      %v5547 = vmax.f32 %v5537, 0.0
      %v5556 = vcombine.high %v5540, %v5540
      %v5558 = vunpack.c.l.s4 1983009808
      %v5559 = vunpack.c.0.s8 %v5558
      %v5560 = vlaneseq
      %v5561 = vshrl.u32 %v5560, 7
      %v5562 = vsub.s32 %v5559, %v5561
      %v5563 = vrot.slane %v5540, %v5562
      %v5565 = vunpack.c.l.s4 1983009808
      %v5566 = vunpack.c.0.s8 %v5565
      %v5567 = vlaneseq
      %v5568 = vshrl.u32 %v5567, 7
      %v5569 = vsub.s32 %v5566, %v5568
      %v5570 = vrot.slane %v5556, %v5569
      %v5571 = vcombine.high %v5563, %v5563
      %v5572 = vcombine.high %v5570, %v5570
      %v5573 = vcombine.high %v5541, %v5541
      %v5575 = vunpack.c.l.s4 1983009808
      %v5576 = vunpack.c.0.s8 %v5575
      %v5577 = vlaneseq
      %v5578 = vshrl.u32 %v5577, 7
      %v5579 = vsub.s32 %v5576, %v5578
      %v5580 = vrot.slane %v5541, %v5579
      %v5582 = vunpack.c.l.s4 1983009808
      %v5583 = vunpack.c.0.s8 %v5582
      %v5584 = vlaneseq
      %v5585 = vshrl.u32 %v5584, 7
      %v5586 = vsub.s32 %v5583, %v5585
      %v5587 = vrot.slane %v5573, %v5586
      %v5588 = vcombine.high %v5580, %v5580
      %v5589 = vcombine.high %v5587, %v5587
      %v5590 = vcombine.high %v5542, %v5542
      %v5592 = vunpack.c.l.s4 1983009808
      %v5593 = vunpack.c.0.s8 %v5592
      %v5594 = vlaneseq
      %v5595 = vshrl.u32 %v5594, 7
      %v5596 = vsub.s32 %v5593, %v5595
      %v5597 = vrot.slane %v5542, %v5596
      %v5599 = vunpack.c.l.s4 1983009808
      %v5600 = vunpack.c.0.s8 %v5599
      %v5601 = vlaneseq
      %v5602 = vshrl.u32 %v5601, 7
      %v5603 = vsub.s32 %v5600, %v5602
      %v5604 = vrot.slane %v5590, %v5603
      %v5605 = vcombine.high %v5597, %v5597
      %v5606 = vcombine.high %v5604, %v5604
      %v5607 = vcombine.high %v5543, %v5543
      %v5609 = vunpack.c.l.s4 1983009808
      %v5610 = vunpack.c.0.s8 %v5609
      %v5611 = vlaneseq
      %v5612 = vshrl.u32 %v5611, 7
      %v5613 = vsub.s32 %v5610, %v5612
      %v5614 = vrot.slane %v5543, %v5613
      %v5616 = vunpack.c.l.s4 1983009808
      %v5617 = vunpack.c.0.s8 %v5616
      %v5618 = vlaneseq
      %v5619 = vshrl.u32 %v5618, 7
      %v5620 = vsub.s32 %v5617, %v5619
      %v5621 = vrot.slane %v5607, %v5620
      %v5622 = vcombine.high %v5614, %v5614
      %v5623 = vcombine.high %v5621, %v5621
      %v5624 = vcombine.high %v5544, %v5544
      %v5626 = vunpack.c.l.s4 1983009808
      %v5627 = vunpack.c.0.s8 %v5626
      %v5628 = vlaneseq
      %v5629 = vshrl.u32 %v5628, 7
      %v5630 = vsub.s32 %v5627, %v5629
      %v5631 = vrot.slane %v5544, %v5630
      %v5633 = vunpack.c.l.s4 1983009808
      %v5634 = vunpack.c.0.s8 %v5633
      %v5635 = vlaneseq
      %v5636 = vshrl.u32 %v5635, 7
      %v5637 = vsub.s32 %v5634, %v5636
      %v5638 = vrot.slane %v5624, %v5637
      %v5639 = vcombine.high %v5631, %v5631
      %v5640 = vcombine.high %v5638, %v5638
      %v5641 = vcombine.high %v5545, %v5545
      %v5643 = vunpack.c.l.s4 1983009808
      %v5644 = vunpack.c.0.s8 %v5643
      %v5645 = vlaneseq
      %v5646 = vshrl.u32 %v5645, 7
      %v5647 = vsub.s32 %v5644, %v5646
      %v5648 = vrot.slane %v5545, %v5647
      %v5650 = vunpack.c.l.s4 1983009808
      %v5651 = vunpack.c.0.s8 %v5650
      %v5652 = vlaneseq
      %v5653 = vshrl.u32 %v5652, 7
      %v5654 = vsub.s32 %v5651, %v5653
      %v5655 = vrot.slane %v5641, %v5654
      %v5656 = vcombine.high %v5648, %v5648
      %v5657 = vcombine.high %v5655, %v5655
      %v5658 = vcombine.high %v5546, %v5546
      %v5660 = vunpack.c.l.s4 1983009808
      %v5661 = vunpack.c.0.s8 %v5660
      %v5662 = vlaneseq
      %v5663 = vshrl.u32 %v5662, 7
      %v5664 = vsub.s32 %v5661, %v5663
      %v5665 = vrot.slane %v5546, %v5664
      %v5667 = vunpack.c.l.s4 1983009808
      %v5668 = vunpack.c.0.s8 %v5667
      %v5669 = vlaneseq
      %v5670 = vshrl.u32 %v5669, 7
      %v5671 = vsub.s32 %v5668, %v5670
      %v5672 = vrot.slane %v5658, %v5671
      %v5673 = vcombine.high %v5665, %v5665
      %v5674 = vcombine.high %v5672, %v5672
      %v5675 = vcombine.high %v5547, %v5547
      %v5677 = vunpack.c.l.s4 1983009808
      %v5678 = vunpack.c.0.s8 %v5677
      %v5679 = vlaneseq
      %v5680 = vshrl.u32 %v5679, 7
      %v5681 = vsub.s32 %v5678, %v5680
      %v5682 = vrot.slane %v5547, %v5681
      %v5684 = vunpack.c.l.s4 1983009808
      %v5685 = vunpack.c.0.s8 %v5684
      %v5686 = vlaneseq
      %v5687 = vshrl.u32 %v5686, 7
      %v5688 = vsub.s32 %v5685, %v5687
      %v5689 = vrot.slane %v5675, %v5688
      %v5690 = vcombine.high %v5682, %v5682
      %v5691 = vcombine.high %v5689, %v5689
      %v5724 = vrot.slane %v5563, 7
      %v5725 = vrot.slane %v5724, 2
      %v5726 = vrot.slane %v5571, 7
      %v5727 = vrot.slane %v5726, 2
      %v5728 = vrot.slane %v5570, 7
      %v5729 = vrot.slane %v5728, 2
      %v5730 = vrot.slane %v5572, 7
      %v5731 = vrot.slane %v5730, 2
      %v5732 = vrot.slane %v5580, 7
      %v5733 = vrot.slane %v5732, 2
      %v5734 = vrot.slane %v5588, 7
      %v5735 = vrot.slane %v5734, 2
      %v5736 = vrot.slane %v5587, 7
      %v5737 = vrot.slane %v5736, 2
      %v5738 = vrot.slane %v5589, 7
      %v5739 = vrot.slane %v5738, 2
      %v5740 = vrot.slane %v5597, 7
      %v5741 = vrot.slane %v5740, 2
      %v5742 = vrot.slane %v5605, 7
      %v5743 = vrot.slane %v5742, 2
      %v5744 = vrot.slane %v5604, 7
      %v5745 = vrot.slane %v5744, 2
      %v5746 = vrot.slane %v5606, 7
      %v5747 = vrot.slane %v5746, 2
      %v5748 = vrot.slane %v5614, 7
      %v5749 = vrot.slane %v5748, 2
      %v5750 = vrot.slane %v5622, 7
      %v5751 = vrot.slane %v5750, 2
      %v5752 = vrot.slane %v5621, 7
      %v5753 = vrot.slane %v5752, 2
      %v5754 = vrot.slane %v5623, 7
      %v5755 = vrot.slane %v5754, 2
      %v5756 = vrot.slane %v5631, 7
      %v5757 = vrot.slane %v5756, 2
      %v5758 = vrot.slane %v5639, 7
      %v5759 = vrot.slane %v5758, 2
      %v5760 = vrot.slane %v5638, 7
      %v5761 = vrot.slane %v5760, 2
      %v5762 = vrot.slane %v5640, 7
      %v5763 = vrot.slane %v5762, 2
      %v5764 = vrot.slane %v5648, 7
      %v5765 = vrot.slane %v5764, 2
      %v5766 = vrot.slane %v5656, 7
      %v5767 = vrot.slane %v5766, 2
      %v5768 = vrot.slane %v5655, 7
      %v5769 = vrot.slane %v5768, 2
      %v5770 = vrot.slane %v5657, 7
      %v5771 = vrot.slane %v5770, 2
      %v5772 = vrot.slane %v5665, 7
      %v5773 = vrot.slane %v5772, 2
      %v5774 = vrot.slane %v5673, 7
      %v5775 = vrot.slane %v5774, 2
      %v5776 = vrot.slane %v5672, 7
      %v5777 = vrot.slane %v5776, 2
      %v5778 = vrot.slane %v5674, 7
      %v5779 = vrot.slane %v5778, 2
      %v5780 = vrot.slane %v5682, 7
      %v5781 = vrot.slane %v5780, 2
      %v5782 = vrot.slane %v5690, 7
      %v5783 = vrot.slane %v5782, 2
      %v5784 = vrot.slane %v5689, 7
      %v5785 = vrot.slane %v5784, 2
      %v5786 = vrot.slane %v5691, 7
      %v5787 = vrot.slane %v5786, 2
      %v5820 = vmax.f32 %v5563, %v5725
      %v5821 = vmax.f32 %v5571, %v5727
      %v5822 = vmax.f32 %v5570, %v5729
      %v5823 = vmax.f32 %v5572, %v5731
      %v5824 = vmax.f32 %v5580, %v5733
      %v5825 = vmax.f32 %v5588, %v5735
      %v5826 = vmax.f32 %v5587, %v5737
      %v5827 = vmax.f32 %v5589, %v5739
      %v5828 = vmax.f32 %v5597, %v5741
      %v5829 = vmax.f32 %v5605, %v5743
      %v5830 = vmax.f32 %v5604, %v5745
      %v5831 = vmax.f32 %v5606, %v5747
      %v5832 = vmax.f32 %v5614, %v5749
      %v5833 = vmax.f32 %v5622, %v5751
      %v5834 = vmax.f32 %v5621, %v5753
      %v5835 = vmax.f32 %v5623, %v5755
      %v5836 = vmax.f32 %v5631, %v5757
      %v5837 = vmax.f32 %v5639, %v5759
      %v5838 = vmax.f32 %v5638, %v5761
      %v5839 = vmax.f32 %v5640, %v5763
      %v5840 = vmax.f32 %v5648, %v5765
      %v5841 = vmax.f32 %v5656, %v5767
      %v5842 = vmax.f32 %v5655, %v5769
      %v5843 = vmax.f32 %v5657, %v5771
      %v5844 = vmax.f32 %v5665, %v5773
      %v5845 = vmax.f32 %v5673, %v5775
      %v5846 = vmax.f32 %v5672, %v5777
      %v5847 = vmax.f32 %v5674, %v5779
      %v5848 = vmax.f32 %v5682, %v5781
      %v5849 = vmax.f32 %v5690, %v5783
      %v5850 = vmax.f32 %v5689, %v5785
      %v5851 = vmax.f32 %v5691, %v5787
      %v5852 = vmax.f32 %v5820, %v5824
      %v5853 = vmax.f32 %v5821, %v5825
      %v5854 = vmax.f32 %v5822, %v5826
      %v5855 = vmax.f32 %v5823, %v5827
      %v5856 = vmax.f32 %v5828, %v5832
      %v5857 = vmax.f32 %v5829, %v5833
      %v5858 = vmax.f32 %v5830, %v5834
      %v5859 = vmax.f32 %v5831, %v5835
      %v5860 = vmax.f32 %v5836, %v5840
      %v5861 = vmax.f32 %v5837, %v5841
      %v5862 = vmax.f32 %v5838, %v5842
      %v5863 = vmax.f32 %v5839, %v5843
      %v5864 = vmax.f32 %v5844, %v5848
      %v5865 = vmax.f32 %v5845, %v5849
      %v5866 = vmax.f32 %v5846, %v5850
      %v5867 = vmax.f32 %v5847, %v5851
      %5868 = vst [vmem:[#allocation5] sm:$0xff] 0.0
      %5869 = vst [vmem:[#allocation5 + $0x8] sm:$0xff] 0.0
      %v5870 = vlaneseq
      %vm5871 = vcmp.ge.s32.totalorder %v5870, 0
      %vm5872 = vcmp.lt.s32.totalorder %v5870, 64
      %vm5873 = vmand %vm5871, %vm5872
      %5874 = vst.msk [vmem:[#allocation5] sm:$0x1] %vm5873, %v5852
      %5875 = vst.msk [vmem:[#allocation5 + $0x1] sm:$0x1] %vm5873, %v5853
      %5876 = vst.msk [vmem:[#allocation5 + $0x2] sm:$0x1] %vm5873, %v5854
      %5877 = vst.msk [vmem:[#allocation5 + $0x3] sm:$0x1] %vm5873, %v5855
      %5878 = vst.msk [vmem:[#allocation5 + $0x4] sm:$0x1] %vm5873, %v5856
      %5879 = vst.msk [vmem:[#allocation5 + $0x5] sm:$0x1] %vm5873, %v5857
      %5880 = vst.msk [vmem:[#allocation5 + $0x6] sm:$0x1] %vm5873, %v5858
      %5881 = vst.msk [vmem:[#allocation5 + $0x7] sm:$0x1] %vm5873, %v5859
      %5882 = vst.msk [vmem:[#allocation5 + $0x8] sm:$0x1] %vm5873, %v5860
      %5883 = vst.msk [vmem:[#allocation5 + $0x9] sm:$0x1] %vm5873, %v5861
      %5884 = vst.msk [vmem:[#allocation5 + $0xa] sm:$0x1] %vm5873, %v5862
      %5885 = vst.msk [vmem:[#allocation5 + $0xb] sm:$0x1] %vm5873, %v5863
      %5886 = vst.msk [vmem:[#allocation5 + $0xc] sm:$0x1] %vm5873, %v5864
      %5887 = vst.msk [vmem:[#allocation5 + $0xd] sm:$0x1] %vm5873, %v5865
      %5888 = vst.msk [vmem:[#allocation5 + $0xe] sm:$0x1] %vm5873, %v5866
      %5889 = vst.msk [vmem:[#allocation5 + $0xf] sm:$0x1] %vm5873, %v5867
      %v5890 = vld [vmem:[#allocation5] sm:$0xff]
      %v5891 = vld [vmem:[#allocation5 + $0x8] sm:$0xff]
      %v5892 = vld [vmem:[%s5] sm:$0xff]
      %v5893 = vld [vmem:[%s5 + $0x8] sm:$0xff]
      %v5894 = vld [vmem:[%s5 + $0x10] sm:$0xff]
      %v5895 = vld [vmem:[%s5 + $0x18] sm:$0xff]
      %v5896 = vld [vmem:[%s5 + $0x20] sm:$0xff]
      %v5897 = vld [vmem:[%s5 + $0x28] sm:$0xff]
      %v5898 = vld [vmem:[%s5 + $0x30] sm:$0xff]
      %v5899 = vld [vmem:[%s5 + $0x38] sm:$0xff]
      %v5900 = vld [vmem:[%s5 + $0x40] sm:$0xff]
      %v5901 = vld [vmem:[%s5 + $0x48] sm:$0xff]
      %v5902 = vld [vmem:[%s5 + $0x50] sm:$0xff]
      %v5903 = vld [vmem:[%s5 + $0x58] sm:$0xff]
      %v5904 = vld [vmem:[%s5 + $0x60] sm:$0xff]
      %v5905 = vld [vmem:[%s5 + $0x68] sm:$0xff]
      %v5906 = vld [vmem:[%s5 + $0x70] sm:$0xff]
      %v5907 = vld [vmem:[%s5 + $0x78] sm:$0xff]
      %v5908 = vld [vmem:[%s5 + $0x80] sm:$0xff]
      %v5909 = vld [vmem:[%s5 + $0x88] sm:$0xff]
      %v5910 = vld [vmem:[%s5 + $0x90] sm:$0xff]
      %v5911 = vld [vmem:[%s5 + $0x98] sm:$0xff]
      %v5912 = vld [vmem:[%s5 + $0xa0] sm:$0xff]
      %v5913 = vld [vmem:[%s5 + $0xa8] sm:$0xff]
      %v5914 = vld [vmem:[%s5 + $0xb0] sm:$0xff]
      %v5915 = vld [vmem:[%s5 + $0xb8] sm:$0xff]
      %v5916 = vld [vmem:[%s5 + $0xc0] sm:$0xff]
      %v5917 = vld [vmem:[%s5 + $0xc8] sm:$0xff]
      %v5918 = vld [vmem:[%s5 + $0xd0] sm:$0xff]
      %v5919 = vld [vmem:[%s5 + $0xd8] sm:$0xff]
      %v5920 = vld [vmem:[%s5 + $0xe0] sm:$0xff]
      %v5921 = vld [vmem:[%s5 + $0xe8] sm:$0xff]
      %v5922 = vld [vmem:[%s5 + $0xf0] sm:$0xff]
      %v5923 = vld [vmem:[%s5 + $0xf8] sm:$0xff]
      %v5924 = vld [vmem:[%s5 + $0x100] sm:$0xff]
      %v5925 = vld [vmem:[%s5 + $0x108] sm:$0xff]
      %v5926 = vld [vmem:[%s5 + $0x110] sm:$0xff]
      %v5927 = vld [vmem:[%s5 + $0x118] sm:$0xff]
      %v5928 = vld [vmem:[%s5 + $0x120] sm:$0xff]
      %v5929 = vld [vmem:[%s5 + $0x128] sm:$0xff]
      %v5930 = vld [vmem:[%s5 + $0x130] sm:$0xff]
      %v5931 = vld [vmem:[%s5 + $0x138] sm:$0xff]
      %v5932 = vld [vmem:[%s5 + $0x140] sm:$0xff]
      %v5933 = vld [vmem:[%s5 + $0x148] sm:$0xff]
      %v5934 = vld [vmem:[%s5 + $0x150] sm:$0xff]
      %v5935 = vld [vmem:[%s5 + $0x158] sm:$0xff]
      %v5936 = vld [vmem:[%s5 + $0x160] sm:$0xff]
      %v5937 = vld [vmem:[%s5 + $0x168] sm:$0xff]
      %v5938 = vld [vmem:[%s5 + $0x170] sm:$0xff]
      %v5939 = vld [vmem:[%s5 + $0x178] sm:$0xff]
      %v5940 = vld [vmem:[%s5 + $0x180] sm:$0xff]
      %v5941 = vld [vmem:[%s5 + $0x188] sm:$0xff]
      %v5942 = vld [vmem:[%s5 + $0x190] sm:$0xff]
      %v5943 = vld [vmem:[%s5 + $0x198] sm:$0xff]
      %v5944 = vld [vmem:[%s5 + $0x1a0] sm:$0xff]
      %v5945 = vld [vmem:[%s5 + $0x1a8] sm:$0xff]
      %v5946 = vld [vmem:[%s5 + $0x1b0] sm:$0xff]
      %v5947 = vld [vmem:[%s5 + $0x1b8] sm:$0xff]
      %v5948 = vld [vmem:[%s5 + $0x1c0] sm:$0xff]
      %v5949 = vld [vmem:[%s5 + $0x1c8] sm:$0xff]
      %v5950 = vld [vmem:[%s5 + $0x1d0] sm:$0xff]
      %v5951 = vld [vmem:[%s5 + $0x1d8] sm:$0xff]
      %v5952 = vld [vmem:[%s5 + $0x1e0] sm:$0xff]
      %v5953 = vld [vmem:[%s5 + $0x1e8] sm:$0xff]
      %v5954 = vld [vmem:[%s5 + $0x1f0] sm:$0xff]
      %v5955 = vld [vmem:[%s5 + $0x1f8] sm:$0xff]
      %v5956 = vld [vmem:[%s5 + $0x200] sm:$0xff]
      %v5957 = vld [vmem:[%s5 + $0x208] sm:$0xff]
      %v5958 = vld [vmem:[%s5 + $0x210] sm:$0xff]
      %v5959 = vld [vmem:[%s5 + $0x218] sm:$0xff]
      %v5960 = vld [vmem:[%s5 + $0x220] sm:$0xff]
      %v5961 = vld [vmem:[%s5 + $0x228] sm:$0xff]
      %v5962 = vld [vmem:[%s5 + $0x230] sm:$0xff]
      %v5963 = vld [vmem:[%s5 + $0x238] sm:$0xff]
      %v5964 = vld [vmem:[%s5 + $0x240] sm:$0xff]
      %v5965 = vld [vmem:[%s5 + $0x248] sm:$0xff]
      %v5966 = vld [vmem:[%s5 + $0x250] sm:$0xff]
      %v5967 = vld [vmem:[%s5 + $0x258] sm:$0xff]
      %v5968 = vld [vmem:[%s5 + $0x260] sm:$0xff]
      %v5969 = vld [vmem:[%s5 + $0x268] sm:$0xff]
      %v5970 = vld [vmem:[%s5 + $0x270] sm:$0xff]
      %v5971 = vld [vmem:[%s5 + $0x278] sm:$0xff]
      %v5972 = vld [vmem:[%s5 + $0x280] sm:$0xff]
      %v5973 = vld [vmem:[%s5 + $0x288] sm:$0xff]
      %v5974 = vld [vmem:[%s5 + $0x290] sm:$0xff]
      %v5975 = vld [vmem:[%s5 + $0x298] sm:$0xff]
      %v5976 = vld [vmem:[%s5 + $0x2a0] sm:$0xff]
      %v5977 = vld [vmem:[%s5 + $0x2a8] sm:$0xff]
      %v5978 = vld [vmem:[%s5 + $0x2b0] sm:$0xff]
      %v5979 = vld [vmem:[%s5 + $0x2b8] sm:$0xff]
      %v5980 = vld [vmem:[%s5 + $0x2c0] sm:$0xff]
      %v5981 = vld [vmem:[%s5 + $0x2c8] sm:$0xff]
      %v5982 = vld [vmem:[%s5 + $0x2d0] sm:$0xff]
      %v5983 = vld [vmem:[%s5 + $0x2d8] sm:$0xff]
      %v5984 = vld [vmem:[%s5 + $0x2e0] sm:$0xff]
      %v5985 = vld [vmem:[%s5 + $0x2e8] sm:$0xff]
      %v5986 = vld [vmem:[%s5 + $0x2f0] sm:$0xff]
      %v5987 = vld [vmem:[%s5 + $0x2f8] sm:$0xff]
      %v5988 = vld [vmem:[%s5 + $0x300] sm:$0xff]
      %v5989 = vld [vmem:[%s5 + $0x308] sm:$0xff]
      %v5990 = vld [vmem:[%s5 + $0x310] sm:$0xff]
      %v5991 = vld [vmem:[%s5 + $0x318] sm:$0xff]
      %v5992 = vld [vmem:[%s5 + $0x320] sm:$0xff]
      %v5993 = vld [vmem:[%s5 + $0x328] sm:$0xff]
      %v5994 = vld [vmem:[%s5 + $0x330] sm:$0xff]
      %v5995 = vld [vmem:[%s5 + $0x338] sm:$0xff]
      %v5996 = vld [vmem:[%s5 + $0x340] sm:$0xff]
      %v5997 = vld [vmem:[%s5 + $0x348] sm:$0xff]
      %v5998 = vld [vmem:[%s5 + $0x350] sm:$0xff]
      %v5999 = vld [vmem:[%s5 + $0x358] sm:$0xff]
      %v6000 = vld [vmem:[%s5 + $0x360] sm:$0xff]
      %v6001 = vld [vmem:[%s5 + $0x368] sm:$0xff]
      %v6002 = vld [vmem:[%s5 + $0x370] sm:$0xff]
      %v6003 = vld [vmem:[%s5 + $0x378] sm:$0xff]
      %v6004 = vld [vmem:[%s5 + $0x380] sm:$0xff]
      %v6005 = vld [vmem:[%s5 + $0x388] sm:$0xff]
      %v6006 = vld [vmem:[%s5 + $0x390] sm:$0xff]
      %v6007 = vld [vmem:[%s5 + $0x398] sm:$0xff]
      %v6008 = vld [vmem:[%s5 + $0x3a0] sm:$0xff]
      %v6009 = vld [vmem:[%s5 + $0x3a8] sm:$0xff]
      %v6010 = vld [vmem:[%s5 + $0x3b0] sm:$0xff]
      %v6011 = vld [vmem:[%s5 + $0x3b8] sm:$0xff]
      %v6012 = vld [vmem:[%s5 + $0x3c0] sm:$0xff]
      %v6013 = vld [vmem:[%s5 + $0x3c8] sm:$0xff]
      %v6014 = vld [vmem:[%s5 + $0x3d0] sm:$0xff]
      %v6015 = vld [vmem:[%s5 + $0x3d8] sm:$0xff]
      %v6016 = vld [vmem:[%s5 + $0x3e0] sm:$0xff]
      %v6017 = vld [vmem:[%s5 + $0x3e8] sm:$0xff]
      %v6018 = vld [vmem:[%s5 + $0x3f0] sm:$0xff]
      %v6019 = vld [vmem:[%s5 + $0x3f8] sm:$0xff]
      %v6020 = vld [vmem:[%s5 + $0x400] sm:$0xff]
      %v6021 = vld [vmem:[%s5 + $0x408] sm:$0xff]
      %v6022 = vld [vmem:[%s5 + $0x410] sm:$0xff]
      %v6023 = vld [vmem:[%s5 + $0x418] sm:$0xff]
      %v6024 = vld [vmem:[%s5 + $0x420] sm:$0xff]
      %v6025 = vld [vmem:[%s5 + $0x428] sm:$0xff]
      %v6026 = vld [vmem:[%s5 + $0x430] sm:$0xff]
      %v6027 = vld [vmem:[%s5 + $0x438] sm:$0xff]
      %v6028 = vld [vmem:[%s5 + $0x440] sm:$0xff]
      %v6029 = vld [vmem:[%s5 + $0x448] sm:$0xff]
      %v6030 = vld [vmem:[%s5 + $0x450] sm:$0xff]
      %v6031 = vld [vmem:[%s5 + $0x458] sm:$0xff]
      %v6032 = vld [vmem:[%s5 + $0x460] sm:$0xff]
      %v6033 = vld [vmem:[%s5 + $0x468] sm:$0xff]
      %v6034 = vld [vmem:[%s5 + $0x470] sm:$0xff]
      %v6035 = vld [vmem:[%s5 + $0x478] sm:$0xff]
      %v6036 = vld [vmem:[%s5 + $0x480] sm:$0xff]
      %v6037 = vld [vmem:[%s5 + $0x488] sm:$0xff]
      %v6038 = vld [vmem:[%s5 + $0x490] sm:$0xff]
      %v6039 = vld [vmem:[%s5 + $0x498] sm:$0xff]
      %v6040 = vld [vmem:[%s5 + $0x4a0] sm:$0xff]
      %v6041 = vld [vmem:[%s5 + $0x4a8] sm:$0xff]
      %v6042 = vld [vmem:[%s5 + $0x4b0] sm:$0xff]
      %v6043 = vld [vmem:[%s5 + $0x4b8] sm:$0xff]
      %v6044 = vld [vmem:[%s5 + $0x4c0] sm:$0xff]
      %v6045 = vld [vmem:[%s5 + $0x4c8] sm:$0xff]
      %v6046 = vld [vmem:[%s5 + $0x4d0] sm:$0xff]
      %v6047 = vld [vmem:[%s5 + $0x4d8] sm:$0xff]
      %v6048 = vld [vmem:[%s5 + $0x4e0] sm:$0xff]
      %v6049 = vld [vmem:[%s5 + $0x4e8] sm:$0xff]
      %v6050 = vld [vmem:[%s5 + $0x4f0] sm:$0xff]
      %v6051 = vld [vmem:[%s5 + $0x4f8] sm:$0xff]
      %v6052 = vld [vmem:[%s5 + $0x500] sm:$0xff]
      %v6053 = vld [vmem:[%s5 + $0x508] sm:$0xff]
      %v6054 = vld [vmem:[%s5 + $0x510] sm:$0xff]
      %v6055 = vld [vmem:[%s5 + $0x518] sm:$0xff]
      %v6056 = vld [vmem:[%s5 + $0x520] sm:$0xff]
      %v6057 = vld [vmem:[%s5 + $0x528] sm:$0xff]
      %v6058 = vld [vmem:[%s5 + $0x530] sm:$0xff]
      %v6059 = vld [vmem:[%s5 + $0x538] sm:$0xff]
      %v6060 = vld [vmem:[%s5 + $0x540] sm:$0xff]
      %v6061 = vld [vmem:[%s5 + $0x548] sm:$0xff]
      %v6062 = vld [vmem:[%s5 + $0x550] sm:$0xff]
      %v6063 = vld [vmem:[%s5 + $0x558] sm:$0xff]
      %v6064 = vld [vmem:[%s5 + $0x560] sm:$0xff]
      %v6065 = vld [vmem:[%s5 + $0x568] sm:$0xff]
      %v6066 = vld [vmem:[%s5 + $0x570] sm:$0xff]
      %v6067 = vld [vmem:[%s5 + $0x578] sm:$0xff]
      %v6068 = vld [vmem:[%s5 + $0x580] sm:$0xff]
      %v6069 = vld [vmem:[%s5 + $0x588] sm:$0xff]
      %v6070 = vld [vmem:[%s5 + $0x590] sm:$0xff]
      %v6071 = vld [vmem:[%s5 + $0x598] sm:$0xff]
      %v6072 = vld [vmem:[%s5 + $0x5a0] sm:$0xff]
      %v6073 = vld [vmem:[%s5 + $0x5a8] sm:$0xff]
      %v6074 = vld [vmem:[%s5 + $0x5b0] sm:$0xff]
      %v6075 = vld [vmem:[%s5 + $0x5b8] sm:$0xff]
      %v6076 = vld [vmem:[%s5 + $0x5c0] sm:$0xff]
      %v6077 = vld [vmem:[%s5 + $0x5c8] sm:$0xff]
      %v6078 = vld [vmem:[%s5 + $0x5d0] sm:$0xff]
      %v6079 = vld [vmem:[%s5 + $0x5d8] sm:$0xff]
      %v6080 = vld [vmem:[%s5 + $0x5e0] sm:$0xff]
      %v6081 = vld [vmem:[%s5 + $0x5e8] sm:$0xff]
      %v6082 = vld [vmem:[%s5 + $0x5f0] sm:$0xff]
      %v6083 = vld [vmem:[%s5 + $0x5f8] sm:$0xff]
      %v6084 = vld [vmem:[%s5 + $0x600] sm:$0xff]
      %v6085 = vld [vmem:[%s5 + $0x608] sm:$0xff]
      %v6086 = vld [vmem:[%s5 + $0x610] sm:$0xff]
      %v6087 = vld [vmem:[%s5 + $0x618] sm:$0xff]
      %v6088 = vld [vmem:[%s5 + $0x620] sm:$0xff]
      %v6089 = vld [vmem:[%s5 + $0x628] sm:$0xff]
      %v6090 = vld [vmem:[%s5 + $0x630] sm:$0xff]
      %v6091 = vld [vmem:[%s5 + $0x638] sm:$0xff]
      %v6092 = vld [vmem:[%s5 + $0x640] sm:$0xff]
      %v6093 = vld [vmem:[%s5 + $0x648] sm:$0xff]
      %v6094 = vld [vmem:[%s5 + $0x650] sm:$0xff]
      %v6095 = vld [vmem:[%s5 + $0x658] sm:$0xff]
      %v6096 = vld [vmem:[%s5 + $0x660] sm:$0xff]
      %v6097 = vld [vmem:[%s5 + $0x668] sm:$0xff]
      %v6098 = vld [vmem:[%s5 + $0x670] sm:$0xff]
      %v6099 = vld [vmem:[%s5 + $0x678] sm:$0xff]
      %v6100 = vld [vmem:[%s5 + $0x680] sm:$0xff]
      %v6101 = vld [vmem:[%s5 + $0x688] sm:$0xff]
      %v6102 = vld [vmem:[%s5 + $0x690] sm:$0xff]
      %v6103 = vld [vmem:[%s5 + $0x698] sm:$0xff]
      %v6104 = vld [vmem:[%s5 + $0x6a0] sm:$0xff]
      %v6105 = vld [vmem:[%s5 + $0x6a8] sm:$0xff]
      %v6106 = vld [vmem:[%s5 + $0x6b0] sm:$0xff]
      %v6107 = vld [vmem:[%s5 + $0x6b8] sm:$0xff]
      %v6108 = vld [vmem:[%s5 + $0x6c0] sm:$0xff]
      %v6109 = vld [vmem:[%s5 + $0x6c8] sm:$0xff]
      %v6110 = vld [vmem:[%s5 + $0x6d0] sm:$0xff]
      %v6111 = vld [vmem:[%s5 + $0x6d8] sm:$0xff]
      %v6112 = vld [vmem:[%s5 + $0x6e0] sm:$0xff]
      %v6113 = vld [vmem:[%s5 + $0x6e8] sm:$0xff]
      %v6114 = vld [vmem:[%s5 + $0x6f0] sm:$0xff]
      %v6115 = vld [vmem:[%s5 + $0x6f8] sm:$0xff]
      %v6116 = vld [vmem:[%s5 + $0x700] sm:$0xff]
      %v6117 = vld [vmem:[%s5 + $0x708] sm:$0xff]
      %v6118 = vld [vmem:[%s5 + $0x710] sm:$0xff]
      %v6119 = vld [vmem:[%s5 + $0x718] sm:$0xff]
      %v6120 = vld [vmem:[%s5 + $0x720] sm:$0xff]
      %v6121 = vld [vmem:[%s5 + $0x728] sm:$0xff]
      %v6122 = vld [vmem:[%s5 + $0x730] sm:$0xff]
      %v6123 = vld [vmem:[%s5 + $0x738] sm:$0xff]
      %v6124 = vld [vmem:[%s5 + $0x740] sm:$0xff]
      %v6125 = vld [vmem:[%s5 + $0x748] sm:$0xff]
      %v6126 = vld [vmem:[%s5 + $0x750] sm:$0xff]
      %v6127 = vld [vmem:[%s5 + $0x758] sm:$0xff]
      %v6128 = vld [vmem:[%s5 + $0x760] sm:$0xff]
      %v6129 = vld [vmem:[%s5 + $0x768] sm:$0xff]
      %v6130 = vld [vmem:[%s5 + $0x770] sm:$0xff]
      %v6131 = vld [vmem:[%s5 + $0x778] sm:$0xff]
      %v6132 = vld [vmem:[%s5 + $0x780] sm:$0xff]
      %v6133 = vld [vmem:[%s5 + $0x788] sm:$0xff]
      %v6134 = vld [vmem:[%s5 + $0x790] sm:$0xff]
      %v6135 = vld [vmem:[%s5 + $0x798] sm:$0xff]
      %v6136 = vld [vmem:[%s5 + $0x7a0] sm:$0xff]
      %v6137 = vld [vmem:[%s5 + $0x7a8] sm:$0xff]
      %v6138 = vld [vmem:[%s5 + $0x7b0] sm:$0xff]
      %v6139 = vld [vmem:[%s5 + $0x7b8] sm:$0xff]
      %v6140 = vld [vmem:[%s5 + $0x7c0] sm:$0xff]
      %v6141 = vld [vmem:[%s5 + $0x7c8] sm:$0xff]
      %v6142 = vld [vmem:[%s5 + $0x7d0] sm:$0xff]
      %v6143 = vld [vmem:[%s5 + $0x7d8] sm:$0xff]
      %v6144 = vld [vmem:[%s5 + $0x7e0] sm:$0xff]
      %v6145 = vld [vmem:[%s5 + $0x7e8] sm:$0xff]
      %v6146 = vld [vmem:[%s5 + $0x7f0] sm:$0xff]
      %v6147 = vld [vmem:[%s5 + $0x7f8] sm:$0xff]
      %v6148 = vld [vmem:[%s6] sm:$0x1]
      %v6151 = vlaneseq
      %v6152 = vshrl.u32 %v6151, 7
      %v6153 = vsub.s32 0, %v6152
      %v6154 = vrot.slane %v5890, %v6153
      %v6155 = vlaneseq
      %v6156 = vshrl.u32 %v6155, 7
      %v6157 = vsub.s32 1, %v6156
      %v6158 = vrot.slane %v5890, %v6157
      %v6159 = vlaneseq
      %v6160 = vshrl.u32 %v6159, 7
      %v6161 = vsub.s32 2, %v6160
      %v6162 = vrot.slane %v5890, %v6161
      %v6163 = vlaneseq
      %v6164 = vshrl.u32 %v6163, 7
      %v6165 = vsub.s32 3, %v6164
      %v6166 = vrot.slane %v5890, %v6165
      %v6167 = vlaneseq
      %v6168 = vshrl.u32 %v6167, 7
      %v6169 = vsub.s32 4, %v6168
      %v6170 = vrot.slane %v5890, %v6169
      %v6171 = vlaneseq
      %v6172 = vshrl.u32 %v6171, 7
      %v6173 = vsub.s32 5, %v6172
      %v6174 = vrot.slane %v5890, %v6173
      %v6175 = vlaneseq
      %v6176 = vshrl.u32 %v6175, 7
      %v6177 = vsub.s32 6, %v6176
      %v6178 = vrot.slane %v5890, %v6177
      %v6179 = vlaneseq
      %v6180 = vshrl.u32 %v6179, 7
      %v6181 = vsub.s32 7, %v6180
      %v6182 = vrot.slane %v5890, %v6181
      %v6183 = vlaneseq
      %v6184 = vshrl.u32 %v6183, 7
      %v6185 = vsub.s32 0, %v6184
      %v6186 = vrot.slane %v5891, %v6185
      %v6187 = vlaneseq
      %v6188 = vshrl.u32 %v6187, 7
      %v6189 = vsub.s32 1, %v6188
      %v6190 = vrot.slane %v5891, %v6189
      %v6191 = vlaneseq
      %v6192 = vshrl.u32 %v6191, 7
      %v6193 = vsub.s32 2, %v6192
      %v6194 = vrot.slane %v5891, %v6193
      %v6195 = vlaneseq
      %v6196 = vshrl.u32 %v6195, 7
      %v6197 = vsub.s32 3, %v6196
      %v6198 = vrot.slane %v5891, %v6197
      %v6199 = vlaneseq
      %v6200 = vshrl.u32 %v6199, 7
      %v6201 = vsub.s32 4, %v6200
      %v6202 = vrot.slane %v5891, %v6201
      %v6203 = vlaneseq
      %v6204 = vshrl.u32 %v6203, 7
      %v6205 = vsub.s32 5, %v6204
      %v6206 = vrot.slane %v5891, %v6205
      %v6207 = vlaneseq
      %v6208 = vshrl.u32 %v6207, 7
      %v6209 = vsub.s32 6, %v6208
      %v6210 = vrot.slane %v5891, %v6209
      %v6211 = vlaneseq
      %v6212 = vshrl.u32 %v6211, 7
      %v6213 = vsub.s32 7, %v6212
      %v6214 = vrot.slane %v5891, %v6213
      %6231 = vmatprep.subr.mxu0 0.0
      %6232 = vmatpush1.msra.mxu0 %v5892
      %6233 = vmatprep.subr.mxu0 0.0
      %6234 = vmatpush1.msra.mxu0 %v5893
      %6235 = vmatprep.subr.mxu0 0.0
      %6236 = vmatpush1.msra.mxu0 %v5894
      %6237 = vmatprep.subr.mxu0 0.0
      %6238 = vmatpush1.msra.mxu0 %v5895
      %6239 = vmatprep.subr.mxu0 0.0
      %6240 = vmatpush1.msra.mxu0 %v5896
      %6241 = vmatprep.subr.mxu0 0.0
      %6242 = vmatpush1.msra.mxu0 %v5897
      %6243 = vmatprep.subr.mxu0 0.0
      %6244 = vmatpush1.msra.mxu0 %v5898
      %6245 = vmatprep.subr.mxu0 0.0
      %6246 = vmatpush1.msra.mxu0 %v5899
      %6247 = vmatprep.subr.mxu0 0.0
      %6248 = vmatpush1.msra.mxu0 %v5900
      %6249 = vmatprep.subr.mxu0 0.0
      %6250 = vmatpush1.msra.mxu0 %v5901
      %6251 = vmatprep.subr.mxu0 0.0
      %6252 = vmatpush1.msra.mxu0 %v5902
      %6253 = vmatprep.subr.mxu0 0.0
      %6254 = vmatpush1.msra.mxu0 %v5903
      %6255 = vmatprep.subr.mxu0 0.0
      %6256 = vmatpush1.msra.mxu0 %v5904
      %6257 = vmatprep.subr.mxu0 0.0
      %6258 = vmatpush1.msra.mxu0 %v5905
      %6259 = vmatprep.subr.mxu0 0.0
      %6260 = vmatpush1.msra.mxu0 %v5906
      %6261 = vmatprep.subr.mxu0 0.0
      %6262 = vmatpush1.msra.mxu0 %v5907
      %6263 = vmatprep.subr.mxu0 0.0
      %6264 = vmatpush1.msra.mxu0 %v5908
      %6265 = vmatprep.subr.mxu0 0.0
      %6266 = vmatpush1.msra.mxu0 %v5909
      %6267 = vmatprep.subr.mxu0 0.0
      %6268 = vmatpush1.msra.mxu0 %v5910
      %6269 = vmatprep.subr.mxu0 0.0
      %6270 = vmatpush1.msra.mxu0 %v5911
      %6271 = vmatprep.subr.mxu0 0.0
      %6272 = vmatpush1.msra.mxu0 %v5912
      %6273 = vmatprep.subr.mxu0 0.0
      %6274 = vmatpush1.msra.mxu0 %v5913
      %6275 = vmatprep.subr.mxu0 0.0
      %6276 = vmatpush1.msra.mxu0 %v5914
      %6277 = vmatprep.subr.mxu0 0.0
      %6278 = vmatpush1.msra.mxu0 %v5915
      %6279 = vmatprep.subr.mxu0 0.0
      %6280 = vmatpush1.msra.mxu0 %v5916
      %6281 = vmatprep.subr.mxu0 0.0
      %6282 = vmatpush1.msra.mxu0 %v5917
      %6283 = vmatprep.subr.mxu0 0.0
      %6284 = vmatpush1.msra.mxu0 %v5918
      %6285 = vmatprep.subr.mxu0 0.0
      %6286 = vmatpush1.msra.mxu0 %v5919
      %6287 = vmatprep.subr.mxu0 0.0
      %6288 = vmatpush1.msra.mxu0 %v5920
      %6289 = vmatprep.subr.mxu0 0.0
      %6290 = vmatpush1.msra.mxu0 %v5921
      %6291 = vmatprep.subr.mxu0 0.0
      %6292 = vmatpush1.msra.mxu0 %v5922
      %6293 = vmatprep.subr.mxu0 0.0
      %6294 = vmatpush1.msra.mxu0 %v5923
      %6295 = vmatprep.mubr.f32.mxu0 %v6158
      %6296 = vmatmul.mubr.f32.gmra.mrb[0].mxu0 %v6154
      %v6297 = vpop.f32.mrb[0].mxu0
      %v6298 = vadd.f32 %v6148, %v6297
      %v6299 = vpop.f32.mrb[0].mxu0
      %6300 = vdwg.mxu0
      %6301 = vmatprep.subr.mxu0 0.0
      %6302 = vmatpush1.msra.mxu0 %v5924
      %6303 = vmatprep.subr.mxu0 0.0
      %6304 = vmatpush1.msra.mxu0 %v5925
      %6305 = vmatprep.subr.mxu0 0.0
      %6306 = vmatpush1.msra.mxu0 %v5926
      %6307 = vmatprep.subr.mxu0 0.0
      %6308 = vmatpush1.msra.mxu0 %v5927
      %6309 = vmatprep.subr.mxu0 0.0
      %6310 = vmatpush1.msra.mxu0 %v5928
      %6311 = vmatprep.subr.mxu0 0.0
      %6312 = vmatpush1.msra.mxu0 %v5929
      %6313 = vmatprep.subr.mxu0 0.0
      %6314 = vmatpush1.msra.mxu0 %v5930
      %6315 = vmatprep.subr.mxu0 0.0
      %6316 = vmatpush1.msra.mxu0 %v5931
      %6317 = vmatprep.subr.mxu0 0.0
      %6318 = vmatpush1.msra.mxu0 %v5932
      %6319 = vmatprep.subr.mxu0 0.0
      %6320 = vmatpush1.msra.mxu0 %v5933
      %6321 = vmatprep.subr.mxu0 0.0
      %6322 = vmatpush1.msra.mxu0 %v5934
      %6323 = vmatprep.subr.mxu0 0.0
      %6324 = vmatpush1.msra.mxu0 %v5935
      %6325 = vmatprep.subr.mxu0 0.0
      %6326 = vmatpush1.msra.mxu0 %v5936
      %6327 = vmatprep.subr.mxu0 0.0
      %6328 = vmatpush1.msra.mxu0 %v5937
      %6329 = vmatprep.subr.mxu0 0.0
      %6330 = vmatpush1.msra.mxu0 %v5938
      %6331 = vmatprep.subr.mxu0 0.0
      %6332 = vmatpush1.msra.mxu0 %v5939
      %6333 = vmatprep.subr.mxu0 0.0
      %6334 = vmatpush1.msra.mxu0 %v5940
      %6335 = vmatprep.subr.mxu0 0.0
      %6336 = vmatpush1.msra.mxu0 %v5941
      %6337 = vmatprep.subr.mxu0 0.0
      %6338 = vmatpush1.msra.mxu0 %v5942
      %6339 = vmatprep.subr.mxu0 0.0
      %6340 = vmatpush1.msra.mxu0 %v5943
      %6341 = vmatprep.subr.mxu0 0.0
      %6342 = vmatpush1.msra.mxu0 %v5944
      %6343 = vmatprep.subr.mxu0 0.0
      %6344 = vmatpush1.msra.mxu0 %v5945
      %6345 = vmatprep.subr.mxu0 0.0
      %6346 = vmatpush1.msra.mxu0 %v5946
      %6347 = vmatprep.subr.mxu0 0.0
      %6348 = vmatpush1.msra.mxu0 %v5947
      %6349 = vmatprep.subr.mxu0 0.0
      %6350 = vmatpush1.msra.mxu0 %v5948
      %6351 = vmatprep.subr.mxu0 0.0
      %6352 = vmatpush1.msra.mxu0 %v5949
      %6353 = vmatprep.subr.mxu0 0.0
      %6354 = vmatpush1.msra.mxu0 %v5950
      %6355 = vmatprep.subr.mxu0 0.0
      %6356 = vmatpush1.msra.mxu0 %v5951
      %6357 = vmatprep.subr.mxu0 0.0
      %6358 = vmatpush1.msra.mxu0 %v5952
      %6359 = vmatprep.subr.mxu0 0.0
      %6360 = vmatpush1.msra.mxu0 %v5953
      %6361 = vmatprep.subr.mxu0 0.0
      %6362 = vmatpush1.msra.mxu0 %v5954
      %6363 = vmatprep.subr.mxu0 0.0
      %6364 = vmatpush1.msra.mxu0 %v5955
      %6365 = vmatprep.mubr.f32.mxu0 %v6166
      %6366 = vmatmul.mubr.f32.gmra.mrb[0].mxu0 %v6162
      %v6367 = vpop.f32.mrb[0].mxu0
      %v6368 = vadd.f32 %v6298, %v6367
      %v6369 = vpop.f32.mrb[0].mxu0
      %6370 = vdwg.mxu0
      %6371 = vmatprep.subr.mxu0 0.0
      %6372 = vmatpush1.msra.mxu0 %v5956
      %6373 = vmatprep.subr.mxu0 0.0
      %6374 = vmatpush1.msra.mxu0 %v5957
      %6375 = vmatprep.subr.mxu0 0.0
      %6376 = vmatpush1.msra.mxu0 %v5958
      %6377 = vmatprep.subr.mxu0 0.0
      %6378 = vmatpush1.msra.mxu0 %v5959
      %6379 = vmatprep.subr.mxu0 0.0
      %6380 = vmatpush1.msra.mxu0 %v5960
      %6381 = vmatprep.subr.mxu0 0.0
      %6382 = vmatpush1.msra.mxu0 %v5961
      %6383 = vmatprep.subr.mxu0 0.0
      %6384 = vmatpush1.msra.mxu0 %v5962
      %6385 = vmatprep.subr.mxu0 0.0
      %6386 = vmatpush1.msra.mxu0 %v5963
      %6387 = vmatprep.subr.mxu0 0.0
      %6388 = vmatpush1.msra.mxu0 %v5964
      %6389 = vmatprep.subr.mxu0 0.0
      %6390 = vmatpush1.msra.mxu0 %v5965
      %6391 = vmatprep.subr.mxu0 0.0
      %6392 = vmatpush1.msra.mxu0 %v5966
      %6393 = vmatprep.subr.mxu0 0.0
      %6394 = vmatpush1.msra.mxu0 %v5967
      %6395 = vmatprep.subr.mxu0 0.0
      %6396 = vmatpush1.msra.mxu0 %v5968
      %6397 = vmatprep.subr.mxu0 0.0
      %6398 = vmatpush1.msra.mxu0 %v5969
      %6399 = vmatprep.subr.mxu0 0.0
      %6400 = vmatpush1.msra.mxu0 %v5970
      %6401 = vmatprep.subr.mxu0 0.0
      %6402 = vmatpush1.msra.mxu0 %v5971
      %6403 = vmatprep.subr.mxu0 0.0
      %6404 = vmatpush1.msra.mxu0 %v5972
      %6405 = vmatprep.subr.mxu0 0.0
      %6406 = vmatpush1.msra.mxu0 %v5973
      %6407 = vmatprep.subr.mxu0 0.0
      %6408 = vmatpush1.msra.mxu0 %v5974
      %6409 = vmatprep.subr.mxu0 0.0
      %6410 = vmatpush1.msra.mxu0 %v5975
      %6411 = vmatprep.subr.mxu0 0.0
      %6412 = vmatpush1.msra.mxu0 %v5976
      %6413 = vmatprep.subr.mxu0 0.0
      %6414 = vmatpush1.msra.mxu0 %v5977
      %6415 = vmatprep.subr.mxu0 0.0
      %6416 = vmatpush1.msra.mxu0 %v5978
      %6417 = vmatprep.subr.mxu0 0.0
      %6418 = vmatpush1.msra.mxu0 %v5979
      %6419 = vmatprep.subr.mxu0 0.0
      %6420 = vmatpush1.msra.mxu0 %v5980
      %6421 = vmatprep.subr.mxu0 0.0
      %6422 = vmatpush1.msra.mxu0 %v5981
      %6423 = vmatprep.subr.mxu0 0.0
      %6424 = vmatpush1.msra.mxu0 %v5982
      %6425 = vmatprep.subr.mxu0 0.0
      %6426 = vmatpush1.msra.mxu0 %v5983
      %6427 = vmatprep.subr.mxu0 0.0
      %6428 = vmatpush1.msra.mxu0 %v5984
      %6429 = vmatprep.subr.mxu0 0.0
      %6430 = vmatpush1.msra.mxu0 %v5985
      %6431 = vmatprep.subr.mxu0 0.0
      %6432 = vmatpush1.msra.mxu0 %v5986
      %6433 = vmatprep.subr.mxu0 0.0
      %6434 = vmatpush1.msra.mxu0 %v5987
      %6435 = vmatprep.mubr.f32.mxu0 %v6174
      %6436 = vmatmul.mubr.f32.gmra.mrb[0].mxu0 %v6170
      %v6437 = vpop.f32.mrb[0].mxu0
      %v6438 = vadd.f32 %v6368, %v6437
      %v6439 = vpop.f32.mrb[0].mxu0
      %6440 = vdwg.mxu0
      %6441 = vmatprep.subr.mxu0 0.0
      %6442 = vmatpush1.msra.mxu0 %v5988
      %6443 = vmatprep.subr.mxu0 0.0
      %6444 = vmatpush1.msra.mxu0 %v5989
      %6445 = vmatprep.subr.mxu0 0.0
      %6446 = vmatpush1.msra.mxu0 %v5990
      %6447 = vmatprep.subr.mxu0 0.0
      %6448 = vmatpush1.msra.mxu0 %v5991
      %6449 = vmatprep.subr.mxu0 0.0
      %6450 = vmatpush1.msra.mxu0 %v5992
      %6451 = vmatprep.subr.mxu0 0.0
      %6452 = vmatpush1.msra.mxu0 %v5993
      %6453 = vmatprep.subr.mxu0 0.0
      %6454 = vmatpush1.msra.mxu0 %v5994
      %6455 = vmatprep.subr.mxu0 0.0
      %6456 = vmatpush1.msra.mxu0 %v5995
      %6457 = vmatprep.subr.mxu0 0.0
      %6458 = vmatpush1.msra.mxu0 %v5996
      %6459 = vmatprep.subr.mxu0 0.0
      %6460 = vmatpush1.msra.mxu0 %v5997
      %6461 = vmatprep.subr.mxu0 0.0
      %6462 = vmatpush1.msra.mxu0 %v5998
      %6463 = vmatprep.subr.mxu0 0.0
      %6464 = vmatpush1.msra.mxu0 %v5999
      %6465 = vmatprep.subr.mxu0 0.0
      %6466 = vmatpush1.msra.mxu0 %v6000
      %6467 = vmatprep.subr.mxu0 0.0
      %6468 = vmatpush1.msra.mxu0 %v6001
      %6469 = vmatprep.subr.mxu0 0.0
      %6470 = vmatpush1.msra.mxu0 %v6002
      %6471 = vmatprep.subr.mxu0 0.0
      %6472 = vmatpush1.msra.mxu0 %v6003
      %6473 = vmatprep.subr.mxu0 0.0
      %6474 = vmatpush1.msra.mxu0 %v6004
      %6475 = vmatprep.subr.mxu0 0.0
      %6476 = vmatpush1.msra.mxu0 %v6005
      %6477 = vmatprep.subr.mxu0 0.0
      %6478 = vmatpush1.msra.mxu0 %v6006
      %6479 = vmatprep.subr.mxu0 0.0
      %6480 = vmatpush1.msra.mxu0 %v6007
      %6481 = vmatprep.subr.mxu0 0.0
      %6482 = vmatpush1.msra.mxu0 %v6008
      %6483 = vmatprep.subr.mxu0 0.0
      %6484 = vmatpush1.msra.mxu0 %v6009
      %6485 = vmatprep.subr.mxu0 0.0
      %6486 = vmatpush1.msra.mxu0 %v6010
      %6487 = vmatprep.subr.mxu0 0.0
      %6488 = vmatpush1.msra.mxu0 %v6011
      %6489 = vmatprep.subr.mxu0 0.0
      %6490 = vmatpush1.msra.mxu0 %v6012
      %6491 = vmatprep.subr.mxu0 0.0
      %6492 = vmatpush1.msra.mxu0 %v6013
      %6493 = vmatprep.subr.mxu0 0.0
      %6494 = vmatpush1.msra.mxu0 %v6014
      %6495 = vmatprep.subr.mxu0 0.0
      %6496 = vmatpush1.msra.mxu0 %v6015
      %6497 = vmatprep.subr.mxu0 0.0
      %6498 = vmatpush1.msra.mxu0 %v6016
      %6499 = vmatprep.subr.mxu0 0.0
      %6500 = vmatpush1.msra.mxu0 %v6017
      %6501 = vmatprep.subr.mxu0 0.0
      %6502 = vmatpush1.msra.mxu0 %v6018
      %6503 = vmatprep.subr.mxu0 0.0
      %6504 = vmatpush1.msra.mxu0 %v6019
      %6505 = vmatprep.mubr.f32.mxu0 %v6182
      %6506 = vmatmul.mubr.f32.gmra.mrb[0].mxu0 %v6178
      %v6507 = vpop.f32.mrb[0].mxu0
      %v6508 = vadd.f32 %v6438, %v6507
      %v6509 = vpop.f32.mrb[0].mxu0
      %6510 = vdwg.mxu0
      %6511 = vmatprep.subr.mxu0 0.0
      %6512 = vmatpush1.msra.mxu0 %v6020
      %6513 = vmatprep.subr.mxu0 0.0
      %6514 = vmatpush1.msra.mxu0 %v6021
      %6515 = vmatprep.subr.mxu0 0.0
      %6516 = vmatpush1.msra.mxu0 %v6022
      %6517 = vmatprep.subr.mxu0 0.0
      %6518 = vmatpush1.msra.mxu0 %v6023
      %6519 = vmatprep.subr.mxu0 0.0
      %6520 = vmatpush1.msra.mxu0 %v6024
      %6521 = vmatprep.subr.mxu0 0.0
      %6522 = vmatpush1.msra.mxu0 %v6025
      %6523 = vmatprep.subr.mxu0 0.0
      %6524 = vmatpush1.msra.mxu0 %v6026
      %6525 = vmatprep.subr.mxu0 0.0
      %6526 = vmatpush1.msra.mxu0 %v6027
      %6527 = vmatprep.subr.mxu0 0.0
      %6528 = vmatpush1.msra.mxu0 %v6028
      %6529 = vmatprep.subr.mxu0 0.0
      %6530 = vmatpush1.msra.mxu0 %v6029
      %6531 = vmatprep.subr.mxu0 0.0
      %6532 = vmatpush1.msra.mxu0 %v6030
      %6533 = vmatprep.subr.mxu0 0.0
      %6534 = vmatpush1.msra.mxu0 %v6031
      %6535 = vmatprep.subr.mxu0 0.0
      %6536 = vmatpush1.msra.mxu0 %v6032
      %6537 = vmatprep.subr.mxu0 0.0
      %6538 = vmatpush1.msra.mxu0 %v6033
      %6539 = vmatprep.subr.mxu0 0.0
      %6540 = vmatpush1.msra.mxu0 %v6034
      %6541 = vmatprep.subr.mxu0 0.0
      %6542 = vmatpush1.msra.mxu0 %v6035
      %6543 = vmatprep.subr.mxu0 0.0
      %6544 = vmatpush1.msra.mxu0 %v6036
      %6545 = vmatprep.subr.mxu0 0.0
      %6546 = vmatpush1.msra.mxu0 %v6037
      %6547 = vmatprep.subr.mxu0 0.0
      %6548 = vmatpush1.msra.mxu0 %v6038
      %6549 = vmatprep.subr.mxu0 0.0
      %6550 = vmatpush1.msra.mxu0 %v6039
      %6551 = vmatprep.subr.mxu0 0.0
      %6552 = vmatpush1.msra.mxu0 %v6040
      %6553 = vmatprep.subr.mxu0 0.0
      %6554 = vmatpush1.msra.mxu0 %v6041
      %6555 = vmatprep.subr.mxu0 0.0
      %6556 = vmatpush1.msra.mxu0 %v6042
      %6557 = vmatprep.subr.mxu0 0.0
      %6558 = vmatpush1.msra.mxu0 %v6043
      %6559 = vmatprep.subr.mxu0 0.0
      %6560 = vmatpush1.msra.mxu0 %v6044
      %6561 = vmatprep.subr.mxu0 0.0
      %6562 = vmatpush1.msra.mxu0 %v6045
      %6563 = vmatprep.subr.mxu0 0.0
      %6564 = vmatpush1.msra.mxu0 %v6046
      %6565 = vmatprep.subr.mxu0 0.0
      %6566 = vmatpush1.msra.mxu0 %v6047
      %6567 = vmatprep.subr.mxu0 0.0
      %6568 = vmatpush1.msra.mxu0 %v6048
      %6569 = vmatprep.subr.mxu0 0.0
      %6570 = vmatpush1.msra.mxu0 %v6049
      %6571 = vmatprep.subr.mxu0 0.0
      %6572 = vmatpush1.msra.mxu0 %v6050
      %6573 = vmatprep.subr.mxu0 0.0
      %6574 = vmatpush1.msra.mxu0 %v6051
      %6575 = vmatprep.mubr.f32.mxu0 %v6190
      %6576 = vmatmul.mubr.f32.gmra.mrb[0].mxu0 %v6186
      %v6577 = vpop.f32.mrb[0].mxu0
      %v6578 = vadd.f32 %v6508, %v6577
      %v6579 = vpop.f32.mrb[0].mxu0
      %6580 = vdwg.mxu0
      %6581 = vmatprep.subr.mxu0 0.0
      %6582 = vmatpush1.msra.mxu0 %v6052
      %6583 = vmatprep.subr.mxu0 0.0
      %6584 = vmatpush1.msra.mxu0 %v6053
      %6585 = vmatprep.subr.mxu0 0.0
      %6586 = vmatpush1.msra.mxu0 %v6054
      %6587 = vmatprep.subr.mxu0 0.0
      %6588 = vmatpush1.msra.mxu0 %v6055
      %6589 = vmatprep.subr.mxu0 0.0
      %6590 = vmatpush1.msra.mxu0 %v6056
      %6591 = vmatprep.subr.mxu0 0.0
      %6592 = vmatpush1.msra.mxu0 %v6057
      %6593 = vmatprep.subr.mxu0 0.0
      %6594 = vmatpush1.msra.mxu0 %v6058
      %6595 = vmatprep.subr.mxu0 0.0
      %6596 = vmatpush1.msra.mxu0 %v6059
      %6597 = vmatprep.subr.mxu0 0.0
      %6598 = vmatpush1.msra.mxu0 %v6060
      %6599 = vmatprep.subr.mxu0 0.0
      %6600 = vmatpush1.msra.mxu0 %v6061
      %6601 = vmatprep.subr.mxu0 0.0
      %6602 = vmatpush1.msra.mxu0 %v6062
      %6603 = vmatprep.subr.mxu0 0.0
      %6604 = vmatpush1.msra.mxu0 %v6063
      %6605 = vmatprep.subr.mxu0 0.0
      %6606 = vmatpush1.msra.mxu0 %v6064
      %6607 = vmatprep.subr.mxu0 0.0
      %6608 = vmatpush1.msra.mxu0 %v6065
      %6609 = vmatprep.subr.mxu0 0.0
      %6610 = vmatpush1.msra.mxu0 %v6066
      %6611 = vmatprep.subr.mxu0 0.0
      %6612 = vmatpush1.msra.mxu0 %v6067
      %6613 = vmatprep.subr.mxu0 0.0
      %6614 = vmatpush1.msra.mxu0 %v6068
      %6615 = vmatprep.subr.mxu0 0.0
      %6616 = vmatpush1.msra.mxu0 %v6069
      %6617 = vmatprep.subr.mxu0 0.0
      %6618 = vmatpush1.msra.mxu0 %v6070
      %6619 = vmatprep.subr.mxu0 0.0
      %6620 = vmatpush1.msra.mxu0 %v6071
      %6621 = vmatprep.subr.mxu0 0.0
      %6622 = vmatpush1.msra.mxu0 %v6072
      %6623 = vmatprep.subr.mxu0 0.0
      %6624 = vmatpush1.msra.mxu0 %v6073
      %6625 = vmatprep.subr.mxu0 0.0
      %6626 = vmatpush1.msra.mxu0 %v6074
      %6627 = vmatprep.subr.mxu0 0.0
      %6628 = vmatpush1.msra.mxu0 %v6075
      %6629 = vmatprep.subr.mxu0 0.0
      %6630 = vmatpush1.msra.mxu0 %v6076
      %6631 = vmatprep.subr.mxu0 0.0
      %6632 = vmatpush1.msra.mxu0 %v6077
      %6633 = vmatprep.subr.mxu0 0.0
      %6634 = vmatpush1.msra.mxu0 %v6078
      %6635 = vmatprep.subr.mxu0 0.0
      %6636 = vmatpush1.msra.mxu0 %v6079
      %6637 = vmatprep.subr.mxu0 0.0
      %6638 = vmatpush1.msra.mxu0 %v6080
      %6639 = vmatprep.subr.mxu0 0.0
      %6640 = vmatpush1.msra.mxu0 %v6081
      %6641 = vmatprep.subr.mxu0 0.0
      %6642 = vmatpush1.msra.mxu0 %v6082
      %6643 = vmatprep.subr.mxu0 0.0
      %6644 = vmatpush1.msra.mxu0 %v6083
      %6645 = vmatprep.mubr.f32.mxu0 %v6198
      %6646 = vmatmul.mubr.f32.gmra.mrb[0].mxu0 %v6194
      %v6647 = vpop.f32.mrb[0].mxu0
      %v6648 = vadd.f32 %v6578, %v6647
      %v6649 = vpop.f32.mrb[0].mxu0
      %6650 = vdwg.mxu0
      %6651 = vmatprep.subr.mxu0 0.0
      %6652 = vmatpush1.msra.mxu0 %v6084
      %6653 = vmatprep.subr.mxu0 0.0
      %6654 = vmatpush1.msra.mxu0 %v6085
      %6655 = vmatprep.subr.mxu0 0.0
      %6656 = vmatpush1.msra.mxu0 %v6086
      %6657 = vmatprep.subr.mxu0 0.0
      %6658 = vmatpush1.msra.mxu0 %v6087
      %6659 = vmatprep.subr.mxu0 0.0
      %6660 = vmatpush1.msra.mxu0 %v6088
      %6661 = vmatprep.subr.mxu0 0.0
      %6662 = vmatpush1.msra.mxu0 %v6089
      %6663 = vmatprep.subr.mxu0 0.0
      %6664 = vmatpush1.msra.mxu0 %v6090
      %6665 = vmatprep.subr.mxu0 0.0
      %6666 = vmatpush1.msra.mxu0 %v6091
      %6667 = vmatprep.subr.mxu0 0.0
      %6668 = vmatpush1.msra.mxu0 %v6092
      %6669 = vmatprep.subr.mxu0 0.0
      %6670 = vmatpush1.msra.mxu0 %v6093
      %6671 = vmatprep.subr.mxu0 0.0
      %6672 = vmatpush1.msra.mxu0 %v6094
      %6673 = vmatprep.subr.mxu0 0.0
      %6674 = vmatpush1.msra.mxu0 %v6095
      %6675 = vmatprep.subr.mxu0 0.0
      %6676 = vmatpush1.msra.mxu0 %v6096
      %6677 = vmatprep.subr.mxu0 0.0
      %6678 = vmatpush1.msra.mxu0 %v6097
      %6679 = vmatprep.subr.mxu0 0.0
      %6680 = vmatpush1.msra.mxu0 %v6098
      %6681 = vmatprep.subr.mxu0 0.0
      %6682 = vmatpush1.msra.mxu0 %v6099
      %6683 = vmatprep.subr.mxu0 0.0
      %6684 = vmatpush1.msra.mxu0 %v6100
      %6685 = vmatprep.subr.mxu0 0.0
      %6686 = vmatpush1.msra.mxu0 %v6101
      %6687 = vmatprep.subr.mxu0 0.0
      %6688 = vmatpush1.msra.mxu0 %v6102
      %6689 = vmatprep.subr.mxu0 0.0
      %6690 = vmatpush1.msra.mxu0 %v6103
      %6691 = vmatprep.subr.mxu0 0.0
      %6692 = vmatpush1.msra.mxu0 %v6104
      %6693 = vmatprep.subr.mxu0 0.0
      %6694 = vmatpush1.msra.mxu0 %v6105
      %6695 = vmatprep.subr.mxu0 0.0
      %6696 = vmatpush1.msra.mxu0 %v6106
      %6697 = vmatprep.subr.mxu0 0.0
      %6698 = vmatpush1.msra.mxu0 %v6107
      %6699 = vmatprep.subr.mxu0 0.0
      %6700 = vmatpush1.msra.mxu0 %v6108
      %6701 = vmatprep.subr.mxu0 0.0
      %6702 = vmatpush1.msra.mxu0 %v6109
      %6703 = vmatprep.subr.mxu0 0.0
      %6704 = vmatpush1.msra.mxu0 %v6110
      %6705 = vmatprep.subr.mxu0 0.0
      %6706 = vmatpush1.msra.mxu0 %v6111
      %6707 = vmatprep.subr.mxu0 0.0
      %6708 = vmatpush1.msra.mxu0 %v6112
      %6709 = vmatprep.subr.mxu0 0.0
      %6710 = vmatpush1.msra.mxu0 %v6113
      %6711 = vmatprep.subr.mxu0 0.0
      %6712 = vmatpush1.msra.mxu0 %v6114
      %6713 = vmatprep.subr.mxu0 0.0
      %6714 = vmatpush1.msra.mxu0 %v6115
      %6715 = vmatprep.mubr.f32.mxu0 %v6206
      %6716 = vmatmul.mubr.f32.gmra.mrb[0].mxu0 %v6202
      %v6717 = vpop.f32.mrb[0].mxu0
      %v6718 = vadd.f32 %v6648, %v6717
      %v6719 = vpop.f32.mrb[0].mxu0
      %6720 = vdwg.mxu0
      %6721 = vmatprep.subr.mxu0 0.0
      %6722 = vmatpush1.msra.mxu0 %v6116
      %6723 = vmatprep.subr.mxu0 0.0
      %6724 = vmatpush1.msra.mxu0 %v6117
      %6725 = vmatprep.subr.mxu0 0.0
      %6726 = vmatpush1.msra.mxu0 %v6118
      %6727 = vmatprep.subr.mxu0 0.0
      %6728 = vmatpush1.msra.mxu0 %v6119
      %6729 = vmatprep.subr.mxu0 0.0
      %6730 = vmatpush1.msra.mxu0 %v6120
      %6731 = vmatprep.subr.mxu0 0.0
      %6732 = vmatpush1.msra.mxu0 %v6121
      %6733 = vmatprep.subr.mxu0 0.0
      %6734 = vmatpush1.msra.mxu0 %v6122
      %6735 = vmatprep.subr.mxu0 0.0
      %6736 = vmatpush1.msra.mxu0 %v6123
      %6737 = vmatprep.subr.mxu0 0.0
      %6738 = vmatpush1.msra.mxu0 %v6124
      %6739 = vmatprep.subr.mxu0 0.0
      %6740 = vmatpush1.msra.mxu0 %v6125
      %6741 = vmatprep.subr.mxu0 0.0
      %6742 = vmatpush1.msra.mxu0 %v6126
      %6743 = vmatprep.subr.mxu0 0.0
      %6744 = vmatpush1.msra.mxu0 %v6127
      %6745 = vmatprep.subr.mxu0 0.0
      %6746 = vmatpush1.msra.mxu0 %v6128
      %6747 = vmatprep.subr.mxu0 0.0
      %6748 = vmatpush1.msra.mxu0 %v6129
      %6749 = vmatprep.subr.mxu0 0.0
      %6750 = vmatpush1.msra.mxu0 %v6130
      %6751 = vmatprep.subr.mxu0 0.0
      %6752 = vmatpush1.msra.mxu0 %v6131
      %6753 = vmatprep.subr.mxu0 0.0
      %6754 = vmatpush1.msra.mxu0 %v6132
      %6755 = vmatprep.subr.mxu0 0.0
      %6756 = vmatpush1.msra.mxu0 %v6133
      %6757 = vmatprep.subr.mxu0 0.0
      %6758 = vmatpush1.msra.mxu0 %v6134
      %6759 = vmatprep.subr.mxu0 0.0
      %6760 = vmatpush1.msra.mxu0 %v6135
      %6761 = vmatprep.subr.mxu0 0.0
      %6762 = vmatpush1.msra.mxu0 %v6136
      %6763 = vmatprep.subr.mxu0 0.0
      %6764 = vmatpush1.msra.mxu0 %v6137
      %6765 = vmatprep.subr.mxu0 0.0
      %6766 = vmatpush1.msra.mxu0 %v6138
      %6767 = vmatprep.subr.mxu0 0.0
      %6768 = vmatpush1.msra.mxu0 %v6139
      %6769 = vmatprep.subr.mxu0 0.0
      %6770 = vmatpush1.msra.mxu0 %v6140
      %6771 = vmatprep.subr.mxu0 0.0
      %6772 = vmatpush1.msra.mxu0 %v6141
      %6773 = vmatprep.subr.mxu0 0.0
      %6774 = vmatpush1.msra.mxu0 %v6142
      %6775 = vmatprep.subr.mxu0 0.0
      %6776 = vmatpush1.msra.mxu0 %v6143
      %6777 = vmatprep.subr.mxu0 0.0
      %6778 = vmatpush1.msra.mxu0 %v6144
      %6779 = vmatprep.subr.mxu0 0.0
      %6780 = vmatpush1.msra.mxu0 %v6145
      %6781 = vmatprep.subr.mxu0 0.0
      %6782 = vmatpush1.msra.mxu0 %v6146
      %6783 = vmatprep.subr.mxu0 0.0
      %6784 = vmatpush1.msra.mxu0 %v6147
      %6785 = vmatprep.mubr.f32.mxu0 %v6214
      %6786 = vmatmul.mubr.f32.gmra.mrb[0].mxu0 %v6210
      %v6787 = vpop.f32.mrb[0].mxu0
      %v6788 = vadd.f32 %v6718, %v6787
      %v6789 = vpop.f32.mrb[0].mxu0
      %6790 = vdwg.mxu0
      %v6791 = vmax.f32 %v6788, 0.0
      %v6792 = vld [vmem:[%s7] sm:$0x1]
      %v6793 = vmul.f32 %v6791, %v6792
      %vm6794 = vcmask 1040384
      %v6795 = vsel %vm6794, %v6793, 0.0
      %6796 = vadd.xlane.f32.xlu0 %v6795
      %v6797 = vpop.xlane.xlu0 %6796
      %v6798 = vld [vmem:[#allocation6] sm:$0x1]
      %v6799 = vadd.f32 %v6797, %v6798
      %vm6800 = vcmask 0
      %6801 = vst.msk [vmem:[%s330] sm:$0x1] %vm6800, %v6799
      %p6802 = scmp.lt.s32.totalorder %s22, 1
      %s6803 = scalar_select %p6802, %s22, 1
      %s6804 = scalar_lea.vmem %s9, %s6803
      // Predicated region
      $region57: #{spectrogram_arrival_cnn.1} parent=55 // pred_check
        %p6805 = pneg %p234
      $region58: #{spectrogram_arrival_cnn.1} parent=55 // pred_check_branch
        %6807 = sbr.rel (%p6805) target = $region60
      $region59: #{spectrogram_arrival_cnn.1} parent=55 // pred_region
        _
      $region60: #{spectrogram_arrival_cnn.1} parent=55 // pred_fallthru
        _
    $region56: #{spectrogram_arrival_cnn.1} parent=5 // pred_fallthru
      _
    %p6808 = scmp.le.s32.totalorder 2, %s17
    // Predicated region
    $region61: #{spectrogram_arrival_cnn.1} parent=5 // pred_check
      %p6809 = pneg %p6808
    $region62: #{spectrogram_arrival_cnn.1} parent=5 // pred_check_branch
      %6811 = sbr.rel (%p6809) target = $region64
    $region63: #{spectrogram_arrival_cnn.1} parent=5 // pred_region
      %s6812 = ssub.s32 %s17, 2
      // Predicated region
      $region65: #{spectrogram_arrival_cnn.1} parent=63 // pred_check
        %p6813 = pneg %p240
      $region66: #{spectrogram_arrival_cnn.1} parent=63 // pred_check_branch
        %6815 = sbr.rel (%p6813) target = $region68
      $region67: #{spectrogram_arrival_cnn.1} parent=63 // pred_region
        %p6816 = scmp.lt.s32.totalorder %s23, 1
        %s6817 = scalar_select %p6816, %s23, 1
        %s6818 = scalar_lea.vmem %s9, %s6817
      $region68: #{spectrogram_arrival_cnn.1} parent=63 // pred_fallthru
        _
    $region64: #{spectrogram_arrival_cnn.1} parent=5 // pred_fallthru
      _
  $region6: #{spectrogram_arrival_cnn.1} parent=0 // loop_footer
    %s21 = sadd.s32 1, %s17
  $region7: #{spectrogram_arrival_cnn.1} parent=0 // loop_footer_branch
    %16 = sbr.rel target = $region3
  $region8: #{spectrogram_arrival_cnn.1} parent=0 // loop_exit
    _

</llo_original>
